<compile_context>
chip_gen: v6e
topology: v6e:2x2x1
jax: 0.10.0
libtpu: 0.0.40
codegen_flags: <defaults>
</compile_context>

<pallas_src>
import functools

import jax
import jax.numpy as jnp
import numpy as np
from jax import lax
from jax.experimental import pallas as pl
from jax.experimental.pallas import tpu as pltpu


MAX_TM = 512                      # row-tile cap; 512 rows amortize overhead
VMEM_LIMIT = 32 * 1024 * 1024     # raise v5e's 16 MiB scoped default


def _round_up(x, m):
    return (x + m - 1) // m * m


def _choose_tiling(m, max_tm=MAX_TM):
    """Return (padded_M, row_tile).  Prefer >=2 grid entries (v7x megacore)
    while keeping tiles multiples of 16 rows for clean bf16/f32 layout."""
    mp = _round_up(m, 16)
    if mp % 32 == 0 and mp // 2 <= max_tm:
        return mp, mp // 2
    if mp <= max_tm:
        return mp, mp
    mp = _round_up(m, max_tm)
    return mp, max_tm


# ----------------------------------------------------------------------------
# Pallas kernels
# ----------------------------------------------------------------------------
def _conv_bn_relu_kernel(p_ref, w_ref, b_ref, o_ref):
    # p_ref: (tm, T*Cin) bf16 taps, w_ref: (T*Cin, Cout) bf16 (scale folded),
    # b_ref: (1, Cout) f32, o_ref: (tm, Cout) f32.  Single MXU matmul with
    # f32 accumulation; no VMEM accumulator scratch.
    acc = jnp.dot(p_ref[...], w_ref[...], preferred_element_type=jnp.float32)
    o_ref[...] = jnp.maximum(acc + b_ref[...], 0.0)


def _conv_bn_relu_maxpool_kernel(p_ref, w_ref, b_ref, o_ref, pool_ref,
                                 *, n_taps, cin):
    # Fused branch0 conv + branch2 max-pool (identical 3x3/stride-2 taps):
    # the bf16 tap block is read once; the pool is a max over n_taps
    # lane-aligned Cin chunks (Cin is a multiple of 128 -> cheap slices).
    p = p_ref[...]
    acc = jnp.dot(p, w_ref[...], preferred_element_type=jnp.float32)
    o_ref[...] = jnp.maximum(acc + b_ref[...], 0.0)
    m = p[:, 0:cin]
    for t in range(1, n_taps):
        m = jnp.maximum(m, p[:, t * cin:(t + 1) * cin])
    pool_ref[...] = m.astype(pool_ref.dtype)


# ----------------------------------------------------------------------------
# pallas_call wrappers
# ----------------------------------------------------------------------------
def conv_bn_relu_pallas(taps, w, bias, tm):
    mp, k = taps.shape
    cout = w.shape[-1]
    return pl.pallas_call(
        _conv_bn_relu_kernel,
        out_shape=jax.ShapeDtypeStruct((mp, cout), jnp.float32),
        grid=(mp // tm,),
        in_specs=[
            pl.BlockSpec((tm, k), lambda m: (m, 0)),
            pl.BlockSpec((k, cout), lambda m: (0, 0)),     # resident weights
            pl.BlockSpec((1, cout), lambda m: (0, 0)),     # resident bias
        ],
        out_specs=pl.BlockSpec((tm, cout), lambda m: (m, 0)),
        compiler_params=pltpu.CompilerParams(
            dimension_semantics=("parallel",),
            vmem_limit_bytes=VMEM_LIMIT),
    )(taps, w, bias)


def conv_bn_relu_maxpool_pallas(taps, w, bias, tm, *, n_taps, cin):
    mp, k = taps.shape
    cout = w.shape[-1]
    kernel = functools.partial(_conv_bn_relu_maxpool_kernel,
                               n_taps=n_taps, cin=cin)
    return pl.pallas_call(
        kernel,
        out_shape=(jax.ShapeDtypeStruct((mp, cout), jnp.float32),
                   jax.ShapeDtypeStruct((mp, cin), jnp.float32)),
        grid=(mp // tm,),
        in_specs=[
            pl.BlockSpec((tm, k), lambda m: (m, 0)),
            pl.BlockSpec((k, cout), lambda m: (0, 0)),
            pl.BlockSpec((1, cout), lambda m: (0, 0)),
        ],
        out_specs=(pl.BlockSpec((tm, cout), lambda m: (m, 0)),
                   pl.BlockSpec((tm, cin), lambda m: (m, 0))),
        compiler_params=pltpu.CompilerParams(
            dimension_semantics=("parallel",),
            vmem_limit_bytes=VMEM_LIMIT),
    )(taps, w, bias)


# ----------------------------------------------------------------------------
# Glue: build (M, T*Cin) tap matrix (taps stacked on the contraction axis)
# ----------------------------------------------------------------------------
def extract_taps(x_nhwc, kh, kw, stride, pad):
    x = x_nhwc.astype(jnp.bfloat16)
    if pad:
        x = jnp.pad(x, ((0, 0), (pad, pad), (pad, pad), (0, 0)))
    n, h, w, c = x.shape
    oh = (h - kh) // stride + 1
    ow = (w - kw) // stride + 1
    views = []
    for i in range(kh):
        for j in range(kw):
            views.append(
                x[:, i:i + stride * oh:stride, j:j + stride * ow:stride, :]
                .reshape(n * oh * ow, c))
    # TODO(synk): for the stride-1 3x3 layer this stack is a 9x HBM
    # amplification; an in-kernel gather (pl.Element index_map over the padded
    # input) would avoid materializing it.
    taps = jnp.stack(views, axis=1).reshape(n * oh * ow, kh * kw * c)
    return taps, n * oh * ow, (n, oh, ow)


# ----------------------------------------------------------------------------
# Parameters (deterministic, folded eval-mode BatchNorm, eps=1e-3)
# ----------------------------------------------------------------------------
def make_basic_conv_params(key, kh, kw, cin, cout, eps=1e-3):
    kw_, kg, kb, km, kv = jax.random.split(key, 5)
    w = jax.random.normal(kw_, (kh, kw, cin, cout), jnp.float32) * 0.05
    gamma = 1.0 + 0.1 * jax.random.normal(kg, (cout,), jnp.float32)
    beta = 0.1 * jax.random.normal(kb, (cout,), jnp.float32)
    mean = 0.1 * jax.random.normal(km, (cout,), jnp.float32)
    var = jnp.abs(jax.random.normal(kv, (cout,), jnp.float32)) + 0.5
    scale = gamma / jnp.sqrt(var + eps)
    bias = beta - mean * scale
    w_folded = w * scale                       # fold BN scale in f32 ...
    return {
        "w_hwio_folded": w_folded,             # f32, used by the reference
        "w_kfused": w_folded.reshape(kh * kw * cin, cout).astype(jnp.bfloat16),
        "bias_row": bias.reshape(1, cout),
        "bias_vec": bias,
        "kh": kh, "kw": kw, "cin": cin, "cout": cout,
    }


def init_mixed_6a_params(key):
    k0, k1a, k1b, k1c = jax.random.split(key, 4)
    return {
        "branch0":   make_basic_conv_params(k0, 3, 3, 256, 384),
        "branch1_0": make_basic_conv_params(k1a, 1, 1, 256, 192),
        "branch1_1": make_basic_conv_params(k1b, 3, 3, 192, 192),
        "branch1_2": make_basic_conv_params(k1c, 3, 3, 192, 256),
    }


# ----------------------------------------------------------------------------
# Layer application
# ----------------------------------------------------------------------------
def basic_conv_apply(x_nhwc, p, stride, pad):
    taps, m, (n, oh, ow) = extract_taps(x_nhwc, p["kh"], p["kw"], stride, pad)
    mp, tm = _choose_tiling(m)
    if mp != m:
        taps = jnp.pad(taps, ((0, mp - m), (0, 0)))
    out = conv_bn_relu_pallas(taps, p["w_kfused"], p["bias_row"], tm)
    return out[:m].reshape(n, oh, ow, p["cout"])


def branch0_and_pool_apply(x_nhwc, p):
    taps, m, (n, oh, ow) = extract_taps(x_nhwc, 3, 3, 2, 0)
    mp, tm = _choose_tiling(m)
    if mp != m:
        taps = jnp.pad(taps, ((0, mp - m), (0, 0)))
    conv_out, pool_out = conv_bn_relu_maxpool_pallas(
        taps, p["w_kfused"], p["bias_row"], tm, n_taps=9, cin=p["cin"])
    x0 = conv_out[:m].reshape(n, oh, ow, p["cout"])
    x2 = pool_out[:m].reshape(n, oh, ow, p["cin"])
    return x0, x2


# ----------------------------------------------------------------------------
# Mixed_6a forward
# ----------------------------------------------------------------------------
def mixed_6a_forward(x_nchw, params):
    x = jnp.transpose(x_nchw, (0, 2, 3, 1))               # -> NHWC

    # branch0 (3x3 s2 conv) + branch2 (MaxPool 3x3 s2) fused (shared taps).
    x0, x2 = branch0_and_pool_apply(x, params["branch0"])

    # branch1: 1x1 s1 -> 3x3 s1 pad1 -> 3x3 s2.
    x1 = basic_conv_apply(x, params["branch1_0"], stride=1, pad=0)
    x1 = basic_conv_apply(x1, params["branch1_1"], stride=1, pad=1)
    x1 = basic_conv_apply(x1, params["branch1_2"], stride=2, pad=0)

    out = jnp.concatenate([x0, x1, x2], axis=-1)           # channel concat
    return jnp.transpose(out, (0, 3, 1, 2))                # back to NCHW


# ----------------------------------------------------------------------------
# Pure-JAX reference (same folded bf16 weights, f32 accumulation)
# ----------------------------------------------------------------------------
def _conv_ref(x_nhwc, p, stride, pad):
    y = lax.conv_general_dilated(
        x_nhwc.astype(jnp.bfloat16),
        p["w_hwio_folded"].astype(jnp.bfloat16),
        (stride, stride), [(pad, pad), (pad, pad)],
        dimension_numbers=("NHWC", "HWIO", "NHWC"),
        preferred_element_type=jnp.float32)
    return jnp.maximum(y + p["bias_vec"], 0.0)


def mixed_6a_ref(x_nchw, params):
    x = jnp.transpose(x_nchw, (0, 2, 3, 1))
    x0 = _conv_ref(x, params["branch0"], 2, 0)
    x1 = _conv_ref(x, params["branch1_0"], 1, 0)
    x1 = _conv_ref(x1, params["branch1_1"], 1, 1)
    x1 = _conv_ref(x1, params["branch1_2"], 2, 0)
    xb = x.astype(jnp.bfloat16).astype(jnp.float32)   # kernel pools bf16 taps
    x2 = lax.reduce_window(xb, -jnp.inf, lax.max,
                           (1, 3, 3, 1), (1, 2, 2, 1), "VALID")
    out = jnp.concatenate([x0, x1, x2], axis=-1)
    return jnp.transpose(out, (0, 3, 1, 2))


if __name__ == "__main__":
    key = jax.random.PRNGKey(0)
    k_params, k_x = jax.random.split(key)

    # Small but module-consistent: Mixed_6a fixes the input channels at 256.
    N, C, H, W = 2, 256, 11, 11
    x = jax.random.normal(k_x, (N, C, H, W), jnp.float32)

    params = init_mixed_6a_params(k_params)

    fwd = jax.jit(lambda xx: mixed_6a_forward(xx, params))
    out = jax.block_until_ready(fwd(x))
    ref = jax.block_until_ready(mixed_6a_ref(x, params))

    assert out.shape == (N, 384 + 256 + 256, 5, 5), out.shape
    assert out.dtype == jnp.float32
    # Both paths use identical folded bf16 weights with f32 accumulation;
    # tolerance covers accumulation-order / intermediate-rounding differences.
    np.testing.assert_allclose(np.asarray(out), np.asarray(ref),
                               rtol=1e-2, atol=1e-2)

    print("KERNEL_OK")
</pallas_src>

<mosaic_0001>
module attributes {stable_mosaic.version = 11 : i64} {
  func.func @_conv_bn_relu_kernel(%arg0: i32, %arg1: memref<128x256xbf16, #tpu.memory_space<vmem>>, %arg2: memref<256x192xbf16, #tpu.memory_space<vmem>>, %arg3: memref<1x192xf32, #tpu.memory_space<vmem>>, %arg4: memref<128x192xf32, #tpu.memory_space<vmem>>) attributes {dimension_semantics = [#tpu.dimension_semantics<parallel>], iteration_bounds = array<i64: 2>, scalar_prefetch = 0 : i64, scratch_operands = 0 : i64, tpu.core_type = #tpu.core_type<tc>, window_params = [{transform_indices = @transform_0, window_bounds = array<i64: 128, 256>}, {pipeline_mode = #tpu.pipeline_mode<synchronous>, transform_indices = @transform_1, window_bounds = array<i64: 256, 192>}, {pipeline_mode = #tpu.pipeline_mode<synchronous>, transform_indices = @transform_2, window_bounds = array<i64: 1, 192>}, {transform_indices = @transform_3, window_bounds = array<i64: 128, 192>}]} {
    %c0 = arith.constant 0 : index
    %c0_0 = arith.constant 0 : index
    %0 = vector.load %arg1[%c0, %c0_0] : memref<128x256xbf16, #tpu.memory_space<vmem>>, vector<128x256xbf16>
    %c0_1 = arith.constant 0 : index
    %c0_2 = arith.constant 0 : index
    %1 = vector.load %arg2[%c0_1, %c0_2] : memref<256x192xbf16, #tpu.memory_space<vmem>>, vector<256x192xbf16>
    %cst = arith.constant dense<0.000000e+00> : vector<128x192xf32>
    %2 = tpu.matmul %0, %1, %cst {dimension_numbers = #tpu.dot_dimension_numbers<[1], [0], [0], [1], [0, 0, 1, 1], [], []>} : vector<128x256xbf16>, vector<256x192xbf16>, vector<128x192xf32> -> vector<128x192xf32>
    %c0_3 = arith.constant 0 : index
    %c0_4 = arith.constant 0 : index
    %3 = vector.load %arg3[%c0_3, %c0_4] : memref<1x192xf32, #tpu.memory_space<vmem>>, vector<1x192xf32>
    %4 = vector.broadcast %3 : vector<1x192xf32> to vector<128x192xf32>
    %5 = arith.addf %2, %4 : vector<128x192xf32>
    %cst_5 = arith.constant 0.000000e+00 : f32
    %6 = vector.broadcast %cst_5 : f32 to vector<128x192xf32>
    %7 = arith.maximumf %5, %6 : vector<128x192xf32>
    %c0_6 = arith.constant 0 : index
    %c0_7 = arith.constant 0 : index
    %8 = vector.load %arg4[%c0_6, %c0_7] : memref<128x192xf32, #tpu.memory_space<vmem>>, vector<128x192xf32>
    tpu.vector_store %arg4[%c0_6, %c0_7], %7 {strides = array<i32>} : memref<128x192xf32, #tpu.memory_space<vmem>>, vector<128x192xf32>,
    return
  }
  func.func @transform_0(%arg0: i32) -> (i32, i32) {
    %c0_i32 = arith.constant 0 : i32
    %c0_i32_0 = arith.constant 0 : i32
    return %arg0, %c0_i32 : i32, i32
  }
  func.func @transform_1(%arg0: i32) -> (i32, i32) {
    %c0_i32 = arith.constant 0 : i32
    %c0_i32_0 = arith.constant 0 : i32
    %c0_i32_1 = arith.constant 0 : i32
    return %c0_i32, %c0_i32_0 : i32, i32
  }
  func.func @transform_2(%arg0: i32) -> (i32, i32) {
    %c0_i32 = arith.constant 0 : i32
    %c0_i32_0 = arith.constant 0 : i32
    %c0_i32_1 = arith.constant 0 : i32
    return %c0_i32, %c0_i32_0 : i32, i32
  }
  func.func @transform_3(%arg0: i32) -> (i32, i32) {
    %c0_i32 = arith.constant 0 : i32
    %c0_i32_0 = arith.constant 0 : i32
    return %arg0, %c0_i32 : i32, i32
  }
}

module attributes {stable_mosaic.version = 11 : i64} {
  func.func @_conv_bn_relu_maxpool_kernel(%arg0: i32, %arg1: memref<32x2304xbf16, #tpu.memory_space<vmem>>, %arg2: memref<2304x384xbf16, #tpu.memory_space<vmem>>, %arg3: memref<1x384xf32, #tpu.memory_space<vmem>>, %arg4: memref<32x384xf32, #tpu.memory_space<vmem>>, %arg5: memref<32x256xf32, #tpu.memory_space<vmem>>) attributes {dimension_semantics = [#tpu.dimension_semantics<parallel>], iteration_bounds = array<i64: 2>, scalar_prefetch = 0 : i64, scratch_operands = 0 : i64, tpu.core_type = #tpu.core_type<tc>, window_params = [{transform_indices = @transform_0, window_bounds = array<i64: 32, 2304>}, {pipeline_mode = #tpu.pipeline_mode<synchronous>, transform_indices = @transform_1, window_bounds = array<i64: 2304, 384>}, {pipeline_mode = #tpu.pipeline_mode<synchronous>, transform_indices = @transform_2, window_bounds = array<i64: 1, 384>}, {transform_indices = @transform_3, window_bounds = array<i64: 32, 384>}, {transform_indices = @transform_4, window_bounds = array<i64: 32, 256>}]} {
    %c0 = arith.constant 0 : index
    %c0_0 = arith.constant 0 : index
    %0 = vector.load %arg1[%c0, %c0_0] : memref<32x2304xbf16, #tpu.memory_space<vmem>>, vector<32x2304xbf16>
    %c0_1 = arith.constant 0 : index
    %c0_2 = arith.constant 0 : index
    %1 = vector.load %arg2[%c0_1, %c0_2] : memref<2304x384xbf16, #tpu.memory_space<vmem>>, vector<2304x384xbf16>
    %cst = arith.constant dense<0.000000e+00> : vector<32x384xf32>
    %2 = tpu.matmul %0, %1, %cst {dimension_numbers = #tpu.dot_dimension_numbers<[1], [0], [0], [1], [0, 0, 1, 1], [], []>} : vector<32x2304xbf16>, vector<2304x384xbf16>, vector<32x384xf32> -> vector<32x384xf32>
    %c0_3 = arith.constant 0 : index
    %c0_4 = arith.constant 0 : index
    %3 = vector.load %arg3[%c0_3, %c0_4] : memref<1x384xf32, #tpu.memory_space<vmem>>, vector<1x384xf32>
    %4 = vector.broadcast %3 : vector<1x384xf32> to vector<32x384xf32>
    %5 = arith.addf %2, %4 : vector<32x384xf32>
    %cst_5 = arith.constant 0.000000e+00 : f32
    %6 = vector.broadcast %cst_5 : f32 to vector<32x384xf32>
    %7 = arith.maximumf %5, %6 : vector<32x384xf32>
    %c0_6 = arith.constant 0 : index
    %c0_7 = arith.constant 0 : index
    %8 = vector.load %arg4[%c0_6, %c0_7] : memref<32x384xf32, #tpu.memory_space<vmem>>, vector<32x384xf32>
    tpu.vector_store %arg4[%c0_6, %c0_7], %7 {strides = array<i32>} : memref<32x384xf32, #tpu.memory_space<vmem>>, vector<32x384xf32>,
    %9 = vector.extract_strided_slice %0 {offsets = [0, 0], sizes = [32, 256], strides = [1, 1]} : vector<32x2304xbf16> to vector<32x256xbf16>
    %10 = vector.extract_strided_slice %0 {offsets = [0, 256], sizes = [32, 256], strides = [1, 1]} : vector<32x2304xbf16> to vector<32x256xbf16>
    %11 = arith.maximumf %9, %10 : vector<32x256xbf16>
    %12 = vector.extract_strided_slice %0 {offsets = [0, 512], sizes = [32, 256], strides = [1, 1]} : vector<32x2304xbf16> to vector<32x256xbf16>
    %13 = arith.maximumf %11, %12 : vector<32x256xbf16>
    %14 = vector.extract_strided_slice %0 {offsets = [0, 768], sizes = [32, 256], strides = [1, 1]} : vector<32x2304xbf16> to vector<32x256xbf16>
    %15 = arith.maximumf %13, %14 : vector<32x256xbf16>
    %16 = vector.extract_strided_slice %0 {offsets = [0, 1024], sizes = [32, 256], strides = [1, 1]} : vector<32x2304xbf16> to vector<32x256xbf16>
    %17 = arith.maximumf %15, %16 : vector<32x256xbf16>
    %18 = vector.extract_strided_slice %0 {offsets = [0, 1280], sizes = [32, 256], strides = [1, 1]} : vector<32x2304xbf16> to vector<32x256xbf16>
    %19 = arith.maximumf %17, %18 : vector<32x256xbf16>
    %20 = vector.extract_strided_slice %0 {offsets = [0, 1536], sizes = [32, 256], strides = [1, 1]} : vector<32x2304xbf16> to vector<32x256xbf16>
    %21 = arith.maximumf %19, %20 : vector<32x256xbf16>
    %22 = vector.extract_strided_slice %0 {offsets = [0, 1792], sizes = [32, 256], strides = [1, 1]} : vector<32x2304xbf16> to vector<32x256xbf16>
    %23 = arith.maximumf %21, %22 : vector<32x256xbf16>
    %24 = vector.extract_strided_slice %0 {offsets = [0, 2048], sizes = [32, 256], strides = [1, 1]} : vector<32x2304xbf16> to vector<32x256xbf16>
    %25 = arith.maximumf %23, %24 : vector<32x256xbf16>
    %26 = arith.extf %25 : vector<32x256xbf16> to vector<32x256xf32>
    %c0_8 = arith.constant 0 : index
    %c0_9 = arith.constant 0 : index
    %27 = vector.load %arg5[%c0_8, %c0_9] : memref<32x256xf32, #tpu.memory_space<vmem>>, vector<32x256xf32>
    tpu.vector_store %arg5[%c0_8, %c0_9], %26 {strides = array<i32>} : memref<32x256xf32, #tpu.memory_space<vmem>>, vector<32x256xf32>,
    return
  }
  func.func @transform_0(%arg0: i32) -> (i32, i32) {
    %c0_i32 = arith.constant 0 : i32
    %c0_i32_0 = arith.constant 0 : i32
    return %arg0, %c0_i32 : i32, i32
  }
  func.func @transform_1(%arg0: i32) -> (i32, i32) {
    %c0_i32 = arith.constant 0 : i32
    %c0_i32_0 = arith.constant 0 : i32
    %c0_i32_1 = arith.constant 0 : i32
    return %c0_i32, %c0_i32_0 : i32, i32
  }
  func.func @transform_2(%arg0: i32) -> (i32, i32) {
    %c0_i32 = arith.constant 0 : i32
    %c0_i32_0 = arith.constant 0 : i32
    %c0_i32_1 = arith.constant 0 : i32
    return %c0_i32, %c0_i32_0 : i32, i32
  }
  func.func @transform_3(%arg0: i32) -> (i32, i32) {
    %c0_i32 = arith.constant 0 : i32
    %c0_i32_0 = arith.constant 0 : i32
    return %arg0, %c0_i32 : i32, i32
  }
  func.func @transform_4(%arg0: i32) -> (i32, i32) {
    %c0_i32 = arith.constant 0 : i32
    %c0_i32_0 = arith.constant 0 : i32
    return %arg0, %c0_i32 : i32, i32
  }
}

module attributes {stable_mosaic.version = 11 : i64} {
  func.func @_conv_bn_relu_kernel(%arg0: i32, %arg1: memref<128x1728xbf16, #tpu.memory_space<vmem>>, %arg2: memref<1728x192xbf16, #tpu.memory_space<vmem>>, %arg3: memref<1x192xf32, #tpu.memory_space<vmem>>, %arg4: memref<128x192xf32, #tpu.memory_space<vmem>>) attributes {dimension_semantics = [#tpu.dimension_semantics<parallel>], iteration_bounds = array<i64: 2>, scalar_prefetch = 0 : i64, scratch_operands = 0 : i64, tpu.core_type = #tpu.core_type<tc>, window_params = [{transform_indices = @transform_0, window_bounds = array<i64: 128, 1728>}, {pipeline_mode = #tpu.pipeline_mode<synchronous>, transform_indices = @transform_1, window_bounds = array<i64: 1728, 192>}, {pipeline_mode = #tpu.pipeline_mode<synchronous>, transform_indices = @transform_2, window_bounds = array<i64: 1, 192>}, {transform_indices = @transform_3, window_bounds = array<i64: 128, 192>}]} {
    %c0 = arith.constant 0 : index
    %c0_0 = arith.constant 0 : index
    %0 = vector.load %arg1[%c0, %c0_0] : memref<128x1728xbf16, #tpu.memory_space<vmem>>, vector<128x1728xbf16>
    %c0_1 = arith.constant 0 : index
    %c0_2 = arith.constant 0 : index
    %1 = vector.load %arg2[%c0_1, %c0_2] : memref<1728x192xbf16, #tpu.memory_space<vmem>>, vector<1728x192xbf16>
    %cst = arith.constant dense<0.000000e+00> : vector<128x192xf32>
    %2 = tpu.matmul %0, %1, %cst {dimension_numbers = #tpu.dot_dimension_numbers<[1], [0], [0], [1], [0, 0, 1, 1], [], []>} : vector<128x1728xbf16>, vector<1728x192xbf16>, vector<128x192xf32> -> vector<128x192xf32>
    %c0_3 = arith.constant 0 : index
    %c0_4 = arith.constant 0 : index
    %3 = vector.load %arg3[%c0_3, %c0_4] : memref<1x192xf32, #tpu.memory_space<vmem>>, vector<1x192xf32>
    %4 = vector.broadcast %3 : vector<1x192xf32> to vector<128x192xf32>
    %5 = arith.addf %2, %4 : vector<128x192xf32>
    %cst_5 = arith.constant 0.000000e+00 : f32
    %6 = vector.broadcast %cst_5 : f32 to vector<128x192xf32>
    %7 = arith.maximumf %5, %6 : vector<128x192xf32>
    %c0_6 = arith.constant 0 : index
    %c0_7 = arith.constant 0 : index
    %8 = vector.load %arg4[%c0_6, %c0_7] : memref<128x192xf32, #tpu.memory_space<vmem>>, vector<128x192xf32>
    tpu.vector_store %arg4[%c0_6, %c0_7], %7 {strides = array<i32>} : memref<128x192xf32, #tpu.memory_space<vmem>>, vector<128x192xf32>,
    return
  }
  func.func @transform_0(%arg0: i32) -> (i32, i32) {
    %c0_i32 = arith.constant 0 : i32
    %c0_i32_0 = arith.constant 0 : i32
    return %arg0, %c0_i32 : i32, i32
  }
  func.func @transform_1(%arg0: i32) -> (i32, i32) {
    %c0_i32 = arith.constant 0 : i32
    %c0_i32_0 = arith.constant 0 : i32
    %c0_i32_1 = arith.constant 0 : i32
    return %c0_i32, %c0_i32_0 : i32, i32
  }
  func.func @transform_2(%arg0: i32) -> (i32, i32) {
    %c0_i32 = arith.constant 0 : i32
    %c0_i32_0 = arith.constant 0 : i32
    %c0_i32_1 = arith.constant 0 : i32
    return %c0_i32, %c0_i32_0 : i32, i32
  }
  func.func @transform_3(%arg0: i32) -> (i32, i32) {
    %c0_i32 = arith.constant 0 : i32
    %c0_i32_0 = arith.constant 0 : i32
    return %arg0, %c0_i32 : i32, i32
  }
}

module attributes {stable_mosaic.version = 11 : i64} {
  func.func @_conv_bn_relu_kernel(%arg0: i32, %arg1: memref<32x1728xbf16, #tpu.memory_space<vmem>>, %arg2: memref<1728x256xbf16, #tpu.memory_space<vmem>>, %arg3: memref<1x256xf32, #tpu.memory_space<vmem>>, %arg4: memref<32x256xf32, #tpu.memory_space<vmem>>) attributes {dimension_semantics = [#tpu.dimension_semantics<parallel>], iteration_bounds = array<i64: 2>, scalar_prefetch = 0 : i64, scratch_operands = 0 : i64, tpu.core_type = #tpu.core_type<tc>, window_params = [{transform_indices = @transform_0, window_bounds = array<i64: 32, 1728>}, {pipeline_mode = #tpu.pipeline_mode<synchronous>, transform_indices = @transform_1, window_bounds = array<i64: 1728, 256>}, {pipeline_mode = #tpu.pipeline_mode<synchronous>, transform_indices = @transform_2, window_bounds = array<i64: 1, 256>}, {transform_indices = @transform_3, window_bounds = array<i64: 32, 256>}]} {
    %c0 = arith.constant 0 : index
    %c0_0 = arith.constant 0 : index
    %0 = vector.load %arg1[%c0, %c0_0] : memref<32x1728xbf16, #tpu.memory_space<vmem>>, vector<32x1728xbf16>
    %c0_1 = arith.constant 0 : index
    %c0_2 = arith.constant 0 : index
    %1 = vector.load %arg2[%c0_1, %c0_2] : memref<1728x256xbf16, #tpu.memory_space<vmem>>, vector<1728x256xbf16>
    %cst = arith.constant dense<0.000000e+00> : vector<32x256xf32>
    %2 = tpu.matmul %0, %1, %cst {dimension_numbers = #tpu.dot_dimension_numbers<[1], [0], [0], [1], [0, 0, 1, 1], [], []>} : vector<32x1728xbf16>, vector<1728x256xbf16>, vector<32x256xf32> -> vector<32x256xf32>
    %c0_3 = arith.constant 0 : index
    %c0_4 = arith.constant 0 : index
    %3 = vector.load %arg3[%c0_3, %c0_4] : memref<1x256xf32, #tpu.memory_space<vmem>>, vector<1x256xf32>
    %4 = vector.broadcast %3 : vector<1x256xf32> to vector<32x256xf32>
    %5 = arith.addf %2, %4 : vector<32x256xf32>
    %cst_5 = arith.constant 0.000000e+00 : f32
    %6 = vector.broadcast %cst_5 : f32 to vector<32x256xf32>
    %7 = arith.maximumf %5, %6 : vector<32x256xf32>
    %c0_6 = arith.constant 0 : index
    %c0_7 = arith.constant 0 : index
    %8 = vector.load %arg4[%c0_6, %c0_7] : memref<32x256xf32, #tpu.memory_space<vmem>>, vector<32x256xf32>
    tpu.vector_store %arg4[%c0_6, %c0_7], %7 {strides = array<i32>} : memref<32x256xf32, #tpu.memory_space<vmem>>, vector<32x256xf32>,
    return
  }
  func.func @transform_0(%arg0: i32) -> (i32, i32) {
    %c0_i32 = arith.constant 0 : i32
    %c0_i32_0 = arith.constant 0 : i32
    return %arg0, %c0_i32 : i32, i32
  }
  func.func @transform_1(%arg0: i32) -> (i32, i32) {
    %c0_i32 = arith.constant 0 : i32
    %c0_i32_0 = arith.constant 0 : i32
    %c0_i32_1 = arith.constant 0 : i32
    return %c0_i32, %c0_i32_0 : i32, i32
  }
  func.func @transform_2(%arg0: i32) -> (i32, i32) {
    %c0_i32 = arith.constant 0 : i32
    %c0_i32_0 = arith.constant 0 : i32
    %c0_i32_1 = arith.constant 0 : i32
    return %c0_i32, %c0_i32_0 : i32, i32
  }
  func.func @transform_3(%arg0: i32) -> (i32, i32) {
    %c0_i32 = arith.constant 0 : i32
    %c0_i32_0 = arith.constant 0 : i32
    return %arg0, %c0_i32 : i32, i32
  }
}

</mosaic_0001>

<llo_original>
// kernel: _lambda_.5
$region0: #{_lambda_.5}
  #allocation0 [shape = 'u32[]', space=smem, size = 0x4, offset = 0x4, fixed_abs, tag = 'smem constant byte address 0x4 - core index']
  #allocation1 [shape = 'u32[144,128]{1,0:T(1,128)}', space=vmem, size = 0x12000, scoped, tag = 'internal scratch']
  %s0 = inlined_call_operand.vmem [shape: bf16[256,256], index: 0, kind: input, shape index: {}]
  %s1 = inlined_call_operand.vmem [shape: bf16[256,192], index: 1, kind: input, shape index: {}]
  %s2 = inlined_call_operand.vmem [shape: f32[1,192], index: 2, kind: input, shape index: {}]
  %s3 = inlined_call_operand.vmem [shape: f32[256,192], index: 3, kind: output, shape index: {}]
  %s4 = sld [smem:[#allocation0]]
  $region45: #{_lambda_.5} parent=0
    _
  %s6 = ssub.s32 1, %s4
  %s7 = scalar_select 0, %s6, %s4
  loop: start=0, step=1, limit=4
  $region2: #{_lambda_.5} parent=0 // loop_pre_header
    _
  $region3: #{_lambda_.5} parent=0 // loop_header
    %s9 = sphi 0, %s13
    %p10 = scmp.ge.s32.totalorder %s9, 4
    %s19 = sphi 0, %s21
    %s22 = sphi 0, %s19
    %s23 = sphi 0, %s22
    %s39 = sphi 0, %s23
    %s43 = sphi 0, %s43
    %s45 = sphi 0, %s43
    %s46 = sphi 0, %s45
    %s60 = sphi 0, %s46
    %s64 = sphi 0, %s64
    %s66 = sphi 0, %s64
    %s67 = sphi 0, %s66
    %s81 = sphi 0, %s67
    %s87 = sphi 0, %s89
    %s90 = sphi 0, %s87
    %s91 = sphi 0, %s90
    %s107 = sphi 0, %s91
  $region4: #{_lambda_.5} parent=0 // loop_header_branch
    %12 = sbr.rel (%p10) target = $region8
  $region5: #{_lambda_.5} parent=0 // loop_body
    %s14 = ssub.s32 %s9, 1
    %s15 = ssub.s32 %s9, 2
    %s16 = sadd.s32 %s9, 1
    %s17 = ssub.s32 %s9, %s16
    %p18 = scmp.eq.s32.totalorder %s17, 0
    %s20 = sadd.s32 %s19, 1
    %s21 = scalar_select %p18, %s19, %s20
    %p24 = pneg %p18
    %p25 = scmp.eq.s32.totalorder %s9, 1
    %p26 = por %p24, %p25
    %p27 = scmp.ne.s32.totalorder %s19, %s22
    %p28 = scmp.eq.s32.totalorder %s9, 0
    %p29 = por %p27, %p28
    %p30 = scmp.ne.s32.totalorder %s19, %s22
    %p31 = scmp.eq.s32.totalorder %s14, 1
    %p32 = por %p30, %p31
    %p33 = scmp.ne.s32.totalorder %s22, %s23
    %p34 = scmp.eq.s32.totalorder %s14, 0
    %p35 = por %p33, %p34
    %p36 = scmp.ne.s32.totalorder %s22, %s23
    %p37 = scmp.eq.s32.totalorder %s15, 1
    %p38 = por %p36, %p37
    %p40 = scmp.ne.s32.totalorder %s23, %s39
    %p41 = scmp.eq.s32.totalorder %s15, 0
    %p42 = por %p40, %p41
    %s44 = sadd.s32 %s43, 1
    %p47 = scmp.eq.s32.totalorder %s9, 1
    %p48 = scmp.ne.s32.totalorder %s43, %s45
    %p49 = scmp.eq.s32.totalorder %s9, 0
    %p50 = por %p48, %p49
    %p51 = scmp.ne.s32.totalorder %s43, %s45
    %p52 = scmp.eq.s32.totalorder %s14, 1
    %p53 = por %p51, %p52
    %p54 = scmp.ne.s32.totalorder %s45, %s46
    %p55 = scmp.eq.s32.totalorder %s14, 0
    %p56 = por %p54, %p55
    %p57 = scmp.ne.s32.totalorder %s45, %s46
    %p58 = scmp.eq.s32.totalorder %s15, 1
    %p59 = por %p57, %p58
    %p61 = scmp.ne.s32.totalorder %s46, %s60
    %p62 = scmp.eq.s32.totalorder %s15, 0
    %p63 = por %p61, %p62
    %s65 = sadd.s32 %s64, 1
    %p68 = scmp.eq.s32.totalorder %s9, 1
    %p69 = scmp.ne.s32.totalorder %s64, %s66
    %p70 = scmp.eq.s32.totalorder %s9, 0
    %p71 = por %p69, %p70
    %p72 = scmp.ne.s32.totalorder %s64, %s66
    %p73 = scmp.eq.s32.totalorder %s14, 1
    %p74 = por %p72, %p73
    %p75 = scmp.ne.s32.totalorder %s66, %s67
    %p76 = scmp.eq.s32.totalorder %s14, 0
    %p77 = por %p75, %p76
    %p78 = scmp.ne.s32.totalorder %s66, %s67
    %p79 = scmp.eq.s32.totalorder %s15, 1
    %p80 = por %p78, %p79
    %p82 = scmp.ne.s32.totalorder %s67, %s81
    %p83 = scmp.eq.s32.totalorder %s15, 0
    %p84 = por %p82, %p83
    %s85 = ssub.s32 %s9, %s16
    %p86 = scmp.eq.s32.totalorder %s85, 0
    %s88 = sadd.s32 %s87, 1
    %s89 = scalar_select %p86, %s87, %s88
    %p92 = pneg %p86
    %p93 = scmp.eq.s32.totalorder %s9, 1
    %p94 = por %p92, %p93
    %p95 = scmp.ne.s32.totalorder %s87, %s90
    %p96 = scmp.eq.s32.totalorder %s9, 0
    %p97 = por %p95, %p96
    %p98 = scmp.ne.s32.totalorder %s87, %s90
    %p99 = scmp.eq.s32.totalorder %s14, 1
    %p100 = por %p98, %p99
    %p101 = scmp.ne.s32.totalorder %s90, %s91
    %p102 = scmp.eq.s32.totalorder %s14, 0
    %p103 = por %p101, %p102
    %p104 = scmp.ne.s32.totalorder %s90, %s91
    %p105 = scmp.eq.s32.totalorder %s15, 1
    %p106 = por %p104, %p105
    %p108 = scmp.ne.s32.totalorder %s91, %s107
    %p109 = scmp.eq.s32.totalorder %s15, 0
    %p110 = por %p108, %p109
    %p111 = scmp.le.s32.totalorder 1, %s9
    %p112 = scmp.lt.s32.totalorder %s9, 3
    %p113 = pnand %p111, %p112
    %p114 = pneg %p113
    // Predicated region
    $region9: #{_lambda_.5} parent=5 // pred_check
      _
    $region10: #{_lambda_.5} parent=5 // pred_check_branch
      %116 = sbr.rel (%p113) target = $region12
    $region11: #{_lambda_.5} parent=5 // pred_region
      %s117 = ssub.s32 %s9, 1
      // Predicated region
      $region13: #{_lambda_.5} parent=11 // pred_check
        %p118 = pneg %p56
      $region14: #{_lambda_.5} parent=11 // pred_check_branch
        %120 = sbr.rel (%p118) target = $region16
      $region15: #{_lambda_.5} parent=11 // pred_region
        _
      $region16: #{_lambda_.5} parent=11 // pred_fallthru
        _
      // Predicated region
      $region17: #{_lambda_.5} parent=11 // pred_check
        %p121 = pneg %p77
      $region18: #{_lambda_.5} parent=11 // pred_check_branch
        %123 = sbr.rel (%p121) target = $region20
      $region19: #{_lambda_.5} parent=11 // pred_region
        _
      $region20: #{_lambda_.5} parent=11 // pred_fallthru
        _
    $region12: #{_lambda_.5} parent=5 // pred_fallthru
      _
    %p124 = scmp.lt.s32.totalorder %s9, 2
    // Predicated region
    $region21: #{_lambda_.5} parent=5 // pred_check
      %p125 = pneg %p124
    $region22: #{_lambda_.5} parent=5 // pred_check_branch
      %127 = sbr.rel (%p125) target = $region24
    $region23: #{_lambda_.5} parent=5 // pred_region
      // Predicated region
      $region25: #{_lambda_.5} parent=23 // pred_check
        %p128 = pneg %p29
      $region26: #{_lambda_.5} parent=23 // pred_check_branch
        %130 = sbr.rel (%p128) target = $region28
      $region27: #{_lambda_.5} parent=23 // pred_region
        %s131 = smul.u32 16, %s9
        %p132 = scmp.lt.s32.totalorder %s131, 31
        %s133 = scalar_select %p132, %s131, 31
        %s134 = smul.addr %s133, 2
        %s135 = smul.addr %s134, 4
        %s136 = scalar_lea.vmem %s0, %s135
        %s137 = smul.u32 16, %s9
      $region28: #{_lambda_.5} parent=23 // pred_fallthru
        _
    $region24: #{_lambda_.5} parent=5 // pred_fallthru
      _
    %p138 = scmp.le.s32.totalorder 1, %s9
    %p139 = scmp.lt.s32.totalorder %s9, 3
    %p140 = pnand %p138, %p139
    %p141 = pneg %p140
    // Predicated region
    $region29: #{_lambda_.5} parent=5 // pred_check
      _
    $region30: #{_lambda_.5} parent=5 // pred_check_branch
      %143 = sbr.rel (%p140) target = $region32
    $region31: #{_lambda_.5} parent=5 // pred_region
      %s144 = ssub.s32 %s9, 1
      %s145 = smul.u32 16, %s14
      %p146 = scmp.lt.s32.totalorder %s145, 31
      %s147 = scalar_select %p146, %s145, 31
      %s148 = smul.addr %s147, 2
      %s149 = smul.addr %s148, 4
      %s150 = scalar_lea.vmem %s0, %s149
      %p151 = pneg %p35
      %p152 = pneg %p32
      %p153 = pneg %p56
      %p154 = pneg %p53
      %p155 = pneg %p77
      %p156 = pneg %p74
      %p157 = pneg %p103
      %p158 = pneg %p100
      %s159 = smul.u32 16, %s14
      %p160 = scmp.lt.s32.totalorder %s159, 31
      %s161 = scalar_select %p160, %s159, 31
      %s162 = smul.addr %s161, 2
      %s163 = smul.addr %s162, 8
      %s164 = scalar_lea.vmem %s3, %s163
      %s165 = smul.u32 16, %s14
      %p166 = scmp.lt.s32.totalorder %s165, 31
      %s167 = scalar_select %p166, %s165, 31
      %s168 = smul.addr %s167, 2
      %s169 = smul.addr %s168, 4
      %s170 = scalar_lea.vmem %s0, %s169
      %s171 = smul.u32 16, %s14
      %s172 = smul.u32 16, %s14
      %p173 = scmp.lt.s32.totalorder %s172, 31
      %s174 = scalar_select %p173, %s172, 31
      %s175 = smul.addr %s174, 2
      %s176 = smul.addr %s175, 8
      %s177 = scalar_lea.vmem %s3, %s176
      %s178 = smul.u32 16, %s14
      %v179 = vld [vmem:[%s170] sm:$0xff]
      %v180 = vld [vmem:[%s170 + $0x8] sm:$0xff]
      %v181 = vld [vmem:[%s170 + $0x10] sm:$0xff]
      %v182 = vld [vmem:[%s170 + $0x18] sm:$0xff]
      %v183 = vld [vmem:[%s170 + $0x20] sm:$0xff]
      %v184 = vld [vmem:[%s170 + $0x28] sm:$0xff]
      %v185 = vld [vmem:[%s170 + $0x30] sm:$0xff]
      %v186 = vld [vmem:[%s170 + $0x38] sm:$0xff]
      %v187 = vld [vmem:[%s170 + $0x40] sm:$0xff]
      %v188 = vld [vmem:[%s170 + $0x48] sm:$0xff]
      %v189 = vld [vmem:[%s170 + $0x50] sm:$0xff]
      %v190 = vld [vmem:[%s170 + $0x58] sm:$0xff]
      %v191 = vld [vmem:[%s170 + $0x60] sm:$0xff]
      %v192 = vld [vmem:[%s170 + $0x68] sm:$0xff]
      %v193 = vld [vmem:[%s170 + $0x70] sm:$0xff]
      %v194 = vld [vmem:[%s170 + $0x78] sm:$0xff]
      %v195 = vld [vmem:[%s1] sm:$0xff]
      %v196 = vld [vmem:[%s1 + $0x8] sm:$0xff]
      %v197 = vld [vmem:[%s1 + $0x10] sm:$0xff]
      %v198 = vld [vmem:[%s1 + $0x18] sm:$0xff]
      %v199 = vld [vmem:[%s1 + $0x20] sm:$0xff]
      %v200 = vld [vmem:[%s1 + $0x28] sm:$0xff]
      %v201 = vld [vmem:[%s1 + $0x30] sm:$0xff]
      %v202 = vld [vmem:[%s1 + $0x38] sm:$0xff]
      %v203 = vld [vmem:[%s1 + $0x40] sm:$0xff]
      %v204 = vld [vmem:[%s1 + $0x48] sm:$0xff]
      %v205 = vld [vmem:[%s1 + $0x50] sm:$0xff]
      %v206 = vld [vmem:[%s1 + $0x58] sm:$0xff]
      %v207 = vld [vmem:[%s1 + $0x60] sm:$0xff]
      %v208 = vld [vmem:[%s1 + $0x68] sm:$0xff]
      %v209 = vld [vmem:[%s1 + $0x70] sm:$0xff]
      %v210 = vld [vmem:[%s1 + $0x78] sm:$0xff]
      %v211 = vld [vmem:[%s1 + $0x80] sm:$0xff]
      %v212 = vld [vmem:[%s1 + $0x88] sm:$0xff]
      %v213 = vld [vmem:[%s1 + $0x90] sm:$0xff]
      %v214 = vld [vmem:[%s1 + $0x98] sm:$0xff]
      %v215 = vld [vmem:[%s1 + $0xa0] sm:$0xff]
      %v216 = vld [vmem:[%s1 + $0xa8] sm:$0xff]
      %v217 = vld [vmem:[%s1 + $0xb0] sm:$0xff]
      %v218 = vld [vmem:[%s1 + $0xb8] sm:$0xff]
      %v219 = vld [vmem:[%s1 + $0xc0] sm:$0xff]
      %v220 = vld [vmem:[%s1 + $0xc8] sm:$0xff]
      %v221 = vld [vmem:[%s1 + $0xd0] sm:$0xff]
      %v222 = vld [vmem:[%s1 + $0xd8] sm:$0xff]
      %v223 = vld [vmem:[%s1 + $0xe0] sm:$0xff]
      %v224 = vld [vmem:[%s1 + $0xe8] sm:$0xff]
      %v225 = vld [vmem:[%s1 + $0xf0] sm:$0xff]
      %v226 = vld [vmem:[%s1 + $0xf8] sm:$0xff]
      %v227 = vld [vmem:[%s2] sm:$0x3]
      %v229 = vlaneseq
      %v230 = vshrl.u32 %v229, 7
      %v231 = vsub.s32 0, %v230
      %v232 = vrot.slane %v227, %v231
      %v233 = vlaneseq
      %v234 = vshrl.u32 %v233, 7
      %v235 = vsub.s32 1, %v234
      %v236 = vrot.slane %v227, %v235
      %v255 = vunpack.c.l.b16 %v179
      %v256 = vunpack.c.h.b16 %v179
      %v257 = vunpack.c.l.b16 %v180
      %v258 = vunpack.c.h.b16 %v180
      %v259 = vunpack.c.l.b16 %v181
      %v260 = vunpack.c.h.b16 %v181
      %v261 = vunpack.c.l.b16 %v182
      %v262 = vunpack.c.h.b16 %v182
      %v263 = vunpack.c.l.b16 %v183
      %v264 = vunpack.c.h.b16 %v183
      %v265 = vunpack.c.l.b16 %v184
      %v266 = vunpack.c.h.b16 %v184
      %v267 = vunpack.c.l.b16 %v185
      %v268 = vunpack.c.h.b16 %v185
      %v269 = vunpack.c.l.b16 %v186
      %v270 = vunpack.c.h.b16 %v186
      %v271 = vunpack.c.l.b16 %v187
      %v272 = vunpack.c.h.b16 %v187
      %v273 = vunpack.c.l.b16 %v188
      %v274 = vunpack.c.h.b16 %v188
      %v275 = vunpack.c.l.b16 %v189
      %v276 = vunpack.c.h.b16 %v189
      %v277 = vunpack.c.l.b16 %v190
      %v278 = vunpack.c.h.b16 %v190
      %v279 = vunpack.c.l.b16 %v191
      %v280 = vunpack.c.h.b16 %v191
      %v281 = vunpack.c.l.b16 %v192
      %v282 = vunpack.c.h.b16 %v192
      %v283 = vunpack.c.l.b16 %v193
      %v284 = vunpack.c.h.b16 %v193
      %v285 = vunpack.c.l.b16 %v194
      %v286 = vunpack.c.h.b16 %v194
      %v287 = vpack.c.b16 %v257, %v255
      %v288 = vpack.c.b16 %v258, %v256
      %v289 = vpack.c.b16 %v261, %v259
      %v290 = vpack.c.b16 %v262, %v260
      %v291 = vpack.c.b16 %v265, %v263
      %v292 = vpack.c.b16 %v266, %v264
      %v293 = vpack.c.b16 %v269, %v267
      %v294 = vpack.c.b16 %v270, %v268
      %v295 = vpack.c.b16 %v273, %v271
      %v296 = vpack.c.b16 %v274, %v272
      %v297 = vpack.c.b16 %v277, %v275
      %v298 = vpack.c.b16 %v278, %v276
      %v299 = vpack.c.b16 %v281, %v279
      %v300 = vpack.c.b16 %v282, %v280
      %v301 = vpack.c.b16 %v285, %v283
      %v302 = vpack.c.b16 %v286, %v284
      %v351 = vunpack.c.l.b16 %v195
      %v352 = vunpack.c.h.b16 %v195
      %v353 = vunpack.c.l.b16 %v196
      %v354 = vunpack.c.h.b16 %v196
      %v355 = vunpack.c.l.b16 %v197
      %v356 = vunpack.c.h.b16 %v197
      %v357 = vunpack.c.l.b16 %v198
      %v358 = vunpack.c.h.b16 %v198
      %v359 = vunpack.c.l.b16 %v199
      %v360 = vunpack.c.h.b16 %v199
      %v361 = vunpack.c.l.b16 %v200
      %v362 = vunpack.c.h.b16 %v200
      %v363 = vunpack.c.l.b16 %v201
      %v364 = vunpack.c.h.b16 %v201
      %v365 = vunpack.c.l.b16 %v202
      %v366 = vunpack.c.h.b16 %v202
      %v367 = vunpack.c.l.b16 %v203
      %v368 = vunpack.c.h.b16 %v203
      %v369 = vunpack.c.l.b16 %v204
      %v370 = vunpack.c.h.b16 %v204
      %v371 = vunpack.c.l.b16 %v205
      %v372 = vunpack.c.h.b16 %v205
      %v373 = vunpack.c.l.b16 %v206
      %v374 = vunpack.c.h.b16 %v206
      %v375 = vunpack.c.l.b16 %v207
      %v376 = vunpack.c.h.b16 %v207
      %v377 = vunpack.c.l.b16 %v208
      %v378 = vunpack.c.h.b16 %v208
      %v379 = vunpack.c.l.b16 %v209
      %v380 = vunpack.c.h.b16 %v209
      %v381 = vunpack.c.l.b16 %v210
      %v382 = vunpack.c.h.b16 %v210
      %v383 = vunpack.c.l.b16 %v211
      %v384 = vunpack.c.h.b16 %v211
      %v385 = vunpack.c.l.b16 %v212
      %v386 = vunpack.c.h.b16 %v212
      %v387 = vunpack.c.l.b16 %v213
      %v388 = vunpack.c.h.b16 %v213
      %v389 = vunpack.c.l.b16 %v214
      %v390 = vunpack.c.h.b16 %v214
      %v391 = vunpack.c.l.b16 %v215
      %v392 = vunpack.c.h.b16 %v215
      %v393 = vunpack.c.l.b16 %v216
      %v394 = vunpack.c.h.b16 %v216
      %v395 = vunpack.c.l.b16 %v217
      %v396 = vunpack.c.h.b16 %v217
      %v397 = vunpack.c.l.b16 %v218
      %v398 = vunpack.c.h.b16 %v218
      %v399 = vunpack.c.l.b16 %v219
      %v400 = vunpack.c.h.b16 %v219
      %v401 = vunpack.c.l.b16 %v220
      %v402 = vunpack.c.h.b16 %v220
      %v403 = vunpack.c.l.b16 %v221
      %v404 = vunpack.c.h.b16 %v221
      %v405 = vunpack.c.l.b16 %v222
      %v406 = vunpack.c.h.b16 %v222
      %v407 = vunpack.c.l.b16 %v223
      %v408 = vunpack.c.h.b16 %v223
      %v409 = vunpack.c.l.b16 %v224
      %v410 = vunpack.c.h.b16 %v224
      %v411 = vunpack.c.l.b16 %v225
      %v412 = vunpack.c.h.b16 %v225
      %v413 = vunpack.c.l.b16 %v226
      %v414 = vunpack.c.h.b16 %v226
      %v415 = vpack.c.b16 %v353, %v351
      %v416 = vpack.c.b16 %v354, %v352
      %v417 = vpack.c.b16 %v357, %v355
      %v418 = vpack.c.b16 %v358, %v356
      %v419 = vpack.c.b16 %v361, %v359
      %v420 = vpack.c.b16 %v362, %v360
      %v421 = vpack.c.b16 %v365, %v363
      %v422 = vpack.c.b16 %v366, %v364
      %v423 = vpack.c.b16 %v369, %v367
      %v424 = vpack.c.b16 %v370, %v368
      %v425 = vpack.c.b16 %v373, %v371
      %v426 = vpack.c.b16 %v374, %v372
      %v427 = vpack.c.b16 %v377, %v375
      %v428 = vpack.c.b16 %v378, %v376
      %v429 = vpack.c.b16 %v381, %v379
      %v430 = vpack.c.b16 %v382, %v380
      %v431 = vpack.c.b16 %v385, %v383
      %v432 = vpack.c.b16 %v386, %v384
      %v433 = vpack.c.b16 %v389, %v387
      %v434 = vpack.c.b16 %v390, %v388
      %v435 = vpack.c.b16 %v393, %v391
      %v436 = vpack.c.b16 %v394, %v392
      %v437 = vpack.c.b16 %v397, %v395
      %v438 = vpack.c.b16 %v398, %v396
      %v439 = vpack.c.b16 %v401, %v399
      %v440 = vpack.c.b16 %v402, %v400
      %v441 = vpack.c.b16 %v405, %v403
      %v442 = vpack.c.b16 %v406, %v404
      %v443 = vpack.c.b16 %v409, %v407
      %v444 = vpack.c.b16 %v410, %v408
      %v445 = vpack.c.b16 %v413, %v411
      %v446 = vpack.c.b16 %v414, %v412
      %479 = vmatprep.subr.bf16.mxu0 %v430
      %480 = vmatpush1.bf16.msra.mxu0 %v429
      %481 = vmatprep.subr.bf16.mxu0 %v428
      %482 = vmatpush1.bf16.msra.mxu0 %v427
      %483 = vmatprep.subr.bf16.mxu0 %v426
      %484 = vmatpush1.bf16.msra.mxu0 %v425
      %485 = vmatprep.subr.bf16.mxu0 %v424
      %486 = vmatpush1.bf16.msra.mxu0 %v423
      %487 = vmatprep.subr.bf16.mxu0 %v422
      %488 = vmatpush1.bf16.msra.mxu0 %v421
      %489 = vmatprep.subr.bf16.mxu0 %v420
      %490 = vmatpush1.bf16.msra.mxu0 %v419
      %491 = vmatprep.subr.bf16.mxu0 %v418
      %492 = vmatpush1.bf16.msra.mxu0 %v417
      %493 = vmatprep.subr.bf16.mxu0 %v416
      %494 = vmatpush1.bf16.msra.mxu0 %v415
      %495 = vmatprep.subr.bf16.mxu0 %v446
      %496 = vmatpush2.bf16.msra.mxu0 %v445
      %497 = vmatprep.subr.bf16.mxu0 %v444
      %498 = vmatpush2.bf16.msra.mxu0 %v443
      %499 = vmatprep.subr.bf16.mxu0 %v442
      %500 = vmatpush2.bf16.msra.mxu0 %v441
      %501 = vmatprep.subr.bf16.mxu0 %v440
      %502 = vmatpush2.bf16.msra.mxu0 %v439
      %503 = vmatprep.subr.bf16.mxu0 %v438
      %504 = vmatpush2.bf16.msra.mxu0 %v437
      %505 = vmatprep.subr.bf16.mxu0 %v436
      %506 = vmatpush2.bf16.msra.mxu0 %v435
      %507 = vmatprep.subr.bf16.mxu0 %v434
      %508 = vmatpush2.bf16.msra.mxu0 %v433
      %509 = vmatprep.subr.bf16.mxu0 %v432
      %510 = vmatpush2.bf16.msra.mxu0 %v431
      %511 = vmatprep.mubr.bf16.mxu0 %v288
      %512 = vmatmul.mubr.bf16.gmra.mxu0 %v287
      %v513 = vpop.f32.mrf.mxu0
      %v514 = vadd.f32 %v232, %v513
      %v515 = vpop.f32.mrf.mxu0
      %v516 = vadd.f32 %v236, %v515
      %v517 = vpop.f32.mrf.mxu0
      %v518 = vadd.f32 %v232, %v517
      %v519 = vpop.f32.mrf.mxu0
      %v520 = vadd.f32 %v236, %v519
      %521 = vmatprep.mubr.bf16.mxu0 %v290
      %522 = vmatmul.mubr.bf16.gmra.mxu0 %v289
      %v523 = vpop.f32.mrf.mxu0
      %v524 = vadd.f32 %v232, %v523
      %v525 = vpop.f32.mrf.mxu0
      %v526 = vadd.f32 %v236, %v525
      %v527 = vpop.f32.mrf.mxu0
      %v528 = vadd.f32 %v232, %v527
      %v529 = vpop.f32.mrf.mxu0
      %v530 = vadd.f32 %v236, %v529
      %531 = vmatprep.mubr.bf16.mxu0 %v292
      %532 = vmatmul.mubr.bf16.gmra.mxu0 %v291
      %v533 = vpop.f32.mrf.mxu0
      %v534 = vadd.f32 %v232, %v533
      %v535 = vpop.f32.mrf.mxu0
      %v536 = vadd.f32 %v236, %v535
      %v537 = vpop.f32.mrf.mxu0
      %v538 = vadd.f32 %v232, %v537
      %v539 = vpop.f32.mrf.mxu0
      %v540 = vadd.f32 %v236, %v539
      %541 = vmatprep.mubr.bf16.mxu0 %v294
      %542 = vmatmul.mubr.bf16.gmra.mxu0 %v293
      %v543 = vpop.f32.mrf.mxu0
      %v544 = vadd.f32 %v232, %v543
      %v545 = vpop.f32.mrf.mxu0
      %v546 = vadd.f32 %v236, %v545
      %v547 = vpop.f32.mrf.mxu0
      %v548 = vadd.f32 %v232, %v547
      %v549 = vpop.f32.mrf.mxu0
      %v550 = vadd.f32 %v236, %v549
      %551 = vmatprep.mubr.bf16.mxu0 %v296
      %552 = vmatmul.mubr.bf16.gmra.mxu0 %v295
      %v553 = vpop.f32.mrf.mxu0
      %v554 = vadd.f32 %v232, %v553
      %v555 = vpop.f32.mrf.mxu0
      %v556 = vadd.f32 %v236, %v555
      %v557 = vpop.f32.mrf.mxu0
      %v558 = vadd.f32 %v232, %v557
      %v559 = vpop.f32.mrf.mxu0
      %v560 = vadd.f32 %v236, %v559
      %561 = vmatprep.mubr.bf16.mxu0 %v298
      %562 = vmatmul.mubr.bf16.gmra.mxu0 %v297
      %v563 = vpop.f32.mrf.mxu0
      %v564 = vadd.f32 %v232, %v563
      %v565 = vpop.f32.mrf.mxu0
      %v566 = vadd.f32 %v236, %v565
      %v567 = vpop.f32.mrf.mxu0
      %v568 = vadd.f32 %v232, %v567
      %v569 = vpop.f32.mrf.mxu0
      %v570 = vadd.f32 %v236, %v569
      %571 = vmatprep.mubr.bf16.mxu0 %v300
      %572 = vmatmul.mubr.bf16.gmra.mxu0 %v299
      %v573 = vpop.f32.mrf.mxu0
      %v574 = vadd.f32 %v232, %v573
      %v575 = vpop.f32.mrf.mxu0
      %v576 = vadd.f32 %v236, %v575
      %v577 = vpop.f32.mrf.mxu0
      %v578 = vadd.f32 %v232, %v577
      %v579 = vpop.f32.mrf.mxu0
      %v580 = vadd.f32 %v236, %v579
      %581 = vmatprep.mubr.bf16.mxu0 %v302
      %582 = vmatmul.mubr.bf16.gmra.mxu0 %v301
      %v583 = vpop.f32.mrf.mxu0
      %v584 = vadd.f32 %v232, %v583
      %v585 = vpop.f32.mrf.mxu0
      %v586 = vadd.f32 %v236, %v585
      %v587 = vpop.f32.mrf.mxu0
      %v588 = vadd.f32 %v232, %v587
      %v589 = vpop.f32.mrf.mxu0
      %v590 = vadd.f32 %v236, %v589
      %591 = vdwg.mxu0
      %v592 = vmax.f32 %v514, 0.0
      %v593 = vmax.f32 %v516, 0.0
      %v594 = vmax.f32 %v518, 0.0
      %v595 = vmax.f32 %v520, 0.0
      %v596 = vmax.f32 %v524, 0.0
      %v597 = vmax.f32 %v526, 0.0
      %v598 = vmax.f32 %v528, 0.0
      %v599 = vmax.f32 %v530, 0.0
      %v600 = vmax.f32 %v534, 0.0
      %v601 = vmax.f32 %v536, 0.0
      %v602 = vmax.f32 %v538, 0.0
      %v603 = vmax.f32 %v540, 0.0
      %v604 = vmax.f32 %v544, 0.0
      %v605 = vmax.f32 %v546, 0.0
      %v606 = vmax.f32 %v548, 0.0
      %v607 = vmax.f32 %v550, 0.0
      %v608 = vmax.f32 %v554, 0.0
      %v609 = vmax.f32 %v556, 0.0
      %v610 = vmax.f32 %v558, 0.0
      %v611 = vmax.f32 %v560, 0.0
      %v612 = vmax.f32 %v564, 0.0
      %v613 = vmax.f32 %v566, 0.0
      %v614 = vmax.f32 %v568, 0.0
      %v615 = vmax.f32 %v570, 0.0
      %v616 = vmax.f32 %v574, 0.0
      %v617 = vmax.f32 %v576, 0.0
      %v618 = vmax.f32 %v578, 0.0
      %v619 = vmax.f32 %v580, 0.0
      %v620 = vmax.f32 %v584, 0.0
      %v621 = vmax.f32 %v586, 0.0
      %v622 = vmax.f32 %v588, 0.0
      %v623 = vmax.f32 %v590, 0.0
      %624 = vst [vmem:[%s177] sm:$0xff] %v592
      %vm625 = vcmask 523264
      %626 = vst.msk [vmem:[%s177 + $0x8] sm:$0xff] %vm625, %v593
      %627 = vst [vmem:[%s177 + $0x10] sm:$0xff] %v594
      %628 = vst.msk [vmem:[%s177 + $0x18] sm:$0xff] %vm625, %v595
      %629 = vst [vmem:[%s177 + $0x20] sm:$0xff] %v596
      %630 = vst.msk [vmem:[%s177 + $0x28] sm:$0xff] %vm625, %v597
      %631 = vst [vmem:[%s177 + $0x30] sm:$0xff] %v598
      %632 = vst.msk [vmem:[%s177 + $0x38] sm:$0xff] %vm625, %v599
      %633 = vst [vmem:[%s177 + $0x40] sm:$0xff] %v600
      %634 = vst.msk [vmem:[%s177 + $0x48] sm:$0xff] %vm625, %v601
      %635 = vst [vmem:[%s177 + $0x50] sm:$0xff] %v602
      %636 = vst.msk [vmem:[%s177 + $0x58] sm:$0xff] %vm625, %v603
      %637 = vst [vmem:[%s177 + $0x60] sm:$0xff] %v604
      %638 = vst.msk [vmem:[%s177 + $0x68] sm:$0xff] %vm625, %v605
      %639 = vst [vmem:[%s177 + $0x70] sm:$0xff] %v606
      %640 = vst.msk [vmem:[%s177 + $0x78] sm:$0xff] %vm625, %v607
      %641 = vst [vmem:[%s177 + $0x80] sm:$0xff] %v608
      %642 = vst.msk [vmem:[%s177 + $0x88] sm:$0xff] %vm625, %v609
      %643 = vst [vmem:[%s177 + $0x90] sm:$0xff] %v610
      %644 = vst.msk [vmem:[%s177 + $0x98] sm:$0xff] %vm625, %v611
      %645 = vst [vmem:[%s177 + $0xa0] sm:$0xff] %v612
      %646 = vst.msk [vmem:[%s177 + $0xa8] sm:$0xff] %vm625, %v613
      %647 = vst [vmem:[%s177 + $0xb0] sm:$0xff] %v614
      %648 = vst.msk [vmem:[%s177 + $0xb8] sm:$0xff] %vm625, %v615
      %649 = vst [vmem:[%s177 + $0xc0] sm:$0xff] %v616
      %650 = vst.msk [vmem:[%s177 + $0xc8] sm:$0xff] %vm625, %v617
      %651 = vst [vmem:[%s177 + $0xd0] sm:$0xff] %v618
      %652 = vst.msk [vmem:[%s177 + $0xd8] sm:$0xff] %vm625, %v619
      %653 = vst [vmem:[%s177 + $0xe0] sm:$0xff] %v620
      %654 = vst.msk [vmem:[%s177 + $0xe8] sm:$0xff] %vm625, %v621
      %655 = vst [vmem:[%s177 + $0xf0] sm:$0xff] %v622
      %656 = vst.msk [vmem:[%s177 + $0xf8] sm:$0xff] %vm625, %v623
      %s657 = smul.u32 16, %s14
      %p658 = scmp.lt.s32.totalorder %s657, 31
      %s659 = scalar_select %p658, %s657, 31
      %s660 = smul.addr %s659, 2
      %s661 = smul.addr %s660, 8
      %s662 = scalar_lea.vmem %s3, %s661
      // Predicated region
      $region33: #{_lambda_.5} parent=31 // pred_check
        %p663 = pneg %p100
      $region34: #{_lambda_.5} parent=31 // pred_check_branch
        %665 = sbr.rel (%p663) target = $region36
      $region35: #{_lambda_.5} parent=31 // pred_region
        %s666 = smul.u32 16, %s14
      $region36: #{_lambda_.5} parent=31 // pred_fallthru
        _
    $region32: #{_lambda_.5} parent=5 // pred_fallthru
      _
    %p667 = scmp.le.s32.totalorder 2, %s9
    // Predicated region
    $region37: #{_lambda_.5} parent=5 // pred_check
      %p668 = pneg %p667
    $region38: #{_lambda_.5} parent=5 // pred_check_branch
      %670 = sbr.rel (%p668) target = $region40
    $region39: #{_lambda_.5} parent=5 // pred_region
      %s671 = ssub.s32 %s9, 2
      // Predicated region
      $region41: #{_lambda_.5} parent=39 // pred_check
        %p672 = pneg %p106
      $region42: #{_lambda_.5} parent=39 // pred_check_branch
        %674 = sbr.rel (%p672) target = $region44
      $region43: #{_lambda_.5} parent=39 // pred_region
        %s675 = smul.u32 16, %s15
        %p676 = scmp.lt.s32.totalorder %s675, 31
        %s677 = scalar_select %p676, %s675, 31
        %s678 = smul.addr %s677, 2
        %s679 = smul.addr %s678, 8
        %s680 = scalar_lea.vmem %s3, %s679
      $region44: #{_lambda_.5} parent=39 // pred_fallthru
        _
    $region40: #{_lambda_.5} parent=5 // pred_fallthru
      _
  $region6: #{_lambda_.5} parent=0 // loop_footer
    %s13 = sadd.s32 1, %s9
  $region7: #{_lambda_.5} parent=0 // loop_footer_branch
    %8 = sbr.rel target = $region3
  $region8: #{_lambda_.5} parent=0 // loop_exit
    _

// kernel: _lambda_.4
$region0: #{_lambda_.4}
  #allocation0 [shape = 'u32[]', space=smem, size = 0x4, offset = 0x4, fixed_abs, tag = 'smem constant byte address 0x4 - core index']
  #allocation1 [shape = 'u32[144,128]{1,0:T(1,128)}', space=vmem, size = 0x12000, scoped, tag = 'internal scratch']
  %s0 = inlined_call_operand.vmem [shape: bf16[64,2304], index: 0, kind: input, shape index: {}]
  %s1 = inlined_call_operand.vmem [shape: bf16[2304,384], index: 1, kind: input, shape index: {}]
  %s2 = inlined_call_operand.vmem [shape: f32[1,384], index: 2, kind: input, shape index: {}]
  %s3 = inlined_call_operand.vmem [shape: f32[64,384], index: 3, kind: output, shape index: {0}]
  %s4 = inlined_call_operand.vmem [shape: f32[64,256], index: 4, kind: output, shape index: {1}]
  %5 = xla_tuple %s3, %s4
  %s6 = sld [smem:[#allocation0]]
  $region53: #{_lambda_.4} parent=0
    _
  %s8 = ssub.s32 1, %s6
  %s9 = scalar_select 0, %s8, %s6
  loop: start=0, step=1, limit=4
  $region2: #{_lambda_.4} parent=0 // loop_pre_header
    _
  $region3: #{_lambda_.4} parent=0 // loop_header
    %s11 = sphi 0, %s15
    %p12 = scmp.ge.s32.totalorder %s11, 4
    %s21 = sphi 0, %s23
    %s24 = sphi 0, %s21
    %s25 = sphi 0, %s24
    %s41 = sphi 0, %s25
    %s45 = sphi 0, %s45
    %s47 = sphi 0, %s45
    %s48 = sphi 0, %s47
    %s62 = sphi 0, %s48
    %s66 = sphi 0, %s66
    %s68 = sphi 0, %s66
    %s69 = sphi 0, %s68
    %s83 = sphi 0, %s69
    %s89 = sphi 0, %s91
    %s92 = sphi 0, %s89
    %s93 = sphi 0, %s92
    %s109 = sphi 0, %s93
    %s115 = sphi 0, %s117
    %s118 = sphi 0, %s115
    %s119 = sphi 0, %s118
    %s135 = sphi 0, %s119
  $region4: #{_lambda_.4} parent=0 // loop_header_branch
    %14 = sbr.rel (%p12) target = $region8
  $region5: #{_lambda_.4} parent=0 // loop_body
    %s16 = ssub.s32 %s11, 1
    %s17 = ssub.s32 %s11, 2
    %s18 = sadd.s32 %s11, 1
    %s19 = ssub.s32 %s11, %s18
    %p20 = scmp.eq.s32.totalorder %s19, 0
    %s22 = sadd.s32 %s21, 1
    %s23 = scalar_select %p20, %s21, %s22
    %p26 = pneg %p20
    %p27 = scmp.eq.s32.totalorder %s11, 1
    %p28 = por %p26, %p27
    %p29 = scmp.ne.s32.totalorder %s21, %s24
    %p30 = scmp.eq.s32.totalorder %s11, 0
    %p31 = por %p29, %p30
    %p32 = scmp.ne.s32.totalorder %s21, %s24
    %p33 = scmp.eq.s32.totalorder %s16, 1
    %p34 = por %p32, %p33
    %p35 = scmp.ne.s32.totalorder %s24, %s25
    %p36 = scmp.eq.s32.totalorder %s16, 0
    %p37 = por %p35, %p36
    %p38 = scmp.ne.s32.totalorder %s24, %s25
    %p39 = scmp.eq.s32.totalorder %s17, 1
    %p40 = por %p38, %p39
    %p42 = scmp.ne.s32.totalorder %s25, %s41
    %p43 = scmp.eq.s32.totalorder %s17, 0
    %p44 = por %p42, %p43
    %s46 = sadd.s32 %s45, 1
    %p49 = scmp.eq.s32.totalorder %s11, 1
    %p50 = scmp.ne.s32.totalorder %s45, %s47
    %p51 = scmp.eq.s32.totalorder %s11, 0
    %p52 = por %p50, %p51
    %p53 = scmp.ne.s32.totalorder %s45, %s47
    %p54 = scmp.eq.s32.totalorder %s16, 1
    %p55 = por %p53, %p54
    %p56 = scmp.ne.s32.totalorder %s47, %s48
    %p57 = scmp.eq.s32.totalorder %s16, 0
    %p58 = por %p56, %p57
    %p59 = scmp.ne.s32.totalorder %s47, %s48
    %p60 = scmp.eq.s32.totalorder %s17, 1
    %p61 = por %p59, %p60
    %p63 = scmp.ne.s32.totalorder %s48, %s62
    %p64 = scmp.eq.s32.totalorder %s17, 0
    %p65 = por %p63, %p64
    %s67 = sadd.s32 %s66, 1
    %p70 = scmp.eq.s32.totalorder %s11, 1
    %p71 = scmp.ne.s32.totalorder %s66, %s68
    %p72 = scmp.eq.s32.totalorder %s11, 0
    %p73 = por %p71, %p72
    %p74 = scmp.ne.s32.totalorder %s66, %s68
    %p75 = scmp.eq.s32.totalorder %s16, 1
    %p76 = por %p74, %p75
    %p77 = scmp.ne.s32.totalorder %s68, %s69
    %p78 = scmp.eq.s32.totalorder %s16, 0
    %p79 = por %p77, %p78
    %p80 = scmp.ne.s32.totalorder %s68, %s69
    %p81 = scmp.eq.s32.totalorder %s17, 1
    %p82 = por %p80, %p81
    %p84 = scmp.ne.s32.totalorder %s69, %s83
    %p85 = scmp.eq.s32.totalorder %s17, 0
    %p86 = por %p84, %p85
    %s87 = ssub.s32 %s11, %s18
    %p88 = scmp.eq.s32.totalorder %s87, 0
    %s90 = sadd.s32 %s89, 1
    %s91 = scalar_select %p88, %s89, %s90
    %p94 = pneg %p88
    %p95 = scmp.eq.s32.totalorder %s11, 1
    %p96 = por %p94, %p95
    %p97 = scmp.ne.s32.totalorder %s89, %s92
    %p98 = scmp.eq.s32.totalorder %s11, 0
    %p99 = por %p97, %p98
    %p100 = scmp.ne.s32.totalorder %s89, %s92
    %p101 = scmp.eq.s32.totalorder %s16, 1
    %p102 = por %p100, %p101
    %p103 = scmp.ne.s32.totalorder %s92, %s93
    %p104 = scmp.eq.s32.totalorder %s16, 0
    %p105 = por %p103, %p104
    %p106 = scmp.ne.s32.totalorder %s92, %s93
    %p107 = scmp.eq.s32.totalorder %s17, 1
    %p108 = por %p106, %p107
    %p110 = scmp.ne.s32.totalorder %s93, %s109
    %p111 = scmp.eq.s32.totalorder %s17, 0
    %p112 = por %p110, %p111
    %s113 = ssub.s32 %s11, %s18
    %p114 = scmp.eq.s32.totalorder %s113, 0
    %s116 = sadd.s32 %s115, 1
    %s117 = scalar_select %p114, %s115, %s116
    %p120 = pneg %p114
    %p121 = scmp.eq.s32.totalorder %s11, 1
    %p122 = por %p120, %p121
    %p123 = scmp.ne.s32.totalorder %s115, %s118
    %p124 = scmp.eq.s32.totalorder %s11, 0
    %p125 = por %p123, %p124
    %p126 = scmp.ne.s32.totalorder %s115, %s118
    %p127 = scmp.eq.s32.totalorder %s16, 1
    %p128 = por %p126, %p127
    %p129 = scmp.ne.s32.totalorder %s118, %s119
    %p130 = scmp.eq.s32.totalorder %s16, 0
    %p131 = por %p129, %p130
    %p132 = scmp.ne.s32.totalorder %s118, %s119
    %p133 = scmp.eq.s32.totalorder %s17, 1
    %p134 = por %p132, %p133
    %p136 = scmp.ne.s32.totalorder %s119, %s135
    %p137 = scmp.eq.s32.totalorder %s17, 0
    %p138 = por %p136, %p137
    %p139 = scmp.le.s32.totalorder 1, %s11
    %p140 = scmp.lt.s32.totalorder %s11, 3
    %p141 = pnand %p139, %p140
    %p142 = pneg %p141
    // Predicated region
    $region9: #{_lambda_.4} parent=5 // pred_check
      _
    $region10: #{_lambda_.4} parent=5 // pred_check_branch
      %144 = sbr.rel (%p141) target = $region12
    $region11: #{_lambda_.4} parent=5 // pred_region
      %s145 = ssub.s32 %s11, 1
      // Predicated region
      $region13: #{_lambda_.4} parent=11 // pred_check
        %p146 = pneg %p58
      $region14: #{_lambda_.4} parent=11 // pred_check_branch
        %148 = sbr.rel (%p146) target = $region16
      $region15: #{_lambda_.4} parent=11 // pred_region
        _
      $region16: #{_lambda_.4} parent=11 // pred_fallthru
        _
      // Predicated region
      $region17: #{_lambda_.4} parent=11 // pred_check
        %p149 = pneg %p79
      $region18: #{_lambda_.4} parent=11 // pred_check_branch
        %151 = sbr.rel (%p149) target = $region20
      $region19: #{_lambda_.4} parent=11 // pred_region
        _
      $region20: #{_lambda_.4} parent=11 // pred_fallthru
        _
    $region12: #{_lambda_.4} parent=5 // pred_fallthru
      _
    %p152 = scmp.lt.s32.totalorder %s11, 2
    // Predicated region
    $region21: #{_lambda_.4} parent=5 // pred_check
      %p153 = pneg %p152
    $region22: #{_lambda_.4} parent=5 // pred_check_branch
      %155 = sbr.rel (%p153) target = $region24
    $region23: #{_lambda_.4} parent=5 // pred_region
      // Predicated region
      $region25: #{_lambda_.4} parent=23 // pred_check
        %p156 = pneg %p31
      $region26: #{_lambda_.4} parent=23 // pred_check_branch
        %158 = sbr.rel (%p156) target = $region28
      $region27: #{_lambda_.4} parent=23 // pred_region
        %s159 = smul.u32 4, %s11
        %p160 = scmp.lt.s32.totalorder %s159, 7
        %s161 = scalar_select %p160, %s159, 7
        %s162 = smul.addr %s161, 18
        %s163 = smul.addr %s162, 4
        %s164 = scalar_lea.vmem %s0, %s163
        %s165 = smul.u32 4, %s11
      $region28: #{_lambda_.4} parent=23 // pred_fallthru
        _
    $region24: #{_lambda_.4} parent=5 // pred_fallthru
      _
    %p166 = scmp.le.s32.totalorder 1, %s11
    %p167 = scmp.lt.s32.totalorder %s11, 3
    %p168 = pnand %p166, %p167
    %p169 = pneg %p168
    // Predicated region
    $region29: #{_lambda_.4} parent=5 // pred_check
      _
    $region30: #{_lambda_.4} parent=5 // pred_check_branch
      %171 = sbr.rel (%p168) target = $region32
    $region31: #{_lambda_.4} parent=5 // pred_region
      %s172 = ssub.s32 %s11, 1
      %s173 = smul.u32 4, %s16
      %p174 = scmp.lt.s32.totalorder %s173, 7
      %s175 = scalar_select %p174, %s173, 7
      %s176 = smul.addr %s175, 18
      %s177 = smul.addr %s176, 4
      %s178 = scalar_lea.vmem %s0, %s177
      %p179 = pneg %p37
      %p180 = pneg %p34
      %p181 = pneg %p58
      %p182 = pneg %p55
      %p183 = pneg %p79
      %p184 = pneg %p76
      %p185 = pneg %p105
      %p186 = pneg %p102
      %s187 = smul.u32 4, %s16
      %p188 = scmp.lt.s32.totalorder %s187, 7
      %s189 = scalar_select %p188, %s187, 7
      %s190 = smul.addr %s189, 3
      %s191 = smul.addr %s190, 8
      %s192 = scalar_lea.vmem %s3, %s191
      %p193 = pneg %p131
      %p194 = pneg %p128
      %s195 = smul.u32 4, %s16
      %p196 = scmp.lt.s32.totalorder %s195, 7
      %s197 = scalar_select %p196, %s195, 7
      %s198 = smul.addr %s197, 2
      %s199 = smul.addr %s198, 8
      %s200 = scalar_lea.vmem %s4, %s199
      %s201 = smul.u32 4, %s16
      %p202 = scmp.lt.s32.totalorder %s201, 7
      %s203 = scalar_select %p202, %s201, 7
      %s204 = smul.addr %s203, 18
      %s205 = smul.addr %s204, 4
      %s206 = scalar_lea.vmem %s0, %s205
      %s207 = smul.u32 4, %s16
      %s208 = smul.u32 4, %s16
      %p209 = scmp.lt.s32.totalorder %s208, 7
      %s210 = scalar_select %p209, %s208, 7
      %s211 = smul.addr %s210, 3
      %s212 = smul.addr %s211, 8
      %s213 = scalar_lea.vmem %s3, %s212
      %s214 = smul.u32 4, %s16
      %s215 = smul.u32 4, %s16
      %p216 = scmp.lt.s32.totalorder %s215, 7
      %s217 = scalar_select %p216, %s215, 7
      %s218 = smul.addr %s217, 2
      %s219 = smul.addr %s218, 8
      %s220 = scalar_lea.vmem %s4, %s219
      %s221 = smul.u32 4, %s16
      %v223 = vld [vmem:[%s206] sm:$0xff]
      %v224 = vld [vmem:[%s206 + $0x8] sm:$0xff]
      %v225 = vld [vmem:[%s206 + $0x10] sm:$0xff]
      %v226 = vld [vmem:[%s206 + $0x18] sm:$0xff]
      %v227 = vld [vmem:[%s206 + $0x20] sm:$0xff]
      %v228 = vld [vmem:[%s206 + $0x28] sm:$0xff]
      %v229 = vld [vmem:[%s206 + $0x30] sm:$0xff]
      %v230 = vld [vmem:[%s206 + $0x38] sm:$0xff]
      %v231 = vld [vmem:[%s206 + $0x40] sm:$0xff]
      %v232 = vld [vmem:[%s206 + $0x48] sm:$0xff]
      %v233 = vld [vmem:[%s206 + $0x50] sm:$0xff]
      %v234 = vld [vmem:[%s206 + $0x58] sm:$0xff]
      %v235 = vld [vmem:[%s206 + $0x60] sm:$0xff]
      %v236 = vld [vmem:[%s206 + $0x68] sm:$0xff]
      %v237 = vld [vmem:[%s206 + $0x70] sm:$0xff]
      %v238 = vld [vmem:[%s206 + $0x78] sm:$0xff]
      %v239 = vld [vmem:[%s206 + $0x80] sm:$0xff]
      %v240 = vld [vmem:[%s206 + $0x88] sm:$0xff]
      %v241 = vld [vmem:[%s206 + $0x90] sm:$0xff]
      %v242 = vld [vmem:[%s206 + $0x98] sm:$0xff]
      %v243 = vld [vmem:[%s206 + $0xa0] sm:$0xff]
      %v244 = vld [vmem:[%s206 + $0xa8] sm:$0xff]
      %v245 = vld [vmem:[%s206 + $0xb0] sm:$0xff]
      %v246 = vld [vmem:[%s206 + $0xb8] sm:$0xff]
      %v247 = vld [vmem:[%s206 + $0xc0] sm:$0xff]
      %v248 = vld [vmem:[%s206 + $0xc8] sm:$0xff]
      %v249 = vld [vmem:[%s206 + $0xd0] sm:$0xff]
      %v250 = vld [vmem:[%s206 + $0xd8] sm:$0xff]
      %v251 = vld [vmem:[%s206 + $0xe0] sm:$0xff]
      %v252 = vld [vmem:[%s206 + $0xe8] sm:$0xff]
      %v253 = vld [vmem:[%s206 + $0xf0] sm:$0xff]
      %v254 = vld [vmem:[%s206 + $0xf8] sm:$0xff]
      %v255 = vld [vmem:[%s206 + $0x100] sm:$0xff]
      %v256 = vld [vmem:[%s206 + $0x108] sm:$0xff]
      %v257 = vld [vmem:[%s206 + $0x110] sm:$0xff]
      %v258 = vld [vmem:[%s206 + $0x118] sm:$0xff]
      %v259 = vld [vmem:[%s1] sm:$0xff]
      %v260 = vld [vmem:[%s1 + $0x8] sm:$0xf]
      %v261 = vld [vmem:[%s1 + $0xc] sm:$0xff]
      %v262 = vld [vmem:[%s1 + $0x14] sm:$0xf]
      %v263 = vld [vmem:[%s1 + $0x18] sm:$0xff]
      %v264 = vld [vmem:[%s1 + $0x20] sm:$0xf]
      %v265 = vld [vmem:[%s1 + $0x24] sm:$0xff]
      %v266 = vld [vmem:[%s1 + $0x2c] sm:$0xf]
      %v267 = vld [vmem:[%s1 + $0x30] sm:$0xff]
      %v268 = vld [vmem:[%s1 + $0x38] sm:$0xf]
      %v269 = vld [vmem:[%s1 + $0x3c] sm:$0xff]
      %v270 = vld [vmem:[%s1 + $0x44] sm:$0xf]
      %v271 = vld [vmem:[%s1 + $0x48] sm:$0xff]
      %v272 = vld [vmem:[%s1 + $0x50] sm:$0xf]
      %v273 = vld [vmem:[%s1 + $0x54] sm:$0xff]
      %v274 = vld [vmem:[%s1 + $0x5c] sm:$0xf]
      %v275 = vld [vmem:[%s1 + $0x60] sm:$0xff]
      %v276 = vld [vmem:[%s1 + $0x68] sm:$0xf]
      %v277 = vld [vmem:[%s1 + $0x6c] sm:$0xff]
      %v278 = vld [vmem:[%s1 + $0x74] sm:$0xf]
      %v279 = vld [vmem:[%s1 + $0x78] sm:$0xff]
      %v280 = vld [vmem:[%s1 + $0x80] sm:$0xf]
      %v281 = vld [vmem:[%s1 + $0x84] sm:$0xff]
      %v282 = vld [vmem:[%s1 + $0x8c] sm:$0xf]
      %v283 = vld [vmem:[%s1 + $0x90] sm:$0xff]
      %v284 = vld [vmem:[%s1 + $0x98] sm:$0xf]
      %v285 = vld [vmem:[%s1 + $0x9c] sm:$0xff]
      %v286 = vld [vmem:[%s1 + $0xa4] sm:$0xf]
      %v287 = vld [vmem:[%s1 + $0xa8] sm:$0xff]
      %v288 = vld [vmem:[%s1 + $0xb0] sm:$0xf]
      %v289 = vld [vmem:[%s1 + $0xb4] sm:$0xff]
      %v290 = vld [vmem:[%s1 + $0xbc] sm:$0xf]
      %v291 = vld [vmem:[%s1 + $0xc0] sm:$0xff]
      %v292 = vld [vmem:[%s1 + $0xc8] sm:$0xf]
      %v293 = vld [vmem:[%s1 + $0xcc] sm:$0xff]
      %v294 = vld [vmem:[%s1 + $0xd4] sm:$0xf]
      %v295 = vld [vmem:[%s1 + $0xd8] sm:$0xff]
      %v296 = vld [vmem:[%s1 + $0xe0] sm:$0xf]
      %v297 = vld [vmem:[%s1 + $0xe4] sm:$0xff]
      %v298 = vld [vmem:[%s1 + $0xec] sm:$0xf]
      %v299 = vld [vmem:[%s1 + $0xf0] sm:$0xff]
      %v300 = vld [vmem:[%s1 + $0xf8] sm:$0xf]
      %v301 = vld [vmem:[%s1 + $0xfc] sm:$0xff]
      %v302 = vld [vmem:[%s1 + $0x104] sm:$0xf]
      %v303 = vld [vmem:[%s1 + $0x108] sm:$0xff]
      %v304 = vld [vmem:[%s1 + $0x110] sm:$0xf]
      %v305 = vld [vmem:[%s1 + $0x114] sm:$0xff]
      %v306 = vld [vmem:[%s1 + $0x11c] sm:$0xf]
      %v307 = vld [vmem:[%s1 + $0x120] sm:$0xff]
      %v308 = vld [vmem:[%s1 + $0x128] sm:$0xf]
      %v309 = vld [vmem:[%s1 + $0x12c] sm:$0xff]
      %v310 = vld [vmem:[%s1 + $0x134] sm:$0xf]
      %v311 = vld [vmem:[%s1 + $0x138] sm:$0xff]
      %v312 = vld [vmem:[%s1 + $0x140] sm:$0xf]
      %v313 = vld [vmem:[%s1 + $0x144] sm:$0xff]
      %v314 = vld [vmem:[%s1 + $0x14c] sm:$0xf]
      %v315 = vld [vmem:[%s1 + $0x150] sm:$0xff]
      %v316 = vld [vmem:[%s1 + $0x158] sm:$0xf]
      %v317 = vld [vmem:[%s1 + $0x15c] sm:$0xff]
      %v318 = vld [vmem:[%s1 + $0x164] sm:$0xf]
      %v319 = vld [vmem:[%s1 + $0x168] sm:$0xff]
      %v320 = vld [vmem:[%s1 + $0x170] sm:$0xf]
      %v321 = vld [vmem:[%s1 + $0x174] sm:$0xff]
      %v322 = vld [vmem:[%s1 + $0x17c] sm:$0xf]
      %v323 = vld [vmem:[%s1 + $0x180] sm:$0xff]
      %v324 = vld [vmem:[%s1 + $0x188] sm:$0xf]
      %v325 = vld [vmem:[%s1 + $0x18c] sm:$0xff]
      %v326 = vld [vmem:[%s1 + $0x194] sm:$0xf]
      %v327 = vld [vmem:[%s1 + $0x198] sm:$0xff]
      %v328 = vld [vmem:[%s1 + $0x1a0] sm:$0xf]
      %v329 = vld [vmem:[%s1 + $0x1a4] sm:$0xff]
      %v330 = vld [vmem:[%s1 + $0x1ac] sm:$0xf]
      %v331 = vld [vmem:[%s1 + $0x1b0] sm:$0xff]
      %v332 = vld [vmem:[%s1 + $0x1b8] sm:$0xf]
      %v333 = vld [vmem:[%s1 + $0x1bc] sm:$0xff]
      %v334 = vld [vmem:[%s1 + $0x1c4] sm:$0xf]
      %v335 = vld [vmem:[%s1 + $0x1c8] sm:$0xff]
      %v336 = vld [vmem:[%s1 + $0x1d0] sm:$0xf]
      %v337 = vld [vmem:[%s1 + $0x1d4] sm:$0xff]
      %v338 = vld [vmem:[%s1 + $0x1dc] sm:$0xf]
      %v339 = vld [vmem:[%s1 + $0x1e0] sm:$0xff]
      %v340 = vld [vmem:[%s1 + $0x1e8] sm:$0xf]
      %v341 = vld [vmem:[%s1 + $0x1ec] sm:$0xff]
      %v342 = vld [vmem:[%s1 + $0x1f4] sm:$0xf]
      %v343 = vld [vmem:[%s1 + $0x1f8] sm:$0xff]
      %v344 = vld [vmem:[%s1 + $0x200] sm:$0xf]
      %v345 = vld [vmem:[%s1 + $0x204] sm:$0xff]
      %v346 = vld [vmem:[%s1 + $0x20c] sm:$0xf]
      %v347 = vld [vmem:[%s1 + $0x210] sm:$0xff]
      %v348 = vld [vmem:[%s1 + $0x218] sm:$0xf]
      %v349 = vld [vmem:[%s1 + $0x21c] sm:$0xff]
      %v350 = vld [vmem:[%s1 + $0x224] sm:$0xf]
      %v351 = vld [vmem:[%s1 + $0x228] sm:$0xff]
      %v352 = vld [vmem:[%s1 + $0x230] sm:$0xf]
      %v353 = vld [vmem:[%s1 + $0x234] sm:$0xff]
      %v354 = vld [vmem:[%s1 + $0x23c] sm:$0xf]
      %v355 = vld [vmem:[%s1 + $0x240] sm:$0xff]
      %v356 = vld [vmem:[%s1 + $0x248] sm:$0xf]
      %v357 = vld [vmem:[%s1 + $0x24c] sm:$0xff]
      %v358 = vld [vmem:[%s1 + $0x254] sm:$0xf]
      %v359 = vld [vmem:[%s1 + $0x258] sm:$0xff]
      %v360 = vld [vmem:[%s1 + $0x260] sm:$0xf]
      %v361 = vld [vmem:[%s1 + $0x264] sm:$0xff]
      %v362 = vld [vmem:[%s1 + $0x26c] sm:$0xf]
      %v363 = vld [vmem:[%s1 + $0x270] sm:$0xff]
      %v364 = vld [vmem:[%s1 + $0x278] sm:$0xf]
      %v365 = vld [vmem:[%s1 + $0x27c] sm:$0xff]
      %v366 = vld [vmem:[%s1 + $0x284] sm:$0xf]
      %v367 = vld [vmem:[%s1 + $0x288] sm:$0xff]
      %v368 = vld [vmem:[%s1 + $0x290] sm:$0xf]
      %v369 = vld [vmem:[%s1 + $0x294] sm:$0xff]
      %v370 = vld [vmem:[%s1 + $0x29c] sm:$0xf]
      %v371 = vld [vmem:[%s1 + $0x2a0] sm:$0xff]
      %v372 = vld [vmem:[%s1 + $0x2a8] sm:$0xf]
      %v373 = vld [vmem:[%s1 + $0x2ac] sm:$0xff]
      %v374 = vld [vmem:[%s1 + $0x2b4] sm:$0xf]
      %v375 = vld [vmem:[%s1 + $0x2b8] sm:$0xff]
      %v376 = vld [vmem:[%s1 + $0x2c0] sm:$0xf]
      %v377 = vld [vmem:[%s1 + $0x2c4] sm:$0xff]
      %v378 = vld [vmem:[%s1 + $0x2cc] sm:$0xf]
      %v379 = vld [vmem:[%s1 + $0x2d0] sm:$0xff]
      %v380 = vld [vmem:[%s1 + $0x2d8] sm:$0xf]
      %v381 = vld [vmem:[%s1 + $0x2dc] sm:$0xff]
      %v382 = vld [vmem:[%s1 + $0x2e4] sm:$0xf]
      %v383 = vld [vmem:[%s1 + $0x2e8] sm:$0xff]
      %v384 = vld [vmem:[%s1 + $0x2f0] sm:$0xf]
      %v385 = vld [vmem:[%s1 + $0x2f4] sm:$0xff]
      %v386 = vld [vmem:[%s1 + $0x2fc] sm:$0xf]
      %v387 = vld [vmem:[%s1 + $0x300] sm:$0xff]
      %v388 = vld [vmem:[%s1 + $0x308] sm:$0xf]
      %v389 = vld [vmem:[%s1 + $0x30c] sm:$0xff]
      %v390 = vld [vmem:[%s1 + $0x314] sm:$0xf]
      %v391 = vld [vmem:[%s1 + $0x318] sm:$0xff]
      %v392 = vld [vmem:[%s1 + $0x320] sm:$0xf]
      %v393 = vld [vmem:[%s1 + $0x324] sm:$0xff]
      %v394 = vld [vmem:[%s1 + $0x32c] sm:$0xf]
      %v395 = vld [vmem:[%s1 + $0x330] sm:$0xff]
      %v396 = vld [vmem:[%s1 + $0x338] sm:$0xf]
      %v397 = vld [vmem:[%s1 + $0x33c] sm:$0xff]
      %v398 = vld [vmem:[%s1 + $0x344] sm:$0xf]
      %v399 = vld [vmem:[%s1 + $0x348] sm:$0xff]
      %v400 = vld [vmem:[%s1 + $0x350] sm:$0xf]
      %v401 = vld [vmem:[%s1 + $0x354] sm:$0xff]
      %v402 = vld [vmem:[%s1 + $0x35c] sm:$0xf]
      %v403 = vld [vmem:[%s1 + $0x360] sm:$0xff]
      %v404 = vld [vmem:[%s1 + $0x368] sm:$0xf]
      %v405 = vld [vmem:[%s1 + $0x36c] sm:$0xff]
      %v406 = vld [vmem:[%s1 + $0x374] sm:$0xf]
      %v407 = vld [vmem:[%s1 + $0x378] sm:$0xff]
      %v408 = vld [vmem:[%s1 + $0x380] sm:$0xf]
      %v409 = vld [vmem:[%s1 + $0x384] sm:$0xff]
      %v410 = vld [vmem:[%s1 + $0x38c] sm:$0xf]
      %v411 = vld [vmem:[%s1 + $0x390] sm:$0xff]
      %v412 = vld [vmem:[%s1 + $0x398] sm:$0xf]
      %v413 = vld [vmem:[%s1 + $0x39c] sm:$0xff]
      %v414 = vld [vmem:[%s1 + $0x3a4] sm:$0xf]
      %v415 = vld [vmem:[%s1 + $0x3a8] sm:$0xff]
      %v416 = vld [vmem:[%s1 + $0x3b0] sm:$0xf]
      %v417 = vld [vmem:[%s1 + $0x3b4] sm:$0xff]
      %v418 = vld [vmem:[%s1 + $0x3bc] sm:$0xf]
      %v419 = vld [vmem:[%s1 + $0x3c0] sm:$0xff]
      %v420 = vld [vmem:[%s1 + $0x3c8] sm:$0xf]
      %v421 = vld [vmem:[%s1 + $0x3cc] sm:$0xff]
      %v422 = vld [vmem:[%s1 + $0x3d4] sm:$0xf]
      %v423 = vld [vmem:[%s1 + $0x3d8] sm:$0xff]
      %v424 = vld [vmem:[%s1 + $0x3e0] sm:$0xf]
      %v425 = vld [vmem:[%s1 + $0x3e4] sm:$0xff]
      %v426 = vld [vmem:[%s1 + $0x3ec] sm:$0xf]
      %v427 = vld [vmem:[%s1 + $0x3f0] sm:$0xff]
      %v428 = vld [vmem:[%s1 + $0x3f8] sm:$0xf]
      %v429 = vld [vmem:[%s1 + $0x3fc] sm:$0xff]
      %v430 = vld [vmem:[%s1 + $0x404] sm:$0xf]
      %v431 = vld [vmem:[%s1 + $0x408] sm:$0xff]
      %v432 = vld [vmem:[%s1 + $0x410] sm:$0xf]
      %v433 = vld [vmem:[%s1 + $0x414] sm:$0xff]
      %v434 = vld [vmem:[%s1 + $0x41c] sm:$0xf]
      %v435 = vld [vmem:[%s1 + $0x420] sm:$0xff]
      %v436 = vld [vmem:[%s1 + $0x428] sm:$0xf]
      %v437 = vld [vmem:[%s1 + $0x42c] sm:$0xff]
      %v438 = vld [vmem:[%s1 + $0x434] sm:$0xf]
      %v439 = vld [vmem:[%s1 + $0x438] sm:$0xff]
      %v440 = vld [vmem:[%s1 + $0x440] sm:$0xf]
      %v441 = vld [vmem:[%s1 + $0x444] sm:$0xff]
      %v442 = vld [vmem:[%s1 + $0x44c] sm:$0xf]
      %v443 = vld [vmem:[%s1 + $0x450] sm:$0xff]
      %v444 = vld [vmem:[%s1 + $0x458] sm:$0xf]
      %v445 = vld [vmem:[%s1 + $0x45c] sm:$0xff]
      %v446 = vld [vmem:[%s1 + $0x464] sm:$0xf]
      %v447 = vld [vmem:[%s1 + $0x468] sm:$0xff]
      %v448 = vld [vmem:[%s1 + $0x470] sm:$0xf]
      %v449 = vld [vmem:[%s1 + $0x474] sm:$0xff]
      %v450 = vld [vmem:[%s1 + $0x47c] sm:$0xf]
      %v451 = vld [vmem:[%s1 + $0x480] sm:$0xff]
      %v452 = vld [vmem:[%s1 + $0x488] sm:$0xf]
      %v453 = vld [vmem:[%s1 + $0x48c] sm:$0xff]
      %v454 = vld [vmem:[%s1 + $0x494] sm:$0xf]
      %v455 = vld [vmem:[%s1 + $0x498] sm:$0xff]
      %v456 = vld [vmem:[%s1 + $0x4a0] sm:$0xf]
      %v457 = vld [vmem:[%s1 + $0x4a4] sm:$0xff]
      %v458 = vld [vmem:[%s1 + $0x4ac] sm:$0xf]
      %v459 = vld [vmem:[%s1 + $0x4b0] sm:$0xff]
      %v460 = vld [vmem:[%s1 + $0x4b8] sm:$0xf]
      %v461 = vld [vmem:[%s1 + $0x4bc] sm:$0xff]
      %v462 = vld [vmem:[%s1 + $0x4c4] sm:$0xf]
      %v463 = vld [vmem:[%s1 + $0x4c8] sm:$0xff]
      %v464 = vld [vmem:[%s1 + $0x4d0] sm:$0xf]
      %v465 = vld [vmem:[%s1 + $0x4d4] sm:$0xff]
      %v466 = vld [vmem:[%s1 + $0x4dc] sm:$0xf]
      %v467 = vld [vmem:[%s1 + $0x4e0] sm:$0xff]
      %v468 = vld [vmem:[%s1 + $0x4e8] sm:$0xf]
      %v469 = vld [vmem:[%s1 + $0x4ec] sm:$0xff]
      %v470 = vld [vmem:[%s1 + $0x4f4] sm:$0xf]
      %v471 = vld [vmem:[%s1 + $0x4f8] sm:$0xff]
      %v472 = vld [vmem:[%s1 + $0x500] sm:$0xf]
      %v473 = vld [vmem:[%s1 + $0x504] sm:$0xff]
      %v474 = vld [vmem:[%s1 + $0x50c] sm:$0xf]
      %v475 = vld [vmem:[%s1 + $0x510] sm:$0xff]
      %v476 = vld [vmem:[%s1 + $0x518] sm:$0xf]
      %v477 = vld [vmem:[%s1 + $0x51c] sm:$0xff]
      %v478 = vld [vmem:[%s1 + $0x524] sm:$0xf]
      %v479 = vld [vmem:[%s1 + $0x528] sm:$0xff]
      %v480 = vld [vmem:[%s1 + $0x530] sm:$0xf]
      %v481 = vld [vmem:[%s1 + $0x534] sm:$0xff]
      %v482 = vld [vmem:[%s1 + $0x53c] sm:$0xf]
      %v483 = vld [vmem:[%s1 + $0x540] sm:$0xff]
      %v484 = vld [vmem:[%s1 + $0x548] sm:$0xf]
      %v485 = vld [vmem:[%s1 + $0x54c] sm:$0xff]
      %v486 = vld [vmem:[%s1 + $0x554] sm:$0xf]
      %v487 = vld [vmem:[%s1 + $0x558] sm:$0xff]
      %v488 = vld [vmem:[%s1 + $0x560] sm:$0xf]
      %v489 = vld [vmem:[%s1 + $0x564] sm:$0xff]
      %v490 = vld [vmem:[%s1 + $0x56c] sm:$0xf]
      %v491 = vld [vmem:[%s1 + $0x570] sm:$0xff]
      %v492 = vld [vmem:[%s1 + $0x578] sm:$0xf]
      %v493 = vld [vmem:[%s1 + $0x57c] sm:$0xff]
      %v494 = vld [vmem:[%s1 + $0x584] sm:$0xf]
      %v495 = vld [vmem:[%s1 + $0x588] sm:$0xff]
      %v496 = vld [vmem:[%s1 + $0x590] sm:$0xf]
      %v497 = vld [vmem:[%s1 + $0x594] sm:$0xff]
      %v498 = vld [vmem:[%s1 + $0x59c] sm:$0xf]
      %v499 = vld [vmem:[%s1 + $0x5a0] sm:$0xff]
      %v500 = vld [vmem:[%s1 + $0x5a8] sm:$0xf]
      %v501 = vld [vmem:[%s1 + $0x5ac] sm:$0xff]
      %v502 = vld [vmem:[%s1 + $0x5b4] sm:$0xf]
      %v503 = vld [vmem:[%s1 + $0x5b8] sm:$0xff]
      %v504 = vld [vmem:[%s1 + $0x5c0] sm:$0xf]
      %v505 = vld [vmem:[%s1 + $0x5c4] sm:$0xff]
      %v506 = vld [vmem:[%s1 + $0x5cc] sm:$0xf]
      %v507 = vld [vmem:[%s1 + $0x5d0] sm:$0xff]
      %v508 = vld [vmem:[%s1 + $0x5d8] sm:$0xf]
      %v509 = vld [vmem:[%s1 + $0x5dc] sm:$0xff]
      %v510 = vld [vmem:[%s1 + $0x5e4] sm:$0xf]
      %v511 = vld [vmem:[%s1 + $0x5e8] sm:$0xff]
      %v512 = vld [vmem:[%s1 + $0x5f0] sm:$0xf]
      %v513 = vld [vmem:[%s1 + $0x5f4] sm:$0xff]
      %v514 = vld [vmem:[%s1 + $0x5fc] sm:$0xf]
      %v515 = vld [vmem:[%s1 + $0x600] sm:$0xff]
      %v516 = vld [vmem:[%s1 + $0x608] sm:$0xf]
      %v517 = vld [vmem:[%s1 + $0x60c] sm:$0xff]
      %v518 = vld [vmem:[%s1 + $0x614] sm:$0xf]
      %v519 = vld [vmem:[%s1 + $0x618] sm:$0xff]
      %v520 = vld [vmem:[%s1 + $0x620] sm:$0xf]
      %v521 = vld [vmem:[%s1 + $0x624] sm:$0xff]
      %v522 = vld [vmem:[%s1 + $0x62c] sm:$0xf]
      %v523 = vld [vmem:[%s1 + $0x630] sm:$0xff]
      %v524 = vld [vmem:[%s1 + $0x638] sm:$0xf]
      %v525 = vld [vmem:[%s1 + $0x63c] sm:$0xff]
      %v526 = vld [vmem:[%s1 + $0x644] sm:$0xf]
      %v527 = vld [vmem:[%s1 + $0x648] sm:$0xff]
      %v528 = vld [vmem:[%s1 + $0x650] sm:$0xf]
      %v529 = vld [vmem:[%s1 + $0x654] sm:$0xff]
      %v530 = vld [vmem:[%s1 + $0x65c] sm:$0xf]
      %v531 = vld [vmem:[%s1 + $0x660] sm:$0xff]
      %v532 = vld [vmem:[%s1 + $0x668] sm:$0xf]
      %v533 = vld [vmem:[%s1 + $0x66c] sm:$0xff]
      %v534 = vld [vmem:[%s1 + $0x674] sm:$0xf]
      %v535 = vld [vmem:[%s1 + $0x678] sm:$0xff]
      %v536 = vld [vmem:[%s1 + $0x680] sm:$0xf]
      %v537 = vld [vmem:[%s1 + $0x684] sm:$0xff]
      %v538 = vld [vmem:[%s1 + $0x68c] sm:$0xf]
      %v539 = vld [vmem:[%s1 + $0x690] sm:$0xff]
      %v540 = vld [vmem:[%s1 + $0x698] sm:$0xf]
      %v541 = vld [vmem:[%s1 + $0x69c] sm:$0xff]
      %v542 = vld [vmem:[%s1 + $0x6a4] sm:$0xf]
      %v543 = vld [vmem:[%s1 + $0x6a8] sm:$0xff]
      %v544 = vld [vmem:[%s1 + $0x6b0] sm:$0xf]
      %v545 = vld [vmem:[%s1 + $0x6b4] sm:$0xff]
      %v546 = vld [vmem:[%s1 + $0x6bc] sm:$0xf]
      %v547 = vld [vmem:[%s1 + $0x6c0] sm:$0xff]
      %v548 = vld [vmem:[%s1 + $0x6c8] sm:$0xf]
      %v549 = vld [vmem:[%s1 + $0x6cc] sm:$0xff]
      %v550 = vld [vmem:[%s1 + $0x6d4] sm:$0xf]
      %v551 = vld [vmem:[%s1 + $0x6d8] sm:$0xff]
      %v552 = vld [vmem:[%s1 + $0x6e0] sm:$0xf]
      %v553 = vld [vmem:[%s1 + $0x6e4] sm:$0xff]
      %v554 = vld [vmem:[%s1 + $0x6ec] sm:$0xf]
      %v555 = vld [vmem:[%s1 + $0x6f0] sm:$0xff]
      %v556 = vld [vmem:[%s1 + $0x6f8] sm:$0xf]
      %v557 = vld [vmem:[%s1 + $0x6fc] sm:$0xff]
      %v558 = vld [vmem:[%s1 + $0x704] sm:$0xf]
      %v559 = vld [vmem:[%s1 + $0x708] sm:$0xff]
      %v560 = vld [vmem:[%s1 + $0x710] sm:$0xf]
      %v561 = vld [vmem:[%s1 + $0x714] sm:$0xff]
      %v562 = vld [vmem:[%s1 + $0x71c] sm:$0xf]
      %v563 = vld [vmem:[%s1 + $0x720] sm:$0xff]
      %v564 = vld [vmem:[%s1 + $0x728] sm:$0xf]
      %v565 = vld [vmem:[%s1 + $0x72c] sm:$0xff]
      %v566 = vld [vmem:[%s1 + $0x734] sm:$0xf]
      %v567 = vld [vmem:[%s1 + $0x738] sm:$0xff]
      %v568 = vld [vmem:[%s1 + $0x740] sm:$0xf]
      %v569 = vld [vmem:[%s1 + $0x744] sm:$0xff]
      %v570 = vld [vmem:[%s1 + $0x74c] sm:$0xf]
      %v571 = vld [vmem:[%s1 + $0x750] sm:$0xff]
      %v572 = vld [vmem:[%s1 + $0x758] sm:$0xf]
      %v573 = vld [vmem:[%s1 + $0x75c] sm:$0xff]
      %v574 = vld [vmem:[%s1 + $0x764] sm:$0xf]
      %v575 = vld [vmem:[%s1 + $0x768] sm:$0xff]
      %v576 = vld [vmem:[%s1 + $0x770] sm:$0xf]
      %v577 = vld [vmem:[%s1 + $0x774] sm:$0xff]
      %v578 = vld [vmem:[%s1 + $0x77c] sm:$0xf]
      %v579 = vld [vmem:[%s1 + $0x780] sm:$0xff]
      %v580 = vld [vmem:[%s1 + $0x788] sm:$0xf]
      %v581 = vld [vmem:[%s1 + $0x78c] sm:$0xff]
      %v582 = vld [vmem:[%s1 + $0x794] sm:$0xf]
      %v583 = vld [vmem:[%s1 + $0x798] sm:$0xff]
      %v584 = vld [vmem:[%s1 + $0x7a0] sm:$0xf]
      %v585 = vld [vmem:[%s1 + $0x7a4] sm:$0xff]
      %v586 = vld [vmem:[%s1 + $0x7ac] sm:$0xf]
      %v587 = vld [vmem:[%s1 + $0x7b0] sm:$0xff]
      %v588 = vld [vmem:[%s1 + $0x7b8] sm:$0xf]
      %v589 = vld [vmem:[%s1 + $0x7bc] sm:$0xff]
      %v590 = vld [vmem:[%s1 + $0x7c4] sm:$0xf]
      %v591 = vld [vmem:[%s1 + $0x7c8] sm:$0xff]
      %v592 = vld [vmem:[%s1 + $0x7d0] sm:$0xf]
      %v593 = vld [vmem:[%s1 + $0x7d4] sm:$0xff]
      %v594 = vld [vmem:[%s1 + $0x7dc] sm:$0xf]
      %v595 = vld [vmem:[%s1 + $0x7e0] sm:$0xff]
      %v596 = vld [vmem:[%s1 + $0x7e8] sm:$0xf]
      %v597 = vld [vmem:[%s1 + $0x7ec] sm:$0xff]
      %v598 = vld [vmem:[%s1 + $0x7f4] sm:$0xf]
      %v599 = vld [vmem:[%s1 + $0x7f8] sm:$0xff]
      %v600 = vld [vmem:[%s1 + $0x800] sm:$0xf]
      %v601 = vld [vmem:[%s1 + $0x804] sm:$0xff]
      %v602 = vld [vmem:[%s1 + $0x80c] sm:$0xf]
      %v603 = vld [vmem:[%s1 + $0x810] sm:$0xff]
      %v604 = vld [vmem:[%s1 + $0x818] sm:$0xf]
      %v605 = vld [vmem:[%s1 + $0x81c] sm:$0xff]
      %v606 = vld [vmem:[%s1 + $0x824] sm:$0xf]
      %v607 = vld [vmem:[%s1 + $0x828] sm:$0xff]
      %v608 = vld [vmem:[%s1 + $0x830] sm:$0xf]
      %v609 = vld [vmem:[%s1 + $0x834] sm:$0xff]
      %v610 = vld [vmem:[%s1 + $0x83c] sm:$0xf]
      %v611 = vld [vmem:[%s1 + $0x840] sm:$0xff]
      %v612 = vld [vmem:[%s1 + $0x848] sm:$0xf]
      %v613 = vld [vmem:[%s1 + $0x84c] sm:$0xff]
      %v614 = vld [vmem:[%s1 + $0x854] sm:$0xf]
      %v615 = vld [vmem:[%s1 + $0x858] sm:$0xff]
      %v616 = vld [vmem:[%s1 + $0x860] sm:$0xf]
      %v617 = vld [vmem:[%s1 + $0x864] sm:$0xff]
      %v618 = vld [vmem:[%s1 + $0x86c] sm:$0xf]
      %v619 = vld [vmem:[%s1 + $0x870] sm:$0xff]
      %v620 = vld [vmem:[%s1 + $0x878] sm:$0xf]
      %v621 = vld [vmem:[%s1 + $0x87c] sm:$0xff]
      %v622 = vld [vmem:[%s1 + $0x884] sm:$0xf]
      %v623 = vld [vmem:[%s1 + $0x888] sm:$0xff]
      %v624 = vld [vmem:[%s1 + $0x890] sm:$0xf]
      %v625 = vld [vmem:[%s1 + $0x894] sm:$0xff]
      %v626 = vld [vmem:[%s1 + $0x89c] sm:$0xf]
      %v627 = vld [vmem:[%s1 + $0x8a0] sm:$0xff]
      %v628 = vld [vmem:[%s1 + $0x8a8] sm:$0xf]
      %v629 = vld [vmem:[%s1 + $0x8ac] sm:$0xff]
      %v630 = vld [vmem:[%s1 + $0x8b4] sm:$0xf]
      %v631 = vld [vmem:[%s1 + $0x8b8] sm:$0xff]
      %v632 = vld [vmem:[%s1 + $0x8c0] sm:$0xf]
      %v633 = vld [vmem:[%s1 + $0x8c4] sm:$0xff]
      %v634 = vld [vmem:[%s1 + $0x8cc] sm:$0xf]
      %v635 = vld [vmem:[%s1 + $0x8d0] sm:$0xff]
      %v636 = vld [vmem:[%s1 + $0x8d8] sm:$0xf]
      %v637 = vld [vmem:[%s1 + $0x8dc] sm:$0xff]
      %v638 = vld [vmem:[%s1 + $0x8e4] sm:$0xf]
      %v639 = vld [vmem:[%s1 + $0x8e8] sm:$0xff]
      %v640 = vld [vmem:[%s1 + $0x8f0] sm:$0xf]
      %v641 = vld [vmem:[%s1 + $0x8f4] sm:$0xff]
      %v642 = vld [vmem:[%s1 + $0x8fc] sm:$0xf]
      %v643 = vld [vmem:[%s1 + $0x900] sm:$0xff]
      %v644 = vld [vmem:[%s1 + $0x908] sm:$0xf]
      %v645 = vld [vmem:[%s1 + $0x90c] sm:$0xff]
      %v646 = vld [vmem:[%s1 + $0x914] sm:$0xf]
      %v647 = vld [vmem:[%s1 + $0x918] sm:$0xff]
      %v648 = vld [vmem:[%s1 + $0x920] sm:$0xf]
      %v649 = vld [vmem:[%s1 + $0x924] sm:$0xff]
      %v650 = vld [vmem:[%s1 + $0x92c] sm:$0xf]
      %v651 = vld [vmem:[%s1 + $0x930] sm:$0xff]
      %v652 = vld [vmem:[%s1 + $0x938] sm:$0xf]
      %v653 = vld [vmem:[%s1 + $0x93c] sm:$0xff]
      %v654 = vld [vmem:[%s1 + $0x944] sm:$0xf]
      %v655 = vld [vmem:[%s1 + $0x948] sm:$0xff]
      %v656 = vld [vmem:[%s1 + $0x950] sm:$0xf]
      %v657 = vld [vmem:[%s1 + $0x954] sm:$0xff]
      %v658 = vld [vmem:[%s1 + $0x95c] sm:$0xf]
      %v659 = vld [vmem:[%s1 + $0x960] sm:$0xff]
      %v660 = vld [vmem:[%s1 + $0x968] sm:$0xf]
      %v661 = vld [vmem:[%s1 + $0x96c] sm:$0xff]
      %v662 = vld [vmem:[%s1 + $0x974] sm:$0xf]
      %v663 = vld [vmem:[%s1 + $0x978] sm:$0xff]
      %v664 = vld [vmem:[%s1 + $0x980] sm:$0xf]
      %v665 = vld [vmem:[%s1 + $0x984] sm:$0xff]
      %v666 = vld [vmem:[%s1 + $0x98c] sm:$0xf]
      %v667 = vld [vmem:[%s1 + $0x990] sm:$0xff]
      %v668 = vld [vmem:[%s1 + $0x998] sm:$0xf]
      %v669 = vld [vmem:[%s1 + $0x99c] sm:$0xff]
      %v670 = vld [vmem:[%s1 + $0x9a4] sm:$0xf]
      %v671 = vld [vmem:[%s1 + $0x9a8] sm:$0xff]
      %v672 = vld [vmem:[%s1 + $0x9b0] sm:$0xf]
      %v673 = vld [vmem:[%s1 + $0x9b4] sm:$0xff]
      %v674 = vld [vmem:[%s1 + $0x9bc] sm:$0xf]
      %v675 = vld [vmem:[%s1 + $0x9c0] sm:$0xff]
      %v676 = vld [vmem:[%s1 + $0x9c8] sm:$0xf]
      %v677 = vld [vmem:[%s1 + $0x9cc] sm:$0xff]
      %v678 = vld [vmem:[%s1 + $0x9d4] sm:$0xf]
      %v679 = vld [vmem:[%s1 + $0x9d8] sm:$0xff]
      %v680 = vld [vmem:[%s1 + $0x9e0] sm:$0xf]
      %v681 = vld [vmem:[%s1 + $0x9e4] sm:$0xff]
      %v682 = vld [vmem:[%s1 + $0x9ec] sm:$0xf]
      %v683 = vld [vmem:[%s1 + $0x9f0] sm:$0xff]
      %v684 = vld [vmem:[%s1 + $0x9f8] sm:$0xf]
      %v685 = vld [vmem:[%s1 + $0x9fc] sm:$0xff]
      %v686 = vld [vmem:[%s1 + $0xa04] sm:$0xf]
      %v687 = vld [vmem:[%s1 + $0xa08] sm:$0xff]
      %v688 = vld [vmem:[%s1 + $0xa10] sm:$0xf]
      %v689 = vld [vmem:[%s1 + $0xa14] sm:$0xff]
      %v690 = vld [vmem:[%s1 + $0xa1c] sm:$0xf]
      %v691 = vld [vmem:[%s1 + $0xa20] sm:$0xff]
      %v692 = vld [vmem:[%s1 + $0xa28] sm:$0xf]
      %v693 = vld [vmem:[%s1 + $0xa2c] sm:$0xff]
      %v694 = vld [vmem:[%s1 + $0xa34] sm:$0xf]
      %v695 = vld [vmem:[%s1 + $0xa38] sm:$0xff]
      %v696 = vld [vmem:[%s1 + $0xa40] sm:$0xf]
      %v697 = vld [vmem:[%s1 + $0xa44] sm:$0xff]
      %v698 = vld [vmem:[%s1 + $0xa4c] sm:$0xf]
      %v699 = vld [vmem:[%s1 + $0xa50] sm:$0xff]
      %v700 = vld [vmem:[%s1 + $0xa58] sm:$0xf]
      %v701 = vld [vmem:[%s1 + $0xa5c] sm:$0xff]
      %v702 = vld [vmem:[%s1 + $0xa64] sm:$0xf]
      %v703 = vld [vmem:[%s1 + $0xa68] sm:$0xff]
      %v704 = vld [vmem:[%s1 + $0xa70] sm:$0xf]
      %v705 = vld [vmem:[%s1 + $0xa74] sm:$0xff]
      %v706 = vld [vmem:[%s1 + $0xa7c] sm:$0xf]
      %v707 = vld [vmem:[%s1 + $0xa80] sm:$0xff]
      %v708 = vld [vmem:[%s1 + $0xa88] sm:$0xf]
      %v709 = vld [vmem:[%s1 + $0xa8c] sm:$0xff]
      %v710 = vld [vmem:[%s1 + $0xa94] sm:$0xf]
      %v711 = vld [vmem:[%s1 + $0xa98] sm:$0xff]
      %v712 = vld [vmem:[%s1 + $0xaa0] sm:$0xf]
      %v713 = vld [vmem:[%s1 + $0xaa4] sm:$0xff]
      %v714 = vld [vmem:[%s1 + $0xaac] sm:$0xf]
      %v715 = vld [vmem:[%s1 + $0xab0] sm:$0xff]
      %v716 = vld [vmem:[%s1 + $0xab8] sm:$0xf]
      %v717 = vld [vmem:[%s1 + $0xabc] sm:$0xff]
      %v718 = vld [vmem:[%s1 + $0xac4] sm:$0xf]
      %v719 = vld [vmem:[%s1 + $0xac8] sm:$0xff]
      %v720 = vld [vmem:[%s1 + $0xad0] sm:$0xf]
      %v721 = vld [vmem:[%s1 + $0xad4] sm:$0xff]
      %v722 = vld [vmem:[%s1 + $0xadc] sm:$0xf]
      %v723 = vld [vmem:[%s1 + $0xae0] sm:$0xff]
      %v724 = vld [vmem:[%s1 + $0xae8] sm:$0xf]
      %v725 = vld [vmem:[%s1 + $0xaec] sm:$0xff]
      %v726 = vld [vmem:[%s1 + $0xaf4] sm:$0xf]
      %v727 = vld [vmem:[%s1 + $0xaf8] sm:$0xff]
      %v728 = vld [vmem:[%s1 + $0xb00] sm:$0xf]
      %v729 = vld [vmem:[%s1 + $0xb04] sm:$0xff]
      %v730 = vld [vmem:[%s1 + $0xb0c] sm:$0xf]
      %v731 = vld [vmem:[%s1 + $0xb10] sm:$0xff]
      %v732 = vld [vmem:[%s1 + $0xb18] sm:$0xf]
      %v733 = vld [vmem:[%s1 + $0xb1c] sm:$0xff]
      %v734 = vld [vmem:[%s1 + $0xb24] sm:$0xf]
      %v735 = vld [vmem:[%s1 + $0xb28] sm:$0xff]
      %v736 = vld [vmem:[%s1 + $0xb30] sm:$0xf]
      %v737 = vld [vmem:[%s1 + $0xb34] sm:$0xff]
      %v738 = vld [vmem:[%s1 + $0xb3c] sm:$0xf]
      %v739 = vld [vmem:[%s1 + $0xb40] sm:$0xff]
      %v740 = vld [vmem:[%s1 + $0xb48] sm:$0xf]
      %v741 = vld [vmem:[%s1 + $0xb4c] sm:$0xff]
      %v742 = vld [vmem:[%s1 + $0xb54] sm:$0xf]
      %v743 = vld [vmem:[%s1 + $0xb58] sm:$0xff]
      %v744 = vld [vmem:[%s1 + $0xb60] sm:$0xf]
      %v745 = vld [vmem:[%s1 + $0xb64] sm:$0xff]
      %v746 = vld [vmem:[%s1 + $0xb6c] sm:$0xf]
      %v747 = vld [vmem:[%s1 + $0xb70] sm:$0xff]
      %v748 = vld [vmem:[%s1 + $0xb78] sm:$0xf]
      %v749 = vld [vmem:[%s1 + $0xb7c] sm:$0xff]
      %v750 = vld [vmem:[%s1 + $0xb84] sm:$0xf]
      %v751 = vld [vmem:[%s1 + $0xb88] sm:$0xff]
      %v752 = vld [vmem:[%s1 + $0xb90] sm:$0xf]
      %v753 = vld [vmem:[%s1 + $0xb94] sm:$0xff]
      %v754 = vld [vmem:[%s1 + $0xb9c] sm:$0xf]
      %v755 = vld [vmem:[%s1 + $0xba0] sm:$0xff]
      %v756 = vld [vmem:[%s1 + $0xba8] sm:$0xf]
      %v757 = vld [vmem:[%s1 + $0xbac] sm:$0xff]
      %v758 = vld [vmem:[%s1 + $0xbb4] sm:$0xf]
      %v759 = vld [vmem:[%s1 + $0xbb8] sm:$0xff]
      %v760 = vld [vmem:[%s1 + $0xbc0] sm:$0xf]
      %v761 = vld [vmem:[%s1 + $0xbc4] sm:$0xff]
      %v762 = vld [vmem:[%s1 + $0xbcc] sm:$0xf]
      %v763 = vld [vmem:[%s1 + $0xbd0] sm:$0xff]
      %v764 = vld [vmem:[%s1 + $0xbd8] sm:$0xf]
      %v765 = vld [vmem:[%s1 + $0xbdc] sm:$0xff]
      %v766 = vld [vmem:[%s1 + $0xbe4] sm:$0xf]
      %v767 = vld [vmem:[%s1 + $0xbe8] sm:$0xff]
      %v768 = vld [vmem:[%s1 + $0xbf0] sm:$0xf]
      %v769 = vld [vmem:[%s1 + $0xbf4] sm:$0xff]
      %v770 = vld [vmem:[%s1 + $0xbfc] sm:$0xf]
      %v771 = vld [vmem:[%s1 + $0xc00] sm:$0xff]
      %v772 = vld [vmem:[%s1 + $0xc08] sm:$0xf]
      %v773 = vld [vmem:[%s1 + $0xc0c] sm:$0xff]
      %v774 = vld [vmem:[%s1 + $0xc14] sm:$0xf]
      %v775 = vld [vmem:[%s1 + $0xc18] sm:$0xff]
      %v776 = vld [vmem:[%s1 + $0xc20] sm:$0xf]
      %v777 = vld [vmem:[%s1 + $0xc24] sm:$0xff]
      %v778 = vld [vmem:[%s1 + $0xc2c] sm:$0xf]
      %v779 = vld [vmem:[%s1 + $0xc30] sm:$0xff]
      %v780 = vld [vmem:[%s1 + $0xc38] sm:$0xf]
      %v781 = vld [vmem:[%s1 + $0xc3c] sm:$0xff]
      %v782 = vld [vmem:[%s1 + $0xc44] sm:$0xf]
      %v783 = vld [vmem:[%s1 + $0xc48] sm:$0xff]
      %v784 = vld [vmem:[%s1 + $0xc50] sm:$0xf]
      %v785 = vld [vmem:[%s1 + $0xc54] sm:$0xff]
      %v786 = vld [vmem:[%s1 + $0xc5c] sm:$0xf]
      %v787 = vld [vmem:[%s1 + $0xc60] sm:$0xff]
      %v788 = vld [vmem:[%s1 + $0xc68] sm:$0xf]
      %v789 = vld [vmem:[%s1 + $0xc6c] sm:$0xff]
      %v790 = vld [vmem:[%s1 + $0xc74] sm:$0xf]
      %v791 = vld [vmem:[%s1 + $0xc78] sm:$0xff]
      %v792 = vld [vmem:[%s1 + $0xc80] sm:$0xf]
      %v793 = vld [vmem:[%s1 + $0xc84] sm:$0xff]
      %v794 = vld [vmem:[%s1 + $0xc8c] sm:$0xf]
      %v795 = vld [vmem:[%s1 + $0xc90] sm:$0xff]
      %v796 = vld [vmem:[%s1 + $0xc98] sm:$0xf]
      %v797 = vld [vmem:[%s1 + $0xc9c] sm:$0xff]
      %v798 = vld [vmem:[%s1 + $0xca4] sm:$0xf]
      %v799 = vld [vmem:[%s1 + $0xca8] sm:$0xff]
      %v800 = vld [vmem:[%s1 + $0xcb0] sm:$0xf]
      %v801 = vld [vmem:[%s1 + $0xcb4] sm:$0xff]
      %v802 = vld [vmem:[%s1 + $0xcbc] sm:$0xf]
      %v803 = vld [vmem:[%s1 + $0xcc0] sm:$0xff]
      %v804 = vld [vmem:[%s1 + $0xcc8] sm:$0xf]
      %v805 = vld [vmem:[%s1 + $0xccc] sm:$0xff]
      %v806 = vld [vmem:[%s1 + $0xcd4] sm:$0xf]
      %v807 = vld [vmem:[%s1 + $0xcd8] sm:$0xff]
      %v808 = vld [vmem:[%s1 + $0xce0] sm:$0xf]
      %v809 = vld [vmem:[%s1 + $0xce4] sm:$0xff]
      %v810 = vld [vmem:[%s1 + $0xcec] sm:$0xf]
      %v811 = vld [vmem:[%s1 + $0xcf0] sm:$0xff]
      %v812 = vld [vmem:[%s1 + $0xcf8] sm:$0xf]
      %v813 = vld [vmem:[%s1 + $0xcfc] sm:$0xff]
      %v814 = vld [vmem:[%s1 + $0xd04] sm:$0xf]
      %v815 = vld [vmem:[%s1 + $0xd08] sm:$0xff]
      %v816 = vld [vmem:[%s1 + $0xd10] sm:$0xf]
      %v817 = vld [vmem:[%s1 + $0xd14] sm:$0xff]
      %v818 = vld [vmem:[%s1 + $0xd1c] sm:$0xf]
      %v819 = vld [vmem:[%s1 + $0xd20] sm:$0xff]
      %v820 = vld [vmem:[%s1 + $0xd28] sm:$0xf]
      %v821 = vld [vmem:[%s1 + $0xd2c] sm:$0xff]
      %v822 = vld [vmem:[%s1 + $0xd34] sm:$0xf]
      %v823 = vld [vmem:[%s1 + $0xd38] sm:$0xff]
      %v824 = vld [vmem:[%s1 + $0xd40] sm:$0xf]
      %v825 = vld [vmem:[%s1 + $0xd44] sm:$0xff]
      %v826 = vld [vmem:[%s1 + $0xd4c] sm:$0xf]
      %v827 = vld [vmem:[%s1 + $0xd50] sm:$0xff]
      %v828 = vld [vmem:[%s1 + $0xd58] sm:$0xf]
      %v829 = vld [vmem:[%s1 + $0xd5c] sm:$0xff]
      %v830 = vld [vmem:[%s1 + $0xd64] sm:$0xf]
      %v831 = vld [vmem:[%s1 + $0xd68] sm:$0xff]
      %v832 = vld [vmem:[%s1 + $0xd70] sm:$0xf]
      %v833 = vld [vmem:[%s1 + $0xd74] sm:$0xff]
      %v834 = vld [vmem:[%s1 + $0xd7c] sm:$0xf]
      %v835 = vld [vmem:[%s2] sm:$0x7]
      %v837 = vlaneseq
      %v838 = vshrl.u32 %v837, 7
      %v839 = vsub.s32 0, %v838
      %v840 = vrot.slane %v835, %v839
      %v841 = vlaneseq
      %v842 = vshrl.u32 %v841, 7
      %v843 = vsub.s32 1, %v842
      %v844 = vrot.slane %v835, %v843
      %v845 = vlaneseq
      %v846 = vshrl.u32 %v845, 7
      %v847 = vsub.s32 2, %v846
      %v848 = vrot.slane %v835, %v847
      %v888 = vunpack.c.l.b16 %v223
      %v889 = vunpack.c.h.b16 %v223
      %v890 = vunpack.c.l.b16 %v224
      %v891 = vunpack.c.h.b16 %v224
      %v892 = vunpack.c.l.b16 %v225
      %v893 = vunpack.c.h.b16 %v225
      %v894 = vunpack.c.l.b16 %v226
      %v895 = vunpack.c.h.b16 %v226
      %v896 = vunpack.c.l.b16 %v227
      %v897 = vunpack.c.h.b16 %v227
      %v898 = vunpack.c.l.b16 %v228
      %v899 = vunpack.c.h.b16 %v228
      %v900 = vunpack.c.l.b16 %v229
      %v901 = vunpack.c.h.b16 %v229
      %v902 = vunpack.c.l.b16 %v230
      %v903 = vunpack.c.h.b16 %v230
      %v904 = vunpack.c.l.b16 %v231
      %v905 = vunpack.c.h.b16 %v231
      %v906 = vunpack.c.l.b16 %v232
      %v907 = vunpack.c.h.b16 %v232
      %v908 = vunpack.c.l.b16 %v233
      %v909 = vunpack.c.h.b16 %v233
      %v910 = vunpack.c.l.b16 %v234
      %v911 = vunpack.c.h.b16 %v234
      %v912 = vunpack.c.l.b16 %v235
      %v913 = vunpack.c.h.b16 %v235
      %v914 = vunpack.c.l.b16 %v236
      %v915 = vunpack.c.h.b16 %v236
      %v916 = vunpack.c.l.b16 %v237
      %v917 = vunpack.c.h.b16 %v237
      %v918 = vunpack.c.l.b16 %v238
      %v919 = vunpack.c.h.b16 %v238
      %v920 = vunpack.c.l.b16 %v239
      %v921 = vunpack.c.h.b16 %v239
      %v922 = vunpack.c.l.b16 %v240
      %v923 = vunpack.c.h.b16 %v240
      %v924 = vunpack.c.l.b16 %v241
      %v925 = vunpack.c.h.b16 %v241
      %v926 = vunpack.c.l.b16 %v242
      %v927 = vunpack.c.h.b16 %v242
      %v928 = vunpack.c.l.b16 %v243
      %v929 = vunpack.c.h.b16 %v243
      %v930 = vunpack.c.l.b16 %v244
      %v931 = vunpack.c.h.b16 %v244
      %v932 = vunpack.c.l.b16 %v245
      %v933 = vunpack.c.h.b16 %v245
      %v934 = vunpack.c.l.b16 %v246
      %v935 = vunpack.c.h.b16 %v246
      %v936 = vunpack.c.l.b16 %v247
      %v937 = vunpack.c.h.b16 %v247
      %v938 = vunpack.c.l.b16 %v248
      %v939 = vunpack.c.h.b16 %v248
      %v940 = vunpack.c.l.b16 %v249
      %v941 = vunpack.c.h.b16 %v249
      %v942 = vunpack.c.l.b16 %v250
      %v943 = vunpack.c.h.b16 %v250
      %v944 = vunpack.c.l.b16 %v251
      %v945 = vunpack.c.h.b16 %v251
      %v946 = vunpack.c.l.b16 %v252
      %v947 = vunpack.c.h.b16 %v252
      %v948 = vunpack.c.l.b16 %v253
      %v949 = vunpack.c.h.b16 %v253
      %v950 = vunpack.c.l.b16 %v254
      %v951 = vunpack.c.h.b16 %v254
      %v952 = vunpack.c.l.b16 %v255
      %v953 = vunpack.c.h.b16 %v255
      %v954 = vunpack.c.l.b16 %v256
      %v955 = vunpack.c.h.b16 %v256
      %v956 = vunpack.c.l.b16 %v257
      %v957 = vunpack.c.h.b16 %v257
      %v958 = vunpack.c.l.b16 %v258
      %v959 = vunpack.c.h.b16 %v258
      %v960 = vpack.c.b16 %v906, %v888
      %v961 = vpack.c.b16 %v907, %v889
      %v962 = vpack.c.b16 %v908, %v890
      %v963 = vpack.c.b16 %v909, %v891
      %v964 = vpack.c.b16 %v910, %v892
      %v965 = vpack.c.b16 %v911, %v893
      %v966 = vpack.c.b16 %v912, %v894
      %v967 = vpack.c.b16 %v913, %v895
      %v968 = vpack.c.b16 %v914, %v896
      %v969 = vpack.c.b16 %v915, %v897
      %v970 = vpack.c.b16 %v916, %v898
      %v971 = vpack.c.b16 %v917, %v899
      %v972 = vpack.c.b16 %v918, %v900
      %v973 = vpack.c.b16 %v919, %v901
      %v974 = vpack.c.b16 %v920, %v902
      %v975 = vpack.c.b16 %v921, %v903
      %v976 = vpack.c.b16 %v922, %v904
      %v977 = vpack.c.b16 %v923, %v905
      %v978 = vpack.c.b16 %v942, %v924
      %v979 = vpack.c.b16 %v943, %v925
      %v980 = vpack.c.b16 %v944, %v926
      %v981 = vpack.c.b16 %v945, %v927
      %v982 = vpack.c.b16 %v946, %v928
      %v983 = vpack.c.b16 %v947, %v929
      %v984 = vpack.c.b16 %v948, %v930
      %v985 = vpack.c.b16 %v949, %v931
      %v986 = vpack.c.b16 %v950, %v932
      %v987 = vpack.c.b16 %v951, %v933
      %v988 = vpack.c.b16 %v952, %v934
      %v989 = vpack.c.b16 %v953, %v935
      %v990 = vpack.c.b16 %v954, %v936
      %v991 = vpack.c.b16 %v955, %v937
      %v992 = vpack.c.b16 %v956, %v938
      %v993 = vpack.c.b16 %v957, %v939
      %v994 = vpack.c.b16 %v958, %v940
      %v995 = vpack.c.b16 %v959, %v941
      %v1608 = vunpack.c.l.b16 %v259
      %v1609 = vunpack.c.h.b16 %v259
      %v1610 = vunpack.c.l.b16 %v260
      %v1611 = vunpack.c.l.b16 %v261
      %v1612 = vunpack.c.h.b16 %v261
      %v1613 = vunpack.c.l.b16 %v262
      %v1614 = vunpack.c.l.b16 %v263
      %v1615 = vunpack.c.h.b16 %v263
      %v1616 = vunpack.c.l.b16 %v264
      %v1617 = vunpack.c.l.b16 %v265
      %v1618 = vunpack.c.h.b16 %v265
      %v1619 = vunpack.c.l.b16 %v266
      %v1620 = vunpack.c.l.b16 %v267
      %v1621 = vunpack.c.h.b16 %v267
      %v1622 = vunpack.c.l.b16 %v268
      %v1623 = vunpack.c.l.b16 %v269
      %v1624 = vunpack.c.h.b16 %v269
      %v1625 = vunpack.c.l.b16 %v270
      %v1626 = vunpack.c.l.b16 %v271
      %v1627 = vunpack.c.h.b16 %v271
      %v1628 = vunpack.c.l.b16 %v272
      %v1629 = vunpack.c.l.b16 %v273
      %v1630 = vunpack.c.h.b16 %v273
      %v1631 = vunpack.c.l.b16 %v274
      %v1632 = vunpack.c.l.b16 %v275
      %v1633 = vunpack.c.h.b16 %v275
      %v1634 = vunpack.c.l.b16 %v276
      %v1635 = vunpack.c.l.b16 %v277
      %v1636 = vunpack.c.h.b16 %v277
      %v1637 = vunpack.c.l.b16 %v278
      %v1638 = vunpack.c.l.b16 %v279
      %v1639 = vunpack.c.h.b16 %v279
      %v1640 = vunpack.c.l.b16 %v280
      %v1641 = vunpack.c.l.b16 %v281
      %v1642 = vunpack.c.h.b16 %v281
      %v1643 = vunpack.c.l.b16 %v282
      %v1644 = vunpack.c.l.b16 %v283
      %v1645 = vunpack.c.h.b16 %v283
      %v1646 = vunpack.c.l.b16 %v284
      %v1647 = vunpack.c.l.b16 %v285
      %v1648 = vunpack.c.h.b16 %v285
      %v1649 = vunpack.c.l.b16 %v286
      %v1650 = vunpack.c.l.b16 %v287
      %v1651 = vunpack.c.h.b16 %v287
      %v1652 = vunpack.c.l.b16 %v288
      %v1653 = vunpack.c.l.b16 %v289
      %v1654 = vunpack.c.h.b16 %v289
      %v1655 = vunpack.c.l.b16 %v290
      %v1656 = vunpack.c.l.b16 %v291
      %v1657 = vunpack.c.h.b16 %v291
      %v1658 = vunpack.c.l.b16 %v292
      %v1659 = vunpack.c.l.b16 %v293
      %v1660 = vunpack.c.h.b16 %v293
      %v1661 = vunpack.c.l.b16 %v294
      %v1662 = vunpack.c.l.b16 %v295
      %v1663 = vunpack.c.h.b16 %v295
      %v1664 = vunpack.c.l.b16 %v296
      %v1665 = vunpack.c.l.b16 %v297
      %v1666 = vunpack.c.h.b16 %v297
      %v1667 = vunpack.c.l.b16 %v298
      %v1668 = vunpack.c.l.b16 %v299
      %v1669 = vunpack.c.h.b16 %v299
      %v1670 = vunpack.c.l.b16 %v300
      %v1671 = vunpack.c.l.b16 %v301
      %v1672 = vunpack.c.h.b16 %v301
      %v1673 = vunpack.c.l.b16 %v302
      %v1674 = vunpack.c.l.b16 %v303
      %v1675 = vunpack.c.h.b16 %v303
      %v1676 = vunpack.c.l.b16 %v304
      %v1677 = vunpack.c.l.b16 %v305
      %v1678 = vunpack.c.h.b16 %v305
      %v1679 = vunpack.c.l.b16 %v306
      %v1680 = vunpack.c.l.b16 %v307
      %v1681 = vunpack.c.h.b16 %v307
      %v1682 = vunpack.c.l.b16 %v308
      %v1683 = vunpack.c.l.b16 %v309
      %v1684 = vunpack.c.h.b16 %v309
      %v1685 = vunpack.c.l.b16 %v310
      %v1686 = vunpack.c.l.b16 %v311
      %v1687 = vunpack.c.h.b16 %v311
      %v1688 = vunpack.c.l.b16 %v312
      %v1689 = vunpack.c.l.b16 %v313
      %v1690 = vunpack.c.h.b16 %v313
      %v1691 = vunpack.c.l.b16 %v314
      %v1692 = vunpack.c.l.b16 %v315
      %v1693 = vunpack.c.h.b16 %v315
      %v1694 = vunpack.c.l.b16 %v316
      %v1695 = vunpack.c.l.b16 %v317
      %v1696 = vunpack.c.h.b16 %v317
      %v1697 = vunpack.c.l.b16 %v318
      %v1698 = vunpack.c.l.b16 %v319
      %v1699 = vunpack.c.h.b16 %v319
      %v1700 = vunpack.c.l.b16 %v320
      %v1701 = vunpack.c.l.b16 %v321
      %v1702 = vunpack.c.h.b16 %v321
      %v1703 = vunpack.c.l.b16 %v322
      %v1704 = vunpack.c.l.b16 %v323
      %v1705 = vunpack.c.h.b16 %v323
      %v1706 = vunpack.c.l.b16 %v324
      %v1707 = vunpack.c.l.b16 %v325
      %v1708 = vunpack.c.h.b16 %v325
      %v1709 = vunpack.c.l.b16 %v326
      %v1710 = vunpack.c.l.b16 %v327
      %v1711 = vunpack.c.h.b16 %v327
      %v1712 = vunpack.c.l.b16 %v328
      %v1713 = vunpack.c.l.b16 %v329
      %v1714 = vunpack.c.h.b16 %v329
      %v1715 = vunpack.c.l.b16 %v330
      %v1716 = vunpack.c.l.b16 %v331
      %v1717 = vunpack.c.h.b16 %v331
      %v1718 = vunpack.c.l.b16 %v332
      %v1719 = vunpack.c.l.b16 %v333
      %v1720 = vunpack.c.h.b16 %v333
      %v1721 = vunpack.c.l.b16 %v334
      %v1722 = vunpack.c.l.b16 %v335
      %v1723 = vunpack.c.h.b16 %v335
      %v1724 = vunpack.c.l.b16 %v336
      %v1725 = vunpack.c.l.b16 %v337
      %v1726 = vunpack.c.h.b16 %v337
      %v1727 = vunpack.c.l.b16 %v338
      %v1728 = vunpack.c.l.b16 %v339
      %v1729 = vunpack.c.h.b16 %v339
      %v1730 = vunpack.c.l.b16 %v340
      %v1731 = vunpack.c.l.b16 %v341
      %v1732 = vunpack.c.h.b16 %v341
      %v1733 = vunpack.c.l.b16 %v342
      %v1734 = vunpack.c.l.b16 %v343
      %v1735 = vunpack.c.h.b16 %v343
      %v1736 = vunpack.c.l.b16 %v344
      %v1737 = vunpack.c.l.b16 %v345
      %v1738 = vunpack.c.h.b16 %v345
      %v1739 = vunpack.c.l.b16 %v346
      %v1740 = vunpack.c.l.b16 %v347
      %v1741 = vunpack.c.h.b16 %v347
      %v1742 = vunpack.c.l.b16 %v348
      %v1743 = vunpack.c.l.b16 %v349
      %v1744 = vunpack.c.h.b16 %v349
      %v1745 = vunpack.c.l.b16 %v350
      %v1746 = vunpack.c.l.b16 %v351
      %v1747 = vunpack.c.h.b16 %v351
      %v1748 = vunpack.c.l.b16 %v352
      %v1749 = vunpack.c.l.b16 %v353
      %v1750 = vunpack.c.h.b16 %v353
      %v1751 = vunpack.c.l.b16 %v354
      %v1752 = vunpack.c.l.b16 %v355
      %v1753 = vunpack.c.h.b16 %v355
      %v1754 = vunpack.c.l.b16 %v356
      %v1755 = vunpack.c.l.b16 %v357
      %v1756 = vunpack.c.h.b16 %v357
      %v1757 = vunpack.c.l.b16 %v358
      %v1758 = vunpack.c.l.b16 %v359
      %v1759 = vunpack.c.h.b16 %v359
      %v1760 = vunpack.c.l.b16 %v360
      %v1761 = vunpack.c.l.b16 %v361
      %v1762 = vunpack.c.h.b16 %v361
      %v1763 = vunpack.c.l.b16 %v362
      %v1764 = vunpack.c.l.b16 %v363
      %v1765 = vunpack.c.h.b16 %v363
      %v1766 = vunpack.c.l.b16 %v364
      %v1767 = vunpack.c.l.b16 %v365
      %v1768 = vunpack.c.h.b16 %v365
      %v1769 = vunpack.c.l.b16 %v366
      %v1770 = vunpack.c.l.b16 %v367
      %v1771 = vunpack.c.h.b16 %v367
      %v1772 = vunpack.c.l.b16 %v368
      %v1773 = vunpack.c.l.b16 %v369
      %v1774 = vunpack.c.h.b16 %v369
      %v1775 = vunpack.c.l.b16 %v370
      %v1776 = vunpack.c.l.b16 %v371
      %v1777 = vunpack.c.h.b16 %v371
      %v1778 = vunpack.c.l.b16 %v372
      %v1779 = vunpack.c.l.b16 %v373
      %v1780 = vunpack.c.h.b16 %v373
      %v1781 = vunpack.c.l.b16 %v374
      %v1782 = vunpack.c.l.b16 %v375
      %v1783 = vunpack.c.h.b16 %v375
      %v1784 = vunpack.c.l.b16 %v376
      %v1785 = vunpack.c.l.b16 %v377
      %v1786 = vunpack.c.h.b16 %v377
      %v1787 = vunpack.c.l.b16 %v378
      %v1788 = vunpack.c.l.b16 %v379
      %v1789 = vunpack.c.h.b16 %v379
      %v1790 = vunpack.c.l.b16 %v380
      %v1791 = vunpack.c.l.b16 %v381
      %v1792 = vunpack.c.h.b16 %v381
      %v1793 = vunpack.c.l.b16 %v382
      %v1794 = vunpack.c.l.b16 %v383
      %v1795 = vunpack.c.h.b16 %v383
      %v1796 = vunpack.c.l.b16 %v384
      %v1797 = vunpack.c.l.b16 %v385
      %v1798 = vunpack.c.h.b16 %v385
      %v1799 = vunpack.c.l.b16 %v386
      %v1800 = vunpack.c.l.b16 %v387
      %v1801 = vunpack.c.h.b16 %v387
      %v1802 = vunpack.c.l.b16 %v388
      %v1803 = vunpack.c.l.b16 %v389
      %v1804 = vunpack.c.h.b16 %v389
      %v1805 = vunpack.c.l.b16 %v390
      %v1806 = vunpack.c.l.b16 %v391
      %v1807 = vunpack.c.h.b16 %v391
      %v1808 = vunpack.c.l.b16 %v392
      %v1809 = vunpack.c.l.b16 %v393
      %v1810 = vunpack.c.h.b16 %v393
      %v1811 = vunpack.c.l.b16 %v394
      %v1812 = vunpack.c.l.b16 %v395
      %v1813 = vunpack.c.h.b16 %v395
      %v1814 = vunpack.c.l.b16 %v396
      %v1815 = vunpack.c.l.b16 %v397
      %v1816 = vunpack.c.h.b16 %v397
      %v1817 = vunpack.c.l.b16 %v398
      %v1818 = vunpack.c.l.b16 %v399
      %v1819 = vunpack.c.h.b16 %v399
      %v1820 = vunpack.c.l.b16 %v400
      %v1821 = vunpack.c.l.b16 %v401
      %v1822 = vunpack.c.h.b16 %v401
      %v1823 = vunpack.c.l.b16 %v402
      %v1824 = vunpack.c.l.b16 %v403
      %v1825 = vunpack.c.h.b16 %v403
      %v1826 = vunpack.c.l.b16 %v404
      %v1827 = vunpack.c.l.b16 %v405
      %v1828 = vunpack.c.h.b16 %v405
      %v1829 = vunpack.c.l.b16 %v406
      %v1830 = vunpack.c.l.b16 %v407
      %v1831 = vunpack.c.h.b16 %v407
      %v1832 = vunpack.c.l.b16 %v408
      %v1833 = vunpack.c.l.b16 %v409
      %v1834 = vunpack.c.h.b16 %v409
      %v1835 = vunpack.c.l.b16 %v410
      %v1836 = vunpack.c.l.b16 %v411
      %v1837 = vunpack.c.h.b16 %v411
      %v1838 = vunpack.c.l.b16 %v412
      %v1839 = vunpack.c.l.b16 %v413
      %v1840 = vunpack.c.h.b16 %v413
      %v1841 = vunpack.c.l.b16 %v414
      %v1842 = vunpack.c.l.b16 %v415
      %v1843 = vunpack.c.h.b16 %v415
      %v1844 = vunpack.c.l.b16 %v416
      %v1845 = vunpack.c.l.b16 %v417
      %v1846 = vunpack.c.h.b16 %v417
      %v1847 = vunpack.c.l.b16 %v418
      %v1848 = vunpack.c.l.b16 %v419
      %v1849 = vunpack.c.h.b16 %v419
      %v1850 = vunpack.c.l.b16 %v420
      %v1851 = vunpack.c.l.b16 %v421
      %v1852 = vunpack.c.h.b16 %v421
      %v1853 = vunpack.c.l.b16 %v422
      %v1854 = vunpack.c.l.b16 %v423
      %v1855 = vunpack.c.h.b16 %v423
      %v1856 = vunpack.c.l.b16 %v424
      %v1857 = vunpack.c.l.b16 %v425
      %v1858 = vunpack.c.h.b16 %v425
      %v1859 = vunpack.c.l.b16 %v426
      %v1860 = vunpack.c.l.b16 %v427
      %v1861 = vunpack.c.h.b16 %v427
      %v1862 = vunpack.c.l.b16 %v428
      %v1863 = vunpack.c.l.b16 %v429
      %v1864 = vunpack.c.h.b16 %v429
      %v1865 = vunpack.c.l.b16 %v430
      %v1866 = vunpack.c.l.b16 %v431
      %v1867 = vunpack.c.h.b16 %v431
      %v1868 = vunpack.c.l.b16 %v432
      %v1869 = vunpack.c.l.b16 %v433
      %v1870 = vunpack.c.h.b16 %v433
      %v1871 = vunpack.c.l.b16 %v434
      %v1872 = vunpack.c.l.b16 %v435
      %v1873 = vunpack.c.h.b16 %v435
      %v1874 = vunpack.c.l.b16 %v436
      %v1875 = vunpack.c.l.b16 %v437
      %v1876 = vunpack.c.h.b16 %v437
      %v1877 = vunpack.c.l.b16 %v438
      %v1878 = vunpack.c.l.b16 %v439
      %v1879 = vunpack.c.h.b16 %v439
      %v1880 = vunpack.c.l.b16 %v440
      %v1881 = vunpack.c.l.b16 %v441
      %v1882 = vunpack.c.h.b16 %v441
      %v1883 = vunpack.c.l.b16 %v442
      %v1884 = vunpack.c.l.b16 %v443
      %v1885 = vunpack.c.h.b16 %v443
      %v1886 = vunpack.c.l.b16 %v444
      %v1887 = vunpack.c.l.b16 %v445
      %v1888 = vunpack.c.h.b16 %v445
      %v1889 = vunpack.c.l.b16 %v446
      %v1890 = vunpack.c.l.b16 %v447
      %v1891 = vunpack.c.h.b16 %v447
      %v1892 = vunpack.c.l.b16 %v448
      %v1893 = vunpack.c.l.b16 %v449
      %v1894 = vunpack.c.h.b16 %v449
      %v1895 = vunpack.c.l.b16 %v450
      %v1896 = vunpack.c.l.b16 %v451
      %v1897 = vunpack.c.h.b16 %v451
      %v1898 = vunpack.c.l.b16 %v452
      %v1899 = vunpack.c.l.b16 %v453
      %v1900 = vunpack.c.h.b16 %v453
      %v1901 = vunpack.c.l.b16 %v454
      %v1902 = vunpack.c.l.b16 %v455
      %v1903 = vunpack.c.h.b16 %v455
      %v1904 = vunpack.c.l.b16 %v456
      %v1905 = vunpack.c.l.b16 %v457
      %v1906 = vunpack.c.h.b16 %v457
      %v1907 = vunpack.c.l.b16 %v458
      %v1908 = vunpack.c.l.b16 %v459
      %v1909 = vunpack.c.h.b16 %v459
      %v1910 = vunpack.c.l.b16 %v460
      %v1911 = vunpack.c.l.b16 %v461
      %v1912 = vunpack.c.h.b16 %v461
      %v1913 = vunpack.c.l.b16 %v462
      %v1914 = vunpack.c.l.b16 %v463
      %v1915 = vunpack.c.h.b16 %v463
      %v1916 = vunpack.c.l.b16 %v464
      %v1917 = vunpack.c.l.b16 %v465
      %v1918 = vunpack.c.h.b16 %v465
      %v1919 = vunpack.c.l.b16 %v466
      %v1920 = vunpack.c.l.b16 %v467
      %v1921 = vunpack.c.h.b16 %v467
      %v1922 = vunpack.c.l.b16 %v468
      %v1923 = vunpack.c.l.b16 %v469
      %v1924 = vunpack.c.h.b16 %v469
      %v1925 = vunpack.c.l.b16 %v470
      %v1926 = vunpack.c.l.b16 %v471
      %v1927 = vunpack.c.h.b16 %v471
      %v1928 = vunpack.c.l.b16 %v472
      %v1929 = vunpack.c.l.b16 %v473
      %v1930 = vunpack.c.h.b16 %v473
      %v1931 = vunpack.c.l.b16 %v474
      %v1932 = vunpack.c.l.b16 %v475
      %v1933 = vunpack.c.h.b16 %v475
      %v1934 = vunpack.c.l.b16 %v476
      %v1935 = vunpack.c.l.b16 %v477
      %v1936 = vunpack.c.h.b16 %v477
      %v1937 = vunpack.c.l.b16 %v478
      %v1938 = vunpack.c.l.b16 %v479
      %v1939 = vunpack.c.h.b16 %v479
      %v1940 = vunpack.c.l.b16 %v480
      %v1941 = vunpack.c.l.b16 %v481
      %v1942 = vunpack.c.h.b16 %v481
      %v1943 = vunpack.c.l.b16 %v482
      %v1944 = vunpack.c.l.b16 %v483
      %v1945 = vunpack.c.h.b16 %v483
      %v1946 = vunpack.c.l.b16 %v484
      %v1947 = vunpack.c.l.b16 %v485
      %v1948 = vunpack.c.h.b16 %v485
      %v1949 = vunpack.c.l.b16 %v486
      %v1950 = vunpack.c.l.b16 %v487
      %v1951 = vunpack.c.h.b16 %v487
      %v1952 = vunpack.c.l.b16 %v488
      %v1953 = vunpack.c.l.b16 %v489
      %v1954 = vunpack.c.h.b16 %v489
      %v1955 = vunpack.c.l.b16 %v490
      %v1956 = vunpack.c.l.b16 %v491
      %v1957 = vunpack.c.h.b16 %v491
      %v1958 = vunpack.c.l.b16 %v492
      %v1959 = vunpack.c.l.b16 %v493
      %v1960 = vunpack.c.h.b16 %v493
      %v1961 = vunpack.c.l.b16 %v494
      %v1962 = vunpack.c.l.b16 %v495
      %v1963 = vunpack.c.h.b16 %v495
      %v1964 = vunpack.c.l.b16 %v496
      %v1965 = vunpack.c.l.b16 %v497
      %v1966 = vunpack.c.h.b16 %v497
      %v1967 = vunpack.c.l.b16 %v498
      %v1968 = vunpack.c.l.b16 %v499
      %v1969 = vunpack.c.h.b16 %v499
      %v1970 = vunpack.c.l.b16 %v500
      %v1971 = vunpack.c.l.b16 %v501
      %v1972 = vunpack.c.h.b16 %v501
      %v1973 = vunpack.c.l.b16 %v502
      %v1974 = vunpack.c.l.b16 %v503
      %v1975 = vunpack.c.h.b16 %v503
      %v1976 = vunpack.c.l.b16 %v504
      %v1977 = vunpack.c.l.b16 %v505
      %v1978 = vunpack.c.h.b16 %v505
      %v1979 = vunpack.c.l.b16 %v506
      %v1980 = vunpack.c.l.b16 %v507
      %v1981 = vunpack.c.h.b16 %v507
      %v1982 = vunpack.c.l.b16 %v508
      %v1983 = vunpack.c.l.b16 %v509
      %v1984 = vunpack.c.h.b16 %v509
      %v1985 = vunpack.c.l.b16 %v510
      %v1986 = vunpack.c.l.b16 %v511
      %v1987 = vunpack.c.h.b16 %v511
      %v1988 = vunpack.c.l.b16 %v512
      %v1989 = vunpack.c.l.b16 %v513
      %v1990 = vunpack.c.h.b16 %v513
      %v1991 = vunpack.c.l.b16 %v514
      %v1992 = vunpack.c.l.b16 %v515
      %v1993 = vunpack.c.h.b16 %v515
      %v1994 = vunpack.c.l.b16 %v516
      %v1995 = vunpack.c.l.b16 %v517
      %v1996 = vunpack.c.h.b16 %v517
      %v1997 = vunpack.c.l.b16 %v518
      %v1998 = vunpack.c.l.b16 %v519
      %v1999 = vunpack.c.h.b16 %v519
      %v2000 = vunpack.c.l.b16 %v520
      %v2001 = vunpack.c.l.b16 %v521
      %v2002 = vunpack.c.h.b16 %v521
      %v2003 = vunpack.c.l.b16 %v522
      %v2004 = vunpack.c.l.b16 %v523
      %v2005 = vunpack.c.h.b16 %v523
      %v2006 = vunpack.c.l.b16 %v524
      %v2007 = vunpack.c.l.b16 %v525
      %v2008 = vunpack.c.h.b16 %v525
      %v2009 = vunpack.c.l.b16 %v526
      %v2010 = vunpack.c.l.b16 %v527
      %v2011 = vunpack.c.h.b16 %v527
      %v2012 = vunpack.c.l.b16 %v528
      %v2013 = vunpack.c.l.b16 %v529
      %v2014 = vunpack.c.h.b16 %v529
      %v2015 = vunpack.c.l.b16 %v530
      %v2016 = vunpack.c.l.b16 %v531
      %v2017 = vunpack.c.h.b16 %v531
      %v2018 = vunpack.c.l.b16 %v532
      %v2019 = vunpack.c.l.b16 %v533
      %v2020 = vunpack.c.h.b16 %v533
      %v2021 = vunpack.c.l.b16 %v534
      %v2022 = vunpack.c.l.b16 %v535
      %v2023 = vunpack.c.h.b16 %v535
      %v2024 = vunpack.c.l.b16 %v536
      %v2025 = vunpack.c.l.b16 %v537
      %v2026 = vunpack.c.h.b16 %v537
      %v2027 = vunpack.c.l.b16 %v538
      %v2028 = vunpack.c.l.b16 %v539
      %v2029 = vunpack.c.h.b16 %v539
      %v2030 = vunpack.c.l.b16 %v540
      %v2031 = vunpack.c.l.b16 %v541
      %v2032 = vunpack.c.h.b16 %v541
      %v2033 = vunpack.c.l.b16 %v542
      %v2034 = vunpack.c.l.b16 %v543
      %v2035 = vunpack.c.h.b16 %v543
      %v2036 = vunpack.c.l.b16 %v544
      %v2037 = vunpack.c.l.b16 %v545
      %v2038 = vunpack.c.h.b16 %v545
      %v2039 = vunpack.c.l.b16 %v546
      %v2040 = vunpack.c.l.b16 %v547
      %v2041 = vunpack.c.h.b16 %v547
      %v2042 = vunpack.c.l.b16 %v548
      %v2043 = vunpack.c.l.b16 %v549
      %v2044 = vunpack.c.h.b16 %v549
      %v2045 = vunpack.c.l.b16 %v550
      %v2046 = vunpack.c.l.b16 %v551
      %v2047 = vunpack.c.h.b16 %v551
      %v2048 = vunpack.c.l.b16 %v552
      %v2049 = vunpack.c.l.b16 %v553
      %v2050 = vunpack.c.h.b16 %v553
      %v2051 = vunpack.c.l.b16 %v554
      %v2052 = vunpack.c.l.b16 %v555
      %v2053 = vunpack.c.h.b16 %v555
      %v2054 = vunpack.c.l.b16 %v556
      %v2055 = vunpack.c.l.b16 %v557
      %v2056 = vunpack.c.h.b16 %v557
      %v2057 = vunpack.c.l.b16 %v558
      %v2058 = vunpack.c.l.b16 %v559
      %v2059 = vunpack.c.h.b16 %v559
      %v2060 = vunpack.c.l.b16 %v560
      %v2061 = vunpack.c.l.b16 %v561
      %v2062 = vunpack.c.h.b16 %v561
      %v2063 = vunpack.c.l.b16 %v562
      %v2064 = vunpack.c.l.b16 %v563
      %v2065 = vunpack.c.h.b16 %v563
      %v2066 = vunpack.c.l.b16 %v564
      %v2067 = vunpack.c.l.b16 %v565
      %v2068 = vunpack.c.h.b16 %v565
      %v2069 = vunpack.c.l.b16 %v566
      %v2070 = vunpack.c.l.b16 %v567
      %v2071 = vunpack.c.h.b16 %v567
      %v2072 = vunpack.c.l.b16 %v568
      %v2073 = vunpack.c.l.b16 %v569
      %v2074 = vunpack.c.h.b16 %v569
      %v2075 = vunpack.c.l.b16 %v570
      %v2076 = vunpack.c.l.b16 %v571
      %v2077 = vunpack.c.h.b16 %v571
      %v2078 = vunpack.c.l.b16 %v572
      %v2079 = vunpack.c.l.b16 %v573
      %v2080 = vunpack.c.h.b16 %v573
      %v2081 = vunpack.c.l.b16 %v574
      %v2082 = vunpack.c.l.b16 %v575
      %v2083 = vunpack.c.h.b16 %v575
      %v2084 = vunpack.c.l.b16 %v576
      %v2085 = vunpack.c.l.b16 %v577
      %v2086 = vunpack.c.h.b16 %v577
      %v2087 = vunpack.c.l.b16 %v578
      %v2088 = vunpack.c.l.b16 %v579
      %v2089 = vunpack.c.h.b16 %v579
      %v2090 = vunpack.c.l.b16 %v580
      %v2091 = vunpack.c.l.b16 %v581
      %v2092 = vunpack.c.h.b16 %v581
      %v2093 = vunpack.c.l.b16 %v582
      %v2094 = vunpack.c.l.b16 %v583
      %v2095 = vunpack.c.h.b16 %v583
      %v2096 = vunpack.c.l.b16 %v584
      %v2097 = vunpack.c.l.b16 %v585
      %v2098 = vunpack.c.h.b16 %v585
      %v2099 = vunpack.c.l.b16 %v586
      %v2100 = vunpack.c.l.b16 %v587
      %v2101 = vunpack.c.h.b16 %v587
      %v2102 = vunpack.c.l.b16 %v588
      %v2103 = vunpack.c.l.b16 %v589
      %v2104 = vunpack.c.h.b16 %v589
      %v2105 = vunpack.c.l.b16 %v590
      %v2106 = vunpack.c.l.b16 %v591
      %v2107 = vunpack.c.h.b16 %v591
      %v2108 = vunpack.c.l.b16 %v592
      %v2109 = vunpack.c.l.b16 %v593
      %v2110 = vunpack.c.h.b16 %v593
      %v2111 = vunpack.c.l.b16 %v594
      %v2112 = vunpack.c.l.b16 %v595
      %v2113 = vunpack.c.h.b16 %v595
      %v2114 = vunpack.c.l.b16 %v596
      %v2115 = vunpack.c.l.b16 %v597
      %v2116 = vunpack.c.h.b16 %v597
      %v2117 = vunpack.c.l.b16 %v598
      %v2118 = vunpack.c.l.b16 %v599
      %v2119 = vunpack.c.h.b16 %v599
      %v2120 = vunpack.c.l.b16 %v600
      %v2121 = vunpack.c.l.b16 %v601
      %v2122 = vunpack.c.h.b16 %v601
      %v2123 = vunpack.c.l.b16 %v602
      %v2124 = vunpack.c.l.b16 %v603
      %v2125 = vunpack.c.h.b16 %v603
      %v2126 = vunpack.c.l.b16 %v604
      %v2127 = vunpack.c.l.b16 %v605
      %v2128 = vunpack.c.h.b16 %v605
      %v2129 = vunpack.c.l.b16 %v606
      %v2130 = vunpack.c.l.b16 %v607
      %v2131 = vunpack.c.h.b16 %v607
      %v2132 = vunpack.c.l.b16 %v608
      %v2133 = vunpack.c.l.b16 %v609
      %v2134 = vunpack.c.h.b16 %v609
      %v2135 = vunpack.c.l.b16 %v610
      %v2136 = vunpack.c.l.b16 %v611
      %v2137 = vunpack.c.h.b16 %v611
      %v2138 = vunpack.c.l.b16 %v612
      %v2139 = vunpack.c.l.b16 %v613
      %v2140 = vunpack.c.h.b16 %v613
      %v2141 = vunpack.c.l.b16 %v614
      %v2142 = vunpack.c.l.b16 %v615
      %v2143 = vunpack.c.h.b16 %v615
      %v2144 = vunpack.c.l.b16 %v616
      %v2145 = vunpack.c.l.b16 %v617
      %v2146 = vunpack.c.h.b16 %v617
      %v2147 = vunpack.c.l.b16 %v618
      %v2148 = vunpack.c.l.b16 %v619
      %v2149 = vunpack.c.h.b16 %v619
      %v2150 = vunpack.c.l.b16 %v620
      %v2151 = vunpack.c.l.b16 %v621
      %v2152 = vunpack.c.h.b16 %v621
      %v2153 = vunpack.c.l.b16 %v622
      %v2154 = vunpack.c.l.b16 %v623
      %v2155 = vunpack.c.h.b16 %v623
      %v2156 = vunpack.c.l.b16 %v624
      %v2157 = vunpack.c.l.b16 %v625
      %v2158 = vunpack.c.h.b16 %v625
      %v2159 = vunpack.c.l.b16 %v626
      %v2160 = vunpack.c.l.b16 %v627
      %v2161 = vunpack.c.h.b16 %v627
      %v2162 = vunpack.c.l.b16 %v628
      %v2163 = vunpack.c.l.b16 %v629
      %v2164 = vunpack.c.h.b16 %v629
      %v2165 = vunpack.c.l.b16 %v630
      %v2166 = vunpack.c.l.b16 %v631
      %v2167 = vunpack.c.h.b16 %v631
      %v2168 = vunpack.c.l.b16 %v632
      %v2169 = vunpack.c.l.b16 %v633
      %v2170 = vunpack.c.h.b16 %v633
      %v2171 = vunpack.c.l.b16 %v634
      %v2172 = vunpack.c.l.b16 %v635
      %v2173 = vunpack.c.h.b16 %v635
      %v2174 = vunpack.c.l.b16 %v636
      %v2175 = vunpack.c.l.b16 %v637
      %v2176 = vunpack.c.h.b16 %v637
      %v2177 = vunpack.c.l.b16 %v638
      %v2178 = vunpack.c.l.b16 %v639
      %v2179 = vunpack.c.h.b16 %v639
      %v2180 = vunpack.c.l.b16 %v640
      %v2181 = vunpack.c.l.b16 %v641
      %v2182 = vunpack.c.h.b16 %v641
      %v2183 = vunpack.c.l.b16 %v642
      %v2184 = vunpack.c.l.b16 %v643
      %v2185 = vunpack.c.h.b16 %v643
      %v2186 = vunpack.c.l.b16 %v644
      %v2187 = vunpack.c.l.b16 %v645
      %v2188 = vunpack.c.h.b16 %v645
      %v2189 = vunpack.c.l.b16 %v646
      %v2190 = vunpack.c.l.b16 %v647
      %v2191 = vunpack.c.h.b16 %v647
      %v2192 = vunpack.c.l.b16 %v648
      %v2193 = vunpack.c.l.b16 %v649
      %v2194 = vunpack.c.h.b16 %v649
      %v2195 = vunpack.c.l.b16 %v650
      %v2196 = vunpack.c.l.b16 %v651
      %v2197 = vunpack.c.h.b16 %v651
      %v2198 = vunpack.c.l.b16 %v652
      %v2199 = vunpack.c.l.b16 %v653
      %v2200 = vunpack.c.h.b16 %v653
      %v2201 = vunpack.c.l.b16 %v654
      %v2202 = vunpack.c.l.b16 %v655
      %v2203 = vunpack.c.h.b16 %v655
      %v2204 = vunpack.c.l.b16 %v656
      %v2205 = vunpack.c.l.b16 %v657
      %v2206 = vunpack.c.h.b16 %v657
      %v2207 = vunpack.c.l.b16 %v658
      %v2208 = vunpack.c.l.b16 %v659
      %v2209 = vunpack.c.h.b16 %v659
      %v2210 = vunpack.c.l.b16 %v660
      %v2211 = vunpack.c.l.b16 %v661
      %v2212 = vunpack.c.h.b16 %v661
      %v2213 = vunpack.c.l.b16 %v662
      %v2214 = vunpack.c.l.b16 %v663
      %v2215 = vunpack.c.h.b16 %v663
      %v2216 = vunpack.c.l.b16 %v664
      %v2217 = vunpack.c.l.b16 %v665
      %v2218 = vunpack.c.h.b16 %v665
      %v2219 = vunpack.c.l.b16 %v666
      %v2220 = vunpack.c.l.b16 %v667
      %v2221 = vunpack.c.h.b16 %v667
      %v2222 = vunpack.c.l.b16 %v668
      %v2223 = vunpack.c.l.b16 %v669
      %v2224 = vunpack.c.h.b16 %v669
      %v2225 = vunpack.c.l.b16 %v670
      %v2226 = vunpack.c.l.b16 %v671
      %v2227 = vunpack.c.h.b16 %v671
      %v2228 = vunpack.c.l.b16 %v672
      %v2229 = vunpack.c.l.b16 %v673
      %v2230 = vunpack.c.h.b16 %v673
      %v2231 = vunpack.c.l.b16 %v674
      %v2232 = vunpack.c.l.b16 %v675
      %v2233 = vunpack.c.h.b16 %v675
      %v2234 = vunpack.c.l.b16 %v676
      %v2235 = vunpack.c.l.b16 %v677
      %v2236 = vunpack.c.h.b16 %v677
      %v2237 = vunpack.c.l.b16 %v678
      %v2238 = vunpack.c.l.b16 %v679
      %v2239 = vunpack.c.h.b16 %v679
      %v2240 = vunpack.c.l.b16 %v680
      %v2241 = vunpack.c.l.b16 %v681
      %v2242 = vunpack.c.h.b16 %v681
      %v2243 = vunpack.c.l.b16 %v682
      %v2244 = vunpack.c.l.b16 %v683
      %v2245 = vunpack.c.h.b16 %v683
      %v2246 = vunpack.c.l.b16 %v684
      %v2247 = vunpack.c.l.b16 %v685
      %v2248 = vunpack.c.h.b16 %v685
      %v2249 = vunpack.c.l.b16 %v686
      %v2250 = vunpack.c.l.b16 %v687
      %v2251 = vunpack.c.h.b16 %v687
      %v2252 = vunpack.c.l.b16 %v688
      %v2253 = vunpack.c.l.b16 %v689
      %v2254 = vunpack.c.h.b16 %v689
      %v2255 = vunpack.c.l.b16 %v690
      %v2256 = vunpack.c.l.b16 %v691
      %v2257 = vunpack.c.h.b16 %v691
      %v2258 = vunpack.c.l.b16 %v692
      %v2259 = vunpack.c.l.b16 %v693
      %v2260 = vunpack.c.h.b16 %v693
      %v2261 = vunpack.c.l.b16 %v694
      %v2262 = vunpack.c.l.b16 %v695
      %v2263 = vunpack.c.h.b16 %v695
      %v2264 = vunpack.c.l.b16 %v696
      %v2265 = vunpack.c.l.b16 %v697
      %v2266 = vunpack.c.h.b16 %v697
      %v2267 = vunpack.c.l.b16 %v698
      %v2268 = vunpack.c.l.b16 %v699
      %v2269 = vunpack.c.h.b16 %v699
      %v2270 = vunpack.c.l.b16 %v700
      %v2271 = vunpack.c.l.b16 %v701
      %v2272 = vunpack.c.h.b16 %v701
      %v2273 = vunpack.c.l.b16 %v702
      %v2274 = vunpack.c.l.b16 %v703
      %v2275 = vunpack.c.h.b16 %v703
      %v2276 = vunpack.c.l.b16 %v704
      %v2277 = vunpack.c.l.b16 %v705
      %v2278 = vunpack.c.h.b16 %v705
      %v2279 = vunpack.c.l.b16 %v706
      %v2280 = vunpack.c.l.b16 %v707
      %v2281 = vunpack.c.h.b16 %v707
      %v2282 = vunpack.c.l.b16 %v708
      %v2283 = vunpack.c.l.b16 %v709
      %v2284 = vunpack.c.h.b16 %v709
      %v2285 = vunpack.c.l.b16 %v710
      %v2286 = vunpack.c.l.b16 %v711
      %v2287 = vunpack.c.h.b16 %v711
      %v2288 = vunpack.c.l.b16 %v712
      %v2289 = vunpack.c.l.b16 %v713
      %v2290 = vunpack.c.h.b16 %v713
      %v2291 = vunpack.c.l.b16 %v714
      %v2292 = vunpack.c.l.b16 %v715
      %v2293 = vunpack.c.h.b16 %v715
      %v2294 = vunpack.c.l.b16 %v716
      %v2295 = vunpack.c.l.b16 %v717
      %v2296 = vunpack.c.h.b16 %v717
      %v2297 = vunpack.c.l.b16 %v718
      %v2298 = vunpack.c.l.b16 %v719
      %v2299 = vunpack.c.h.b16 %v719
      %v2300 = vunpack.c.l.b16 %v720
      %v2301 = vunpack.c.l.b16 %v721
      %v2302 = vunpack.c.h.b16 %v721
      %v2303 = vunpack.c.l.b16 %v722
      %v2304 = vunpack.c.l.b16 %v723
      %v2305 = vunpack.c.h.b16 %v723
      %v2306 = vunpack.c.l.b16 %v724
      %v2307 = vunpack.c.l.b16 %v725
      %v2308 = vunpack.c.h.b16 %v725
      %v2309 = vunpack.c.l.b16 %v726
      %v2310 = vunpack.c.l.b16 %v727
      %v2311 = vunpack.c.h.b16 %v727
      %v2312 = vunpack.c.l.b16 %v728
      %v2313 = vunpack.c.l.b16 %v729
      %v2314 = vunpack.c.h.b16 %v729
      %v2315 = vunpack.c.l.b16 %v730
      %v2316 = vunpack.c.l.b16 %v731
      %v2317 = vunpack.c.h.b16 %v731
      %v2318 = vunpack.c.l.b16 %v732
      %v2319 = vunpack.c.l.b16 %v733
      %v2320 = vunpack.c.h.b16 %v733
      %v2321 = vunpack.c.l.b16 %v734
      %v2322 = vunpack.c.l.b16 %v735
      %v2323 = vunpack.c.h.b16 %v735
      %v2324 = vunpack.c.l.b16 %v736
      %v2325 = vunpack.c.l.b16 %v737
      %v2326 = vunpack.c.h.b16 %v737
      %v2327 = vunpack.c.l.b16 %v738
      %v2328 = vunpack.c.l.b16 %v739
      %v2329 = vunpack.c.h.b16 %v739
      %v2330 = vunpack.c.l.b16 %v740
      %v2331 = vunpack.c.l.b16 %v741
      %v2332 = vunpack.c.h.b16 %v741
      %v2333 = vunpack.c.l.b16 %v742
      %v2334 = vunpack.c.l.b16 %v743
      %v2335 = vunpack.c.h.b16 %v743
      %v2336 = vunpack.c.l.b16 %v744
      %v2337 = vunpack.c.l.b16 %v745
      %v2338 = vunpack.c.h.b16 %v745
      %v2339 = vunpack.c.l.b16 %v746
      %v2340 = vunpack.c.l.b16 %v747
      %v2341 = vunpack.c.h.b16 %v747
      %v2342 = vunpack.c.l.b16 %v748
      %v2343 = vunpack.c.l.b16 %v749
      %v2344 = vunpack.c.h.b16 %v749
      %v2345 = vunpack.c.l.b16 %v750
      %v2346 = vunpack.c.l.b16 %v751
      %v2347 = vunpack.c.h.b16 %v751
      %v2348 = vunpack.c.l.b16 %v752
      %v2349 = vunpack.c.l.b16 %v753
      %v2350 = vunpack.c.h.b16 %v753
      %v2351 = vunpack.c.l.b16 %v754
      %v2352 = vunpack.c.l.b16 %v755
      %v2353 = vunpack.c.h.b16 %v755
      %v2354 = vunpack.c.l.b16 %v756
      %v2355 = vunpack.c.l.b16 %v757
      %v2356 = vunpack.c.h.b16 %v757
      %v2357 = vunpack.c.l.b16 %v758
      %v2358 = vunpack.c.l.b16 %v759
      %v2359 = vunpack.c.h.b16 %v759
      %v2360 = vunpack.c.l.b16 %v760
      %v2361 = vunpack.c.l.b16 %v761
      %v2362 = vunpack.c.h.b16 %v761
      %v2363 = vunpack.c.l.b16 %v762
      %v2364 = vunpack.c.l.b16 %v763
      %v2365 = vunpack.c.h.b16 %v763
      %v2366 = vunpack.c.l.b16 %v764
      %v2367 = vunpack.c.l.b16 %v765
      %v2368 = vunpack.c.h.b16 %v765
      %v2369 = vunpack.c.l.b16 %v766
      %v2370 = vunpack.c.l.b16 %v767
      %v2371 = vunpack.c.h.b16 %v767
      %v2372 = vunpack.c.l.b16 %v768
      %v2373 = vunpack.c.l.b16 %v769
      %v2374 = vunpack.c.h.b16 %v769
      %v2375 = vunpack.c.l.b16 %v770
      %v2376 = vunpack.c.l.b16 %v771
      %v2377 = vunpack.c.h.b16 %v771
      %v2378 = vunpack.c.l.b16 %v772
      %v2379 = vunpack.c.l.b16 %v773
      %v2380 = vunpack.c.h.b16 %v773
      %v2381 = vunpack.c.l.b16 %v774
      %v2382 = vunpack.c.l.b16 %v775
      %v2383 = vunpack.c.h.b16 %v775
      %v2384 = vunpack.c.l.b16 %v776
      %v2385 = vunpack.c.l.b16 %v777
      %v2386 = vunpack.c.h.b16 %v777
      %v2387 = vunpack.c.l.b16 %v778
      %v2388 = vunpack.c.l.b16 %v779
      %v2389 = vunpack.c.h.b16 %v779
      %v2390 = vunpack.c.l.b16 %v780
      %v2391 = vunpack.c.l.b16 %v781
      %v2392 = vunpack.c.h.b16 %v781
      %v2393 = vunpack.c.l.b16 %v782
      %v2394 = vunpack.c.l.b16 %v783
      %v2395 = vunpack.c.h.b16 %v783
      %v2396 = vunpack.c.l.b16 %v784
      %v2397 = vunpack.c.l.b16 %v785
      %v2398 = vunpack.c.h.b16 %v785
      %v2399 = vunpack.c.l.b16 %v786
      %v2400 = vunpack.c.l.b16 %v787
      %v2401 = vunpack.c.h.b16 %v787
      %v2402 = vunpack.c.l.b16 %v788
      %v2403 = vunpack.c.l.b16 %v789
      %v2404 = vunpack.c.h.b16 %v789
      %v2405 = vunpack.c.l.b16 %v790
      %v2406 = vunpack.c.l.b16 %v791
      %v2407 = vunpack.c.h.b16 %v791
      %v2408 = vunpack.c.l.b16 %v792
      %v2409 = vunpack.c.l.b16 %v793
      %v2410 = vunpack.c.h.b16 %v793
      %v2411 = vunpack.c.l.b16 %v794
      %v2412 = vunpack.c.l.b16 %v795
      %v2413 = vunpack.c.h.b16 %v795
      %v2414 = vunpack.c.l.b16 %v796
      %v2415 = vunpack.c.l.b16 %v797
      %v2416 = vunpack.c.h.b16 %v797
      %v2417 = vunpack.c.l.b16 %v798
      %v2418 = vunpack.c.l.b16 %v799
      %v2419 = vunpack.c.h.b16 %v799
      %v2420 = vunpack.c.l.b16 %v800
      %v2421 = vunpack.c.l.b16 %v801
      %v2422 = vunpack.c.h.b16 %v801
      %v2423 = vunpack.c.l.b16 %v802
      %v2424 = vunpack.c.l.b16 %v803
      %v2425 = vunpack.c.h.b16 %v803
      %v2426 = vunpack.c.l.b16 %v804
      %v2427 = vunpack.c.l.b16 %v805
      %v2428 = vunpack.c.h.b16 %v805
      %v2429 = vunpack.c.l.b16 %v806
      %v2430 = vunpack.c.l.b16 %v807
      %v2431 = vunpack.c.h.b16 %v807
      %v2432 = vunpack.c.l.b16 %v808
      %v2433 = vunpack.c.l.b16 %v809
      %v2434 = vunpack.c.h.b16 %v809
      %v2435 = vunpack.c.l.b16 %v810
      %v2436 = vunpack.c.l.b16 %v811
      %v2437 = vunpack.c.h.b16 %v811
      %v2438 = vunpack.c.l.b16 %v812
      %v2439 = vunpack.c.l.b16 %v813
      %v2440 = vunpack.c.h.b16 %v813
      %v2441 = vunpack.c.l.b16 %v814
      %v2442 = vunpack.c.l.b16 %v815
      %v2443 = vunpack.c.h.b16 %v815
      %v2444 = vunpack.c.l.b16 %v816
      %v2445 = vunpack.c.l.b16 %v817
      %v2446 = vunpack.c.h.b16 %v817
      %v2447 = vunpack.c.l.b16 %v818
      %v2448 = vunpack.c.l.b16 %v819
      %v2449 = vunpack.c.h.b16 %v819
      %v2450 = vunpack.c.l.b16 %v820
      %v2451 = vunpack.c.l.b16 %v821
      %v2452 = vunpack.c.h.b16 %v821
      %v2453 = vunpack.c.l.b16 %v822
      %v2454 = vunpack.c.l.b16 %v823
      %v2455 = vunpack.c.h.b16 %v823
      %v2456 = vunpack.c.l.b16 %v824
      %v2457 = vunpack.c.l.b16 %v825
      %v2458 = vunpack.c.h.b16 %v825
      %v2459 = vunpack.c.l.b16 %v826
      %v2460 = vunpack.c.l.b16 %v827
      %v2461 = vunpack.c.h.b16 %v827
      %v2462 = vunpack.c.l.b16 %v828
      %v2463 = vunpack.c.l.b16 %v829
      %v2464 = vunpack.c.h.b16 %v829
      %v2465 = vunpack.c.l.b16 %v830
      %v2466 = vunpack.c.l.b16 %v831
      %v2467 = vunpack.c.h.b16 %v831
      %v2468 = vunpack.c.l.b16 %v832
      %v2469 = vunpack.c.l.b16 %v833
      %v2470 = vunpack.c.h.b16 %v833
      %v2471 = vunpack.c.l.b16 %v834
      %v2472 = vpack.c.b16 %v1611, %v1608
      %v2473 = vpack.c.b16 %v1612, %v1609
      %v2474 = vpack.c.b16 %v1613, %v1610
      %v2475 = vpack.c.b16 %v1617, %v1614
      %v2476 = vpack.c.b16 %v1618, %v1615
      %v2477 = vpack.c.b16 %v1619, %v1616
      %v2478 = vpack.c.b16 %v1623, %v1620
      %v2479 = vpack.c.b16 %v1624, %v1621
      %v2480 = vpack.c.b16 %v1625, %v1622
      %v2481 = vpack.c.b16 %v1629, %v1626
      %v2482 = vpack.c.b16 %v1630, %v1627
      %v2483 = vpack.c.b16 %v1631, %v1628
      %v2484 = vpack.c.b16 %v1635, %v1632
      %v2485 = vpack.c.b16 %v1636, %v1633
      %v2486 = vpack.c.b16 %v1637, %v1634
      %v2487 = vpack.c.b16 %v1641, %v1638
      %v2488 = vpack.c.b16 %v1642, %v1639
      %v2489 = vpack.c.b16 %v1643, %v1640
      %v2490 = vpack.c.b16 %v1647, %v1644
      %v2491 = vpack.c.b16 %v1648, %v1645
      %v2492 = vpack.c.b16 %v1649, %v1646
      %v2493 = vpack.c.b16 %v1653, %v1650
      %v2494 = vpack.c.b16 %v1654, %v1651
      %v2495 = vpack.c.b16 %v1655, %v1652
      %v2496 = vpack.c.b16 %v1659, %v1656
      %v2497 = vpack.c.b16 %v1660, %v1657
      %v2498 = vpack.c.b16 %v1661, %v1658
      %v2499 = vpack.c.b16 %v1665, %v1662
      %v2500 = vpack.c.b16 %v1666, %v1663
      %v2501 = vpack.c.b16 %v1667, %v1664
      %v2502 = vpack.c.b16 %v1671, %v1668
      %v2503 = vpack.c.b16 %v1672, %v1669
      %v2504 = vpack.c.b16 %v1673, %v1670
      %v2505 = vpack.c.b16 %v1677, %v1674
      %v2506 = vpack.c.b16 %v1678, %v1675
      %v2507 = vpack.c.b16 %v1679, %v1676
      %v2508 = vpack.c.b16 %v1683, %v1680
      %v2509 = vpack.c.b16 %v1684, %v1681
      %v2510 = vpack.c.b16 %v1685, %v1682
      %v2511 = vpack.c.b16 %v1689, %v1686
      %v2512 = vpack.c.b16 %v1690, %v1687
      %v2513 = vpack.c.b16 %v1691, %v1688
      %v2514 = vpack.c.b16 %v1695, %v1692
      %v2515 = vpack.c.b16 %v1696, %v1693
      %v2516 = vpack.c.b16 %v1697, %v1694
      %v2517 = vpack.c.b16 %v1701, %v1698
      %v2518 = vpack.c.b16 %v1702, %v1699
      %v2519 = vpack.c.b16 %v1703, %v1700
      %v2520 = vpack.c.b16 %v1707, %v1704
      %v2521 = vpack.c.b16 %v1708, %v1705
      %v2522 = vpack.c.b16 %v1709, %v1706
      %v2523 = vpack.c.b16 %v1713, %v1710
      %v2524 = vpack.c.b16 %v1714, %v1711
      %v2525 = vpack.c.b16 %v1715, %v1712
      %v2526 = vpack.c.b16 %v1719, %v1716
      %v2527 = vpack.c.b16 %v1720, %v1717
      %v2528 = vpack.c.b16 %v1721, %v1718
      %v2529 = vpack.c.b16 %v1725, %v1722
      %v2530 = vpack.c.b16 %v1726, %v1723
      %v2531 = vpack.c.b16 %v1727, %v1724
      %v2532 = vpack.c.b16 %v1731, %v1728
      %v2533 = vpack.c.b16 %v1732, %v1729
      %v2534 = vpack.c.b16 %v1733, %v1730
      %v2535 = vpack.c.b16 %v1737, %v1734
      %v2536 = vpack.c.b16 %v1738, %v1735
      %v2537 = vpack.c.b16 %v1739, %v1736
      %v2538 = vpack.c.b16 %v1743, %v1740
      %v2539 = vpack.c.b16 %v1744, %v1741
      %v2540 = vpack.c.b16 %v1745, %v1742
      %v2541 = vpack.c.b16 %v1749, %v1746
      %v2542 = vpack.c.b16 %v1750, %v1747
      %v2543 = vpack.c.b16 %v1751, %v1748
      %v2544 = vpack.c.b16 %v1755, %v1752
      %v2545 = vpack.c.b16 %v1756, %v1753
      %v2546 = vpack.c.b16 %v1757, %v1754
      %v2547 = vpack.c.b16 %v1761, %v1758
      %v2548 = vpack.c.b16 %v1762, %v1759
      %v2549 = vpack.c.b16 %v1763, %v1760
      %v2550 = vpack.c.b16 %v1767, %v1764
      %v2551 = vpack.c.b16 %v1768, %v1765
      %v2552 = vpack.c.b16 %v1769, %v1766
      %v2553 = vpack.c.b16 %v1773, %v1770
      %v2554 = vpack.c.b16 %v1774, %v1771
      %v2555 = vpack.c.b16 %v1775, %v1772
      %v2556 = vpack.c.b16 %v1779, %v1776
      %v2557 = vpack.c.b16 %v1780, %v1777
      %v2558 = vpack.c.b16 %v1781, %v1778
      %v2559 = vpack.c.b16 %v1785, %v1782
      %v2560 = vpack.c.b16 %v1786, %v1783
      %v2561 = vpack.c.b16 %v1787, %v1784
      %v2562 = vpack.c.b16 %v1791, %v1788
      %v2563 = vpack.c.b16 %v1792, %v1789
      %v2564 = vpack.c.b16 %v1793, %v1790
      %v2565 = vpack.c.b16 %v1797, %v1794
      %v2566 = vpack.c.b16 %v1798, %v1795
      %v2567 = vpack.c.b16 %v1799, %v1796
      %v2568 = vpack.c.b16 %v1803, %v1800
      %v2569 = vpack.c.b16 %v1804, %v1801
      %v2570 = vpack.c.b16 %v1805, %v1802
      %v2571 = vpack.c.b16 %v1809, %v1806
      %v2572 = vpack.c.b16 %v1810, %v1807
      %v2573 = vpack.c.b16 %v1811, %v1808
      %v2574 = vpack.c.b16 %v1815, %v1812
      %v2575 = vpack.c.b16 %v1816, %v1813
      %v2576 = vpack.c.b16 %v1817, %v1814
      %v2577 = vpack.c.b16 %v1821, %v1818
      %v2578 = vpack.c.b16 %v1822, %v1819
      %v2579 = vpack.c.b16 %v1823, %v1820
      %v2580 = vpack.c.b16 %v1827, %v1824
      %v2581 = vpack.c.b16 %v1828, %v1825
      %v2582 = vpack.c.b16 %v1829, %v1826
      %v2583 = vpack.c.b16 %v1833, %v1830
      %v2584 = vpack.c.b16 %v1834, %v1831
      %v2585 = vpack.c.b16 %v1835, %v1832
      %v2586 = vpack.c.b16 %v1839, %v1836
      %v2587 = vpack.c.b16 %v1840, %v1837
      %v2588 = vpack.c.b16 %v1841, %v1838
      %v2589 = vpack.c.b16 %v1845, %v1842
      %v2590 = vpack.c.b16 %v1846, %v1843
      %v2591 = vpack.c.b16 %v1847, %v1844
      %v2592 = vpack.c.b16 %v1851, %v1848
      %v2593 = vpack.c.b16 %v1852, %v1849
      %v2594 = vpack.c.b16 %v1853, %v1850
      %v2595 = vpack.c.b16 %v1857, %v1854
      %v2596 = vpack.c.b16 %v1858, %v1855
      %v2597 = vpack.c.b16 %v1859, %v1856
      %v2598 = vpack.c.b16 %v1863, %v1860
      %v2599 = vpack.c.b16 %v1864, %v1861
      %v2600 = vpack.c.b16 %v1865, %v1862
      %v2601 = vpack.c.b16 %v1869, %v1866
      %v2602 = vpack.c.b16 %v1870, %v1867
      %v2603 = vpack.c.b16 %v1871, %v1868
      %v2604 = vpack.c.b16 %v1875, %v1872
      %v2605 = vpack.c.b16 %v1876, %v1873
      %v2606 = vpack.c.b16 %v1877, %v1874
      %v2607 = vpack.c.b16 %v1881, %v1878
      %v2608 = vpack.c.b16 %v1882, %v1879
      %v2609 = vpack.c.b16 %v1883, %v1880
      %v2610 = vpack.c.b16 %v1887, %v1884
      %v2611 = vpack.c.b16 %v1888, %v1885
      %v2612 = vpack.c.b16 %v1889, %v1886
      %v2613 = vpack.c.b16 %v1893, %v1890
      %v2614 = vpack.c.b16 %v1894, %v1891
      %v2615 = vpack.c.b16 %v1895, %v1892
      %v2616 = vpack.c.b16 %v1899, %v1896
      %v2617 = vpack.c.b16 %v1900, %v1897
      %v2618 = vpack.c.b16 %v1901, %v1898
      %v2619 = vpack.c.b16 %v1905, %v1902
      %v2620 = vpack.c.b16 %v1906, %v1903
      %v2621 = vpack.c.b16 %v1907, %v1904
      %v2622 = vpack.c.b16 %v1911, %v1908
      %v2623 = vpack.c.b16 %v1912, %v1909
      %v2624 = vpack.c.b16 %v1913, %v1910
      %v2625 = vpack.c.b16 %v1917, %v1914
      %v2626 = vpack.c.b16 %v1918, %v1915
      %v2627 = vpack.c.b16 %v1919, %v1916
      %v2628 = vpack.c.b16 %v1923, %v1920
      %v2629 = vpack.c.b16 %v1924, %v1921
      %v2630 = vpack.c.b16 %v1925, %v1922
      %v2631 = vpack.c.b16 %v1929, %v1926
      %v2632 = vpack.c.b16 %v1930, %v1927
      %v2633 = vpack.c.b16 %v1931, %v1928
      %v2634 = vpack.c.b16 %v1935, %v1932
      %v2635 = vpack.c.b16 %v1936, %v1933
      %v2636 = vpack.c.b16 %v1937, %v1934
      %v2637 = vpack.c.b16 %v1941, %v1938
      %v2638 = vpack.c.b16 %v1942, %v1939
      %v2639 = vpack.c.b16 %v1943, %v1940
      %v2640 = vpack.c.b16 %v1947, %v1944
      %v2641 = vpack.c.b16 %v1948, %v1945
      %v2642 = vpack.c.b16 %v1949, %v1946
      %v2643 = vpack.c.b16 %v1953, %v1950
      %v2644 = vpack.c.b16 %v1954, %v1951
      %v2645 = vpack.c.b16 %v1955, %v1952
      %v2646 = vpack.c.b16 %v1959, %v1956
      %v2647 = vpack.c.b16 %v1960, %v1957
      %v2648 = vpack.c.b16 %v1961, %v1958
      %v2649 = vpack.c.b16 %v1965, %v1962
      %v2650 = vpack.c.b16 %v1966, %v1963
      %v2651 = vpack.c.b16 %v1967, %v1964
      %v2652 = vpack.c.b16 %v1971, %v1968
      %v2653 = vpack.c.b16 %v1972, %v1969
      %v2654 = vpack.c.b16 %v1973, %v1970
      %v2655 = vpack.c.b16 %v1977, %v1974
      %v2656 = vpack.c.b16 %v1978, %v1975
      %v2657 = vpack.c.b16 %v1979, %v1976
      %v2658 = vpack.c.b16 %v1983, %v1980
      %v2659 = vpack.c.b16 %v1984, %v1981
      %v2660 = vpack.c.b16 %v1985, %v1982
      %v2661 = vpack.c.b16 %v1989, %v1986
      %v2662 = vpack.c.b16 %v1990, %v1987
      %v2663 = vpack.c.b16 %v1991, %v1988
      %v2664 = vpack.c.b16 %v1995, %v1992
      %v2665 = vpack.c.b16 %v1996, %v1993
      %v2666 = vpack.c.b16 %v1997, %v1994
      %v2667 = vpack.c.b16 %v2001, %v1998
      %v2668 = vpack.c.b16 %v2002, %v1999
      %v2669 = vpack.c.b16 %v2003, %v2000
      %v2670 = vpack.c.b16 %v2007, %v2004
      %v2671 = vpack.c.b16 %v2008, %v2005
      %v2672 = vpack.c.b16 %v2009, %v2006
      %v2673 = vpack.c.b16 %v2013, %v2010
      %v2674 = vpack.c.b16 %v2014, %v2011
      %v2675 = vpack.c.b16 %v2015, %v2012
      %v2676 = vpack.c.b16 %v2019, %v2016
      %v2677 = vpack.c.b16 %v2020, %v2017
      %v2678 = vpack.c.b16 %v2021, %v2018
      %v2679 = vpack.c.b16 %v2025, %v2022
      %v2680 = vpack.c.b16 %v2026, %v2023
      %v2681 = vpack.c.b16 %v2027, %v2024
      %v2682 = vpack.c.b16 %v2031, %v2028
      %v2683 = vpack.c.b16 %v2032, %v2029
      %v2684 = vpack.c.b16 %v2033, %v2030
      %v2685 = vpack.c.b16 %v2037, %v2034
      %v2686 = vpack.c.b16 %v2038, %v2035
      %v2687 = vpack.c.b16 %v2039, %v2036
      %v2688 = vpack.c.b16 %v2043, %v2040
      %v2689 = vpack.c.b16 %v2044, %v2041
      %v2690 = vpack.c.b16 %v2045, %v2042
      %v2691 = vpack.c.b16 %v2049, %v2046
      %v2692 = vpack.c.b16 %v2050, %v2047
      %v2693 = vpack.c.b16 %v2051, %v2048
      %v2694 = vpack.c.b16 %v2055, %v2052
      %v2695 = vpack.c.b16 %v2056, %v2053
      %v2696 = vpack.c.b16 %v2057, %v2054
      %v2697 = vpack.c.b16 %v2061, %v2058
      %v2698 = vpack.c.b16 %v2062, %v2059
      %v2699 = vpack.c.b16 %v2063, %v2060
      %v2700 = vpack.c.b16 %v2067, %v2064
      %v2701 = vpack.c.b16 %v2068, %v2065
      %v2702 = vpack.c.b16 %v2069, %v2066
      %v2703 = vpack.c.b16 %v2073, %v2070
      %v2704 = vpack.c.b16 %v2074, %v2071
      %v2705 = vpack.c.b16 %v2075, %v2072
      %v2706 = vpack.c.b16 %v2079, %v2076
      %v2707 = vpack.c.b16 %v2080, %v2077
      %v2708 = vpack.c.b16 %v2081, %v2078
      %v2709 = vpack.c.b16 %v2085, %v2082
      %v2710 = vpack.c.b16 %v2086, %v2083
      %v2711 = vpack.c.b16 %v2087, %v2084
      %v2712 = vpack.c.b16 %v2091, %v2088
      %v2713 = vpack.c.b16 %v2092, %v2089
      %v2714 = vpack.c.b16 %v2093, %v2090
      %v2715 = vpack.c.b16 %v2097, %v2094
      %v2716 = vpack.c.b16 %v2098, %v2095
      %v2717 = vpack.c.b16 %v2099, %v2096
      %v2718 = vpack.c.b16 %v2103, %v2100
      %v2719 = vpack.c.b16 %v2104, %v2101
      %v2720 = vpack.c.b16 %v2105, %v2102
      %v2721 = vpack.c.b16 %v2109, %v2106
      %v2722 = vpack.c.b16 %v2110, %v2107
      %v2723 = vpack.c.b16 %v2111, %v2108
      %v2724 = vpack.c.b16 %v2115, %v2112
      %v2725 = vpack.c.b16 %v2116, %v2113
      %v2726 = vpack.c.b16 %v2117, %v2114
      %v2727 = vpack.c.b16 %v2121, %v2118
      %v2728 = vpack.c.b16 %v2122, %v2119
      %v2729 = vpack.c.b16 %v2123, %v2120
      %v2730 = vpack.c.b16 %v2127, %v2124
      %v2731 = vpack.c.b16 %v2128, %v2125
      %v2732 = vpack.c.b16 %v2129, %v2126
      %v2733 = vpack.c.b16 %v2133, %v2130
      %v2734 = vpack.c.b16 %v2134, %v2131
      %v2735 = vpack.c.b16 %v2135, %v2132
      %v2736 = vpack.c.b16 %v2139, %v2136
      %v2737 = vpack.c.b16 %v2140, %v2137
      %v2738 = vpack.c.b16 %v2141, %v2138
      %v2739 = vpack.c.b16 %v2145, %v2142
      %v2740 = vpack.c.b16 %v2146, %v2143
      %v2741 = vpack.c.b16 %v2147, %v2144
      %v2742 = vpack.c.b16 %v2151, %v2148
      %v2743 = vpack.c.b16 %v2152, %v2149
      %v2744 = vpack.c.b16 %v2153, %v2150
      %v2745 = vpack.c.b16 %v2157, %v2154
      %v2746 = vpack.c.b16 %v2158, %v2155
      %v2747 = vpack.c.b16 %v2159, %v2156
      %v2748 = vpack.c.b16 %v2163, %v2160
      %v2749 = vpack.c.b16 %v2164, %v2161
      %v2750 = vpack.c.b16 %v2165, %v2162
      %v2751 = vpack.c.b16 %v2169, %v2166
      %v2752 = vpack.c.b16 %v2170, %v2167
      %v2753 = vpack.c.b16 %v2171, %v2168
      %v2754 = vpack.c.b16 %v2175, %v2172
      %v2755 = vpack.c.b16 %v2176, %v2173
      %v2756 = vpack.c.b16 %v2177, %v2174
      %v2757 = vpack.c.b16 %v2181, %v2178
      %v2758 = vpack.c.b16 %v2182, %v2179
      %v2759 = vpack.c.b16 %v2183, %v2180
      %v2760 = vpack.c.b16 %v2187, %v2184
      %v2761 = vpack.c.b16 %v2188, %v2185
      %v2762 = vpack.c.b16 %v2189, %v2186
      %v2763 = vpack.c.b16 %v2193, %v2190
      %v2764 = vpack.c.b16 %v2194, %v2191
      %v2765 = vpack.c.b16 %v2195, %v2192
      %v2766 = vpack.c.b16 %v2199, %v2196
      %v2767 = vpack.c.b16 %v2200, %v2197
      %v2768 = vpack.c.b16 %v2201, %v2198
      %v2769 = vpack.c.b16 %v2205, %v2202
      %v2770 = vpack.c.b16 %v2206, %v2203
      %v2771 = vpack.c.b16 %v2207, %v2204
      %v2772 = vpack.c.b16 %v2211, %v2208
      %v2773 = vpack.c.b16 %v2212, %v2209
      %v2774 = vpack.c.b16 %v2213, %v2210
      %v2775 = vpack.c.b16 %v2217, %v2214
      %v2776 = vpack.c.b16 %v2218, %v2215
      %v2777 = vpack.c.b16 %v2219, %v2216
      %v2778 = vpack.c.b16 %v2223, %v2220
      %v2779 = vpack.c.b16 %v2224, %v2221
      %v2780 = vpack.c.b16 %v2225, %v2222
      %v2781 = vpack.c.b16 %v2229, %v2226
      %v2782 = vpack.c.b16 %v2230, %v2227
      %v2783 = vpack.c.b16 %v2231, %v2228
      %v2784 = vpack.c.b16 %v2235, %v2232
      %v2785 = vpack.c.b16 %v2236, %v2233
      %v2786 = vpack.c.b16 %v2237, %v2234
      %v2787 = vpack.c.b16 %v2241, %v2238
      %v2788 = vpack.c.b16 %v2242, %v2239
      %v2789 = vpack.c.b16 %v2243, %v2240
      %v2790 = vpack.c.b16 %v2247, %v2244
      %v2791 = vpack.c.b16 %v2248, %v2245
      %v2792 = vpack.c.b16 %v2249, %v2246
      %v2793 = vpack.c.b16 %v2253, %v2250
      %v2794 = vpack.c.b16 %v2254, %v2251
      %v2795 = vpack.c.b16 %v2255, %v2252
      %v2796 = vpack.c.b16 %v2259, %v2256
      %v2797 = vpack.c.b16 %v2260, %v2257
      %v2798 = vpack.c.b16 %v2261, %v2258
      %v2799 = vpack.c.b16 %v2265, %v2262
      %v2800 = vpack.c.b16 %v2266, %v2263
      %v2801 = vpack.c.b16 %v2267, %v2264
      %v2802 = vpack.c.b16 %v2271, %v2268
      %v2803 = vpack.c.b16 %v2272, %v2269
      %v2804 = vpack.c.b16 %v2273, %v2270
      %v2805 = vpack.c.b16 %v2277, %v2274
      %v2806 = vpack.c.b16 %v2278, %v2275
      %v2807 = vpack.c.b16 %v2279, %v2276
      %v2808 = vpack.c.b16 %v2283, %v2280
      %v2809 = vpack.c.b16 %v2284, %v2281
      %v2810 = vpack.c.b16 %v2285, %v2282
      %v2811 = vpack.c.b16 %v2289, %v2286
      %v2812 = vpack.c.b16 %v2290, %v2287
      %v2813 = vpack.c.b16 %v2291, %v2288
      %v2814 = vpack.c.b16 %v2295, %v2292
      %v2815 = vpack.c.b16 %v2296, %v2293
      %v2816 = vpack.c.b16 %v2297, %v2294
      %v2817 = vpack.c.b16 %v2301, %v2298
      %v2818 = vpack.c.b16 %v2302, %v2299
      %v2819 = vpack.c.b16 %v2303, %v2300
      %v2820 = vpack.c.b16 %v2307, %v2304
      %v2821 = vpack.c.b16 %v2308, %v2305
      %v2822 = vpack.c.b16 %v2309, %v2306
      %v2823 = vpack.c.b16 %v2313, %v2310
      %v2824 = vpack.c.b16 %v2314, %v2311
      %v2825 = vpack.c.b16 %v2315, %v2312
      %v2826 = vpack.c.b16 %v2319, %v2316
      %v2827 = vpack.c.b16 %v2320, %v2317
      %v2828 = vpack.c.b16 %v2321, %v2318
      %v2829 = vpack.c.b16 %v2325, %v2322
      %v2830 = vpack.c.b16 %v2326, %v2323
      %v2831 = vpack.c.b16 %v2327, %v2324
      %v2832 = vpack.c.b16 %v2331, %v2328
      %v2833 = vpack.c.b16 %v2332, %v2329
      %v2834 = vpack.c.b16 %v2333, %v2330
      %v2835 = vpack.c.b16 %v2337, %v2334
      %v2836 = vpack.c.b16 %v2338, %v2335
      %v2837 = vpack.c.b16 %v2339, %v2336
      %v2838 = vpack.c.b16 %v2343, %v2340
      %v2839 = vpack.c.b16 %v2344, %v2341
      %v2840 = vpack.c.b16 %v2345, %v2342
      %v2841 = vpack.c.b16 %v2349, %v2346
      %v2842 = vpack.c.b16 %v2350, %v2347
      %v2843 = vpack.c.b16 %v2351, %v2348
      %v2844 = vpack.c.b16 %v2355, %v2352
      %v2845 = vpack.c.b16 %v2356, %v2353
      %v2846 = vpack.c.b16 %v2357, %v2354
      %v2847 = vpack.c.b16 %v2361, %v2358
      %v2848 = vpack.c.b16 %v2362, %v2359
      %v2849 = vpack.c.b16 %v2363, %v2360
      %v2850 = vpack.c.b16 %v2367, %v2364
      %v2851 = vpack.c.b16 %v2368, %v2365
      %v2852 = vpack.c.b16 %v2369, %v2366
      %v2853 = vpack.c.b16 %v2373, %v2370
      %v2854 = vpack.c.b16 %v2374, %v2371
      %v2855 = vpack.c.b16 %v2375, %v2372
      %v2856 = vpack.c.b16 %v2379, %v2376
      %v2857 = vpack.c.b16 %v2380, %v2377
      %v2858 = vpack.c.b16 %v2381, %v2378
      %v2859 = vpack.c.b16 %v2385, %v2382
      %v2860 = vpack.c.b16 %v2386, %v2383
      %v2861 = vpack.c.b16 %v2387, %v2384
      %v2862 = vpack.c.b16 %v2391, %v2388
      %v2863 = vpack.c.b16 %v2392, %v2389
      %v2864 = vpack.c.b16 %v2393, %v2390
      %v2865 = vpack.c.b16 %v2397, %v2394
      %v2866 = vpack.c.b16 %v2398, %v2395
      %v2867 = vpack.c.b16 %v2399, %v2396
      %v2868 = vpack.c.b16 %v2403, %v2400
      %v2869 = vpack.c.b16 %v2404, %v2401
      %v2870 = vpack.c.b16 %v2405, %v2402
      %v2871 = vpack.c.b16 %v2409, %v2406
      %v2872 = vpack.c.b16 %v2410, %v2407
      %v2873 = vpack.c.b16 %v2411, %v2408
      %v2874 = vpack.c.b16 %v2415, %v2412
      %v2875 = vpack.c.b16 %v2416, %v2413
      %v2876 = vpack.c.b16 %v2417, %v2414
      %v2877 = vpack.c.b16 %v2421, %v2418
      %v2878 = vpack.c.b16 %v2422, %v2419
      %v2879 = vpack.c.b16 %v2423, %v2420
      %v2880 = vpack.c.b16 %v2427, %v2424
      %v2881 = vpack.c.b16 %v2428, %v2425
      %v2882 = vpack.c.b16 %v2429, %v2426
      %v2883 = vpack.c.b16 %v2433, %v2430
      %v2884 = vpack.c.b16 %v2434, %v2431
      %v2885 = vpack.c.b16 %v2435, %v2432
      %v2886 = vpack.c.b16 %v2439, %v2436
      %v2887 = vpack.c.b16 %v2440, %v2437
      %v2888 = vpack.c.b16 %v2441, %v2438
      %v2889 = vpack.c.b16 %v2445, %v2442
      %v2890 = vpack.c.b16 %v2446, %v2443
      %v2891 = vpack.c.b16 %v2447, %v2444
      %v2892 = vpack.c.b16 %v2451, %v2448
      %v2893 = vpack.c.b16 %v2452, %v2449
      %v2894 = vpack.c.b16 %v2453, %v2450
      %v2895 = vpack.c.b16 %v2457, %v2454
      %v2896 = vpack.c.b16 %v2458, %v2455
      %v2897 = vpack.c.b16 %v2459, %v2456
      %v2898 = vpack.c.b16 %v2463, %v2460
      %v2899 = vpack.c.b16 %v2464, %v2461
      %v2900 = vpack.c.b16 %v2465, %v2462
      %v2901 = vpack.c.b16 %v2469, %v2466
      %v2902 = vpack.c.b16 %v2470, %v2467
      %v2903 = vpack.c.b16 %v2471, %v2468
      %3336 = vmatprep.subr.bf16.mxu0 %v2494
      %3337 = vmatpush1.bf16.msra.mxu0 %v2493
      %3338 = vmatprep.subr.bf16.mxu0 %v2491
      %3339 = vmatpush1.bf16.msra.mxu0 %v2490
      %3340 = vmatprep.subr.bf16.mxu0 %v2488
      %3341 = vmatpush1.bf16.msra.mxu0 %v2487
      %3342 = vmatprep.subr.bf16.mxu0 %v2485
      %3343 = vmatpush1.bf16.msra.mxu0 %v2484
      %3344 = vmatprep.subr.bf16.mxu0 %v2482
      %3345 = vmatpush1.bf16.msra.mxu0 %v2481
      %3346 = vmatprep.subr.bf16.mxu0 %v2479
      %3347 = vmatpush1.bf16.msra.mxu0 %v2478
      %3348 = vmatprep.subr.bf16.mxu0 %v2476
      %3349 = vmatpush1.bf16.msra.mxu0 %v2475
      %3350 = vmatprep.subr.bf16.mxu0 %v2473
      %3351 = vmatpush1.bf16.msra.mxu0 %v2472
      %3352 = vmatprep.subr.bf16.mxu0 %v2518
      %3353 = vmatpush2.bf16.msra.mxu0 %v2517
      %3354 = vmatprep.subr.bf16.mxu0 %v2515
      %3355 = vmatpush2.bf16.msra.mxu0 %v2514
      %3356 = vmatprep.subr.bf16.mxu0 %v2512
      %3357 = vmatpush2.bf16.msra.mxu0 %v2511
      %3358 = vmatprep.subr.bf16.mxu0 %v2509
      %3359 = vmatpush2.bf16.msra.mxu0 %v2508
      %3360 = vmatprep.subr.bf16.mxu0 %v2506
      %3361 = vmatpush2.bf16.msra.mxu0 %v2505
      %3362 = vmatprep.subr.bf16.mxu0 %v2503
      %3363 = vmatpush2.bf16.msra.mxu0 %v2502
      %3364 = vmatprep.subr.bf16.mxu0 %v2500
      %3365 = vmatpush2.bf16.msra.mxu0 %v2499
      %3366 = vmatprep.subr.bf16.mxu0 %v2497
      %3367 = vmatpush2.bf16.msra.mxu0 %v2496
      %3368 = vmatprep.mubr.bf16.mxu0 %v961
      %3369 = vmatmul.mubr.bf16.gmra.mxu0 %v960
      %v3370 = vpop.f32.mrf.mxu0
      %v3371 = vadd.f32 %v840, %v3370
      %v3372 = vpop.f32.mrf.mxu0
      %v3373 = vadd.f32 %v844, %v3372
      %v3374 = vpop.f32.mrf.mxu0
      %v3375 = vadd.f32 %v840, %v3374
      %v3376 = vpop.f32.mrf.mxu0
      %v3377 = vadd.f32 %v844, %v3376
      %3378 = vmatprep.mubr.bf16.mxu0 %v979
      %3379 = vmatmul.mubr.bf16.gmra.mxu0 %v978
      %v3380 = vpop.f32.mrf.mxu0
      %v3381 = vadd.f32 %v840, %v3380
      %v3382 = vpop.f32.mrf.mxu0
      %v3383 = vadd.f32 %v844, %v3382
      %v3384 = vpop.f32.mrf.mxu0
      %v3385 = vadd.f32 %v840, %v3384
      %v3386 = vpop.f32.mrf.mxu0
      %v3387 = vadd.f32 %v844, %v3386
      %3388 = vdwg.mxu0
      %3389 = vmatprep.subr.bf16.mxu0 %v2542
      %3390 = vmatpush1.bf16.msra.mxu0 %v2541
      %3391 = vmatprep.subr.bf16.mxu0 %v2539
      %3392 = vmatpush1.bf16.msra.mxu0 %v2538
      %3393 = vmatprep.subr.bf16.mxu0 %v2536
      %3394 = vmatpush1.bf16.msra.mxu0 %v2535
      %3395 = vmatprep.subr.bf16.mxu0 %v2533
      %3396 = vmatpush1.bf16.msra.mxu0 %v2532
      %3397 = vmatprep.subr.bf16.mxu0 %v2530
      %3398 = vmatpush1.bf16.msra.mxu0 %v2529
      %3399 = vmatprep.subr.bf16.mxu0 %v2527
      %3400 = vmatpush1.bf16.msra.mxu0 %v2526
      %3401 = vmatprep.subr.bf16.mxu0 %v2524
      %3402 = vmatpush1.bf16.msra.mxu0 %v2523
      %3403 = vmatprep.subr.bf16.mxu0 %v2521
      %3404 = vmatpush1.bf16.msra.mxu0 %v2520
      %3405 = vmatprep.subr.bf16.mxu0 %v2566
      %3406 = vmatpush2.bf16.msra.mxu0 %v2565
      %3407 = vmatprep.subr.bf16.mxu0 %v2563
      %3408 = vmatpush2.bf16.msra.mxu0 %v2562
      %3409 = vmatprep.subr.bf16.mxu0 %v2560
      %3410 = vmatpush2.bf16.msra.mxu0 %v2559
      %3411 = vmatprep.subr.bf16.mxu0 %v2557
      %3412 = vmatpush2.bf16.msra.mxu0 %v2556
      %3413 = vmatprep.subr.bf16.mxu0 %v2554
      %3414 = vmatpush2.bf16.msra.mxu0 %v2553
      %3415 = vmatprep.subr.bf16.mxu0 %v2551
      %3416 = vmatpush2.bf16.msra.mxu0 %v2550
      %3417 = vmatprep.subr.bf16.mxu0 %v2548
      %3418 = vmatpush2.bf16.msra.mxu0 %v2547
      %3419 = vmatprep.subr.bf16.mxu0 %v2545
      %3420 = vmatpush2.bf16.msra.mxu0 %v2544
      %3421 = vmatprep.mubr.bf16.mxu0 %v963
      %3422 = vmatmul.mubr.bf16.gmra.mxu0 %v962
      %v3423 = vpop.f32.mrf.mxu0
      %v3424 = vadd.f32 %v3371, %v3423
      %v3425 = vpop.f32.mrf.mxu0
      %v3426 = vadd.f32 %v3373, %v3425
      %v3427 = vpop.f32.mrf.mxu0
      %v3428 = vadd.f32 %v3375, %v3427
      %v3429 = vpop.f32.mrf.mxu0
      %v3430 = vadd.f32 %v3377, %v3429
      %3431 = vmatprep.mubr.bf16.mxu0 %v981
      %3432 = vmatmul.mubr.bf16.gmra.mxu0 %v980
      %v3433 = vpop.f32.mrf.mxu0
      %v3434 = vadd.f32 %v3381, %v3433
      %v3435 = vpop.f32.mrf.mxu0
      %v3436 = vadd.f32 %v3383, %v3435
      %v3437 = vpop.f32.mrf.mxu0
      %v3438 = vadd.f32 %v3385, %v3437
      %v3439 = vpop.f32.mrf.mxu0
      %v3440 = vadd.f32 %v3387, %v3439
      %3441 = vdwg.mxu0
      %3442 = vmatprep.subr.bf16.mxu0 %v2590
      %3443 = vmatpush1.bf16.msra.mxu0 %v2589
      %3444 = vmatprep.subr.bf16.mxu0 %v2587
      %3445 = vmatpush1.bf16.msra.mxu0 %v2586
      %3446 = vmatprep.subr.bf16.mxu0 %v2584
      %3447 = vmatpush1.bf16.msra.mxu0 %v2583
      %3448 = vmatprep.subr.bf16.mxu0 %v2581
      %3449 = vmatpush1.bf16.msra.mxu0 %v2580
      %3450 = vmatprep.subr.bf16.mxu0 %v2578
      %3451 = vmatpush1.bf16.msra.mxu0 %v2577
      %3452 = vmatprep.subr.bf16.mxu0 %v2575
      %3453 = vmatpush1.bf16.msra.mxu0 %v2574
      %3454 = vmatprep.subr.bf16.mxu0 %v2572
      %3455 = vmatpush1.bf16.msra.mxu0 %v2571
      %3456 = vmatprep.subr.bf16.mxu0 %v2569
      %3457 = vmatpush1.bf16.msra.mxu0 %v2568
      %3458 = vmatprep.subr.bf16.mxu0 %v2614
      %3459 = vmatpush2.bf16.msra.mxu0 %v2613
      %3460 = vmatprep.subr.bf16.mxu0 %v2611
      %3461 = vmatpush2.bf16.msra.mxu0 %v2610
      %3462 = vmatprep.subr.bf16.mxu0 %v2608
      %3463 = vmatpush2.bf16.msra.mxu0 %v2607
      %3464 = vmatprep.subr.bf16.mxu0 %v2605
      %3465 = vmatpush2.bf16.msra.mxu0 %v2604
      %3466 = vmatprep.subr.bf16.mxu0 %v2602
      %3467 = vmatpush2.bf16.msra.mxu0 %v2601
      %3468 = vmatprep.subr.bf16.mxu0 %v2599
      %3469 = vmatpush2.bf16.msra.mxu0 %v2598
      %3470 = vmatprep.subr.bf16.mxu0 %v2596
      %3471 = vmatpush2.bf16.msra.mxu0 %v2595
      %3472 = vmatprep.subr.bf16.mxu0 %v2593
      %3473 = vmatpush2.bf16.msra.mxu0 %v2592
      %3474 = vmatprep.mubr.bf16.mxu0 %v965
      %3475 = vmatmul.mubr.bf16.gmra.mxu0 %v964
      %v3476 = vpop.f32.mrf.mxu0
      %v3477 = vadd.f32 %v3424, %v3476
      %v3478 = vpop.f32.mrf.mxu0
      %v3479 = vadd.f32 %v3426, %v3478
      %v3480 = vpop.f32.mrf.mxu0
      %v3481 = vadd.f32 %v3428, %v3480
      %v3482 = vpop.f32.mrf.mxu0
      %v3483 = vadd.f32 %v3430, %v3482
      %3484 = vmatprep.mubr.bf16.mxu0 %v983
      %3485 = vmatmul.mubr.bf16.gmra.mxu0 %v982
      %v3486 = vpop.f32.mrf.mxu0
      %v3487 = vadd.f32 %v3434, %v3486
      %v3488 = vpop.f32.mrf.mxu0
      %v3489 = vadd.f32 %v3436, %v3488
      %v3490 = vpop.f32.mrf.mxu0
      %v3491 = vadd.f32 %v3438, %v3490
      %v3492 = vpop.f32.mrf.mxu0
      %v3493 = vadd.f32 %v3440, %v3492
      %3494 = vdwg.mxu0
      %3495 = vmatprep.subr.bf16.mxu0 %v2638
      %3496 = vmatpush1.bf16.msra.mxu0 %v2637
      %3497 = vmatprep.subr.bf16.mxu0 %v2635
      %3498 = vmatpush1.bf16.msra.mxu0 %v2634
      %3499 = vmatprep.subr.bf16.mxu0 %v2632
      %3500 = vmatpush1.bf16.msra.mxu0 %v2631
      %3501 = vmatprep.subr.bf16.mxu0 %v2629
      %3502 = vmatpush1.bf16.msra.mxu0 %v2628
      %3503 = vmatprep.subr.bf16.mxu0 %v2626
      %3504 = vmatpush1.bf16.msra.mxu0 %v2625
      %3505 = vmatprep.subr.bf16.mxu0 %v2623
      %3506 = vmatpush1.bf16.msra.mxu0 %v2622
      %3507 = vmatprep.subr.bf16.mxu0 %v2620
      %3508 = vmatpush1.bf16.msra.mxu0 %v2619
      %3509 = vmatprep.subr.bf16.mxu0 %v2617
      %3510 = vmatpush1.bf16.msra.mxu0 %v2616
      %3511 = vmatprep.subr.bf16.mxu0 %v2662
      %3512 = vmatpush2.bf16.msra.mxu0 %v2661
      %3513 = vmatprep.subr.bf16.mxu0 %v2659
      %3514 = vmatpush2.bf16.msra.mxu0 %v2658
      %3515 = vmatprep.subr.bf16.mxu0 %v2656
      %3516 = vmatpush2.bf16.msra.mxu0 %v2655
      %3517 = vmatprep.subr.bf16.mxu0 %v2653
      %3518 = vmatpush2.bf16.msra.mxu0 %v2652
      %3519 = vmatprep.subr.bf16.mxu0 %v2650
      %3520 = vmatpush2.bf16.msra.mxu0 %v2649
      %3521 = vmatprep.subr.bf16.mxu0 %v2647
      %3522 = vmatpush2.bf16.msra.mxu0 %v2646
      %3523 = vmatprep.subr.bf16.mxu0 %v2644
      %3524 = vmatpush2.bf16.msra.mxu0 %v2643
      %3525 = vmatprep.subr.bf16.mxu0 %v2641
      %3526 = vmatpush2.bf16.msra.mxu0 %v2640
      %3527 = vmatprep.mubr.bf16.mxu0 %v967
      %3528 = vmatmul.mubr.bf16.gmra.mxu0 %v966
      %v3529 = vpop.f32.mrf.mxu0
      %v3530 = vadd.f32 %v3477, %v3529
      %v3531 = vpop.f32.mrf.mxu0
      %v3532 = vadd.f32 %v3479, %v3531
      %v3533 = vpop.f32.mrf.mxu0
      %v3534 = vadd.f32 %v3481, %v3533
      %v3535 = vpop.f32.mrf.mxu0
      %v3536 = vadd.f32 %v3483, %v3535
      %3537 = vmatprep.mubr.bf16.mxu0 %v985
      %3538 = vmatmul.mubr.bf16.gmra.mxu0 %v984
      %v3539 = vpop.f32.mrf.mxu0
      %v3540 = vadd.f32 %v3487, %v3539
      %v3541 = vpop.f32.mrf.mxu0
      %v3542 = vadd.f32 %v3489, %v3541
      %v3543 = vpop.f32.mrf.mxu0
      %v3544 = vadd.f32 %v3491, %v3543
      %v3545 = vpop.f32.mrf.mxu0
      %v3546 = vadd.f32 %v3493, %v3545
      %3547 = vdwg.mxu0
      %3548 = vmatprep.subr.bf16.mxu0 %v2686
      %3549 = vmatpush1.bf16.msra.mxu0 %v2685
      %3550 = vmatprep.subr.bf16.mxu0 %v2683
      %3551 = vmatpush1.bf16.msra.mxu0 %v2682
      %3552 = vmatprep.subr.bf16.mxu0 %v2680
      %3553 = vmatpush1.bf16.msra.mxu0 %v2679
      %3554 = vmatprep.subr.bf16.mxu0 %v2677
      %3555 = vmatpush1.bf16.msra.mxu0 %v2676
      %3556 = vmatprep.subr.bf16.mxu0 %v2674
      %3557 = vmatpush1.bf16.msra.mxu0 %v2673
      %3558 = vmatprep.subr.bf16.mxu0 %v2671
      %3559 = vmatpush1.bf16.msra.mxu0 %v2670
      %3560 = vmatprep.subr.bf16.mxu0 %v2668
      %3561 = vmatpush1.bf16.msra.mxu0 %v2667
      %3562 = vmatprep.subr.bf16.mxu0 %v2665
      %3563 = vmatpush1.bf16.msra.mxu0 %v2664
      %3564 = vmatprep.subr.bf16.mxu0 %v2710
      %3565 = vmatpush2.bf16.msra.mxu0 %v2709
      %3566 = vmatprep.subr.bf16.mxu0 %v2707
      %3567 = vmatpush2.bf16.msra.mxu0 %v2706
      %3568 = vmatprep.subr.bf16.mxu0 %v2704
      %3569 = vmatpush2.bf16.msra.mxu0 %v2703
      %3570 = vmatprep.subr.bf16.mxu0 %v2701
      %3571 = vmatpush2.bf16.msra.mxu0 %v2700
      %3572 = vmatprep.subr.bf16.mxu0 %v2698
      %3573 = vmatpush2.bf16.msra.mxu0 %v2697
      %3574 = vmatprep.subr.bf16.mxu0 %v2695
      %3575 = vmatpush2.bf16.msra.mxu0 %v2694
      %3576 = vmatprep.subr.bf16.mxu0 %v2692
      %3577 = vmatpush2.bf16.msra.mxu0 %v2691
      %3578 = vmatprep.subr.bf16.mxu0 %v2689
      %3579 = vmatpush2.bf16.msra.mxu0 %v2688
      %3580 = vmatprep.mubr.bf16.mxu0 %v969
      %3581 = vmatmul.mubr.bf16.gmra.mxu0 %v968
      %v3582 = vpop.f32.mrf.mxu0
      %v3583 = vadd.f32 %v3530, %v3582
      %v3584 = vpop.f32.mrf.mxu0
      %v3585 = vadd.f32 %v3532, %v3584
      %v3586 = vpop.f32.mrf.mxu0
      %v3587 = vadd.f32 %v3534, %v3586
      %v3588 = vpop.f32.mrf.mxu0
      %v3589 = vadd.f32 %v3536, %v3588
      %3590 = vmatprep.mubr.bf16.mxu0 %v987
      %3591 = vmatmul.mubr.bf16.gmra.mxu0 %v986
      %v3592 = vpop.f32.mrf.mxu0
      %v3593 = vadd.f32 %v3540, %v3592
      %v3594 = vpop.f32.mrf.mxu0
      %v3595 = vadd.f32 %v3542, %v3594
      %v3596 = vpop.f32.mrf.mxu0
      %v3597 = vadd.f32 %v3544, %v3596
      %v3598 = vpop.f32.mrf.mxu0
      %v3599 = vadd.f32 %v3546, %v3598
      %3600 = vdwg.mxu0
      %3601 = vmatprep.subr.bf16.mxu0 %v2734
      %3602 = vmatpush1.bf16.msra.mxu0 %v2733
      %3603 = vmatprep.subr.bf16.mxu0 %v2731
      %3604 = vmatpush1.bf16.msra.mxu0 %v2730
      %3605 = vmatprep.subr.bf16.mxu0 %v2728
      %3606 = vmatpush1.bf16.msra.mxu0 %v2727
      %3607 = vmatprep.subr.bf16.mxu0 %v2725
      %3608 = vmatpush1.bf16.msra.mxu0 %v2724
      %3609 = vmatprep.subr.bf16.mxu0 %v2722
      %3610 = vmatpush1.bf16.msra.mxu0 %v2721
      %3611 = vmatprep.subr.bf16.mxu0 %v2719
      %3612 = vmatpush1.bf16.msra.mxu0 %v2718
      %3613 = vmatprep.subr.bf16.mxu0 %v2716
      %3614 = vmatpush1.bf16.msra.mxu0 %v2715
      %3615 = vmatprep.subr.bf16.mxu0 %v2713
      %3616 = vmatpush1.bf16.msra.mxu0 %v2712
      %3617 = vmatprep.subr.bf16.mxu0 %v2758
      %3618 = vmatpush2.bf16.msra.mxu0 %v2757
      %3619 = vmatprep.subr.bf16.mxu0 %v2755
      %3620 = vmatpush2.bf16.msra.mxu0 %v2754
      %3621 = vmatprep.subr.bf16.mxu0 %v2752
      %3622 = vmatpush2.bf16.msra.mxu0 %v2751
      %3623 = vmatprep.subr.bf16.mxu0 %v2749
      %3624 = vmatpush2.bf16.msra.mxu0 %v2748
      %3625 = vmatprep.subr.bf16.mxu0 %v2746
      %3626 = vmatpush2.bf16.msra.mxu0 %v2745
      %3627 = vmatprep.subr.bf16.mxu0 %v2743
      %3628 = vmatpush2.bf16.msra.mxu0 %v2742
      %3629 = vmatprep.subr.bf16.mxu0 %v2740
      %3630 = vmatpush2.bf16.msra.mxu0 %v2739
      %3631 = vmatprep.subr.bf16.mxu0 %v2737
      %3632 = vmatpush2.bf16.msra.mxu0 %v2736
      %3633 = vmatprep.mubr.bf16.mxu0 %v971
      %3634 = vmatmul.mubr.bf16.gmra.mxu0 %v970
      %v3635 = vpop.f32.mrf.mxu0
      %v3636 = vadd.f32 %v3583, %v3635
      %v3637 = vpop.f32.mrf.mxu0
      %v3638 = vadd.f32 %v3585, %v3637
      %v3639 = vpop.f32.mrf.mxu0
      %v3640 = vadd.f32 %v3587, %v3639
      %v3641 = vpop.f32.mrf.mxu0
      %v3642 = vadd.f32 %v3589, %v3641
      %3643 = vmatprep.mubr.bf16.mxu0 %v989
      %3644 = vmatmul.mubr.bf16.gmra.mxu0 %v988
      %v3645 = vpop.f32.mrf.mxu0
      %v3646 = vadd.f32 %v3593, %v3645
      %v3647 = vpop.f32.mrf.mxu0
      %v3648 = vadd.f32 %v3595, %v3647
      %v3649 = vpop.f32.mrf.mxu0
      %v3650 = vadd.f32 %v3597, %v3649
      %v3651 = vpop.f32.mrf.mxu0
      %v3652 = vadd.f32 %v3599, %v3651
      %3653 = vdwg.mxu0
      %3654 = vmatprep.subr.bf16.mxu0 %v2782
      %3655 = vmatpush1.bf16.msra.mxu0 %v2781
      %3656 = vmatprep.subr.bf16.mxu0 %v2779
      %3657 = vmatpush1.bf16.msra.mxu0 %v2778
      %3658 = vmatprep.subr.bf16.mxu0 %v2776
      %3659 = vmatpush1.bf16.msra.mxu0 %v2775
      %3660 = vmatprep.subr.bf16.mxu0 %v2773
      %3661 = vmatpush1.bf16.msra.mxu0 %v2772
      %3662 = vmatprep.subr.bf16.mxu0 %v2770
      %3663 = vmatpush1.bf16.msra.mxu0 %v2769
      %3664 = vmatprep.subr.bf16.mxu0 %v2767
      %3665 = vmatpush1.bf16.msra.mxu0 %v2766
      %3666 = vmatprep.subr.bf16.mxu0 %v2764
      %3667 = vmatpush1.bf16.msra.mxu0 %v2763
      %3668 = vmatprep.subr.bf16.mxu0 %v2761
      %3669 = vmatpush1.bf16.msra.mxu0 %v2760
      %3670 = vmatprep.subr.bf16.mxu0 %v2806
      %3671 = vmatpush2.bf16.msra.mxu0 %v2805
      %3672 = vmatprep.subr.bf16.mxu0 %v2803
      %3673 = vmatpush2.bf16.msra.mxu0 %v2802
      %3674 = vmatprep.subr.bf16.mxu0 %v2800
      %3675 = vmatpush2.bf16.msra.mxu0 %v2799
      %3676 = vmatprep.subr.bf16.mxu0 %v2797
      %3677 = vmatpush2.bf16.msra.mxu0 %v2796
      %3678 = vmatprep.subr.bf16.mxu0 %v2794
      %3679 = vmatpush2.bf16.msra.mxu0 %v2793
      %3680 = vmatprep.subr.bf16.mxu0 %v2791
      %3681 = vmatpush2.bf16.msra.mxu0 %v2790
      %3682 = vmatprep.subr.bf16.mxu0 %v2788
      %3683 = vmatpush2.bf16.msra.mxu0 %v2787
      %3684 = vmatprep.subr.bf16.mxu0 %v2785
      %3685 = vmatpush2.bf16.msra.mxu0 %v2784
      %3686 = vmatprep.mubr.bf16.mxu0 %v973
      %3687 = vmatmul.mubr.bf16.gmra.mxu0 %v972
      %v3688 = vpop.f32.mrf.mxu0
      %v3689 = vadd.f32 %v3636, %v3688
      %v3690 = vpop.f32.mrf.mxu0
      %v3691 = vadd.f32 %v3638, %v3690
      %v3692 = vpop.f32.mrf.mxu0
      %v3693 = vadd.f32 %v3640, %v3692
      %v3694 = vpop.f32.mrf.mxu0
      %v3695 = vadd.f32 %v3642, %v3694
      %3696 = vmatprep.mubr.bf16.mxu0 %v991
      %3697 = vmatmul.mubr.bf16.gmra.mxu0 %v990
      %v3698 = vpop.f32.mrf.mxu0
      %v3699 = vadd.f32 %v3646, %v3698
      %v3700 = vpop.f32.mrf.mxu0
      %v3701 = vadd.f32 %v3648, %v3700
      %v3702 = vpop.f32.mrf.mxu0
      %v3703 = vadd.f32 %v3650, %v3702
      %v3704 = vpop.f32.mrf.mxu0
      %v3705 = vadd.f32 %v3652, %v3704
      %3706 = vdwg.mxu0
      %3707 = vmatprep.subr.bf16.mxu0 %v2830
      %3708 = vmatpush1.bf16.msra.mxu0 %v2829
      %3709 = vmatprep.subr.bf16.mxu0 %v2827
      %3710 = vmatpush1.bf16.msra.mxu0 %v2826
      %3711 = vmatprep.subr.bf16.mxu0 %v2824
      %3712 = vmatpush1.bf16.msra.mxu0 %v2823
      %3713 = vmatprep.subr.bf16.mxu0 %v2821
      %3714 = vmatpush1.bf16.msra.mxu0 %v2820
      %3715 = vmatprep.subr.bf16.mxu0 %v2818
      %3716 = vmatpush1.bf16.msra.mxu0 %v2817
      %3717 = vmatprep.subr.bf16.mxu0 %v2815
      %3718 = vmatpush1.bf16.msra.mxu0 %v2814
      %3719 = vmatprep.subr.bf16.mxu0 %v2812
      %3720 = vmatpush1.bf16.msra.mxu0 %v2811
      %3721 = vmatprep.subr.bf16.mxu0 %v2809
      %3722 = vmatpush1.bf16.msra.mxu0 %v2808
      %3723 = vmatprep.subr.bf16.mxu0 %v2854
      %3724 = vmatpush2.bf16.msra.mxu0 %v2853
      %3725 = vmatprep.subr.bf16.mxu0 %v2851
      %3726 = vmatpush2.bf16.msra.mxu0 %v2850
      %3727 = vmatprep.subr.bf16.mxu0 %v2848
      %3728 = vmatpush2.bf16.msra.mxu0 %v2847
      %3729 = vmatprep.subr.bf16.mxu0 %v2845
      %3730 = vmatpush2.bf16.msra.mxu0 %v2844
      %3731 = vmatprep.subr.bf16.mxu0 %v2842
      %3732 = vmatpush2.bf16.msra.mxu0 %v2841
      %3733 = vmatprep.subr.bf16.mxu0 %v2839
      %3734 = vmatpush2.bf16.msra.mxu0 %v2838
      %3735 = vmatprep.subr.bf16.mxu0 %v2836
      %3736 = vmatpush2.bf16.msra.mxu0 %v2835
      %3737 = vmatprep.subr.bf16.mxu0 %v2833
      %3738 = vmatpush2.bf16.msra.mxu0 %v2832
      %3739 = vmatprep.mubr.bf16.mxu0 %v975
      %3740 = vmatmul.mubr.bf16.gmra.mxu0 %v974
      %v3741 = vpop.f32.mrf.mxu0
      %v3742 = vadd.f32 %v3689, %v3741
      %v3743 = vpop.f32.mrf.mxu0
      %v3744 = vadd.f32 %v3691, %v3743
      %v3745 = vpop.f32.mrf.mxu0
      %v3746 = vadd.f32 %v3693, %v3745
      %v3747 = vpop.f32.mrf.mxu0
      %v3748 = vadd.f32 %v3695, %v3747
      %3749 = vmatprep.mubr.bf16.mxu0 %v993
      %3750 = vmatmul.mubr.bf16.gmra.mxu0 %v992
      %v3751 = vpop.f32.mrf.mxu0
      %v3752 = vadd.f32 %v3699, %v3751
      %v3753 = vpop.f32.mrf.mxu0
      %v3754 = vadd.f32 %v3701, %v3753
      %v3755 = vpop.f32.mrf.mxu0
      %v3756 = vadd.f32 %v3703, %v3755
      %v3757 = vpop.f32.mrf.mxu0
      %v3758 = vadd.f32 %v3705, %v3757
      %3759 = vdwg.mxu0
      %3760 = vmatprep.subr.bf16.mxu0 %v2878
      %3761 = vmatpush1.bf16.msra.mxu0 %v2877
      %3762 = vmatprep.subr.bf16.mxu0 %v2875
      %3763 = vmatpush1.bf16.msra.mxu0 %v2874
      %3764 = vmatprep.subr.bf16.mxu0 %v2872
      %3765 = vmatpush1.bf16.msra.mxu0 %v2871
      %3766 = vmatprep.subr.bf16.mxu0 %v2869
      %3767 = vmatpush1.bf16.msra.mxu0 %v2868
      %3768 = vmatprep.subr.bf16.mxu0 %v2866
      %3769 = vmatpush1.bf16.msra.mxu0 %v2865
      %3770 = vmatprep.subr.bf16.mxu0 %v2863
      %3771 = vmatpush1.bf16.msra.mxu0 %v2862
      %3772 = vmatprep.subr.bf16.mxu0 %v2860
      %3773 = vmatpush1.bf16.msra.mxu0 %v2859
      %3774 = vmatprep.subr.bf16.mxu0 %v2857
      %3775 = vmatpush1.bf16.msra.mxu0 %v2856
      %3776 = vmatprep.subr.bf16.mxu0 %v2902
      %3777 = vmatpush2.bf16.msra.mxu0 %v2901
      %3778 = vmatprep.subr.bf16.mxu0 %v2899
      %3779 = vmatpush2.bf16.msra.mxu0 %v2898
      %3780 = vmatprep.subr.bf16.mxu0 %v2896
      %3781 = vmatpush2.bf16.msra.mxu0 %v2895
      %3782 = vmatprep.subr.bf16.mxu0 %v2893
      %3783 = vmatpush2.bf16.msra.mxu0 %v2892
      %3784 = vmatprep.subr.bf16.mxu0 %v2890
      %3785 = vmatpush2.bf16.msra.mxu0 %v2889
      %3786 = vmatprep.subr.bf16.mxu0 %v2887
      %3787 = vmatpush2.bf16.msra.mxu0 %v2886
      %3788 = vmatprep.subr.bf16.mxu0 %v2884
      %3789 = vmatpush2.bf16.msra.mxu0 %v2883
      %3790 = vmatprep.subr.bf16.mxu0 %v2881
      %3791 = vmatpush2.bf16.msra.mxu0 %v2880
      %3792 = vmatprep.mubr.bf16.mxu0 %v977
      %3793 = vmatmul.mubr.bf16.gmra.mxu0 %v976
      %v3794 = vpop.f32.mrf.mxu0
      %v3795 = vadd.f32 %v3742, %v3794
      %v3796 = vpop.f32.mrf.mxu0
      %v3797 = vadd.f32 %v3744, %v3796
      %v3798 = vpop.f32.mrf.mxu0
      %v3799 = vadd.f32 %v3746, %v3798
      %v3800 = vpop.f32.mrf.mxu0
      %v3801 = vadd.f32 %v3748, %v3800
      %3802 = vmatprep.mubr.bf16.mxu0 %v995
      %3803 = vmatmul.mubr.bf16.gmra.mxu0 %v994
      %v3804 = vpop.f32.mrf.mxu0
      %v3805 = vadd.f32 %v3752, %v3804
      %v3806 = vpop.f32.mrf.mxu0
      %v3807 = vadd.f32 %v3754, %v3806
      %v3808 = vpop.f32.mrf.mxu0
      %v3809 = vadd.f32 %v3756, %v3808
      %v3810 = vpop.f32.mrf.mxu0
      %v3811 = vadd.f32 %v3758, %v3810
      %3812 = vdwg.mxu0
      %3813 = vmatprep.subr.bf16.mxu0 0
      %3814 = vmatpush1.bf16.msra.mxu0 %v2495
      %3815 = vmatprep.subr.bf16.mxu0 0
      %3816 = vmatpush1.bf16.msra.mxu0 %v2492
      %3817 = vmatprep.subr.bf16.mxu0 0
      %3818 = vmatpush1.bf16.msra.mxu0 %v2489
      %3819 = vmatprep.subr.bf16.mxu0 0
      %3820 = vmatpush1.bf16.msra.mxu0 %v2486
      %3821 = vmatprep.subr.bf16.mxu0 0
      %3822 = vmatpush1.bf16.msra.mxu0 %v2483
      %3823 = vmatprep.subr.bf16.mxu0 0
      %3824 = vmatpush1.bf16.msra.mxu0 %v2480
      %3825 = vmatprep.subr.bf16.mxu0 0
      %3826 = vmatpush1.bf16.msra.mxu0 %v2477
      %3827 = vmatprep.subr.bf16.mxu0 0
      %3828 = vmatpush1.bf16.msra.mxu0 %v2474
      %3829 = vmatprep.subr.bf16.mxu0 0
      %3830 = vmatpush2.bf16.msra.mxu0 %v2519
      %3831 = vmatprep.subr.bf16.mxu0 0
      %3832 = vmatpush2.bf16.msra.mxu0 %v2516
      %3833 = vmatprep.subr.bf16.mxu0 0
      %3834 = vmatpush2.bf16.msra.mxu0 %v2513
      %3835 = vmatprep.subr.bf16.mxu0 0
      %3836 = vmatpush2.bf16.msra.mxu0 %v2510
      %3837 = vmatprep.subr.bf16.mxu0 0
      %3838 = vmatpush2.bf16.msra.mxu0 %v2507
      %3839 = vmatprep.subr.bf16.mxu0 0
      %3840 = vmatpush2.bf16.msra.mxu0 %v2504
      %3841 = vmatprep.subr.bf16.mxu0 0
      %3842 = vmatpush2.bf16.msra.mxu0 %v2501
      %3843 = vmatprep.subr.bf16.mxu0 0
      %3844 = vmatpush2.bf16.msra.mxu0 %v2498
      %3845 = vmatprep.mubr.bf16.mxu0 %v961
      %3846 = vmatmul.mubr.bf16.gmra.mxu0 %v960
      %v3847 = vpop.f32.mrf.mxu0
      %v3848 = vadd.f32 %v848, %v3847
      %v3849 = vpop.f32.mrf.mxu0
      %v3850 = vpop.f32.mrf.mxu0
      %v3851 = vadd.f32 %v848, %v3850
      %v3852 = vpop.f32.mrf.mxu0
      %3853 = vmatprep.mubr.bf16.mxu0 %v979
      %3854 = vmatmul.mubr.bf16.gmra.mxu0 %v978
      %v3855 = vpop.f32.mrf.mxu0
      %v3856 = vadd.f32 %v848, %v3855
      %v3857 = vpop.f32.mrf.mxu0
      %v3858 = vpop.f32.mrf.mxu0
      %v3859 = vadd.f32 %v848, %v3858
      %v3860 = vpop.f32.mrf.mxu0
      %3861 = vdwg.mxu0
      %3862 = vmatprep.subr.bf16.mxu0 0
      %3863 = vmatpush1.bf16.msra.mxu0 %v2543
      %3864 = vmatprep.subr.bf16.mxu0 0
      %3865 = vmatpush1.bf16.msra.mxu0 %v2540
      %3866 = vmatprep.subr.bf16.mxu0 0
      %3867 = vmatpush1.bf16.msra.mxu0 %v2537
      %3868 = vmatprep.subr.bf16.mxu0 0
      %3869 = vmatpush1.bf16.msra.mxu0 %v2534
      %3870 = vmatprep.subr.bf16.mxu0 0
      %3871 = vmatpush1.bf16.msra.mxu0 %v2531
      %3872 = vmatprep.subr.bf16.mxu0 0
      %3873 = vmatpush1.bf16.msra.mxu0 %v2528
      %3874 = vmatprep.subr.bf16.mxu0 0
      %3875 = vmatpush1.bf16.msra.mxu0 %v2525
      %3876 = vmatprep.subr.bf16.mxu0 0
      %3877 = vmatpush1.bf16.msra.mxu0 %v2522
      %3878 = vmatprep.subr.bf16.mxu0 0
      %3879 = vmatpush2.bf16.msra.mxu0 %v2567
      %3880 = vmatprep.subr.bf16.mxu0 0
      %3881 = vmatpush2.bf16.msra.mxu0 %v2564
      %3882 = vmatprep.subr.bf16.mxu0 0
      %3883 = vmatpush2.bf16.msra.mxu0 %v2561
      %3884 = vmatprep.subr.bf16.mxu0 0
      %3885 = vmatpush2.bf16.msra.mxu0 %v2558
      %3886 = vmatprep.subr.bf16.mxu0 0
      %3887 = vmatpush2.bf16.msra.mxu0 %v2555
      %3888 = vmatprep.subr.bf16.mxu0 0
      %3889 = vmatpush2.bf16.msra.mxu0 %v2552
      %3890 = vmatprep.subr.bf16.mxu0 0
      %3891 = vmatpush2.bf16.msra.mxu0 %v2549
      %3892 = vmatprep.subr.bf16.mxu0 0
      %3893 = vmatpush2.bf16.msra.mxu0 %v2546
      %3894 = vmatprep.mubr.bf16.mxu0 %v963
      %3895 = vmatmul.mubr.bf16.gmra.mxu0 %v962
      %v3896 = vpop.f32.mrf.mxu0
      %v3897 = vadd.f32 %v3848, %v3896
      %v3898 = vpop.f32.mrf.mxu0
      %v3899 = vpop.f32.mrf.mxu0
      %v3900 = vadd.f32 %v3851, %v3899
      %v3901 = vpop.f32.mrf.mxu0
      %3902 = vmatprep.mubr.bf16.mxu0 %v981
      %3903 = vmatmul.mubr.bf16.gmra.mxu0 %v980
      %v3904 = vpop.f32.mrf.mxu0
      %v3905 = vadd.f32 %v3856, %v3904
      %v3906 = vpop.f32.mrf.mxu0
      %v3907 = vpop.f32.mrf.mxu0
      %v3908 = vadd.f32 %v3859, %v3907
      %v3909 = vpop.f32.mrf.mxu0
      %3910 = vdwg.mxu0
      %3911 = vmatprep.subr.bf16.mxu0 0
      %3912 = vmatpush1.bf16.msra.mxu0 %v2591
      %3913 = vmatprep.subr.bf16.mxu0 0
      %3914 = vmatpush1.bf16.msra.mxu0 %v2588
      %3915 = vmatprep.subr.bf16.mxu0 0
      %3916 = vmatpush1.bf16.msra.mxu0 %v2585
      %3917 = vmatprep.subr.bf16.mxu0 0
      %3918 = vmatpush1.bf16.msra.mxu0 %v2582
      %3919 = vmatprep.subr.bf16.mxu0 0
      %3920 = vmatpush1.bf16.msra.mxu0 %v2579
      %3921 = vmatprep.subr.bf16.mxu0 0
      %3922 = vmatpush1.bf16.msra.mxu0 %v2576
      %3923 = vmatprep.subr.bf16.mxu0 0
      %3924 = vmatpush1.bf16.msra.mxu0 %v2573
      %3925 = vmatprep.subr.bf16.mxu0 0
      %3926 = vmatpush1.bf16.msra.mxu0 %v2570
      %3927 = vmatprep.subr.bf16.mxu0 0
      %3928 = vmatpush2.bf16.msra.mxu0 %v2615
      %3929 = vmatprep.subr.bf16.mxu0 0
      %3930 = vmatpush2.bf16.msra.mxu0 %v2612
      %3931 = vmatprep.subr.bf16.mxu0 0
      %3932 = vmatpush2.bf16.msra.mxu0 %v2609
      %3933 = vmatprep.subr.bf16.mxu0 0
      %3934 = vmatpush2.bf16.msra.mxu0 %v2606
      %3935 = vmatprep.subr.bf16.mxu0 0
      %3936 = vmatpush2.bf16.msra.mxu0 %v2603
      %3937 = vmatprep.subr.bf16.mxu0 0
      %3938 = vmatpush2.bf16.msra.mxu0 %v2600
      %3939 = vmatprep.subr.bf16.mxu0 0
      %3940 = vmatpush2.bf16.msra.mxu0 %v2597
      %3941 = vmatprep.subr.bf16.mxu0 0
      %3942 = vmatpush2.bf16.msra.mxu0 %v2594
      %3943 = vmatprep.mubr.bf16.mxu0 %v965
      %3944 = vmatmul.mubr.bf16.gmra.mxu0 %v964
      %v3945 = vpop.f32.mrf.mxu0
      %v3946 = vadd.f32 %v3897, %v3945
      %v3947 = vpop.f32.mrf.mxu0
      %v3948 = vpop.f32.mrf.mxu0
      %v3949 = vadd.f32 %v3900, %v3948
      %v3950 = vpop.f32.mrf.mxu0
      %3951 = vmatprep.mubr.bf16.mxu0 %v983
      %3952 = vmatmul.mubr.bf16.gmra.mxu0 %v982
      %v3953 = vpop.f32.mrf.mxu0
      %v3954 = vadd.f32 %v3905, %v3953
      %v3955 = vpop.f32.mrf.mxu0
      %v3956 = vpop.f32.mrf.mxu0
      %v3957 = vadd.f32 %v3908, %v3956
      %v3958 = vpop.f32.mrf.mxu0
      %3959 = vdwg.mxu0
      %3960 = vmatprep.subr.bf16.mxu0 0
      %3961 = vmatpush1.bf16.msra.mxu0 %v2639
      %3962 = vmatprep.subr.bf16.mxu0 0
      %3963 = vmatpush1.bf16.msra.mxu0 %v2636
      %3964 = vmatprep.subr.bf16.mxu0 0
      %3965 = vmatpush1.bf16.msra.mxu0 %v2633
      %3966 = vmatprep.subr.bf16.mxu0 0
      %3967 = vmatpush1.bf16.msra.mxu0 %v2630
      %3968 = vmatprep.subr.bf16.mxu0 0
      %3969 = vmatpush1.bf16.msra.mxu0 %v2627
      %3970 = vmatprep.subr.bf16.mxu0 0
      %3971 = vmatpush1.bf16.msra.mxu0 %v2624
      %3972 = vmatprep.subr.bf16.mxu0 0
      %3973 = vmatpush1.bf16.msra.mxu0 %v2621
      %3974 = vmatprep.subr.bf16.mxu0 0
      %3975 = vmatpush1.bf16.msra.mxu0 %v2618
      %3976 = vmatprep.subr.bf16.mxu0 0
      %3977 = vmatpush2.bf16.msra.mxu0 %v2663
      %3978 = vmatprep.subr.bf16.mxu0 0
      %3979 = vmatpush2.bf16.msra.mxu0 %v2660
      %3980 = vmatprep.subr.bf16.mxu0 0
      %3981 = vmatpush2.bf16.msra.mxu0 %v2657
      %3982 = vmatprep.subr.bf16.mxu0 0
      %3983 = vmatpush2.bf16.msra.mxu0 %v2654
      %3984 = vmatprep.subr.bf16.mxu0 0
      %3985 = vmatpush2.bf16.msra.mxu0 %v2651
      %3986 = vmatprep.subr.bf16.mxu0 0
      %3987 = vmatpush2.bf16.msra.mxu0 %v2648
      %3988 = vmatprep.subr.bf16.mxu0 0
      %3989 = vmatpush2.bf16.msra.mxu0 %v2645
      %3990 = vmatprep.subr.bf16.mxu0 0
      %3991 = vmatpush2.bf16.msra.mxu0 %v2642
      %3992 = vmatprep.mubr.bf16.mxu0 %v967
      %3993 = vmatmul.mubr.bf16.gmra.mxu0 %v966
      %v3994 = vpop.f32.mrf.mxu0
      %v3995 = vadd.f32 %v3946, %v3994
      %v3996 = vpop.f32.mrf.mxu0
      %v3997 = vpop.f32.mrf.mxu0
      %v3998 = vadd.f32 %v3949, %v3997
      %v3999 = vpop.f32.mrf.mxu0
      %4000 = vmatprep.mubr.bf16.mxu0 %v985
      %4001 = vmatmul.mubr.bf16.gmra.mxu0 %v984
      %v4002 = vpop.f32.mrf.mxu0
      %v4003 = vadd.f32 %v3954, %v4002
      %v4004 = vpop.f32.mrf.mxu0
      %v4005 = vpop.f32.mrf.mxu0
      %v4006 = vadd.f32 %v3957, %v4005
      %v4007 = vpop.f32.mrf.mxu0
      %4008 = vdwg.mxu0
      %4009 = vmatprep.subr.bf16.mxu0 0
      %4010 = vmatpush1.bf16.msra.mxu0 %v2687
      %4011 = vmatprep.subr.bf16.mxu0 0
      %4012 = vmatpush1.bf16.msra.mxu0 %v2684
      %4013 = vmatprep.subr.bf16.mxu0 0
      %4014 = vmatpush1.bf16.msra.mxu0 %v2681
      %4015 = vmatprep.subr.bf16.mxu0 0
      %4016 = vmatpush1.bf16.msra.mxu0 %v2678
      %4017 = vmatprep.subr.bf16.mxu0 0
      %4018 = vmatpush1.bf16.msra.mxu0 %v2675
      %4019 = vmatprep.subr.bf16.mxu0 0
      %4020 = vmatpush1.bf16.msra.mxu0 %v2672
      %4021 = vmatprep.subr.bf16.mxu0 0
      %4022 = vmatpush1.bf16.msra.mxu0 %v2669
      %4023 = vmatprep.subr.bf16.mxu0 0
      %4024 = vmatpush1.bf16.msra.mxu0 %v2666
      %4025 = vmatprep.subr.bf16.mxu0 0
      %4026 = vmatpush2.bf16.msra.mxu0 %v2711
      %4027 = vmatprep.subr.bf16.mxu0 0
      %4028 = vmatpush2.bf16.msra.mxu0 %v2708
      %4029 = vmatprep.subr.bf16.mxu0 0
      %4030 = vmatpush2.bf16.msra.mxu0 %v2705
      %4031 = vmatprep.subr.bf16.mxu0 0
      %4032 = vmatpush2.bf16.msra.mxu0 %v2702
      %4033 = vmatprep.subr.bf16.mxu0 0
      %4034 = vmatpush2.bf16.msra.mxu0 %v2699
      %4035 = vmatprep.subr.bf16.mxu0 0
      %4036 = vmatpush2.bf16.msra.mxu0 %v2696
      %4037 = vmatprep.subr.bf16.mxu0 0
      %4038 = vmatpush2.bf16.msra.mxu0 %v2693
      %4039 = vmatprep.subr.bf16.mxu0 0
      %4040 = vmatpush2.bf16.msra.mxu0 %v2690
      %4041 = vmatprep.mubr.bf16.mxu0 %v969
      %4042 = vmatmul.mubr.bf16.gmra.mxu0 %v968
      %v4043 = vpop.f32.mrf.mxu0
      %v4044 = vadd.f32 %v3995, %v4043
      %v4045 = vpop.f32.mrf.mxu0
      %v4046 = vpop.f32.mrf.mxu0
      %v4047 = vadd.f32 %v3998, %v4046
      %v4048 = vpop.f32.mrf.mxu0
      %4049 = vmatprep.mubr.bf16.mxu0 %v987
      %4050 = vmatmul.mubr.bf16.gmra.mxu0 %v986
      %v4051 = vpop.f32.mrf.mxu0
      %v4052 = vadd.f32 %v4003, %v4051
      %v4053 = vpop.f32.mrf.mxu0
      %v4054 = vpop.f32.mrf.mxu0
      %v4055 = vadd.f32 %v4006, %v4054
      %v4056 = vpop.f32.mrf.mxu0
      %4057 = vdwg.mxu0
      %4058 = vmatprep.subr.bf16.mxu0 0
      %4059 = vmatpush1.bf16.msra.mxu0 %v2735
      %4060 = vmatprep.subr.bf16.mxu0 0
      %4061 = vmatpush1.bf16.msra.mxu0 %v2732
      %4062 = vmatprep.subr.bf16.mxu0 0
      %4063 = vmatpush1.bf16.msra.mxu0 %v2729
      %4064 = vmatprep.subr.bf16.mxu0 0
      %4065 = vmatpush1.bf16.msra.mxu0 %v2726
      %4066 = vmatprep.subr.bf16.mxu0 0
      %4067 = vmatpush1.bf16.msra.mxu0 %v2723
      %4068 = vmatprep.subr.bf16.mxu0 0
      %4069 = vmatpush1.bf16.msra.mxu0 %v2720
      %4070 = vmatprep.subr.bf16.mxu0 0
      %4071 = vmatpush1.bf16.msra.mxu0 %v2717
      %4072 = vmatprep.subr.bf16.mxu0 0
      %4073 = vmatpush1.bf16.msra.mxu0 %v2714
      %4074 = vmatprep.subr.bf16.mxu0 0
      %4075 = vmatpush2.bf16.msra.mxu0 %v2759
      %4076 = vmatprep.subr.bf16.mxu0 0
      %4077 = vmatpush2.bf16.msra.mxu0 %v2756
      %4078 = vmatprep.subr.bf16.mxu0 0
      %4079 = vmatpush2.bf16.msra.mxu0 %v2753
      %4080 = vmatprep.subr.bf16.mxu0 0
      %4081 = vmatpush2.bf16.msra.mxu0 %v2750
      %4082 = vmatprep.subr.bf16.mxu0 0
      %4083 = vmatpush2.bf16.msra.mxu0 %v2747
      %4084 = vmatprep.subr.bf16.mxu0 0
      %4085 = vmatpush2.bf16.msra.mxu0 %v2744
      %4086 = vmatprep.subr.bf16.mxu0 0
      %4087 = vmatpush2.bf16.msra.mxu0 %v2741
      %4088 = vmatprep.subr.bf16.mxu0 0
      %4089 = vmatpush2.bf16.msra.mxu0 %v2738
      %4090 = vmatprep.mubr.bf16.mxu0 %v971
      %4091 = vmatmul.mubr.bf16.gmra.mxu0 %v970
      %v4092 = vpop.f32.mrf.mxu0
      %v4093 = vadd.f32 %v4044, %v4092
      %v4094 = vpop.f32.mrf.mxu0
      %v4095 = vpop.f32.mrf.mxu0
      %v4096 = vadd.f32 %v4047, %v4095
      %v4097 = vpop.f32.mrf.mxu0
      %4098 = vmatprep.mubr.bf16.mxu0 %v989
      %4099 = vmatmul.mubr.bf16.gmra.mxu0 %v988
      %v4100 = vpop.f32.mrf.mxu0
      %v4101 = vadd.f32 %v4052, %v4100
      %v4102 = vpop.f32.mrf.mxu0
      %v4103 = vpop.f32.mrf.mxu0
      %v4104 = vadd.f32 %v4055, %v4103
      %v4105 = vpop.f32.mrf.mxu0
      %4106 = vdwg.mxu0
      %4107 = vmatprep.subr.bf16.mxu0 0
      %4108 = vmatpush1.bf16.msra.mxu0 %v2783
      %4109 = vmatprep.subr.bf16.mxu0 0
      %4110 = vmatpush1.bf16.msra.mxu0 %v2780
      %4111 = vmatprep.subr.bf16.mxu0 0
      %4112 = vmatpush1.bf16.msra.mxu0 %v2777
      %4113 = vmatprep.subr.bf16.mxu0 0
      %4114 = vmatpush1.bf16.msra.mxu0 %v2774
      %4115 = vmatprep.subr.bf16.mxu0 0
      %4116 = vmatpush1.bf16.msra.mxu0 %v2771
      %4117 = vmatprep.subr.bf16.mxu0 0
      %4118 = vmatpush1.bf16.msra.mxu0 %v2768
      %4119 = vmatprep.subr.bf16.mxu0 0
      %4120 = vmatpush1.bf16.msra.mxu0 %v2765
      %4121 = vmatprep.subr.bf16.mxu0 0
      %4122 = vmatpush1.bf16.msra.mxu0 %v2762
      %4123 = vmatprep.subr.bf16.mxu0 0
      %4124 = vmatpush2.bf16.msra.mxu0 %v2807
      %4125 = vmatprep.subr.bf16.mxu0 0
      %4126 = vmatpush2.bf16.msra.mxu0 %v2804
      %4127 = vmatprep.subr.bf16.mxu0 0
      %4128 = vmatpush2.bf16.msra.mxu0 %v2801
      %4129 = vmatprep.subr.bf16.mxu0 0
      %4130 = vmatpush2.bf16.msra.mxu0 %v2798
      %4131 = vmatprep.subr.bf16.mxu0 0
      %4132 = vmatpush2.bf16.msra.mxu0 %v2795
      %4133 = vmatprep.subr.bf16.mxu0 0
      %4134 = vmatpush2.bf16.msra.mxu0 %v2792
      %4135 = vmatprep.subr.bf16.mxu0 0
      %4136 = vmatpush2.bf16.msra.mxu0 %v2789
      %4137 = vmatprep.subr.bf16.mxu0 0
      %4138 = vmatpush2.bf16.msra.mxu0 %v2786
      %4139 = vmatprep.mubr.bf16.mxu0 %v973
      %4140 = vmatmul.mubr.bf16.gmra.mxu0 %v972
      %v4141 = vpop.f32.mrf.mxu0
      %v4142 = vadd.f32 %v4093, %v4141
      %v4143 = vpop.f32.mrf.mxu0
      %v4144 = vpop.f32.mrf.mxu0
      %v4145 = vadd.f32 %v4096, %v4144
      %v4146 = vpop.f32.mrf.mxu0
      %4147 = vmatprep.mubr.bf16.mxu0 %v991
      %4148 = vmatmul.mubr.bf16.gmra.mxu0 %v990
      %v4149 = vpop.f32.mrf.mxu0
      %v4150 = vadd.f32 %v4101, %v4149
      %v4151 = vpop.f32.mrf.mxu0
      %v4152 = vpop.f32.mrf.mxu0
      %v4153 = vadd.f32 %v4104, %v4152
      %v4154 = vpop.f32.mrf.mxu0
      %4155 = vdwg.mxu0
      %4156 = vmatprep.subr.bf16.mxu0 0
      %4157 = vmatpush1.bf16.msra.mxu0 %v2831
      %4158 = vmatprep.subr.bf16.mxu0 0
      %4159 = vmatpush1.bf16.msra.mxu0 %v2828
      %4160 = vmatprep.subr.bf16.mxu0 0
      %4161 = vmatpush1.bf16.msra.mxu0 %v2825
      %4162 = vmatprep.subr.bf16.mxu0 0
      %4163 = vmatpush1.bf16.msra.mxu0 %v2822
      %4164 = vmatprep.subr.bf16.mxu0 0
      %4165 = vmatpush1.bf16.msra.mxu0 %v2819
      %4166 = vmatprep.subr.bf16.mxu0 0
      %4167 = vmatpush1.bf16.msra.mxu0 %v2816
      %4168 = vmatprep.subr.bf16.mxu0 0
      %4169 = vmatpush1.bf16.msra.mxu0 %v2813
      %4170 = vmatprep.subr.bf16.mxu0 0
      %4171 = vmatpush1.bf16.msra.mxu0 %v2810
      %4172 = vmatprep.subr.bf16.mxu0 0
      %4173 = vmatpush2.bf16.msra.mxu0 %v2855
      %4174 = vmatprep.subr.bf16.mxu0 0
      %4175 = vmatpush2.bf16.msra.mxu0 %v2852
      %4176 = vmatprep.subr.bf16.mxu0 0
      %4177 = vmatpush2.bf16.msra.mxu0 %v2849
      %4178 = vmatprep.subr.bf16.mxu0 0
      %4179 = vmatpush2.bf16.msra.mxu0 %v2846
      %4180 = vmatprep.subr.bf16.mxu0 0
      %4181 = vmatpush2.bf16.msra.mxu0 %v2843
      %4182 = vmatprep.subr.bf16.mxu0 0
      %4183 = vmatpush2.bf16.msra.mxu0 %v2840
      %4184 = vmatprep.subr.bf16.mxu0 0
      %4185 = vmatpush2.bf16.msra.mxu0 %v2837
      %4186 = vmatprep.subr.bf16.mxu0 0
      %4187 = vmatpush2.bf16.msra.mxu0 %v2834
      %4188 = vmatprep.mubr.bf16.mxu0 %v975
      %4189 = vmatmul.mubr.bf16.gmra.mxu0 %v974
      %v4190 = vpop.f32.mrf.mxu0
      %v4191 = vadd.f32 %v4142, %v4190
      %v4192 = vpop.f32.mrf.mxu0
      %v4193 = vpop.f32.mrf.mxu0
      %v4194 = vadd.f32 %v4145, %v4193
      %v4195 = vpop.f32.mrf.mxu0
      %4196 = vmatprep.mubr.bf16.mxu0 %v993
      %4197 = vmatmul.mubr.bf16.gmra.mxu0 %v992
      %v4198 = vpop.f32.mrf.mxu0
      %v4199 = vadd.f32 %v4150, %v4198
      %v4200 = vpop.f32.mrf.mxu0
      %v4201 = vpop.f32.mrf.mxu0
      %v4202 = vadd.f32 %v4153, %v4201
      %v4203 = vpop.f32.mrf.mxu0
      %4204 = vdwg.mxu0
      %4205 = vmatprep.subr.bf16.mxu0 0
      %4206 = vmatpush1.bf16.msra.mxu0 %v2879
      %4207 = vmatprep.subr.bf16.mxu0 0
      %4208 = vmatpush1.bf16.msra.mxu0 %v2876
      %4209 = vmatprep.subr.bf16.mxu0 0
      %4210 = vmatpush1.bf16.msra.mxu0 %v2873
      %4211 = vmatprep.subr.bf16.mxu0 0
      %4212 = vmatpush1.bf16.msra.mxu0 %v2870
      %4213 = vmatprep.subr.bf16.mxu0 0
      %4214 = vmatpush1.bf16.msra.mxu0 %v2867
      %4215 = vmatprep.subr.bf16.mxu0 0
      %4216 = vmatpush1.bf16.msra.mxu0 %v2864
      %4217 = vmatprep.subr.bf16.mxu0 0
      %4218 = vmatpush1.bf16.msra.mxu0 %v2861
      %4219 = vmatprep.subr.bf16.mxu0 0
      %4220 = vmatpush1.bf16.msra.mxu0 %v2858
      %4221 = vmatprep.subr.bf16.mxu0 0
      %4222 = vmatpush2.bf16.msra.mxu0 %v2903
      %4223 = vmatprep.subr.bf16.mxu0 0
      %4224 = vmatpush2.bf16.msra.mxu0 %v2900
      %4225 = vmatprep.subr.bf16.mxu0 0
      %4226 = vmatpush2.bf16.msra.mxu0 %v2897
      %4227 = vmatprep.subr.bf16.mxu0 0
      %4228 = vmatpush2.bf16.msra.mxu0 %v2894
      %4229 = vmatprep.subr.bf16.mxu0 0
      %4230 = vmatpush2.bf16.msra.mxu0 %v2891
      %4231 = vmatprep.subr.bf16.mxu0 0
      %4232 = vmatpush2.bf16.msra.mxu0 %v2888
      %4233 = vmatprep.subr.bf16.mxu0 0
      %4234 = vmatpush2.bf16.msra.mxu0 %v2885
      %4235 = vmatprep.subr.bf16.mxu0 0
      %4236 = vmatpush2.bf16.msra.mxu0 %v2882
      %4237 = vmatprep.mubr.bf16.mxu0 %v977
      %4238 = vmatmul.mubr.bf16.gmra.mxu0 %v976
      %v4239 = vpop.f32.mrf.mxu0
      %v4240 = vadd.f32 %v4191, %v4239
      %v4241 = vpop.f32.mrf.mxu0
      %v4242 = vpop.f32.mrf.mxu0
      %v4243 = vadd.f32 %v4194, %v4242
      %v4244 = vpop.f32.mrf.mxu0
      %4245 = vmatprep.mubr.bf16.mxu0 %v995
      %4246 = vmatmul.mubr.bf16.gmra.mxu0 %v994
      %v4247 = vpop.f32.mrf.mxu0
      %v4248 = vadd.f32 %v4199, %v4247
      %v4249 = vpop.f32.mrf.mxu0
      %v4250 = vpop.f32.mrf.mxu0
      %v4251 = vadd.f32 %v4202, %v4250
      %v4252 = vpop.f32.mrf.mxu0
      %4253 = vdwg.mxu0
      %v4254 = vmax.f32 %v3795, 0.0
      %v4255 = vmax.f32 %v3797, 0.0
      %v4256 = vmax.f32 %v4240, 0.0
      %v4257 = vmax.f32 %v3799, 0.0
      %v4258 = vmax.f32 %v3801, 0.0
      %v4259 = vmax.f32 %v4243, 0.0
      %v4260 = vmax.f32 %v3805, 0.0
      %v4261 = vmax.f32 %v3807, 0.0
      %v4262 = vmax.f32 %v4248, 0.0
      %v4263 = vmax.f32 %v3809, 0.0
      %v4264 = vmax.f32 %v3811, 0.0
      %v4265 = vmax.f32 %v4251, 0.0
      %4266 = vst [vmem:[%s213] sm:$0xff] %v4254
      %4267 = vst [vmem:[%s213 + $0x8] sm:$0xff] %v4255
      %4268 = vst [vmem:[%s213 + $0x10] sm:$0xff] %v4256
      %4269 = vst [vmem:[%s213 + $0x18] sm:$0xff] %v4257
      %4270 = vst [vmem:[%s213 + $0x20] sm:$0xff] %v4258
      %4271 = vst [vmem:[%s213 + $0x28] sm:$0xff] %v4259
      %4272 = vst [vmem:[%s213 + $0x30] sm:$0xff] %v4260
      %4273 = vst [vmem:[%s213 + $0x38] sm:$0xff] %v4261
      %4274 = vst [vmem:[%s213 + $0x40] sm:$0xff] %v4262
      %4275 = vst [vmem:[%s213 + $0x48] sm:$0xff] %v4263
      %4276 = vst [vmem:[%s213 + $0x50] sm:$0xff] %v4264
      %4277 = vst [vmem:[%s213 + $0x58] sm:$0xff] %v4265
      %v4278 = vmax.bf16 %v223, %v224
      %v4279 = vmax.bf16 %v232, %v233
      %v4280 = vmax.bf16 %v241, %v242
      %v4281 = vmax.bf16 %v250, %v251
      %v4282 = vmax.bf16 %v4278, %v225
      %v4283 = vmax.bf16 %v4279, %v234
      %v4284 = vmax.bf16 %v4280, %v243
      %v4285 = vmax.bf16 %v4281, %v252
      %v4286 = vmax.bf16 %v4282, %v226
      %v4287 = vmax.bf16 %v4283, %v235
      %v4288 = vmax.bf16 %v4284, %v244
      %v4289 = vmax.bf16 %v4285, %v253
      %v4290 = vmax.bf16 %v4286, %v227
      %v4291 = vmax.bf16 %v4287, %v236
      %v4292 = vmax.bf16 %v4288, %v245
      %v4293 = vmax.bf16 %v4289, %v254
      %v4294 = vmax.bf16 %v4290, %v228
      %v4295 = vmax.bf16 %v4291, %v237
      %v4296 = vmax.bf16 %v4292, %v246
      %v4297 = vmax.bf16 %v4293, %v255
      %v4298 = vmax.bf16 %v4294, %v229
      %v4299 = vmax.bf16 %v4295, %v238
      %v4300 = vmax.bf16 %v4296, %v247
      %v4301 = vmax.bf16 %v4297, %v256
      %v4302 = vmax.bf16 %v4298, %v230
      %v4303 = vmax.bf16 %v4299, %v239
      %v4304 = vmax.bf16 %v4300, %v248
      %v4305 = vmax.bf16 %v4301, %v257
      %v4306 = vmax.bf16 %v4302, %v231
      %v4307 = vmax.bf16 %v4303, %v240
      %v4308 = vmax.bf16 %v4304, %v249
      %v4309 = vmax.bf16 %v4305, %v258
      %v4310 = vunpack.c.l.bf16 %v4306
      %v4311 = vunpack.c.h.bf16 %v4306
      %v4312 = vunpack.c.l.bf16 %v4307
      %v4313 = vunpack.c.h.bf16 %v4307
      %v4314 = vunpack.c.l.bf16 %v4308
      %v4315 = vunpack.c.h.bf16 %v4308
      %v4316 = vunpack.c.l.bf16 %v4309
      %v4317 = vunpack.c.h.bf16 %v4309
      %4318 = vst [vmem:[%s220] sm:$0xff] %v4310
      %4319 = vst [vmem:[%s220 + $0x8] sm:$0xff] %v4311
      %4320 = vst [vmem:[%s220 + $0x10] sm:$0xff] %v4312
      %4321 = vst [vmem:[%s220 + $0x18] sm:$0xff] %v4313
      %4322 = vst [vmem:[%s220 + $0x20] sm:$0xff] %v4314
      %4323 = vst [vmem:[%s220 + $0x28] sm:$0xff] %v4315
      %4324 = vst [vmem:[%s220 + $0x30] sm:$0xff] %v4316
      %4325 = vst [vmem:[%s220 + $0x38] sm:$0xff] %v4317
      %s4326 = smul.u32 4, %s16
      %p4327 = scmp.lt.s32.totalorder %s4326, 7
      %s4328 = scalar_select %p4327, %s4326, 7
      %s4329 = smul.addr %s4328, 3
      %s4330 = smul.addr %s4329, 8
      %s4331 = scalar_lea.vmem %s3, %s4330
      %s4332 = smul.u32 4, %s16
      %p4333 = scmp.lt.s32.totalorder %s4332, 7
      %s4334 = scalar_select %p4333, %s4332, 7
      %s4335 = smul.addr %s4334, 2
      %s4336 = smul.addr %s4335, 8
      %s4337 = scalar_lea.vmem %s4, %s4336
      // Predicated region
      $region33: #{_lambda_.4} parent=31 // pred_check
        %p4338 = pneg %p102
      $region34: #{_lambda_.4} parent=31 // pred_check_branch
        %4340 = sbr.rel (%p4338) target = $region36
      $region35: #{_lambda_.4} parent=31 // pred_region
        %s4341 = smul.u32 4, %s16
      $region36: #{_lambda_.4} parent=31 // pred_fallthru
        _
      // Predicated region
      $region37: #{_lambda_.4} parent=31 // pred_check
        %p4342 = pneg %p128
      $region38: #{_lambda_.4} parent=31 // pred_check_branch
        %4344 = sbr.rel (%p4342) target = $region40
      $region39: #{_lambda_.4} parent=31 // pred_region
        %s4345 = smul.u32 4, %s16
      $region40: #{_lambda_.4} parent=31 // pred_fallthru
        _
    $region32: #{_lambda_.4} parent=5 // pred_fallthru
      _
    %p4346 = scmp.le.s32.totalorder 2, %s11
    // Predicated region
    $region41: #{_lambda_.4} parent=5 // pred_check
      %p4347 = pneg %p4346
    $region42: #{_lambda_.4} parent=5 // pred_check_branch
      %4349 = sbr.rel (%p4347) target = $region44
    $region43: #{_lambda_.4} parent=5 // pred_region
      %s4350 = ssub.s32 %s11, 2
      // Predicated region
      $region45: #{_lambda_.4} parent=43 // pred_check
        %p4351 = pneg %p108
      $region46: #{_lambda_.4} parent=43 // pred_check_branch
        %4353 = sbr.rel (%p4351) target = $region48
      $region47: #{_lambda_.4} parent=43 // pred_region
        %s4354 = smul.u32 4, %s17
        %p4355 = scmp.lt.s32.totalorder %s4354, 7
        %s4356 = scalar_select %p4355, %s4354, 7
        %s4357 = smul.addr %s4356, 3
        %s4358 = smul.addr %s4357, 8
        %s4359 = scalar_lea.vmem %s3, %s4358
      $region48: #{_lambda_.4} parent=43 // pred_fallthru
        _
      // Predicated region
      $region49: #{_lambda_.4} parent=43 // pred_check
        %p4360 = pneg %p134
      $region50: #{_lambda_.4} parent=43 // pred_check_branch
        %4362 = sbr.rel (%p4360) target = $region52
      $region51: #{_lambda_.4} parent=43 // pred_region
        %s4363 = smul.u32 4, %s17
        %p4364 = scmp.lt.s32.totalorder %s4363, 7
        %s4365 = scalar_select %p4364, %s4363, 7
        %s4366 = smul.addr %s4365, 2
        %s4367 = smul.addr %s4366, 8
        %s4368 = scalar_lea.vmem %s4, %s4367
      $region52: #{_lambda_.4} parent=43 // pred_fallthru
        _
    $region44: #{_lambda_.4} parent=5 // pred_fallthru
      _
  $region6: #{_lambda_.4} parent=0 // loop_footer
    %s15 = sadd.s32 1, %s11
  $region7: #{_lambda_.4} parent=0 // loop_footer_branch
    %10 = sbr.rel target = $region3
  $region8: #{_lambda_.4} parent=0 // loop_exit
    _

// kernel: _lambda_.6
$region0: #{_lambda_.6}
  #allocation0 [shape = 'u32[]', space=smem, size = 0x4, offset = 0x4, fixed_abs, tag = 'smem constant byte address 0x4 - core index']
  #allocation1 [shape = 'u32[144,128]{1,0:T(1,128)}', space=vmem, size = 0x12000, scoped, tag = 'internal scratch']
  %s0 = inlined_call_operand.vmem [shape: bf16[256,1728], index: 0, kind: input, shape index: {}]
  %s1 = inlined_call_operand.vmem [shape: bf16[1728,192], index: 1, kind: input, shape index: {}]
  %s2 = inlined_call_operand.vmem [shape: f32[1,192], index: 2, kind: input, shape index: {}]
  %s3 = inlined_call_operand.vmem [shape: f32[256,192], index: 3, kind: output, shape index: {}]
  %s4 = sld [smem:[#allocation0]]
  $region45: #{_lambda_.6} parent=0
    _
  %s6 = ssub.s32 1, %s4
  %s7 = scalar_select 0, %s6, %s4
  loop: start=0, step=1, limit=4
  $region2: #{_lambda_.6} parent=0 // loop_pre_header
    _
  $region3: #{_lambda_.6} parent=0 // loop_header
    %s9 = sphi 0, %s13
    %p10 = scmp.ge.s32.totalorder %s9, 4
    %s19 = sphi 0, %s21
    %s22 = sphi 0, %s19
    %s23 = sphi 0, %s22
    %s39 = sphi 0, %s23
    %s43 = sphi 0, %s43
    %s45 = sphi 0, %s43
    %s46 = sphi 0, %s45
    %s60 = sphi 0, %s46
    %s64 = sphi 0, %s64
    %s66 = sphi 0, %s64
    %s67 = sphi 0, %s66
    %s81 = sphi 0, %s67
    %s87 = sphi 0, %s89
    %s90 = sphi 0, %s87
    %s91 = sphi 0, %s90
    %s107 = sphi 0, %s91
  $region4: #{_lambda_.6} parent=0 // loop_header_branch
    %12 = sbr.rel (%p10) target = $region8
  $region5: #{_lambda_.6} parent=0 // loop_body
    %s14 = ssub.s32 %s9, 1
    %s15 = ssub.s32 %s9, 2
    %s16 = sadd.s32 %s9, 1
    %s17 = ssub.s32 %s9, %s16
    %p18 = scmp.eq.s32.totalorder %s17, 0
    %s20 = sadd.s32 %s19, 1
    %s21 = scalar_select %p18, %s19, %s20
    %p24 = pneg %p18
    %p25 = scmp.eq.s32.totalorder %s9, 1
    %p26 = por %p24, %p25
    %p27 = scmp.ne.s32.totalorder %s19, %s22
    %p28 = scmp.eq.s32.totalorder %s9, 0
    %p29 = por %p27, %p28
    %p30 = scmp.ne.s32.totalorder %s19, %s22
    %p31 = scmp.eq.s32.totalorder %s14, 1
    %p32 = por %p30, %p31
    %p33 = scmp.ne.s32.totalorder %s22, %s23
    %p34 = scmp.eq.s32.totalorder %s14, 0
    %p35 = por %p33, %p34
    %p36 = scmp.ne.s32.totalorder %s22, %s23
    %p37 = scmp.eq.s32.totalorder %s15, 1
    %p38 = por %p36, %p37
    %p40 = scmp.ne.s32.totalorder %s23, %s39
    %p41 = scmp.eq.s32.totalorder %s15, 0
    %p42 = por %p40, %p41
    %s44 = sadd.s32 %s43, 1
    %p47 = scmp.eq.s32.totalorder %s9, 1
    %p48 = scmp.ne.s32.totalorder %s43, %s45
    %p49 = scmp.eq.s32.totalorder %s9, 0
    %p50 = por %p48, %p49
    %p51 = scmp.ne.s32.totalorder %s43, %s45
    %p52 = scmp.eq.s32.totalorder %s14, 1
    %p53 = por %p51, %p52
    %p54 = scmp.ne.s32.totalorder %s45, %s46
    %p55 = scmp.eq.s32.totalorder %s14, 0
    %p56 = por %p54, %p55
    %p57 = scmp.ne.s32.totalorder %s45, %s46
    %p58 = scmp.eq.s32.totalorder %s15, 1
    %p59 = por %p57, %p58
    %p61 = scmp.ne.s32.totalorder %s46, %s60
    %p62 = scmp.eq.s32.totalorder %s15, 0
    %p63 = por %p61, %p62
    %s65 = sadd.s32 %s64, 1
    %p68 = scmp.eq.s32.totalorder %s9, 1
    %p69 = scmp.ne.s32.totalorder %s64, %s66
    %p70 = scmp.eq.s32.totalorder %s9, 0
    %p71 = por %p69, %p70
    %p72 = scmp.ne.s32.totalorder %s64, %s66
    %p73 = scmp.eq.s32.totalorder %s14, 1
    %p74 = por %p72, %p73
    %p75 = scmp.ne.s32.totalorder %s66, %s67
    %p76 = scmp.eq.s32.totalorder %s14, 0
    %p77 = por %p75, %p76
    %p78 = scmp.ne.s32.totalorder %s66, %s67
    %p79 = scmp.eq.s32.totalorder %s15, 1
    %p80 = por %p78, %p79
    %p82 = scmp.ne.s32.totalorder %s67, %s81
    %p83 = scmp.eq.s32.totalorder %s15, 0
    %p84 = por %p82, %p83
    %s85 = ssub.s32 %s9, %s16
    %p86 = scmp.eq.s32.totalorder %s85, 0
    %s88 = sadd.s32 %s87, 1
    %s89 = scalar_select %p86, %s87, %s88
    %p92 = pneg %p86
    %p93 = scmp.eq.s32.totalorder %s9, 1
    %p94 = por %p92, %p93
    %p95 = scmp.ne.s32.totalorder %s87, %s90
    %p96 = scmp.eq.s32.totalorder %s9, 0
    %p97 = por %p95, %p96
    %p98 = scmp.ne.s32.totalorder %s87, %s90
    %p99 = scmp.eq.s32.totalorder %s14, 1
    %p100 = por %p98, %p99
    %p101 = scmp.ne.s32.totalorder %s90, %s91
    %p102 = scmp.eq.s32.totalorder %s14, 0
    %p103 = por %p101, %p102
    %p104 = scmp.ne.s32.totalorder %s90, %s91
    %p105 = scmp.eq.s32.totalorder %s15, 1
    %p106 = por %p104, %p105
    %p108 = scmp.ne.s32.totalorder %s91, %s107
    %p109 = scmp.eq.s32.totalorder %s15, 0
    %p110 = por %p108, %p109
    %p111 = scmp.le.s32.totalorder 1, %s9
    %p112 = scmp.lt.s32.totalorder %s9, 3
    %p113 = pnand %p111, %p112
    %p114 = pneg %p113
    // Predicated region
    $region9: #{_lambda_.6} parent=5 // pred_check
      _
    $region10: #{_lambda_.6} parent=5 // pred_check_branch
      %116 = sbr.rel (%p113) target = $region12
    $region11: #{_lambda_.6} parent=5 // pred_region
      %s117 = ssub.s32 %s9, 1
      // Predicated region
      $region13: #{_lambda_.6} parent=11 // pred_check
        %p118 = pneg %p56
      $region14: #{_lambda_.6} parent=11 // pred_check_branch
        %120 = sbr.rel (%p118) target = $region16
      $region15: #{_lambda_.6} parent=11 // pred_region
        _
      $region16: #{_lambda_.6} parent=11 // pred_fallthru
        _
      // Predicated region
      $region17: #{_lambda_.6} parent=11 // pred_check
        %p121 = pneg %p77
      $region18: #{_lambda_.6} parent=11 // pred_check_branch
        %123 = sbr.rel (%p121) target = $region20
      $region19: #{_lambda_.6} parent=11 // pred_region
        _
      $region20: #{_lambda_.6} parent=11 // pred_fallthru
        _
    $region12: #{_lambda_.6} parent=5 // pred_fallthru
      _
    %p124 = scmp.lt.s32.totalorder %s9, 2
    // Predicated region
    $region21: #{_lambda_.6} parent=5 // pred_check
      %p125 = pneg %p124
    $region22: #{_lambda_.6} parent=5 // pred_check_branch
      %127 = sbr.rel (%p125) target = $region24
    $region23: #{_lambda_.6} parent=5 // pred_region
      // Predicated region
      $region25: #{_lambda_.6} parent=23 // pred_check
        %p128 = pneg %p29
      $region26: #{_lambda_.6} parent=23 // pred_check_branch
        %130 = sbr.rel (%p128) target = $region28
      $region27: #{_lambda_.6} parent=23 // pred_region
        %s131 = smul.u32 16, %s9
        %p132 = scmp.lt.s32.totalorder %s131, 31
        %s133 = scalar_select %p132, %s131, 31
        %s134 = smul.addr %s133, 14
        %s135 = smul.addr %s134, 4
        %s136 = scalar_lea.vmem %s0, %s135
        %s137 = smul.u32 16, %s9
      $region28: #{_lambda_.6} parent=23 // pred_fallthru
        _
    $region24: #{_lambda_.6} parent=5 // pred_fallthru
      _
    %p138 = scmp.le.s32.totalorder 1, %s9
    %p139 = scmp.lt.s32.totalorder %s9, 3
    %p140 = pnand %p138, %p139
    %p141 = pneg %p140
    // Predicated region
    $region29: #{_lambda_.6} parent=5 // pred_check
      _
    $region30: #{_lambda_.6} parent=5 // pred_check_branch
      %143 = sbr.rel (%p140) target = $region32
    $region31: #{_lambda_.6} parent=5 // pred_region
      %s144 = ssub.s32 %s9, 1
      %s145 = smul.u32 16, %s14
      %p146 = scmp.lt.s32.totalorder %s145, 31
      %s147 = scalar_select %p146, %s145, 31
      %s148 = smul.addr %s147, 14
      %s149 = smul.addr %s148, 4
      %s150 = scalar_lea.vmem %s0, %s149
      %p151 = pneg %p35
      %p152 = pneg %p32
      %p153 = pneg %p56
      %p154 = pneg %p53
      %p155 = pneg %p77
      %p156 = pneg %p74
      %p157 = pneg %p103
      %p158 = pneg %p100
      %s159 = smul.u32 16, %s14
      %p160 = scmp.lt.s32.totalorder %s159, 31
      %s161 = scalar_select %p160, %s159, 31
      %s162 = smul.addr %s161, 2
      %s163 = smul.addr %s162, 8
      %s164 = scalar_lea.vmem %s3, %s163
      %s165 = smul.u32 16, %s14
      %p166 = scmp.lt.s32.totalorder %s165, 31
      %s167 = scalar_select %p166, %s165, 31
      %s168 = smul.addr %s167, 14
      %s169 = smul.addr %s168, 4
      %s170 = scalar_lea.vmem %s0, %s169
      %s171 = smul.u32 16, %s14
      %s172 = smul.u32 16, %s14
      %p173 = scmp.lt.s32.totalorder %s172, 31
      %s174 = scalar_select %p173, %s172, 31
      %s175 = smul.addr %s174, 2
      %s176 = smul.addr %s175, 8
      %s177 = scalar_lea.vmem %s3, %s176
      %s178 = smul.u32 16, %s14
      %v180 = vld [vmem:[%s170] sm:$0xff]
      %v181 = vld [vmem:[%s170 + $0x8] sm:$0xff]
      %v182 = vld [vmem:[%s170 + $0x10] sm:$0xff]
      %v183 = vld [vmem:[%s170 + $0x18] sm:$0xff]
      %v184 = vld [vmem:[%s170 + $0x20] sm:$0xff]
      %v185 = vld [vmem:[%s170 + $0x28] sm:$0xff]
      %v186 = vld [vmem:[%s170 + $0x30] sm:$0xff]
      %v187 = vld [vmem:[%s170 + $0x38] sm:$0xff]
      %v188 = vld [vmem:[%s170 + $0x40] sm:$0xff]
      %v189 = vld [vmem:[%s170 + $0x48] sm:$0xff]
      %v190 = vld [vmem:[%s170 + $0x50] sm:$0xff]
      %v191 = vld [vmem:[%s170 + $0x58] sm:$0xff]
      %v192 = vld [vmem:[%s170 + $0x60] sm:$0xff]
      %v193 = vld [vmem:[%s170 + $0x68] sm:$0xff]
      %v194 = vld [vmem:[%s170 + $0x70] sm:$0xff]
      %v195 = vld [vmem:[%s170 + $0x78] sm:$0xff]
      %v196 = vld [vmem:[%s170 + $0x80] sm:$0xff]
      %v197 = vld [vmem:[%s170 + $0x88] sm:$0xff]
      %v198 = vld [vmem:[%s170 + $0x90] sm:$0xff]
      %v199 = vld [vmem:[%s170 + $0x98] sm:$0xff]
      %v200 = vld [vmem:[%s170 + $0xa0] sm:$0xff]
      %v201 = vld [vmem:[%s170 + $0xa8] sm:$0xff]
      %v202 = vld [vmem:[%s170 + $0xb0] sm:$0xff]
      %v203 = vld [vmem:[%s170 + $0xb8] sm:$0xff]
      %v204 = vld [vmem:[%s170 + $0xc0] sm:$0xff]
      %v205 = vld [vmem:[%s170 + $0xc8] sm:$0xff]
      %v206 = vld [vmem:[%s170 + $0xd0] sm:$0xff]
      %v207 = vld [vmem:[%s170 + $0xd8] sm:$0xff]
      %v208 = vld [vmem:[%s170 + $0xe0] sm:$0xff]
      %v209 = vld [vmem:[%s170 + $0xe8] sm:$0xff]
      %v210 = vld [vmem:[%s170 + $0xf0] sm:$0xff]
      %v211 = vld [vmem:[%s170 + $0xf8] sm:$0xff]
      %v212 = vld [vmem:[%s170 + $0x100] sm:$0xff]
      %v213 = vld [vmem:[%s170 + $0x108] sm:$0xff]
      %v214 = vld [vmem:[%s170 + $0x110] sm:$0xff]
      %v215 = vld [vmem:[%s170 + $0x118] sm:$0xff]
      %v216 = vld [vmem:[%s170 + $0x120] sm:$0xff]
      %v217 = vld [vmem:[%s170 + $0x128] sm:$0xff]
      %v218 = vld [vmem:[%s170 + $0x130] sm:$0xff]
      %v219 = vld [vmem:[%s170 + $0x138] sm:$0xff]
      %v220 = vld [vmem:[%s170 + $0x140] sm:$0xff]
      %v221 = vld [vmem:[%s170 + $0x148] sm:$0xff]
      %v222 = vld [vmem:[%s170 + $0x150] sm:$0xff]
      %v223 = vld [vmem:[%s170 + $0x158] sm:$0xff]
      %v224 = vld [vmem:[%s170 + $0x160] sm:$0xff]
      %v225 = vld [vmem:[%s170 + $0x168] sm:$0xff]
      %v226 = vld [vmem:[%s170 + $0x170] sm:$0xff]
      %v227 = vld [vmem:[%s170 + $0x178] sm:$0xff]
      %v228 = vld [vmem:[%s170 + $0x180] sm:$0xff]
      %v229 = vld [vmem:[%s170 + $0x188] sm:$0xff]
      %v230 = vld [vmem:[%s170 + $0x190] sm:$0xff]
      %v231 = vld [vmem:[%s170 + $0x198] sm:$0xff]
      %v232 = vld [vmem:[%s170 + $0x1a0] sm:$0xff]
      %v233 = vld [vmem:[%s170 + $0x1a8] sm:$0xff]
      %v234 = vld [vmem:[%s170 + $0x1b0] sm:$0xff]
      %v235 = vld [vmem:[%s170 + $0x1b8] sm:$0xff]
      %v236 = vld [vmem:[%s170 + $0x1c0] sm:$0xff]
      %v237 = vld [vmem:[%s170 + $0x1c8] sm:$0xff]
      %v238 = vld [vmem:[%s170 + $0x1d0] sm:$0xff]
      %v239 = vld [vmem:[%s170 + $0x1d8] sm:$0xff]
      %v240 = vld [vmem:[%s170 + $0x1e0] sm:$0xff]
      %v241 = vld [vmem:[%s170 + $0x1e8] sm:$0xff]
      %v242 = vld [vmem:[%s170 + $0x1f0] sm:$0xff]
      %v243 = vld [vmem:[%s170 + $0x1f8] sm:$0xff]
      %v244 = vld [vmem:[%s170 + $0x200] sm:$0xff]
      %v245 = vld [vmem:[%s170 + $0x208] sm:$0xff]
      %v246 = vld [vmem:[%s170 + $0x210] sm:$0xff]
      %v247 = vld [vmem:[%s170 + $0x218] sm:$0xff]
      %v248 = vld [vmem:[%s170 + $0x220] sm:$0xff]
      %v249 = vld [vmem:[%s170 + $0x228] sm:$0xff]
      %v250 = vld [vmem:[%s170 + $0x230] sm:$0xff]
      %v251 = vld [vmem:[%s170 + $0x238] sm:$0xff]
      %v252 = vld [vmem:[%s170 + $0x240] sm:$0xff]
      %v253 = vld [vmem:[%s170 + $0x248] sm:$0xff]
      %v254 = vld [vmem:[%s170 + $0x250] sm:$0xff]
      %v255 = vld [vmem:[%s170 + $0x258] sm:$0xff]
      %v256 = vld [vmem:[%s170 + $0x260] sm:$0xff]
      %v257 = vld [vmem:[%s170 + $0x268] sm:$0xff]
      %v258 = vld [vmem:[%s170 + $0x270] sm:$0xff]
      %v259 = vld [vmem:[%s170 + $0x278] sm:$0xff]
      %v260 = vld [vmem:[%s170 + $0x280] sm:$0xff]
      %v261 = vld [vmem:[%s170 + $0x288] sm:$0xff]
      %v262 = vld [vmem:[%s170 + $0x290] sm:$0xff]
      %v263 = vld [vmem:[%s170 + $0x298] sm:$0xff]
      %v264 = vld [vmem:[%s170 + $0x2a0] sm:$0xff]
      %v265 = vld [vmem:[%s170 + $0x2a8] sm:$0xff]
      %v266 = vld [vmem:[%s170 + $0x2b0] sm:$0xff]
      %v267 = vld [vmem:[%s170 + $0x2b8] sm:$0xff]
      %v268 = vld [vmem:[%s170 + $0x2c0] sm:$0xff]
      %v269 = vld [vmem:[%s170 + $0x2c8] sm:$0xff]
      %v270 = vld [vmem:[%s170 + $0x2d0] sm:$0xff]
      %v271 = vld [vmem:[%s170 + $0x2d8] sm:$0xff]
      %v272 = vld [vmem:[%s170 + $0x2e0] sm:$0xff]
      %v273 = vld [vmem:[%s170 + $0x2e8] sm:$0xff]
      %v274 = vld [vmem:[%s170 + $0x2f0] sm:$0xff]
      %v275 = vld [vmem:[%s170 + $0x2f8] sm:$0xff]
      %v276 = vld [vmem:[%s170 + $0x300] sm:$0xff]
      %v277 = vld [vmem:[%s170 + $0x308] sm:$0xff]
      %v278 = vld [vmem:[%s170 + $0x310] sm:$0xff]
      %v279 = vld [vmem:[%s170 + $0x318] sm:$0xff]
      %v280 = vld [vmem:[%s170 + $0x320] sm:$0xff]
      %v281 = vld [vmem:[%s170 + $0x328] sm:$0xff]
      %v282 = vld [vmem:[%s170 + $0x330] sm:$0xff]
      %v283 = vld [vmem:[%s170 + $0x338] sm:$0xff]
      %v284 = vld [vmem:[%s170 + $0x340] sm:$0xff]
      %v285 = vld [vmem:[%s170 + $0x348] sm:$0xff]
      %v286 = vld [vmem:[%s170 + $0x350] sm:$0xff]
      %v287 = vld [vmem:[%s170 + $0x358] sm:$0xff]
      %v288 = vld [vmem:[%s170 + $0x360] sm:$0xff]
      %v289 = vld [vmem:[%s170 + $0x368] sm:$0xff]
      %v290 = vld [vmem:[%s170 + $0x370] sm:$0xff]
      %v291 = vld [vmem:[%s170 + $0x378] sm:$0xff]
      %v292 = vld [vmem:[%s1] sm:$0xff]
      %v293 = vld [vmem:[%s1 + $0x8] sm:$0xff]
      %v294 = vld [vmem:[%s1 + $0x10] sm:$0xff]
      %v295 = vld [vmem:[%s1 + $0x18] sm:$0xff]
      %v296 = vld [vmem:[%s1 + $0x20] sm:$0xff]
      %v297 = vld [vmem:[%s1 + $0x28] sm:$0xff]
      %v298 = vld [vmem:[%s1 + $0x30] sm:$0xff]
      %v299 = vld [vmem:[%s1 + $0x38] sm:$0xff]
      %v300 = vld [vmem:[%s1 + $0x40] sm:$0xff]
      %v301 = vld [vmem:[%s1 + $0x48] sm:$0xff]
      %v302 = vld [vmem:[%s1 + $0x50] sm:$0xff]
      %v303 = vld [vmem:[%s1 + $0x58] sm:$0xff]
      %v304 = vld [vmem:[%s1 + $0x60] sm:$0xff]
      %v305 = vld [vmem:[%s1 + $0x68] sm:$0xff]
      %v306 = vld [vmem:[%s1 + $0x70] sm:$0xff]
      %v307 = vld [vmem:[%s1 + $0x78] sm:$0xff]
      %v308 = vld [vmem:[%s1 + $0x80] sm:$0xff]
      %v309 = vld [vmem:[%s1 + $0x88] sm:$0xff]
      %v310 = vld [vmem:[%s1 + $0x90] sm:$0xff]
      %v311 = vld [vmem:[%s1 + $0x98] sm:$0xff]
      %v312 = vld [vmem:[%s1 + $0xa0] sm:$0xff]
      %v313 = vld [vmem:[%s1 + $0xa8] sm:$0xff]
      %v314 = vld [vmem:[%s1 + $0xb0] sm:$0xff]
      %v315 = vld [vmem:[%s1 + $0xb8] sm:$0xff]
      %v316 = vld [vmem:[%s1 + $0xc0] sm:$0xff]
      %v317 = vld [vmem:[%s1 + $0xc8] sm:$0xff]
      %v318 = vld [vmem:[%s1 + $0xd0] sm:$0xff]
      %v319 = vld [vmem:[%s1 + $0xd8] sm:$0xff]
      %v320 = vld [vmem:[%s1 + $0xe0] sm:$0xff]
      %v321 = vld [vmem:[%s1 + $0xe8] sm:$0xff]
      %v322 = vld [vmem:[%s1 + $0xf0] sm:$0xff]
      %v323 = vld [vmem:[%s1 + $0xf8] sm:$0xff]
      %v324 = vld [vmem:[%s1 + $0x100] sm:$0xff]
      %v325 = vld [vmem:[%s1 + $0x108] sm:$0xff]
      %v326 = vld [vmem:[%s1 + $0x110] sm:$0xff]
      %v327 = vld [vmem:[%s1 + $0x118] sm:$0xff]
      %v328 = vld [vmem:[%s1 + $0x120] sm:$0xff]
      %v329 = vld [vmem:[%s1 + $0x128] sm:$0xff]
      %v330 = vld [vmem:[%s1 + $0x130] sm:$0xff]
      %v331 = vld [vmem:[%s1 + $0x138] sm:$0xff]
      %v332 = vld [vmem:[%s1 + $0x140] sm:$0xff]
      %v333 = vld [vmem:[%s1 + $0x148] sm:$0xff]
      %v334 = vld [vmem:[%s1 + $0x150] sm:$0xff]
      %v335 = vld [vmem:[%s1 + $0x158] sm:$0xff]
      %v336 = vld [vmem:[%s1 + $0x160] sm:$0xff]
      %v337 = vld [vmem:[%s1 + $0x168] sm:$0xff]
      %v338 = vld [vmem:[%s1 + $0x170] sm:$0xff]
      %v339 = vld [vmem:[%s1 + $0x178] sm:$0xff]
      %v340 = vld [vmem:[%s1 + $0x180] sm:$0xff]
      %v341 = vld [vmem:[%s1 + $0x188] sm:$0xff]
      %v342 = vld [vmem:[%s1 + $0x190] sm:$0xff]
      %v343 = vld [vmem:[%s1 + $0x198] sm:$0xff]
      %v344 = vld [vmem:[%s1 + $0x1a0] sm:$0xff]
      %v345 = vld [vmem:[%s1 + $0x1a8] sm:$0xff]
      %v346 = vld [vmem:[%s1 + $0x1b0] sm:$0xff]
      %v347 = vld [vmem:[%s1 + $0x1b8] sm:$0xff]
      %v348 = vld [vmem:[%s1 + $0x1c0] sm:$0xff]
      %v349 = vld [vmem:[%s1 + $0x1c8] sm:$0xff]
      %v350 = vld [vmem:[%s1 + $0x1d0] sm:$0xff]
      %v351 = vld [vmem:[%s1 + $0x1d8] sm:$0xff]
      %v352 = vld [vmem:[%s1 + $0x1e0] sm:$0xff]
      %v353 = vld [vmem:[%s1 + $0x1e8] sm:$0xff]
      %v354 = vld [vmem:[%s1 + $0x1f0] sm:$0xff]
      %v355 = vld [vmem:[%s1 + $0x1f8] sm:$0xff]
      %v356 = vld [vmem:[%s1 + $0x200] sm:$0xff]
      %v357 = vld [vmem:[%s1 + $0x208] sm:$0xff]
      %v358 = vld [vmem:[%s1 + $0x210] sm:$0xff]
      %v359 = vld [vmem:[%s1 + $0x218] sm:$0xff]
      %v360 = vld [vmem:[%s1 + $0x220] sm:$0xff]
      %v361 = vld [vmem:[%s1 + $0x228] sm:$0xff]
      %v362 = vld [vmem:[%s1 + $0x230] sm:$0xff]
      %v363 = vld [vmem:[%s1 + $0x238] sm:$0xff]
      %v364 = vld [vmem:[%s1 + $0x240] sm:$0xff]
      %v365 = vld [vmem:[%s1 + $0x248] sm:$0xff]
      %v366 = vld [vmem:[%s1 + $0x250] sm:$0xff]
      %v367 = vld [vmem:[%s1 + $0x258] sm:$0xff]
      %v368 = vld [vmem:[%s1 + $0x260] sm:$0xff]
      %v369 = vld [vmem:[%s1 + $0x268] sm:$0xff]
      %v370 = vld [vmem:[%s1 + $0x270] sm:$0xff]
      %v371 = vld [vmem:[%s1 + $0x278] sm:$0xff]
      %v372 = vld [vmem:[%s1 + $0x280] sm:$0xff]
      %v373 = vld [vmem:[%s1 + $0x288] sm:$0xff]
      %v374 = vld [vmem:[%s1 + $0x290] sm:$0xff]
      %v375 = vld [vmem:[%s1 + $0x298] sm:$0xff]
      %v376 = vld [vmem:[%s1 + $0x2a0] sm:$0xff]
      %v377 = vld [vmem:[%s1 + $0x2a8] sm:$0xff]
      %v378 = vld [vmem:[%s1 + $0x2b0] sm:$0xff]
      %v379 = vld [vmem:[%s1 + $0x2b8] sm:$0xff]
      %v380 = vld [vmem:[%s1 + $0x2c0] sm:$0xff]
      %v381 = vld [vmem:[%s1 + $0x2c8] sm:$0xff]
      %v382 = vld [vmem:[%s1 + $0x2d0] sm:$0xff]
      %v383 = vld [vmem:[%s1 + $0x2d8] sm:$0xff]
      %v384 = vld [vmem:[%s1 + $0x2e0] sm:$0xff]
      %v385 = vld [vmem:[%s1 + $0x2e8] sm:$0xff]
      %v386 = vld [vmem:[%s1 + $0x2f0] sm:$0xff]
      %v387 = vld [vmem:[%s1 + $0x2f8] sm:$0xff]
      %v388 = vld [vmem:[%s1 + $0x300] sm:$0xff]
      %v389 = vld [vmem:[%s1 + $0x308] sm:$0xff]
      %v390 = vld [vmem:[%s1 + $0x310] sm:$0xff]
      %v391 = vld [vmem:[%s1 + $0x318] sm:$0xff]
      %v392 = vld [vmem:[%s1 + $0x320] sm:$0xff]
      %v393 = vld [vmem:[%s1 + $0x328] sm:$0xff]
      %v394 = vld [vmem:[%s1 + $0x330] sm:$0xff]
      %v395 = vld [vmem:[%s1 + $0x338] sm:$0xff]
      %v396 = vld [vmem:[%s1 + $0x340] sm:$0xff]
      %v397 = vld [vmem:[%s1 + $0x348] sm:$0xff]
      %v398 = vld [vmem:[%s1 + $0x350] sm:$0xff]
      %v399 = vld [vmem:[%s1 + $0x358] sm:$0xff]
      %v400 = vld [vmem:[%s1 + $0x360] sm:$0xff]
      %v401 = vld [vmem:[%s1 + $0x368] sm:$0xff]
      %v402 = vld [vmem:[%s1 + $0x370] sm:$0xff]
      %v403 = vld [vmem:[%s1 + $0x378] sm:$0xff]
      %v404 = vld [vmem:[%s1 + $0x380] sm:$0xff]
      %v405 = vld [vmem:[%s1 + $0x388] sm:$0xff]
      %v406 = vld [vmem:[%s1 + $0x390] sm:$0xff]
      %v407 = vld [vmem:[%s1 + $0x398] sm:$0xff]
      %v408 = vld [vmem:[%s1 + $0x3a0] sm:$0xff]
      %v409 = vld [vmem:[%s1 + $0x3a8] sm:$0xff]
      %v410 = vld [vmem:[%s1 + $0x3b0] sm:$0xff]
      %v411 = vld [vmem:[%s1 + $0x3b8] sm:$0xff]
      %v412 = vld [vmem:[%s1 + $0x3c0] sm:$0xff]
      %v413 = vld [vmem:[%s1 + $0x3c8] sm:$0xff]
      %v414 = vld [vmem:[%s1 + $0x3d0] sm:$0xff]
      %v415 = vld [vmem:[%s1 + $0x3d8] sm:$0xff]
      %v416 = vld [vmem:[%s1 + $0x3e0] sm:$0xff]
      %v417 = vld [vmem:[%s1 + $0x3e8] sm:$0xff]
      %v418 = vld [vmem:[%s1 + $0x3f0] sm:$0xff]
      %v419 = vld [vmem:[%s1 + $0x3f8] sm:$0xff]
      %v420 = vld [vmem:[%s1 + $0x400] sm:$0xff]
      %v421 = vld [vmem:[%s1 + $0x408] sm:$0xff]
      %v422 = vld [vmem:[%s1 + $0x410] sm:$0xff]
      %v423 = vld [vmem:[%s1 + $0x418] sm:$0xff]
      %v424 = vld [vmem:[%s1 + $0x420] sm:$0xff]
      %v425 = vld [vmem:[%s1 + $0x428] sm:$0xff]
      %v426 = vld [vmem:[%s1 + $0x430] sm:$0xff]
      %v427 = vld [vmem:[%s1 + $0x438] sm:$0xff]
      %v428 = vld [vmem:[%s1 + $0x440] sm:$0xff]
      %v429 = vld [vmem:[%s1 + $0x448] sm:$0xff]
      %v430 = vld [vmem:[%s1 + $0x450] sm:$0xff]
      %v431 = vld [vmem:[%s1 + $0x458] sm:$0xff]
      %v432 = vld [vmem:[%s1 + $0x460] sm:$0xff]
      %v433 = vld [vmem:[%s1 + $0x468] sm:$0xff]
      %v434 = vld [vmem:[%s1 + $0x470] sm:$0xff]
      %v435 = vld [vmem:[%s1 + $0x478] sm:$0xff]
      %v436 = vld [vmem:[%s1 + $0x480] sm:$0xff]
      %v437 = vld [vmem:[%s1 + $0x488] sm:$0xff]
      %v438 = vld [vmem:[%s1 + $0x490] sm:$0xff]
      %v439 = vld [vmem:[%s1 + $0x498] sm:$0xff]
      %v440 = vld [vmem:[%s1 + $0x4a0] sm:$0xff]
      %v441 = vld [vmem:[%s1 + $0x4a8] sm:$0xff]
      %v442 = vld [vmem:[%s1 + $0x4b0] sm:$0xff]
      %v443 = vld [vmem:[%s1 + $0x4b8] sm:$0xff]
      %v444 = vld [vmem:[%s1 + $0x4c0] sm:$0xff]
      %v445 = vld [vmem:[%s1 + $0x4c8] sm:$0xff]
      %v446 = vld [vmem:[%s1 + $0x4d0] sm:$0xff]
      %v447 = vld [vmem:[%s1 + $0x4d8] sm:$0xff]
      %v448 = vld [vmem:[%s1 + $0x4e0] sm:$0xff]
      %v449 = vld [vmem:[%s1 + $0x4e8] sm:$0xff]
      %v450 = vld [vmem:[%s1 + $0x4f0] sm:$0xff]
      %v451 = vld [vmem:[%s1 + $0x4f8] sm:$0xff]
      %v452 = vld [vmem:[%s1 + $0x500] sm:$0xff]
      %v453 = vld [vmem:[%s1 + $0x508] sm:$0xff]
      %v454 = vld [vmem:[%s1 + $0x510] sm:$0xff]
      %v455 = vld [vmem:[%s1 + $0x518] sm:$0xff]
      %v456 = vld [vmem:[%s1 + $0x520] sm:$0xff]
      %v457 = vld [vmem:[%s1 + $0x528] sm:$0xff]
      %v458 = vld [vmem:[%s1 + $0x530] sm:$0xff]
      %v459 = vld [vmem:[%s1 + $0x538] sm:$0xff]
      %v460 = vld [vmem:[%s1 + $0x540] sm:$0xff]
      %v461 = vld [vmem:[%s1 + $0x548] sm:$0xff]
      %v462 = vld [vmem:[%s1 + $0x550] sm:$0xff]
      %v463 = vld [vmem:[%s1 + $0x558] sm:$0xff]
      %v464 = vld [vmem:[%s1 + $0x560] sm:$0xff]
      %v465 = vld [vmem:[%s1 + $0x568] sm:$0xff]
      %v466 = vld [vmem:[%s1 + $0x570] sm:$0xff]
      %v467 = vld [vmem:[%s1 + $0x578] sm:$0xff]
      %v468 = vld [vmem:[%s1 + $0x580] sm:$0xff]
      %v469 = vld [vmem:[%s1 + $0x588] sm:$0xff]
      %v470 = vld [vmem:[%s1 + $0x590] sm:$0xff]
      %v471 = vld [vmem:[%s1 + $0x598] sm:$0xff]
      %v472 = vld [vmem:[%s1 + $0x5a0] sm:$0xff]
      %v473 = vld [vmem:[%s1 + $0x5a8] sm:$0xff]
      %v474 = vld [vmem:[%s1 + $0x5b0] sm:$0xff]
      %v475 = vld [vmem:[%s1 + $0x5b8] sm:$0xff]
      %v476 = vld [vmem:[%s1 + $0x5c0] sm:$0xff]
      %v477 = vld [vmem:[%s1 + $0x5c8] sm:$0xff]
      %v478 = vld [vmem:[%s1 + $0x5d0] sm:$0xff]
      %v479 = vld [vmem:[%s1 + $0x5d8] sm:$0xff]
      %v480 = vld [vmem:[%s1 + $0x5e0] sm:$0xff]
      %v481 = vld [vmem:[%s1 + $0x5e8] sm:$0xff]
      %v482 = vld [vmem:[%s1 + $0x5f0] sm:$0xff]
      %v483 = vld [vmem:[%s1 + $0x5f8] sm:$0xff]
      %v484 = vld [vmem:[%s1 + $0x600] sm:$0xff]
      %v485 = vld [vmem:[%s1 + $0x608] sm:$0xff]
      %v486 = vld [vmem:[%s1 + $0x610] sm:$0xff]
      %v487 = vld [vmem:[%s1 + $0x618] sm:$0xff]
      %v488 = vld [vmem:[%s1 + $0x620] sm:$0xff]
      %v489 = vld [vmem:[%s1 + $0x628] sm:$0xff]
      %v490 = vld [vmem:[%s1 + $0x630] sm:$0xff]
      %v491 = vld [vmem:[%s1 + $0x638] sm:$0xff]
      %v492 = vld [vmem:[%s1 + $0x640] sm:$0xff]
      %v493 = vld [vmem:[%s1 + $0x648] sm:$0xff]
      %v494 = vld [vmem:[%s1 + $0x650] sm:$0xff]
      %v495 = vld [vmem:[%s1 + $0x658] sm:$0xff]
      %v496 = vld [vmem:[%s1 + $0x660] sm:$0xff]
      %v497 = vld [vmem:[%s1 + $0x668] sm:$0xff]
      %v498 = vld [vmem:[%s1 + $0x670] sm:$0xff]
      %v499 = vld [vmem:[%s1 + $0x678] sm:$0xff]
      %v500 = vld [vmem:[%s1 + $0x680] sm:$0xff]
      %v501 = vld [vmem:[%s1 + $0x688] sm:$0xff]
      %v502 = vld [vmem:[%s1 + $0x690] sm:$0xff]
      %v503 = vld [vmem:[%s1 + $0x698] sm:$0xff]
      %v504 = vld [vmem:[%s1 + $0x6a0] sm:$0xff]
      %v505 = vld [vmem:[%s1 + $0x6a8] sm:$0xff]
      %v506 = vld [vmem:[%s1 + $0x6b0] sm:$0xff]
      %v507 = vld [vmem:[%s1 + $0x6b8] sm:$0xff]
      %v508 = vld [vmem:[%s2] sm:$0x3]
      %v510 = vlaneseq
      %v511 = vshrl.u32 %v510, 7
      %v512 = vsub.s32 0, %v511
      %v513 = vrot.slane %v508, %v512
      %v514 = vlaneseq
      %v515 = vshrl.u32 %v514, 7
      %v516 = vsub.s32 1, %v515
      %v517 = vrot.slane %v508, %v516
      %v632 = vunpack.c.l.b16 %v180
      %v633 = vunpack.c.h.b16 %v180
      %v634 = vunpack.c.l.b16 %v181
      %v635 = vunpack.c.h.b16 %v181
      %v636 = vunpack.c.l.b16 %v182
      %v637 = vunpack.c.h.b16 %v182
      %v638 = vunpack.c.l.b16 %v183
      %v639 = vunpack.c.h.b16 %v183
      %v640 = vunpack.c.l.b16 %v184
      %v641 = vunpack.c.h.b16 %v184
      %v642 = vunpack.c.l.b16 %v185
      %v643 = vunpack.c.h.b16 %v185
      %v644 = vunpack.c.l.b16 %v186
      %v645 = vunpack.c.h.b16 %v186
      %v646 = vunpack.c.l.b16 %v187
      %v647 = vunpack.c.h.b16 %v187
      %v648 = vunpack.c.l.b16 %v188
      %v649 = vunpack.c.h.b16 %v188
      %v650 = vunpack.c.l.b16 %v189
      %v651 = vunpack.c.h.b16 %v189
      %v652 = vunpack.c.l.b16 %v190
      %v653 = vunpack.c.h.b16 %v190
      %v654 = vunpack.c.l.b16 %v191
      %v655 = vunpack.c.h.b16 %v191
      %v656 = vunpack.c.l.b16 %v192
      %v657 = vunpack.c.h.b16 %v192
      %v658 = vunpack.c.l.b16 %v193
      %v659 = vunpack.c.h.b16 %v193
      %v660 = vunpack.c.l.b16 %v194
      %v661 = vunpack.c.h.b16 %v194
      %v662 = vunpack.c.l.b16 %v195
      %v663 = vunpack.c.h.b16 %v195
      %v664 = vunpack.c.l.b16 %v196
      %v665 = vunpack.c.h.b16 %v196
      %v666 = vunpack.c.l.b16 %v197
      %v667 = vunpack.c.h.b16 %v197
      %v668 = vunpack.c.l.b16 %v198
      %v669 = vunpack.c.h.b16 %v198
      %v670 = vunpack.c.l.b16 %v199
      %v671 = vunpack.c.h.b16 %v199
      %v672 = vunpack.c.l.b16 %v200
      %v673 = vunpack.c.h.b16 %v200
      %v674 = vunpack.c.l.b16 %v201
      %v675 = vunpack.c.h.b16 %v201
      %v676 = vunpack.c.l.b16 %v202
      %v677 = vunpack.c.h.b16 %v202
      %v678 = vunpack.c.l.b16 %v203
      %v679 = vunpack.c.h.b16 %v203
      %v680 = vunpack.c.l.b16 %v204
      %v681 = vunpack.c.h.b16 %v204
      %v682 = vunpack.c.l.b16 %v205
      %v683 = vunpack.c.h.b16 %v205
      %v684 = vunpack.c.l.b16 %v206
      %v685 = vunpack.c.h.b16 %v206
      %v686 = vunpack.c.l.b16 %v207
      %v687 = vunpack.c.h.b16 %v207
      %v688 = vunpack.c.l.b16 %v208
      %v689 = vunpack.c.h.b16 %v208
      %v690 = vunpack.c.l.b16 %v209
      %v691 = vunpack.c.h.b16 %v209
      %v692 = vunpack.c.l.b16 %v210
      %v693 = vunpack.c.h.b16 %v210
      %v694 = vunpack.c.l.b16 %v211
      %v695 = vunpack.c.h.b16 %v211
      %v696 = vunpack.c.l.b16 %v212
      %v697 = vunpack.c.h.b16 %v212
      %v698 = vunpack.c.l.b16 %v213
      %v699 = vunpack.c.h.b16 %v213
      %v700 = vunpack.c.l.b16 %v214
      %v701 = vunpack.c.h.b16 %v214
      %v702 = vunpack.c.l.b16 %v215
      %v703 = vunpack.c.h.b16 %v215
      %v704 = vunpack.c.l.b16 %v216
      %v705 = vunpack.c.h.b16 %v216
      %v706 = vunpack.c.l.b16 %v217
      %v707 = vunpack.c.h.b16 %v217
      %v708 = vunpack.c.l.b16 %v218
      %v709 = vunpack.c.h.b16 %v218
      %v710 = vunpack.c.l.b16 %v219
      %v711 = vunpack.c.h.b16 %v219
      %v712 = vunpack.c.l.b16 %v220
      %v713 = vunpack.c.h.b16 %v220
      %v714 = vunpack.c.l.b16 %v221
      %v715 = vunpack.c.h.b16 %v221
      %v716 = vunpack.c.l.b16 %v222
      %v717 = vunpack.c.h.b16 %v222
      %v718 = vunpack.c.l.b16 %v223
      %v719 = vunpack.c.h.b16 %v223
      %v720 = vunpack.c.l.b16 %v224
      %v721 = vunpack.c.h.b16 %v224
      %v722 = vunpack.c.l.b16 %v225
      %v723 = vunpack.c.h.b16 %v225
      %v724 = vunpack.c.l.b16 %v226
      %v725 = vunpack.c.h.b16 %v226
      %v726 = vunpack.c.l.b16 %v227
      %v727 = vunpack.c.h.b16 %v227
      %v728 = vunpack.c.l.b16 %v228
      %v729 = vunpack.c.h.b16 %v228
      %v730 = vunpack.c.l.b16 %v229
      %v731 = vunpack.c.h.b16 %v229
      %v732 = vunpack.c.l.b16 %v230
      %v733 = vunpack.c.h.b16 %v230
      %v734 = vunpack.c.l.b16 %v231
      %v735 = vunpack.c.h.b16 %v231
      %v736 = vunpack.c.l.b16 %v232
      %v737 = vunpack.c.h.b16 %v232
      %v738 = vunpack.c.l.b16 %v233
      %v739 = vunpack.c.h.b16 %v233
      %v740 = vunpack.c.l.b16 %v234
      %v741 = vunpack.c.h.b16 %v234
      %v742 = vunpack.c.l.b16 %v235
      %v743 = vunpack.c.h.b16 %v235
      %v744 = vunpack.c.l.b16 %v236
      %v745 = vunpack.c.h.b16 %v236
      %v746 = vunpack.c.l.b16 %v237
      %v747 = vunpack.c.h.b16 %v237
      %v748 = vunpack.c.l.b16 %v238
      %v749 = vunpack.c.h.b16 %v238
      %v750 = vunpack.c.l.b16 %v239
      %v751 = vunpack.c.h.b16 %v239
      %v752 = vunpack.c.l.b16 %v240
      %v753 = vunpack.c.h.b16 %v240
      %v754 = vunpack.c.l.b16 %v241
      %v755 = vunpack.c.h.b16 %v241
      %v756 = vunpack.c.l.b16 %v242
      %v757 = vunpack.c.h.b16 %v242
      %v758 = vunpack.c.l.b16 %v243
      %v759 = vunpack.c.h.b16 %v243
      %v760 = vunpack.c.l.b16 %v244
      %v761 = vunpack.c.h.b16 %v244
      %v762 = vunpack.c.l.b16 %v245
      %v763 = vunpack.c.h.b16 %v245
      %v764 = vunpack.c.l.b16 %v246
      %v765 = vunpack.c.h.b16 %v246
      %v766 = vunpack.c.l.b16 %v247
      %v767 = vunpack.c.h.b16 %v247
      %v768 = vunpack.c.l.b16 %v248
      %v769 = vunpack.c.h.b16 %v248
      %v770 = vunpack.c.l.b16 %v249
      %v771 = vunpack.c.h.b16 %v249
      %v772 = vunpack.c.l.b16 %v250
      %v773 = vunpack.c.h.b16 %v250
      %v774 = vunpack.c.l.b16 %v251
      %v775 = vunpack.c.h.b16 %v251
      %v776 = vunpack.c.l.b16 %v252
      %v777 = vunpack.c.h.b16 %v252
      %v778 = vunpack.c.l.b16 %v253
      %v779 = vunpack.c.h.b16 %v253
      %v780 = vunpack.c.l.b16 %v254
      %v781 = vunpack.c.h.b16 %v254
      %v782 = vunpack.c.l.b16 %v255
      %v783 = vunpack.c.h.b16 %v255
      %v784 = vunpack.c.l.b16 %v256
      %v785 = vunpack.c.h.b16 %v256
      %v786 = vunpack.c.l.b16 %v257
      %v787 = vunpack.c.h.b16 %v257
      %v788 = vunpack.c.l.b16 %v258
      %v789 = vunpack.c.h.b16 %v258
      %v790 = vunpack.c.l.b16 %v259
      %v791 = vunpack.c.h.b16 %v259
      %v792 = vunpack.c.l.b16 %v260
      %v793 = vunpack.c.h.b16 %v260
      %v794 = vunpack.c.l.b16 %v261
      %v795 = vunpack.c.h.b16 %v261
      %v796 = vunpack.c.l.b16 %v262
      %v797 = vunpack.c.h.b16 %v262
      %v798 = vunpack.c.l.b16 %v263
      %v799 = vunpack.c.h.b16 %v263
      %v800 = vunpack.c.l.b16 %v264
      %v801 = vunpack.c.h.b16 %v264
      %v802 = vunpack.c.l.b16 %v265
      %v803 = vunpack.c.h.b16 %v265
      %v804 = vunpack.c.l.b16 %v266
      %v805 = vunpack.c.h.b16 %v266
      %v806 = vunpack.c.l.b16 %v267
      %v807 = vunpack.c.h.b16 %v267
      %v808 = vunpack.c.l.b16 %v268
      %v809 = vunpack.c.h.b16 %v268
      %v810 = vunpack.c.l.b16 %v269
      %v811 = vunpack.c.h.b16 %v269
      %v812 = vunpack.c.l.b16 %v270
      %v813 = vunpack.c.h.b16 %v270
      %v814 = vunpack.c.l.b16 %v271
      %v815 = vunpack.c.h.b16 %v271
      %v816 = vunpack.c.l.b16 %v272
      %v817 = vunpack.c.h.b16 %v272
      %v818 = vunpack.c.l.b16 %v273
      %v819 = vunpack.c.h.b16 %v273
      %v820 = vunpack.c.l.b16 %v274
      %v821 = vunpack.c.h.b16 %v274
      %v822 = vunpack.c.l.b16 %v275
      %v823 = vunpack.c.h.b16 %v275
      %v824 = vunpack.c.l.b16 %v276
      %v825 = vunpack.c.h.b16 %v276
      %v826 = vunpack.c.l.b16 %v277
      %v827 = vunpack.c.h.b16 %v277
      %v828 = vunpack.c.l.b16 %v278
      %v829 = vunpack.c.h.b16 %v278
      %v830 = vunpack.c.l.b16 %v279
      %v831 = vunpack.c.h.b16 %v279
      %v832 = vunpack.c.l.b16 %v280
      %v833 = vunpack.c.h.b16 %v280
      %v834 = vunpack.c.l.b16 %v281
      %v835 = vunpack.c.h.b16 %v281
      %v836 = vunpack.c.l.b16 %v282
      %v837 = vunpack.c.h.b16 %v282
      %v838 = vunpack.c.l.b16 %v283
      %v839 = vunpack.c.h.b16 %v283
      %v840 = vunpack.c.l.b16 %v284
      %v841 = vunpack.c.h.b16 %v284
      %v842 = vunpack.c.l.b16 %v285
      %v843 = vunpack.c.h.b16 %v285
      %v844 = vunpack.c.l.b16 %v286
      %v845 = vunpack.c.h.b16 %v286
      %v846 = vunpack.c.l.b16 %v287
      %v847 = vunpack.c.h.b16 %v287
      %v848 = vunpack.c.l.b16 %v288
      %v849 = vunpack.c.h.b16 %v288
      %v850 = vunpack.c.l.b16 %v289
      %v851 = vunpack.c.h.b16 %v289
      %v852 = vunpack.c.l.b16 %v290
      %v853 = vunpack.c.h.b16 %v290
      %v854 = vunpack.c.l.b16 %v291
      %v855 = vunpack.c.h.b16 %v291
      %v856 = vpack.c.b16 %v646, %v632
      %v857 = vpack.c.b16 %v647, %v633
      %v858 = vpack.c.b16 %v648, %v634
      %v859 = vpack.c.b16 %v649, %v635
      %v860 = vpack.c.b16 %v650, %v636
      %v861 = vpack.c.b16 %v651, %v637
      %v862 = vpack.c.b16 %v652, %v638
      %v863 = vpack.c.b16 %v653, %v639
      %v864 = vpack.c.b16 %v654, %v640
      %v865 = vpack.c.b16 %v655, %v641
      %v866 = vpack.c.b16 %v656, %v642
      %v867 = vpack.c.b16 %v657, %v643
      %v868 = vpack.c.b16 %v658, %v644
      %v869 = vpack.c.b16 %v659, %v645
      %v870 = vpack.c.b16 %v674, %v660
      %v871 = vpack.c.b16 %v675, %v661
      %v872 = vpack.c.b16 %v676, %v662
      %v873 = vpack.c.b16 %v677, %v663
      %v874 = vpack.c.b16 %v678, %v664
      %v875 = vpack.c.b16 %v679, %v665
      %v876 = vpack.c.b16 %v680, %v666
      %v877 = vpack.c.b16 %v681, %v667
      %v878 = vpack.c.b16 %v682, %v668
      %v879 = vpack.c.b16 %v683, %v669
      %v880 = vpack.c.b16 %v684, %v670
      %v881 = vpack.c.b16 %v685, %v671
      %v882 = vpack.c.b16 %v686, %v672
      %v883 = vpack.c.b16 %v687, %v673
      %v884 = vpack.c.b16 %v702, %v688
      %v885 = vpack.c.b16 %v703, %v689
      %v886 = vpack.c.b16 %v704, %v690
      %v887 = vpack.c.b16 %v705, %v691
      %v888 = vpack.c.b16 %v706, %v692
      %v889 = vpack.c.b16 %v707, %v693
      %v890 = vpack.c.b16 %v708, %v694
      %v891 = vpack.c.b16 %v709, %v695
      %v892 = vpack.c.b16 %v710, %v696
      %v893 = vpack.c.b16 %v711, %v697
      %v894 = vpack.c.b16 %v712, %v698
      %v895 = vpack.c.b16 %v713, %v699
      %v896 = vpack.c.b16 %v714, %v700
      %v897 = vpack.c.b16 %v715, %v701
      %v898 = vpack.c.b16 %v730, %v716
      %v899 = vpack.c.b16 %v731, %v717
      %v900 = vpack.c.b16 %v732, %v718
      %v901 = vpack.c.b16 %v733, %v719
      %v902 = vpack.c.b16 %v734, %v720
      %v903 = vpack.c.b16 %v735, %v721
      %v904 = vpack.c.b16 %v736, %v722
      %v905 = vpack.c.b16 %v737, %v723
      %v906 = vpack.c.b16 %v738, %v724
      %v907 = vpack.c.b16 %v739, %v725
      %v908 = vpack.c.b16 %v740, %v726
      %v909 = vpack.c.b16 %v741, %v727
      %v910 = vpack.c.b16 %v742, %v728
      %v911 = vpack.c.b16 %v743, %v729
      %v912 = vpack.c.b16 %v758, %v744
      %v913 = vpack.c.b16 %v759, %v745
      %v914 = vpack.c.b16 %v760, %v746
      %v915 = vpack.c.b16 %v761, %v747
      %v916 = vpack.c.b16 %v762, %v748
      %v917 = vpack.c.b16 %v763, %v749
      %v918 = vpack.c.b16 %v764, %v750
      %v919 = vpack.c.b16 %v765, %v751
      %v920 = vpack.c.b16 %v766, %v752
      %v921 = vpack.c.b16 %v767, %v753
      %v922 = vpack.c.b16 %v768, %v754
      %v923 = vpack.c.b16 %v769, %v755
      %v924 = vpack.c.b16 %v770, %v756
      %v925 = vpack.c.b16 %v771, %v757
      %v926 = vpack.c.b16 %v786, %v772
      %v927 = vpack.c.b16 %v787, %v773
      %v928 = vpack.c.b16 %v788, %v774
      %v929 = vpack.c.b16 %v789, %v775
      %v930 = vpack.c.b16 %v790, %v776
      %v931 = vpack.c.b16 %v791, %v777
      %v932 = vpack.c.b16 %v792, %v778
      %v933 = vpack.c.b16 %v793, %v779
      %v934 = vpack.c.b16 %v794, %v780
      %v935 = vpack.c.b16 %v795, %v781
      %v936 = vpack.c.b16 %v796, %v782
      %v937 = vpack.c.b16 %v797, %v783
      %v938 = vpack.c.b16 %v798, %v784
      %v939 = vpack.c.b16 %v799, %v785
      %v940 = vpack.c.b16 %v814, %v800
      %v941 = vpack.c.b16 %v815, %v801
      %v942 = vpack.c.b16 %v816, %v802
      %v943 = vpack.c.b16 %v817, %v803
      %v944 = vpack.c.b16 %v818, %v804
      %v945 = vpack.c.b16 %v819, %v805
      %v946 = vpack.c.b16 %v820, %v806
      %v947 = vpack.c.b16 %v821, %v807
      %v948 = vpack.c.b16 %v822, %v808
      %v949 = vpack.c.b16 %v823, %v809
      %v950 = vpack.c.b16 %v824, %v810
      %v951 = vpack.c.b16 %v825, %v811
      %v952 = vpack.c.b16 %v826, %v812
      %v953 = vpack.c.b16 %v827, %v813
      %v954 = vpack.c.b16 %v842, %v828
      %v955 = vpack.c.b16 %v843, %v829
      %v956 = vpack.c.b16 %v844, %v830
      %v957 = vpack.c.b16 %v845, %v831
      %v958 = vpack.c.b16 %v846, %v832
      %v959 = vpack.c.b16 %v847, %v833
      %v960 = vpack.c.b16 %v848, %v834
      %v961 = vpack.c.b16 %v849, %v835
      %v962 = vpack.c.b16 %v850, %v836
      %v963 = vpack.c.b16 %v851, %v837
      %v964 = vpack.c.b16 %v852, %v838
      %v965 = vpack.c.b16 %v853, %v839
      %v966 = vpack.c.b16 %v854, %v840
      %v967 = vpack.c.b16 %v855, %v841
      %v1288 = vunpack.c.l.b16 %v292
      %v1289 = vunpack.c.h.b16 %v292
      %v1290 = vunpack.c.l.b16 %v293
      %v1291 = vunpack.c.h.b16 %v293
      %v1292 = vunpack.c.l.b16 %v294
      %v1293 = vunpack.c.h.b16 %v294
      %v1294 = vunpack.c.l.b16 %v295
      %v1295 = vunpack.c.h.b16 %v295
      %v1296 = vunpack.c.l.b16 %v296
      %v1297 = vunpack.c.h.b16 %v296
      %v1298 = vunpack.c.l.b16 %v297
      %v1299 = vunpack.c.h.b16 %v297
      %v1300 = vunpack.c.l.b16 %v298
      %v1301 = vunpack.c.h.b16 %v298
      %v1302 = vunpack.c.l.b16 %v299
      %v1303 = vunpack.c.h.b16 %v299
      %v1304 = vunpack.c.l.b16 %v300
      %v1305 = vunpack.c.h.b16 %v300
      %v1306 = vunpack.c.l.b16 %v301
      %v1307 = vunpack.c.h.b16 %v301
      %v1308 = vunpack.c.l.b16 %v302
      %v1309 = vunpack.c.h.b16 %v302
      %v1310 = vunpack.c.l.b16 %v303
      %v1311 = vunpack.c.h.b16 %v303
      %v1312 = vunpack.c.l.b16 %v304
      %v1313 = vunpack.c.h.b16 %v304
      %v1314 = vunpack.c.l.b16 %v305
      %v1315 = vunpack.c.h.b16 %v305
      %v1316 = vunpack.c.l.b16 %v306
      %v1317 = vunpack.c.h.b16 %v306
      %v1318 = vunpack.c.l.b16 %v307
      %v1319 = vunpack.c.h.b16 %v307
      %v1320 = vunpack.c.l.b16 %v308
      %v1321 = vunpack.c.h.b16 %v308
      %v1322 = vunpack.c.l.b16 %v309
      %v1323 = vunpack.c.h.b16 %v309
      %v1324 = vunpack.c.l.b16 %v310
      %v1325 = vunpack.c.h.b16 %v310
      %v1326 = vunpack.c.l.b16 %v311
      %v1327 = vunpack.c.h.b16 %v311
      %v1328 = vunpack.c.l.b16 %v312
      %v1329 = vunpack.c.h.b16 %v312
      %v1330 = vunpack.c.l.b16 %v313
      %v1331 = vunpack.c.h.b16 %v313
      %v1332 = vunpack.c.l.b16 %v314
      %v1333 = vunpack.c.h.b16 %v314
      %v1334 = vunpack.c.l.b16 %v315
      %v1335 = vunpack.c.h.b16 %v315
      %v1336 = vunpack.c.l.b16 %v316
      %v1337 = vunpack.c.h.b16 %v316
      %v1338 = vunpack.c.l.b16 %v317
      %v1339 = vunpack.c.h.b16 %v317
      %v1340 = vunpack.c.l.b16 %v318
      %v1341 = vunpack.c.h.b16 %v318
      %v1342 = vunpack.c.l.b16 %v319
      %v1343 = vunpack.c.h.b16 %v319
      %v1344 = vunpack.c.l.b16 %v320
      %v1345 = vunpack.c.h.b16 %v320
      %v1346 = vunpack.c.l.b16 %v321
      %v1347 = vunpack.c.h.b16 %v321
      %v1348 = vunpack.c.l.b16 %v322
      %v1349 = vunpack.c.h.b16 %v322
      %v1350 = vunpack.c.l.b16 %v323
      %v1351 = vunpack.c.h.b16 %v323
      %v1352 = vunpack.c.l.b16 %v324
      %v1353 = vunpack.c.h.b16 %v324
      %v1354 = vunpack.c.l.b16 %v325
      %v1355 = vunpack.c.h.b16 %v325
      %v1356 = vunpack.c.l.b16 %v326
      %v1357 = vunpack.c.h.b16 %v326
      %v1358 = vunpack.c.l.b16 %v327
      %v1359 = vunpack.c.h.b16 %v327
      %v1360 = vunpack.c.l.b16 %v328
      %v1361 = vunpack.c.h.b16 %v328
      %v1362 = vunpack.c.l.b16 %v329
      %v1363 = vunpack.c.h.b16 %v329
      %v1364 = vunpack.c.l.b16 %v330
      %v1365 = vunpack.c.h.b16 %v330
      %v1366 = vunpack.c.l.b16 %v331
      %v1367 = vunpack.c.h.b16 %v331
      %v1368 = vunpack.c.l.b16 %v332
      %v1369 = vunpack.c.h.b16 %v332
      %v1370 = vunpack.c.l.b16 %v333
      %v1371 = vunpack.c.h.b16 %v333
      %v1372 = vunpack.c.l.b16 %v334
      %v1373 = vunpack.c.h.b16 %v334
      %v1374 = vunpack.c.l.b16 %v335
      %v1375 = vunpack.c.h.b16 %v335
      %v1376 = vunpack.c.l.b16 %v336
      %v1377 = vunpack.c.h.b16 %v336
      %v1378 = vunpack.c.l.b16 %v337
      %v1379 = vunpack.c.h.b16 %v337
      %v1380 = vunpack.c.l.b16 %v338
      %v1381 = vunpack.c.h.b16 %v338
      %v1382 = vunpack.c.l.b16 %v339
      %v1383 = vunpack.c.h.b16 %v339
      %v1384 = vunpack.c.l.b16 %v340
      %v1385 = vunpack.c.h.b16 %v340
      %v1386 = vunpack.c.l.b16 %v341
      %v1387 = vunpack.c.h.b16 %v341
      %v1388 = vunpack.c.l.b16 %v342
      %v1389 = vunpack.c.h.b16 %v342
      %v1390 = vunpack.c.l.b16 %v343
      %v1391 = vunpack.c.h.b16 %v343
      %v1392 = vunpack.c.l.b16 %v344
      %v1393 = vunpack.c.h.b16 %v344
      %v1394 = vunpack.c.l.b16 %v345
      %v1395 = vunpack.c.h.b16 %v345
      %v1396 = vunpack.c.l.b16 %v346
      %v1397 = vunpack.c.h.b16 %v346
      %v1398 = vunpack.c.l.b16 %v347
      %v1399 = vunpack.c.h.b16 %v347
      %v1400 = vunpack.c.l.b16 %v348
      %v1401 = vunpack.c.h.b16 %v348
      %v1402 = vunpack.c.l.b16 %v349
      %v1403 = vunpack.c.h.b16 %v349
      %v1404 = vunpack.c.l.b16 %v350
      %v1405 = vunpack.c.h.b16 %v350
      %v1406 = vunpack.c.l.b16 %v351
      %v1407 = vunpack.c.h.b16 %v351
      %v1408 = vunpack.c.l.b16 %v352
      %v1409 = vunpack.c.h.b16 %v352
      %v1410 = vunpack.c.l.b16 %v353
      %v1411 = vunpack.c.h.b16 %v353
      %v1412 = vunpack.c.l.b16 %v354
      %v1413 = vunpack.c.h.b16 %v354
      %v1414 = vunpack.c.l.b16 %v355
      %v1415 = vunpack.c.h.b16 %v355
      %v1416 = vunpack.c.l.b16 %v356
      %v1417 = vunpack.c.h.b16 %v356
      %v1418 = vunpack.c.l.b16 %v357
      %v1419 = vunpack.c.h.b16 %v357
      %v1420 = vunpack.c.l.b16 %v358
      %v1421 = vunpack.c.h.b16 %v358
      %v1422 = vunpack.c.l.b16 %v359
      %v1423 = vunpack.c.h.b16 %v359
      %v1424 = vunpack.c.l.b16 %v360
      %v1425 = vunpack.c.h.b16 %v360
      %v1426 = vunpack.c.l.b16 %v361
      %v1427 = vunpack.c.h.b16 %v361
      %v1428 = vunpack.c.l.b16 %v362
      %v1429 = vunpack.c.h.b16 %v362
      %v1430 = vunpack.c.l.b16 %v363
      %v1431 = vunpack.c.h.b16 %v363
      %v1432 = vunpack.c.l.b16 %v364
      %v1433 = vunpack.c.h.b16 %v364
      %v1434 = vunpack.c.l.b16 %v365
      %v1435 = vunpack.c.h.b16 %v365
      %v1436 = vunpack.c.l.b16 %v366
      %v1437 = vunpack.c.h.b16 %v366
      %v1438 = vunpack.c.l.b16 %v367
      %v1439 = vunpack.c.h.b16 %v367
      %v1440 = vunpack.c.l.b16 %v368
      %v1441 = vunpack.c.h.b16 %v368
      %v1442 = vunpack.c.l.b16 %v369
      %v1443 = vunpack.c.h.b16 %v369
      %v1444 = vunpack.c.l.b16 %v370
      %v1445 = vunpack.c.h.b16 %v370
      %v1446 = vunpack.c.l.b16 %v371
      %v1447 = vunpack.c.h.b16 %v371
      %v1448 = vunpack.c.l.b16 %v372
      %v1449 = vunpack.c.h.b16 %v372
      %v1450 = vunpack.c.l.b16 %v373
      %v1451 = vunpack.c.h.b16 %v373
      %v1452 = vunpack.c.l.b16 %v374
      %v1453 = vunpack.c.h.b16 %v374
      %v1454 = vunpack.c.l.b16 %v375
      %v1455 = vunpack.c.h.b16 %v375
      %v1456 = vunpack.c.l.b16 %v376
      %v1457 = vunpack.c.h.b16 %v376
      %v1458 = vunpack.c.l.b16 %v377
      %v1459 = vunpack.c.h.b16 %v377
      %v1460 = vunpack.c.l.b16 %v378
      %v1461 = vunpack.c.h.b16 %v378
      %v1462 = vunpack.c.l.b16 %v379
      %v1463 = vunpack.c.h.b16 %v379
      %v1464 = vunpack.c.l.b16 %v380
      %v1465 = vunpack.c.h.b16 %v380
      %v1466 = vunpack.c.l.b16 %v381
      %v1467 = vunpack.c.h.b16 %v381
      %v1468 = vunpack.c.l.b16 %v382
      %v1469 = vunpack.c.h.b16 %v382
      %v1470 = vunpack.c.l.b16 %v383
      %v1471 = vunpack.c.h.b16 %v383
      %v1472 = vunpack.c.l.b16 %v384
      %v1473 = vunpack.c.h.b16 %v384
      %v1474 = vunpack.c.l.b16 %v385
      %v1475 = vunpack.c.h.b16 %v385
      %v1476 = vunpack.c.l.b16 %v386
      %v1477 = vunpack.c.h.b16 %v386
      %v1478 = vunpack.c.l.b16 %v387
      %v1479 = vunpack.c.h.b16 %v387
      %v1480 = vunpack.c.l.b16 %v388
      %v1481 = vunpack.c.h.b16 %v388
      %v1482 = vunpack.c.l.b16 %v389
      %v1483 = vunpack.c.h.b16 %v389
      %v1484 = vunpack.c.l.b16 %v390
      %v1485 = vunpack.c.h.b16 %v390
      %v1486 = vunpack.c.l.b16 %v391
      %v1487 = vunpack.c.h.b16 %v391
      %v1488 = vunpack.c.l.b16 %v392
      %v1489 = vunpack.c.h.b16 %v392
      %v1490 = vunpack.c.l.b16 %v393
      %v1491 = vunpack.c.h.b16 %v393
      %v1492 = vunpack.c.l.b16 %v394
      %v1493 = vunpack.c.h.b16 %v394
      %v1494 = vunpack.c.l.b16 %v395
      %v1495 = vunpack.c.h.b16 %v395
      %v1496 = vunpack.c.l.b16 %v396
      %v1497 = vunpack.c.h.b16 %v396
      %v1498 = vunpack.c.l.b16 %v397
      %v1499 = vunpack.c.h.b16 %v397
      %v1500 = vunpack.c.l.b16 %v398
      %v1501 = vunpack.c.h.b16 %v398
      %v1502 = vunpack.c.l.b16 %v399
      %v1503 = vunpack.c.h.b16 %v399
      %v1504 = vunpack.c.l.b16 %v400
      %v1505 = vunpack.c.h.b16 %v400
      %v1506 = vunpack.c.l.b16 %v401
      %v1507 = vunpack.c.h.b16 %v401
      %v1508 = vunpack.c.l.b16 %v402
      %v1509 = vunpack.c.h.b16 %v402
      %v1510 = vunpack.c.l.b16 %v403
      %v1511 = vunpack.c.h.b16 %v403
      %v1512 = vunpack.c.l.b16 %v404
      %v1513 = vunpack.c.h.b16 %v404
      %v1514 = vunpack.c.l.b16 %v405
      %v1515 = vunpack.c.h.b16 %v405
      %v1516 = vunpack.c.l.b16 %v406
      %v1517 = vunpack.c.h.b16 %v406
      %v1518 = vunpack.c.l.b16 %v407
      %v1519 = vunpack.c.h.b16 %v407
      %v1520 = vunpack.c.l.b16 %v408
      %v1521 = vunpack.c.h.b16 %v408
      %v1522 = vunpack.c.l.b16 %v409
      %v1523 = vunpack.c.h.b16 %v409
      %v1524 = vunpack.c.l.b16 %v410
      %v1525 = vunpack.c.h.b16 %v410
      %v1526 = vunpack.c.l.b16 %v411
      %v1527 = vunpack.c.h.b16 %v411
      %v1528 = vunpack.c.l.b16 %v412
      %v1529 = vunpack.c.h.b16 %v412
      %v1530 = vunpack.c.l.b16 %v413
      %v1531 = vunpack.c.h.b16 %v413
      %v1532 = vunpack.c.l.b16 %v414
      %v1533 = vunpack.c.h.b16 %v414
      %v1534 = vunpack.c.l.b16 %v415
      %v1535 = vunpack.c.h.b16 %v415
      %v1536 = vunpack.c.l.b16 %v416
      %v1537 = vunpack.c.h.b16 %v416
      %v1538 = vunpack.c.l.b16 %v417
      %v1539 = vunpack.c.h.b16 %v417
      %v1540 = vunpack.c.l.b16 %v418
      %v1541 = vunpack.c.h.b16 %v418
      %v1542 = vunpack.c.l.b16 %v419
      %v1543 = vunpack.c.h.b16 %v419
      %v1544 = vunpack.c.l.b16 %v420
      %v1545 = vunpack.c.h.b16 %v420
      %v1546 = vunpack.c.l.b16 %v421
      %v1547 = vunpack.c.h.b16 %v421
      %v1548 = vunpack.c.l.b16 %v422
      %v1549 = vunpack.c.h.b16 %v422
      %v1550 = vunpack.c.l.b16 %v423
      %v1551 = vunpack.c.h.b16 %v423
      %v1552 = vunpack.c.l.b16 %v424
      %v1553 = vunpack.c.h.b16 %v424
      %v1554 = vunpack.c.l.b16 %v425
      %v1555 = vunpack.c.h.b16 %v425
      %v1556 = vunpack.c.l.b16 %v426
      %v1557 = vunpack.c.h.b16 %v426
      %v1558 = vunpack.c.l.b16 %v427
      %v1559 = vunpack.c.h.b16 %v427
      %v1560 = vunpack.c.l.b16 %v428
      %v1561 = vunpack.c.h.b16 %v428
      %v1562 = vunpack.c.l.b16 %v429
      %v1563 = vunpack.c.h.b16 %v429
      %v1564 = vunpack.c.l.b16 %v430
      %v1565 = vunpack.c.h.b16 %v430
      %v1566 = vunpack.c.l.b16 %v431
      %v1567 = vunpack.c.h.b16 %v431
      %v1568 = vunpack.c.l.b16 %v432
      %v1569 = vunpack.c.h.b16 %v432
      %v1570 = vunpack.c.l.b16 %v433
      %v1571 = vunpack.c.h.b16 %v433
      %v1572 = vunpack.c.l.b16 %v434
      %v1573 = vunpack.c.h.b16 %v434
      %v1574 = vunpack.c.l.b16 %v435
      %v1575 = vunpack.c.h.b16 %v435
      %v1576 = vunpack.c.l.b16 %v436
      %v1577 = vunpack.c.h.b16 %v436
      %v1578 = vunpack.c.l.b16 %v437
      %v1579 = vunpack.c.h.b16 %v437
      %v1580 = vunpack.c.l.b16 %v438
      %v1581 = vunpack.c.h.b16 %v438
      %v1582 = vunpack.c.l.b16 %v439
      %v1583 = vunpack.c.h.b16 %v439
      %v1584 = vunpack.c.l.b16 %v440
      %v1585 = vunpack.c.h.b16 %v440
      %v1586 = vunpack.c.l.b16 %v441
      %v1587 = vunpack.c.h.b16 %v441
      %v1588 = vunpack.c.l.b16 %v442
      %v1589 = vunpack.c.h.b16 %v442
      %v1590 = vunpack.c.l.b16 %v443
      %v1591 = vunpack.c.h.b16 %v443
      %v1592 = vunpack.c.l.b16 %v444
      %v1593 = vunpack.c.h.b16 %v444
      %v1594 = vunpack.c.l.b16 %v445
      %v1595 = vunpack.c.h.b16 %v445
      %v1596 = vunpack.c.l.b16 %v446
      %v1597 = vunpack.c.h.b16 %v446
      %v1598 = vunpack.c.l.b16 %v447
      %v1599 = vunpack.c.h.b16 %v447
      %v1600 = vunpack.c.l.b16 %v448
      %v1601 = vunpack.c.h.b16 %v448
      %v1602 = vunpack.c.l.b16 %v449
      %v1603 = vunpack.c.h.b16 %v449
      %v1604 = vunpack.c.l.b16 %v450
      %v1605 = vunpack.c.h.b16 %v450
      %v1606 = vunpack.c.l.b16 %v451
      %v1607 = vunpack.c.h.b16 %v451
      %v1608 = vunpack.c.l.b16 %v452
      %v1609 = vunpack.c.h.b16 %v452
      %v1610 = vunpack.c.l.b16 %v453
      %v1611 = vunpack.c.h.b16 %v453
      %v1612 = vunpack.c.l.b16 %v454
      %v1613 = vunpack.c.h.b16 %v454
      %v1614 = vunpack.c.l.b16 %v455
      %v1615 = vunpack.c.h.b16 %v455
      %v1616 = vunpack.c.l.b16 %v456
      %v1617 = vunpack.c.h.b16 %v456
      %v1618 = vunpack.c.l.b16 %v457
      %v1619 = vunpack.c.h.b16 %v457
      %v1620 = vunpack.c.l.b16 %v458
      %v1621 = vunpack.c.h.b16 %v458
      %v1622 = vunpack.c.l.b16 %v459
      %v1623 = vunpack.c.h.b16 %v459
      %v1624 = vunpack.c.l.b16 %v460
      %v1625 = vunpack.c.h.b16 %v460
      %v1626 = vunpack.c.l.b16 %v461
      %v1627 = vunpack.c.h.b16 %v461
      %v1628 = vunpack.c.l.b16 %v462
      %v1629 = vunpack.c.h.b16 %v462
      %v1630 = vunpack.c.l.b16 %v463
      %v1631 = vunpack.c.h.b16 %v463
      %v1632 = vunpack.c.l.b16 %v464
      %v1633 = vunpack.c.h.b16 %v464
      %v1634 = vunpack.c.l.b16 %v465
      %v1635 = vunpack.c.h.b16 %v465
      %v1636 = vunpack.c.l.b16 %v466
      %v1637 = vunpack.c.h.b16 %v466
      %v1638 = vunpack.c.l.b16 %v467
      %v1639 = vunpack.c.h.b16 %v467
      %v1640 = vunpack.c.l.b16 %v468
      %v1641 = vunpack.c.h.b16 %v468
      %v1642 = vunpack.c.l.b16 %v469
      %v1643 = vunpack.c.h.b16 %v469
      %v1644 = vunpack.c.l.b16 %v470
      %v1645 = vunpack.c.h.b16 %v470
      %v1646 = vunpack.c.l.b16 %v471
      %v1647 = vunpack.c.h.b16 %v471
      %v1648 = vunpack.c.l.b16 %v472
      %v1649 = vunpack.c.h.b16 %v472
      %v1650 = vunpack.c.l.b16 %v473
      %v1651 = vunpack.c.h.b16 %v473
      %v1652 = vunpack.c.l.b16 %v474
      %v1653 = vunpack.c.h.b16 %v474
      %v1654 = vunpack.c.l.b16 %v475
      %v1655 = vunpack.c.h.b16 %v475
      %v1656 = vunpack.c.l.b16 %v476
      %v1657 = vunpack.c.h.b16 %v476
      %v1658 = vunpack.c.l.b16 %v477
      %v1659 = vunpack.c.h.b16 %v477
      %v1660 = vunpack.c.l.b16 %v478
      %v1661 = vunpack.c.h.b16 %v478
      %v1662 = vunpack.c.l.b16 %v479
      %v1663 = vunpack.c.h.b16 %v479
      %v1664 = vunpack.c.l.b16 %v480
      %v1665 = vunpack.c.h.b16 %v480
      %v1666 = vunpack.c.l.b16 %v481
      %v1667 = vunpack.c.h.b16 %v481
      %v1668 = vunpack.c.l.b16 %v482
      %v1669 = vunpack.c.h.b16 %v482
      %v1670 = vunpack.c.l.b16 %v483
      %v1671 = vunpack.c.h.b16 %v483
      %v1672 = vunpack.c.l.b16 %v484
      %v1673 = vunpack.c.h.b16 %v484
      %v1674 = vunpack.c.l.b16 %v485
      %v1675 = vunpack.c.h.b16 %v485
      %v1676 = vunpack.c.l.b16 %v486
      %v1677 = vunpack.c.h.b16 %v486
      %v1678 = vunpack.c.l.b16 %v487
      %v1679 = vunpack.c.h.b16 %v487
      %v1680 = vunpack.c.l.b16 %v488
      %v1681 = vunpack.c.h.b16 %v488
      %v1682 = vunpack.c.l.b16 %v489
      %v1683 = vunpack.c.h.b16 %v489
      %v1684 = vunpack.c.l.b16 %v490
      %v1685 = vunpack.c.h.b16 %v490
      %v1686 = vunpack.c.l.b16 %v491
      %v1687 = vunpack.c.h.b16 %v491
      %v1688 = vunpack.c.l.b16 %v492
      %v1689 = vunpack.c.h.b16 %v492
      %v1690 = vunpack.c.l.b16 %v493
      %v1691 = vunpack.c.h.b16 %v493
      %v1692 = vunpack.c.l.b16 %v494
      %v1693 = vunpack.c.h.b16 %v494
      %v1694 = vunpack.c.l.b16 %v495
      %v1695 = vunpack.c.h.b16 %v495
      %v1696 = vunpack.c.l.b16 %v496
      %v1697 = vunpack.c.h.b16 %v496
      %v1698 = vunpack.c.l.b16 %v497
      %v1699 = vunpack.c.h.b16 %v497
      %v1700 = vunpack.c.l.b16 %v498
      %v1701 = vunpack.c.h.b16 %v498
      %v1702 = vunpack.c.l.b16 %v499
      %v1703 = vunpack.c.h.b16 %v499
      %v1704 = vunpack.c.l.b16 %v500
      %v1705 = vunpack.c.h.b16 %v500
      %v1706 = vunpack.c.l.b16 %v501
      %v1707 = vunpack.c.h.b16 %v501
      %v1708 = vunpack.c.l.b16 %v502
      %v1709 = vunpack.c.h.b16 %v502
      %v1710 = vunpack.c.l.b16 %v503
      %v1711 = vunpack.c.h.b16 %v503
      %v1712 = vunpack.c.l.b16 %v504
      %v1713 = vunpack.c.h.b16 %v504
      %v1714 = vunpack.c.l.b16 %v505
      %v1715 = vunpack.c.h.b16 %v505
      %v1716 = vunpack.c.l.b16 %v506
      %v1717 = vunpack.c.h.b16 %v506
      %v1718 = vunpack.c.l.b16 %v507
      %v1719 = vunpack.c.h.b16 %v507
      %v1720 = vpack.c.b16 %v1290, %v1288
      %v1721 = vpack.c.b16 %v1291, %v1289
      %v1722 = vpack.c.b16 %v1294, %v1292
      %v1723 = vpack.c.b16 %v1295, %v1293
      %v1724 = vpack.c.b16 %v1298, %v1296
      %v1725 = vpack.c.b16 %v1299, %v1297
      %v1726 = vpack.c.b16 %v1302, %v1300
      %v1727 = vpack.c.b16 %v1303, %v1301
      %v1728 = vpack.c.b16 %v1306, %v1304
      %v1729 = vpack.c.b16 %v1307, %v1305
      %v1730 = vpack.c.b16 %v1310, %v1308
      %v1731 = vpack.c.b16 %v1311, %v1309
      %v1732 = vpack.c.b16 %v1314, %v1312
      %v1733 = vpack.c.b16 %v1315, %v1313
      %v1734 = vpack.c.b16 %v1318, %v1316
      %v1735 = vpack.c.b16 %v1319, %v1317
      %v1736 = vpack.c.b16 %v1322, %v1320
      %v1737 = vpack.c.b16 %v1323, %v1321
      %v1738 = vpack.c.b16 %v1326, %v1324
      %v1739 = vpack.c.b16 %v1327, %v1325
      %v1740 = vpack.c.b16 %v1330, %v1328
      %v1741 = vpack.c.b16 %v1331, %v1329
      %v1742 = vpack.c.b16 %v1334, %v1332
      %v1743 = vpack.c.b16 %v1335, %v1333
      %v1744 = vpack.c.b16 %v1338, %v1336
      %v1745 = vpack.c.b16 %v1339, %v1337
      %v1746 = vpack.c.b16 %v1342, %v1340
      %v1747 = vpack.c.b16 %v1343, %v1341
      %v1748 = vpack.c.b16 %v1346, %v1344
      %v1749 = vpack.c.b16 %v1347, %v1345
      %v1750 = vpack.c.b16 %v1350, %v1348
      %v1751 = vpack.c.b16 %v1351, %v1349
      %v1752 = vpack.c.b16 %v1354, %v1352
      %v1753 = vpack.c.b16 %v1355, %v1353
      %v1754 = vpack.c.b16 %v1358, %v1356
      %v1755 = vpack.c.b16 %v1359, %v1357
      %v1756 = vpack.c.b16 %v1362, %v1360
      %v1757 = vpack.c.b16 %v1363, %v1361
      %v1758 = vpack.c.b16 %v1366, %v1364
      %v1759 = vpack.c.b16 %v1367, %v1365
      %v1760 = vpack.c.b16 %v1370, %v1368
      %v1761 = vpack.c.b16 %v1371, %v1369
      %v1762 = vpack.c.b16 %v1374, %v1372
      %v1763 = vpack.c.b16 %v1375, %v1373
      %v1764 = vpack.c.b16 %v1378, %v1376
      %v1765 = vpack.c.b16 %v1379, %v1377
      %v1766 = vpack.c.b16 %v1382, %v1380
      %v1767 = vpack.c.b16 %v1383, %v1381
      %v1768 = vpack.c.b16 %v1386, %v1384
      %v1769 = vpack.c.b16 %v1387, %v1385
      %v1770 = vpack.c.b16 %v1390, %v1388
      %v1771 = vpack.c.b16 %v1391, %v1389
      %v1772 = vpack.c.b16 %v1394, %v1392
      %v1773 = vpack.c.b16 %v1395, %v1393
      %v1774 = vpack.c.b16 %v1398, %v1396
      %v1775 = vpack.c.b16 %v1399, %v1397
      %v1776 = vpack.c.b16 %v1402, %v1400
      %v1777 = vpack.c.b16 %v1403, %v1401
      %v1778 = vpack.c.b16 %v1406, %v1404
      %v1779 = vpack.c.b16 %v1407, %v1405
      %v1780 = vpack.c.b16 %v1410, %v1408
      %v1781 = vpack.c.b16 %v1411, %v1409
      %v1782 = vpack.c.b16 %v1414, %v1412
      %v1783 = vpack.c.b16 %v1415, %v1413
      %v1784 = vpack.c.b16 %v1418, %v1416
      %v1785 = vpack.c.b16 %v1419, %v1417
      %v1786 = vpack.c.b16 %v1422, %v1420
      %v1787 = vpack.c.b16 %v1423, %v1421
      %v1788 = vpack.c.b16 %v1426, %v1424
      %v1789 = vpack.c.b16 %v1427, %v1425
      %v1790 = vpack.c.b16 %v1430, %v1428
      %v1791 = vpack.c.b16 %v1431, %v1429
      %v1792 = vpack.c.b16 %v1434, %v1432
      %v1793 = vpack.c.b16 %v1435, %v1433
      %v1794 = vpack.c.b16 %v1438, %v1436
      %v1795 = vpack.c.b16 %v1439, %v1437
      %v1796 = vpack.c.b16 %v1442, %v1440
      %v1797 = vpack.c.b16 %v1443, %v1441
      %v1798 = vpack.c.b16 %v1446, %v1444
      %v1799 = vpack.c.b16 %v1447, %v1445
      %v1800 = vpack.c.b16 %v1450, %v1448
      %v1801 = vpack.c.b16 %v1451, %v1449
      %v1802 = vpack.c.b16 %v1454, %v1452
      %v1803 = vpack.c.b16 %v1455, %v1453
      %v1804 = vpack.c.b16 %v1458, %v1456
      %v1805 = vpack.c.b16 %v1459, %v1457
      %v1806 = vpack.c.b16 %v1462, %v1460
      %v1807 = vpack.c.b16 %v1463, %v1461
      %v1808 = vpack.c.b16 %v1466, %v1464
      %v1809 = vpack.c.b16 %v1467, %v1465
      %v1810 = vpack.c.b16 %v1470, %v1468
      %v1811 = vpack.c.b16 %v1471, %v1469
      %v1812 = vpack.c.b16 %v1474, %v1472
      %v1813 = vpack.c.b16 %v1475, %v1473
      %v1814 = vpack.c.b16 %v1478, %v1476
      %v1815 = vpack.c.b16 %v1479, %v1477
      %v1816 = vpack.c.b16 %v1482, %v1480
      %v1817 = vpack.c.b16 %v1483, %v1481
      %v1818 = vpack.c.b16 %v1486, %v1484
      %v1819 = vpack.c.b16 %v1487, %v1485
      %v1820 = vpack.c.b16 %v1490, %v1488
      %v1821 = vpack.c.b16 %v1491, %v1489
      %v1822 = vpack.c.b16 %v1494, %v1492
      %v1823 = vpack.c.b16 %v1495, %v1493
      %v1824 = vpack.c.b16 %v1498, %v1496
      %v1825 = vpack.c.b16 %v1499, %v1497
      %v1826 = vpack.c.b16 %v1502, %v1500
      %v1827 = vpack.c.b16 %v1503, %v1501
      %v1828 = vpack.c.b16 %v1506, %v1504
      %v1829 = vpack.c.b16 %v1507, %v1505
      %v1830 = vpack.c.b16 %v1510, %v1508
      %v1831 = vpack.c.b16 %v1511, %v1509
      %v1832 = vpack.c.b16 %v1514, %v1512
      %v1833 = vpack.c.b16 %v1515, %v1513
      %v1834 = vpack.c.b16 %v1518, %v1516
      %v1835 = vpack.c.b16 %v1519, %v1517
      %v1836 = vpack.c.b16 %v1522, %v1520
      %v1837 = vpack.c.b16 %v1523, %v1521
      %v1838 = vpack.c.b16 %v1526, %v1524
      %v1839 = vpack.c.b16 %v1527, %v1525
      %v1840 = vpack.c.b16 %v1530, %v1528
      %v1841 = vpack.c.b16 %v1531, %v1529
      %v1842 = vpack.c.b16 %v1534, %v1532
      %v1843 = vpack.c.b16 %v1535, %v1533
      %v1844 = vpack.c.b16 %v1538, %v1536
      %v1845 = vpack.c.b16 %v1539, %v1537
      %v1846 = vpack.c.b16 %v1542, %v1540
      %v1847 = vpack.c.b16 %v1543, %v1541
      %v1848 = vpack.c.b16 %v1546, %v1544
      %v1849 = vpack.c.b16 %v1547, %v1545
      %v1850 = vpack.c.b16 %v1550, %v1548
      %v1851 = vpack.c.b16 %v1551, %v1549
      %v1852 = vpack.c.b16 %v1554, %v1552
      %v1853 = vpack.c.b16 %v1555, %v1553
      %v1854 = vpack.c.b16 %v1558, %v1556
      %v1855 = vpack.c.b16 %v1559, %v1557
      %v1856 = vpack.c.b16 %v1562, %v1560
      %v1857 = vpack.c.b16 %v1563, %v1561
      %v1858 = vpack.c.b16 %v1566, %v1564
      %v1859 = vpack.c.b16 %v1567, %v1565
      %v1860 = vpack.c.b16 %v1570, %v1568
      %v1861 = vpack.c.b16 %v1571, %v1569
      %v1862 = vpack.c.b16 %v1574, %v1572
      %v1863 = vpack.c.b16 %v1575, %v1573
      %v1864 = vpack.c.b16 %v1578, %v1576
      %v1865 = vpack.c.b16 %v1579, %v1577
      %v1866 = vpack.c.b16 %v1582, %v1580
      %v1867 = vpack.c.b16 %v1583, %v1581
      %v1868 = vpack.c.b16 %v1586, %v1584
      %v1869 = vpack.c.b16 %v1587, %v1585
      %v1870 = vpack.c.b16 %v1590, %v1588
      %v1871 = vpack.c.b16 %v1591, %v1589
      %v1872 = vpack.c.b16 %v1594, %v1592
      %v1873 = vpack.c.b16 %v1595, %v1593
      %v1874 = vpack.c.b16 %v1598, %v1596
      %v1875 = vpack.c.b16 %v1599, %v1597
      %v1876 = vpack.c.b16 %v1602, %v1600
      %v1877 = vpack.c.b16 %v1603, %v1601
      %v1878 = vpack.c.b16 %v1606, %v1604
      %v1879 = vpack.c.b16 %v1607, %v1605
      %v1880 = vpack.c.b16 %v1610, %v1608
      %v1881 = vpack.c.b16 %v1611, %v1609
      %v1882 = vpack.c.b16 %v1614, %v1612
      %v1883 = vpack.c.b16 %v1615, %v1613
      %v1884 = vpack.c.b16 %v1618, %v1616
      %v1885 = vpack.c.b16 %v1619, %v1617
      %v1886 = vpack.c.b16 %v1622, %v1620
      %v1887 = vpack.c.b16 %v1623, %v1621
      %v1888 = vpack.c.b16 %v1626, %v1624
      %v1889 = vpack.c.b16 %v1627, %v1625
      %v1890 = vpack.c.b16 %v1630, %v1628
      %v1891 = vpack.c.b16 %v1631, %v1629
      %v1892 = vpack.c.b16 %v1634, %v1632
      %v1893 = vpack.c.b16 %v1635, %v1633
      %v1894 = vpack.c.b16 %v1638, %v1636
      %v1895 = vpack.c.b16 %v1639, %v1637
      %v1896 = vpack.c.b16 %v1642, %v1640
      %v1897 = vpack.c.b16 %v1643, %v1641
      %v1898 = vpack.c.b16 %v1646, %v1644
      %v1899 = vpack.c.b16 %v1647, %v1645
      %v1900 = vpack.c.b16 %v1650, %v1648
      %v1901 = vpack.c.b16 %v1651, %v1649
      %v1902 = vpack.c.b16 %v1654, %v1652
      %v1903 = vpack.c.b16 %v1655, %v1653
      %v1904 = vpack.c.b16 %v1658, %v1656
      %v1905 = vpack.c.b16 %v1659, %v1657
      %v1906 = vpack.c.b16 %v1662, %v1660
      %v1907 = vpack.c.b16 %v1663, %v1661
      %v1908 = vpack.c.b16 %v1666, %v1664
      %v1909 = vpack.c.b16 %v1667, %v1665
      %v1910 = vpack.c.b16 %v1670, %v1668
      %v1911 = vpack.c.b16 %v1671, %v1669
      %v1912 = vpack.c.b16 %v1674, %v1672
      %v1913 = vpack.c.b16 %v1675, %v1673
      %v1914 = vpack.c.b16 %v1678, %v1676
      %v1915 = vpack.c.b16 %v1679, %v1677
      %v1916 = vpack.c.b16 %v1682, %v1680
      %v1917 = vpack.c.b16 %v1683, %v1681
      %v1918 = vpack.c.b16 %v1686, %v1684
      %v1919 = vpack.c.b16 %v1687, %v1685
      %v1920 = vpack.c.b16 %v1690, %v1688
      %v1921 = vpack.c.b16 %v1691, %v1689
      %v1922 = vpack.c.b16 %v1694, %v1692
      %v1923 = vpack.c.b16 %v1695, %v1693
      %v1924 = vpack.c.b16 %v1698, %v1696
      %v1925 = vpack.c.b16 %v1699, %v1697
      %v1926 = vpack.c.b16 %v1702, %v1700
      %v1927 = vpack.c.b16 %v1703, %v1701
      %v1928 = vpack.c.b16 %v1706, %v1704
      %v1929 = vpack.c.b16 %v1707, %v1705
      %v1930 = vpack.c.b16 %v1710, %v1708
      %v1931 = vpack.c.b16 %v1711, %v1709
      %v1932 = vpack.c.b16 %v1714, %v1712
      %v1933 = vpack.c.b16 %v1715, %v1713
      %v1934 = vpack.c.b16 %v1718, %v1716
      %v1935 = vpack.c.b16 %v1719, %v1717
      %vm2152 = vcmask 523264
      %v2154 = vsel %vm2152, %v869, 0
      %v2157 = vsel %vm2152, %v883, 0
      %v2160 = vsel %vm2152, %v897, 0
      %v2163 = vsel %vm2152, %v911, 0
      %v2166 = vsel %vm2152, %v925, 0
      %v2169 = vsel %vm2152, %v939, 0
      %v2172 = vsel %vm2152, %v953, 0
      %v2175 = vsel %vm2152, %v967, 0
      %2177 = vmatprep.subr.bf16.mxu0 %v1735
      %2178 = vmatpush1.bf16.msra.mxu0 %v1734
      %2179 = vmatprep.subr.bf16.mxu0 %v1733
      %2180 = vmatpush1.bf16.msra.mxu0 %v1732
      %2181 = vmatprep.subr.bf16.mxu0 %v1731
      %2182 = vmatpush1.bf16.msra.mxu0 %v1730
      %2183 = vmatprep.subr.bf16.mxu0 %v1729
      %2184 = vmatpush1.bf16.msra.mxu0 %v1728
      %2185 = vmatprep.subr.bf16.mxu0 %v1727
      %2186 = vmatpush1.bf16.msra.mxu0 %v1726
      %2187 = vmatprep.subr.bf16.mxu0 %v1725
      %2188 = vmatpush1.bf16.msra.mxu0 %v1724
      %2189 = vmatprep.subr.bf16.mxu0 %v1723
      %2190 = vmatpush1.bf16.msra.mxu0 %v1722
      %2191 = vmatprep.subr.bf16.mxu0 %v1721
      %2192 = vmatpush1.bf16.msra.mxu0 %v1720
      %2193 = vmatprep.subr.bf16.mxu0 %v1751
      %2194 = vmatpush2.bf16.msra.mxu0 %v1750
      %2195 = vmatprep.subr.bf16.mxu0 %v1749
      %2196 = vmatpush2.bf16.msra.mxu0 %v1748
      %2197 = vmatprep.subr.bf16.mxu0 %v1747
      %2198 = vmatpush2.bf16.msra.mxu0 %v1746
      %2199 = vmatprep.subr.bf16.mxu0 %v1745
      %2200 = vmatpush2.bf16.msra.mxu0 %v1744
      %2201 = vmatprep.subr.bf16.mxu0 %v1743
      %2202 = vmatpush2.bf16.msra.mxu0 %v1742
      %2203 = vmatprep.subr.bf16.mxu0 %v1741
      %2204 = vmatpush2.bf16.msra.mxu0 %v1740
      %2205 = vmatprep.subr.bf16.mxu0 %v1739
      %2206 = vmatpush2.bf16.msra.mxu0 %v1738
      %2207 = vmatprep.subr.bf16.mxu0 %v1737
      %2208 = vmatpush2.bf16.msra.mxu0 %v1736
      %2209 = vmatprep.mubr.bf16.mxu0 %v857
      %2210 = vmatmul.mubr.bf16.gmra.mxu0 %v856
      %v2211 = vpop.f32.mrf.mxu0
      %v2212 = vadd.f32 %v513, %v2211
      %v2213 = vpop.f32.mrf.mxu0
      %v2214 = vadd.f32 %v517, %v2213
      %v2215 = vpop.f32.mrf.mxu0
      %v2216 = vadd.f32 %v513, %v2215
      %v2217 = vpop.f32.mrf.mxu0
      %v2218 = vadd.f32 %v517, %v2217
      %2219 = vmatprep.mubr.bf16.mxu0 %v871
      %2220 = vmatmul.mubr.bf16.gmra.mxu0 %v870
      %v2221 = vpop.f32.mrf.mxu0
      %v2222 = vadd.f32 %v513, %v2221
      %v2223 = vpop.f32.mrf.mxu0
      %v2224 = vadd.f32 %v517, %v2223
      %v2225 = vpop.f32.mrf.mxu0
      %v2226 = vadd.f32 %v513, %v2225
      %v2227 = vpop.f32.mrf.mxu0
      %v2228 = vadd.f32 %v517, %v2227
      %2229 = vmatprep.mubr.bf16.mxu0 %v885
      %2230 = vmatmul.mubr.bf16.gmra.mxu0 %v884
      %v2231 = vpop.f32.mrf.mxu0
      %v2232 = vadd.f32 %v513, %v2231
      %v2233 = vpop.f32.mrf.mxu0
      %v2234 = vadd.f32 %v517, %v2233
      %v2235 = vpop.f32.mrf.mxu0
      %v2236 = vadd.f32 %v513, %v2235
      %v2237 = vpop.f32.mrf.mxu0
      %v2238 = vadd.f32 %v517, %v2237
      %2239 = vmatprep.mubr.bf16.mxu0 %v899
      %2240 = vmatmul.mubr.bf16.gmra.mxu0 %v898
      %v2241 = vpop.f32.mrf.mxu0
      %v2242 = vadd.f32 %v513, %v2241
      %v2243 = vpop.f32.mrf.mxu0
      %v2244 = vadd.f32 %v517, %v2243
      %v2245 = vpop.f32.mrf.mxu0
      %v2246 = vadd.f32 %v513, %v2245
      %v2247 = vpop.f32.mrf.mxu0
      %v2248 = vadd.f32 %v517, %v2247
      %2249 = vmatprep.mubr.bf16.mxu0 %v913
      %2250 = vmatmul.mubr.bf16.gmra.mxu0 %v912
      %v2251 = vpop.f32.mrf.mxu0
      %v2252 = vadd.f32 %v513, %v2251
      %v2253 = vpop.f32.mrf.mxu0
      %v2254 = vadd.f32 %v517, %v2253
      %v2255 = vpop.f32.mrf.mxu0
      %v2256 = vadd.f32 %v513, %v2255
      %v2257 = vpop.f32.mrf.mxu0
      %v2258 = vadd.f32 %v517, %v2257
      %2259 = vmatprep.mubr.bf16.mxu0 %v927
      %2260 = vmatmul.mubr.bf16.gmra.mxu0 %v926
      %v2261 = vpop.f32.mrf.mxu0
      %v2262 = vadd.f32 %v513, %v2261
      %v2263 = vpop.f32.mrf.mxu0
      %v2264 = vadd.f32 %v517, %v2263
      %v2265 = vpop.f32.mrf.mxu0
      %v2266 = vadd.f32 %v513, %v2265
      %v2267 = vpop.f32.mrf.mxu0
      %v2268 = vadd.f32 %v517, %v2267
      %2269 = vmatprep.mubr.bf16.mxu0 %v941
      %2270 = vmatmul.mubr.bf16.gmra.mxu0 %v940
      %v2271 = vpop.f32.mrf.mxu0
      %v2272 = vadd.f32 %v513, %v2271
      %v2273 = vpop.f32.mrf.mxu0
      %v2274 = vadd.f32 %v517, %v2273
      %v2275 = vpop.f32.mrf.mxu0
      %v2276 = vadd.f32 %v513, %v2275
      %v2277 = vpop.f32.mrf.mxu0
      %v2278 = vadd.f32 %v517, %v2277
      %2279 = vmatprep.mubr.bf16.mxu0 %v955
      %2280 = vmatmul.mubr.bf16.gmra.mxu0 %v954
      %v2281 = vpop.f32.mrf.mxu0
      %v2282 = vadd.f32 %v513, %v2281
      %v2283 = vpop.f32.mrf.mxu0
      %v2284 = vadd.f32 %v517, %v2283
      %v2285 = vpop.f32.mrf.mxu0
      %v2286 = vadd.f32 %v513, %v2285
      %v2287 = vpop.f32.mrf.mxu0
      %v2288 = vadd.f32 %v517, %v2287
      %2289 = vdwg.mxu0
      %2290 = vmatprep.subr.bf16.mxu0 %v1767
      %2291 = vmatpush1.bf16.msra.mxu0 %v1766
      %2292 = vmatprep.subr.bf16.mxu0 %v1765
      %2293 = vmatpush1.bf16.msra.mxu0 %v1764
      %2294 = vmatprep.subr.bf16.mxu0 %v1763
      %2295 = vmatpush1.bf16.msra.mxu0 %v1762
      %2296 = vmatprep.subr.bf16.mxu0 %v1761
      %2297 = vmatpush1.bf16.msra.mxu0 %v1760
      %2298 = vmatprep.subr.bf16.mxu0 %v1759
      %2299 = vmatpush1.bf16.msra.mxu0 %v1758
      %2300 = vmatprep.subr.bf16.mxu0 %v1757
      %2301 = vmatpush1.bf16.msra.mxu0 %v1756
      %2302 = vmatprep.subr.bf16.mxu0 %v1755
      %2303 = vmatpush1.bf16.msra.mxu0 %v1754
      %2304 = vmatprep.subr.bf16.mxu0 %v1753
      %2305 = vmatpush1.bf16.msra.mxu0 %v1752
      %2306 = vmatprep.subr.bf16.mxu0 %v1783
      %2307 = vmatpush2.bf16.msra.mxu0 %v1782
      %2308 = vmatprep.subr.bf16.mxu0 %v1781
      %2309 = vmatpush2.bf16.msra.mxu0 %v1780
      %2310 = vmatprep.subr.bf16.mxu0 %v1779
      %2311 = vmatpush2.bf16.msra.mxu0 %v1778
      %2312 = vmatprep.subr.bf16.mxu0 %v1777
      %2313 = vmatpush2.bf16.msra.mxu0 %v1776
      %2314 = vmatprep.subr.bf16.mxu0 %v1775
      %2315 = vmatpush2.bf16.msra.mxu0 %v1774
      %2316 = vmatprep.subr.bf16.mxu0 %v1773
      %2317 = vmatpush2.bf16.msra.mxu0 %v1772
      %2318 = vmatprep.subr.bf16.mxu0 %v1771
      %2319 = vmatpush2.bf16.msra.mxu0 %v1770
      %2320 = vmatprep.subr.bf16.mxu0 %v1769
      %2321 = vmatpush2.bf16.msra.mxu0 %v1768
      %2322 = vmatprep.mubr.bf16.mxu0 %v859
      %2323 = vmatmul.mubr.bf16.gmra.mxu0 %v858
      %v2324 = vpop.f32.mrf.mxu0
      %v2325 = vadd.f32 %v2212, %v2324
      %v2326 = vpop.f32.mrf.mxu0
      %v2327 = vadd.f32 %v2214, %v2326
      %v2328 = vpop.f32.mrf.mxu0
      %v2329 = vadd.f32 %v2216, %v2328
      %v2330 = vpop.f32.mrf.mxu0
      %v2331 = vadd.f32 %v2218, %v2330
      %2332 = vmatprep.mubr.bf16.mxu0 %v873
      %2333 = vmatmul.mubr.bf16.gmra.mxu0 %v872
      %v2334 = vpop.f32.mrf.mxu0
      %v2335 = vadd.f32 %v2222, %v2334
      %v2336 = vpop.f32.mrf.mxu0
      %v2337 = vadd.f32 %v2224, %v2336
      %v2338 = vpop.f32.mrf.mxu0
      %v2339 = vadd.f32 %v2226, %v2338
      %v2340 = vpop.f32.mrf.mxu0
      %v2341 = vadd.f32 %v2228, %v2340
      %2342 = vmatprep.mubr.bf16.mxu0 %v887
      %2343 = vmatmul.mubr.bf16.gmra.mxu0 %v886
      %v2344 = vpop.f32.mrf.mxu0
      %v2345 = vadd.f32 %v2232, %v2344
      %v2346 = vpop.f32.mrf.mxu0
      %v2347 = vadd.f32 %v2234, %v2346
      %v2348 = vpop.f32.mrf.mxu0
      %v2349 = vadd.f32 %v2236, %v2348
      %v2350 = vpop.f32.mrf.mxu0
      %v2351 = vadd.f32 %v2238, %v2350
      %2352 = vmatprep.mubr.bf16.mxu0 %v901
      %2353 = vmatmul.mubr.bf16.gmra.mxu0 %v900
      %v2354 = vpop.f32.mrf.mxu0
      %v2355 = vadd.f32 %v2242, %v2354
      %v2356 = vpop.f32.mrf.mxu0
      %v2357 = vadd.f32 %v2244, %v2356
      %v2358 = vpop.f32.mrf.mxu0
      %v2359 = vadd.f32 %v2246, %v2358
      %v2360 = vpop.f32.mrf.mxu0
      %v2361 = vadd.f32 %v2248, %v2360
      %2362 = vmatprep.mubr.bf16.mxu0 %v915
      %2363 = vmatmul.mubr.bf16.gmra.mxu0 %v914
      %v2364 = vpop.f32.mrf.mxu0
      %v2365 = vadd.f32 %v2252, %v2364
      %v2366 = vpop.f32.mrf.mxu0
      %v2367 = vadd.f32 %v2254, %v2366
      %v2368 = vpop.f32.mrf.mxu0
      %v2369 = vadd.f32 %v2256, %v2368
      %v2370 = vpop.f32.mrf.mxu0
      %v2371 = vadd.f32 %v2258, %v2370
      %2372 = vmatprep.mubr.bf16.mxu0 %v929
      %2373 = vmatmul.mubr.bf16.gmra.mxu0 %v928
      %v2374 = vpop.f32.mrf.mxu0
      %v2375 = vadd.f32 %v2262, %v2374
      %v2376 = vpop.f32.mrf.mxu0
      %v2377 = vadd.f32 %v2264, %v2376
      %v2378 = vpop.f32.mrf.mxu0
      %v2379 = vadd.f32 %v2266, %v2378
      %v2380 = vpop.f32.mrf.mxu0
      %v2381 = vadd.f32 %v2268, %v2380
      %2382 = vmatprep.mubr.bf16.mxu0 %v943
      %2383 = vmatmul.mubr.bf16.gmra.mxu0 %v942
      %v2384 = vpop.f32.mrf.mxu0
      %v2385 = vadd.f32 %v2272, %v2384
      %v2386 = vpop.f32.mrf.mxu0
      %v2387 = vadd.f32 %v2274, %v2386
      %v2388 = vpop.f32.mrf.mxu0
      %v2389 = vadd.f32 %v2276, %v2388
      %v2390 = vpop.f32.mrf.mxu0
      %v2391 = vadd.f32 %v2278, %v2390
      %2392 = vmatprep.mubr.bf16.mxu0 %v957
      %2393 = vmatmul.mubr.bf16.gmra.mxu0 %v956
      %v2394 = vpop.f32.mrf.mxu0
      %v2395 = vadd.f32 %v2282, %v2394
      %v2396 = vpop.f32.mrf.mxu0
      %v2397 = vadd.f32 %v2284, %v2396
      %v2398 = vpop.f32.mrf.mxu0
      %v2399 = vadd.f32 %v2286, %v2398
      %v2400 = vpop.f32.mrf.mxu0
      %v2401 = vadd.f32 %v2288, %v2400
      %2402 = vdwg.mxu0
      %2403 = vmatprep.subr.bf16.mxu0 %v1799
      %2404 = vmatpush1.bf16.msra.mxu0 %v1798
      %2405 = vmatprep.subr.bf16.mxu0 %v1797
      %2406 = vmatpush1.bf16.msra.mxu0 %v1796
      %2407 = vmatprep.subr.bf16.mxu0 %v1795
      %2408 = vmatpush1.bf16.msra.mxu0 %v1794
      %2409 = vmatprep.subr.bf16.mxu0 %v1793
      %2410 = vmatpush1.bf16.msra.mxu0 %v1792
      %2411 = vmatprep.subr.bf16.mxu0 %v1791
      %2412 = vmatpush1.bf16.msra.mxu0 %v1790
      %2413 = vmatprep.subr.bf16.mxu0 %v1789
      %2414 = vmatpush1.bf16.msra.mxu0 %v1788
      %2415 = vmatprep.subr.bf16.mxu0 %v1787
      %2416 = vmatpush1.bf16.msra.mxu0 %v1786
      %2417 = vmatprep.subr.bf16.mxu0 %v1785
      %2418 = vmatpush1.bf16.msra.mxu0 %v1784
      %2419 = vmatprep.subr.bf16.mxu0 %v1815
      %2420 = vmatpush2.bf16.msra.mxu0 %v1814
      %2421 = vmatprep.subr.bf16.mxu0 %v1813
      %2422 = vmatpush2.bf16.msra.mxu0 %v1812
      %2423 = vmatprep.subr.bf16.mxu0 %v1811
      %2424 = vmatpush2.bf16.msra.mxu0 %v1810
      %2425 = vmatprep.subr.bf16.mxu0 %v1809
      %2426 = vmatpush2.bf16.msra.mxu0 %v1808
      %2427 = vmatprep.subr.bf16.mxu0 %v1807
      %2428 = vmatpush2.bf16.msra.mxu0 %v1806
      %2429 = vmatprep.subr.bf16.mxu0 %v1805
      %2430 = vmatpush2.bf16.msra.mxu0 %v1804
      %2431 = vmatprep.subr.bf16.mxu0 %v1803
      %2432 = vmatpush2.bf16.msra.mxu0 %v1802
      %2433 = vmatprep.subr.bf16.mxu0 %v1801
      %2434 = vmatpush2.bf16.msra.mxu0 %v1800
      %2435 = vmatprep.mubr.bf16.mxu0 %v861
      %2436 = vmatmul.mubr.bf16.gmra.mxu0 %v860
      %v2437 = vpop.f32.mrf.mxu0
      %v2438 = vadd.f32 %v2325, %v2437
      %v2439 = vpop.f32.mrf.mxu0
      %v2440 = vadd.f32 %v2327, %v2439
      %v2441 = vpop.f32.mrf.mxu0
      %v2442 = vadd.f32 %v2329, %v2441
      %v2443 = vpop.f32.mrf.mxu0
      %v2444 = vadd.f32 %v2331, %v2443
      %2445 = vmatprep.mubr.bf16.mxu0 %v875
      %2446 = vmatmul.mubr.bf16.gmra.mxu0 %v874
      %v2447 = vpop.f32.mrf.mxu0
      %v2448 = vadd.f32 %v2335, %v2447
      %v2449 = vpop.f32.mrf.mxu0
      %v2450 = vadd.f32 %v2337, %v2449
      %v2451 = vpop.f32.mrf.mxu0
      %v2452 = vadd.f32 %v2339, %v2451
      %v2453 = vpop.f32.mrf.mxu0
      %v2454 = vadd.f32 %v2341, %v2453
      %2455 = vmatprep.mubr.bf16.mxu0 %v889
      %2456 = vmatmul.mubr.bf16.gmra.mxu0 %v888
      %v2457 = vpop.f32.mrf.mxu0
      %v2458 = vadd.f32 %v2345, %v2457
      %v2459 = vpop.f32.mrf.mxu0
      %v2460 = vadd.f32 %v2347, %v2459
      %v2461 = vpop.f32.mrf.mxu0
      %v2462 = vadd.f32 %v2349, %v2461
      %v2463 = vpop.f32.mrf.mxu0
      %v2464 = vadd.f32 %v2351, %v2463
      %2465 = vmatprep.mubr.bf16.mxu0 %v903
      %2466 = vmatmul.mubr.bf16.gmra.mxu0 %v902
      %v2467 = vpop.f32.mrf.mxu0
      %v2468 = vadd.f32 %v2355, %v2467
      %v2469 = vpop.f32.mrf.mxu0
      %v2470 = vadd.f32 %v2357, %v2469
      %v2471 = vpop.f32.mrf.mxu0
      %v2472 = vadd.f32 %v2359, %v2471
      %v2473 = vpop.f32.mrf.mxu0
      %v2474 = vadd.f32 %v2361, %v2473
      %2475 = vmatprep.mubr.bf16.mxu0 %v917
      %2476 = vmatmul.mubr.bf16.gmra.mxu0 %v916
      %v2477 = vpop.f32.mrf.mxu0
      %v2478 = vadd.f32 %v2365, %v2477
      %v2479 = vpop.f32.mrf.mxu0
      %v2480 = vadd.f32 %v2367, %v2479
      %v2481 = vpop.f32.mrf.mxu0
      %v2482 = vadd.f32 %v2369, %v2481
      %v2483 = vpop.f32.mrf.mxu0
      %v2484 = vadd.f32 %v2371, %v2483
      %2485 = vmatprep.mubr.bf16.mxu0 %v931
      %2486 = vmatmul.mubr.bf16.gmra.mxu0 %v930
      %v2487 = vpop.f32.mrf.mxu0
      %v2488 = vadd.f32 %v2375, %v2487
      %v2489 = vpop.f32.mrf.mxu0
      %v2490 = vadd.f32 %v2377, %v2489
      %v2491 = vpop.f32.mrf.mxu0
      %v2492 = vadd.f32 %v2379, %v2491
      %v2493 = vpop.f32.mrf.mxu0
      %v2494 = vadd.f32 %v2381, %v2493
      %2495 = vmatprep.mubr.bf16.mxu0 %v945
      %2496 = vmatmul.mubr.bf16.gmra.mxu0 %v944
      %v2497 = vpop.f32.mrf.mxu0
      %v2498 = vadd.f32 %v2385, %v2497
      %v2499 = vpop.f32.mrf.mxu0
      %v2500 = vadd.f32 %v2387, %v2499
      %v2501 = vpop.f32.mrf.mxu0
      %v2502 = vadd.f32 %v2389, %v2501
      %v2503 = vpop.f32.mrf.mxu0
      %v2504 = vadd.f32 %v2391, %v2503
      %2505 = vmatprep.mubr.bf16.mxu0 %v959
      %2506 = vmatmul.mubr.bf16.gmra.mxu0 %v958
      %v2507 = vpop.f32.mrf.mxu0
      %v2508 = vadd.f32 %v2395, %v2507
      %v2509 = vpop.f32.mrf.mxu0
      %v2510 = vadd.f32 %v2397, %v2509
      %v2511 = vpop.f32.mrf.mxu0
      %v2512 = vadd.f32 %v2399, %v2511
      %v2513 = vpop.f32.mrf.mxu0
      %v2514 = vadd.f32 %v2401, %v2513
      %2515 = vdwg.mxu0
      %2516 = vmatprep.subr.bf16.mxu0 %v1831
      %2517 = vmatpush1.bf16.msra.mxu0 %v1830
      %2518 = vmatprep.subr.bf16.mxu0 %v1829
      %2519 = vmatpush1.bf16.msra.mxu0 %v1828
      %2520 = vmatprep.subr.bf16.mxu0 %v1827
      %2521 = vmatpush1.bf16.msra.mxu0 %v1826
      %2522 = vmatprep.subr.bf16.mxu0 %v1825
      %2523 = vmatpush1.bf16.msra.mxu0 %v1824
      %2524 = vmatprep.subr.bf16.mxu0 %v1823
      %2525 = vmatpush1.bf16.msra.mxu0 %v1822
      %2526 = vmatprep.subr.bf16.mxu0 %v1821
      %2527 = vmatpush1.bf16.msra.mxu0 %v1820
      %2528 = vmatprep.subr.bf16.mxu0 %v1819
      %2529 = vmatpush1.bf16.msra.mxu0 %v1818
      %2530 = vmatprep.subr.bf16.mxu0 %v1817
      %2531 = vmatpush1.bf16.msra.mxu0 %v1816
      %2532 = vmatprep.subr.bf16.mxu0 %v1847
      %2533 = vmatpush2.bf16.msra.mxu0 %v1846
      %2534 = vmatprep.subr.bf16.mxu0 %v1845
      %2535 = vmatpush2.bf16.msra.mxu0 %v1844
      %2536 = vmatprep.subr.bf16.mxu0 %v1843
      %2537 = vmatpush2.bf16.msra.mxu0 %v1842
      %2538 = vmatprep.subr.bf16.mxu0 %v1841
      %2539 = vmatpush2.bf16.msra.mxu0 %v1840
      %2540 = vmatprep.subr.bf16.mxu0 %v1839
      %2541 = vmatpush2.bf16.msra.mxu0 %v1838
      %2542 = vmatprep.subr.bf16.mxu0 %v1837
      %2543 = vmatpush2.bf16.msra.mxu0 %v1836
      %2544 = vmatprep.subr.bf16.mxu0 %v1835
      %2545 = vmatpush2.bf16.msra.mxu0 %v1834
      %2546 = vmatprep.subr.bf16.mxu0 %v1833
      %2547 = vmatpush2.bf16.msra.mxu0 %v1832
      %2548 = vmatprep.mubr.bf16.mxu0 %v863
      %2549 = vmatmul.mubr.bf16.gmra.mxu0 %v862
      %v2550 = vpop.f32.mrf.mxu0
      %v2551 = vadd.f32 %v2438, %v2550
      %v2552 = vpop.f32.mrf.mxu0
      %v2553 = vadd.f32 %v2440, %v2552
      %v2554 = vpop.f32.mrf.mxu0
      %v2555 = vadd.f32 %v2442, %v2554
      %v2556 = vpop.f32.mrf.mxu0
      %v2557 = vadd.f32 %v2444, %v2556
      %2558 = vmatprep.mubr.bf16.mxu0 %v877
      %2559 = vmatmul.mubr.bf16.gmra.mxu0 %v876
      %v2560 = vpop.f32.mrf.mxu0
      %v2561 = vadd.f32 %v2448, %v2560
      %v2562 = vpop.f32.mrf.mxu0
      %v2563 = vadd.f32 %v2450, %v2562
      %v2564 = vpop.f32.mrf.mxu0
      %v2565 = vadd.f32 %v2452, %v2564
      %v2566 = vpop.f32.mrf.mxu0
      %v2567 = vadd.f32 %v2454, %v2566
      %2568 = vmatprep.mubr.bf16.mxu0 %v891
      %2569 = vmatmul.mubr.bf16.gmra.mxu0 %v890
      %v2570 = vpop.f32.mrf.mxu0
      %v2571 = vadd.f32 %v2458, %v2570
      %v2572 = vpop.f32.mrf.mxu0
      %v2573 = vadd.f32 %v2460, %v2572
      %v2574 = vpop.f32.mrf.mxu0
      %v2575 = vadd.f32 %v2462, %v2574
      %v2576 = vpop.f32.mrf.mxu0
      %v2577 = vadd.f32 %v2464, %v2576
      %2578 = vmatprep.mubr.bf16.mxu0 %v905
      %2579 = vmatmul.mubr.bf16.gmra.mxu0 %v904
      %v2580 = vpop.f32.mrf.mxu0
      %v2581 = vadd.f32 %v2468, %v2580
      %v2582 = vpop.f32.mrf.mxu0
      %v2583 = vadd.f32 %v2470, %v2582
      %v2584 = vpop.f32.mrf.mxu0
      %v2585 = vadd.f32 %v2472, %v2584
      %v2586 = vpop.f32.mrf.mxu0
      %v2587 = vadd.f32 %v2474, %v2586
      %2588 = vmatprep.mubr.bf16.mxu0 %v919
      %2589 = vmatmul.mubr.bf16.gmra.mxu0 %v918
      %v2590 = vpop.f32.mrf.mxu0
      %v2591 = vadd.f32 %v2478, %v2590
      %v2592 = vpop.f32.mrf.mxu0
      %v2593 = vadd.f32 %v2480, %v2592
      %v2594 = vpop.f32.mrf.mxu0
      %v2595 = vadd.f32 %v2482, %v2594
      %v2596 = vpop.f32.mrf.mxu0
      %v2597 = vadd.f32 %v2484, %v2596
      %2598 = vmatprep.mubr.bf16.mxu0 %v933
      %2599 = vmatmul.mubr.bf16.gmra.mxu0 %v932
      %v2600 = vpop.f32.mrf.mxu0
      %v2601 = vadd.f32 %v2488, %v2600
      %v2602 = vpop.f32.mrf.mxu0
      %v2603 = vadd.f32 %v2490, %v2602
      %v2604 = vpop.f32.mrf.mxu0
      %v2605 = vadd.f32 %v2492, %v2604
      %v2606 = vpop.f32.mrf.mxu0
      %v2607 = vadd.f32 %v2494, %v2606
      %2608 = vmatprep.mubr.bf16.mxu0 %v947
      %2609 = vmatmul.mubr.bf16.gmra.mxu0 %v946
      %v2610 = vpop.f32.mrf.mxu0
      %v2611 = vadd.f32 %v2498, %v2610
      %v2612 = vpop.f32.mrf.mxu0
      %v2613 = vadd.f32 %v2500, %v2612
      %v2614 = vpop.f32.mrf.mxu0
      %v2615 = vadd.f32 %v2502, %v2614
      %v2616 = vpop.f32.mrf.mxu0
      %v2617 = vadd.f32 %v2504, %v2616
      %2618 = vmatprep.mubr.bf16.mxu0 %v961
      %2619 = vmatmul.mubr.bf16.gmra.mxu0 %v960
      %v2620 = vpop.f32.mrf.mxu0
      %v2621 = vadd.f32 %v2508, %v2620
      %v2622 = vpop.f32.mrf.mxu0
      %v2623 = vadd.f32 %v2510, %v2622
      %v2624 = vpop.f32.mrf.mxu0
      %v2625 = vadd.f32 %v2512, %v2624
      %v2626 = vpop.f32.mrf.mxu0
      %v2627 = vadd.f32 %v2514, %v2626
      %2628 = vdwg.mxu0
      %2629 = vmatprep.subr.bf16.mxu0 %v1863
      %2630 = vmatpush1.bf16.msra.mxu0 %v1862
      %2631 = vmatprep.subr.bf16.mxu0 %v1861
      %2632 = vmatpush1.bf16.msra.mxu0 %v1860
      %2633 = vmatprep.subr.bf16.mxu0 %v1859
      %2634 = vmatpush1.bf16.msra.mxu0 %v1858
      %2635 = vmatprep.subr.bf16.mxu0 %v1857
      %2636 = vmatpush1.bf16.msra.mxu0 %v1856
      %2637 = vmatprep.subr.bf16.mxu0 %v1855
      %2638 = vmatpush1.bf16.msra.mxu0 %v1854
      %2639 = vmatprep.subr.bf16.mxu0 %v1853
      %2640 = vmatpush1.bf16.msra.mxu0 %v1852
      %2641 = vmatprep.subr.bf16.mxu0 %v1851
      %2642 = vmatpush1.bf16.msra.mxu0 %v1850
      %2643 = vmatprep.subr.bf16.mxu0 %v1849
      %2644 = vmatpush1.bf16.msra.mxu0 %v1848
      %2645 = vmatprep.subr.bf16.mxu0 %v1879
      %2646 = vmatpush2.bf16.msra.mxu0 %v1878
      %2647 = vmatprep.subr.bf16.mxu0 %v1877
      %2648 = vmatpush2.bf16.msra.mxu0 %v1876
      %2649 = vmatprep.subr.bf16.mxu0 %v1875
      %2650 = vmatpush2.bf16.msra.mxu0 %v1874
      %2651 = vmatprep.subr.bf16.mxu0 %v1873
      %2652 = vmatpush2.bf16.msra.mxu0 %v1872
      %2653 = vmatprep.subr.bf16.mxu0 %v1871
      %2654 = vmatpush2.bf16.msra.mxu0 %v1870
      %2655 = vmatprep.subr.bf16.mxu0 %v1869
      %2656 = vmatpush2.bf16.msra.mxu0 %v1868
      %2657 = vmatprep.subr.bf16.mxu0 %v1867
      %2658 = vmatpush2.bf16.msra.mxu0 %v1866
      %2659 = vmatprep.subr.bf16.mxu0 %v1865
      %2660 = vmatpush2.bf16.msra.mxu0 %v1864
      %2661 = vmatprep.mubr.bf16.mxu0 %v865
      %2662 = vmatmul.mubr.bf16.gmra.mxu0 %v864
      %v2663 = vpop.f32.mrf.mxu0
      %v2664 = vadd.f32 %v2551, %v2663
      %v2665 = vpop.f32.mrf.mxu0
      %v2666 = vadd.f32 %v2553, %v2665
      %v2667 = vpop.f32.mrf.mxu0
      %v2668 = vadd.f32 %v2555, %v2667
      %v2669 = vpop.f32.mrf.mxu0
      %v2670 = vadd.f32 %v2557, %v2669
      %2671 = vmatprep.mubr.bf16.mxu0 %v879
      %2672 = vmatmul.mubr.bf16.gmra.mxu0 %v878
      %v2673 = vpop.f32.mrf.mxu0
      %v2674 = vadd.f32 %v2561, %v2673
      %v2675 = vpop.f32.mrf.mxu0
      %v2676 = vadd.f32 %v2563, %v2675
      %v2677 = vpop.f32.mrf.mxu0
      %v2678 = vadd.f32 %v2565, %v2677
      %v2679 = vpop.f32.mrf.mxu0
      %v2680 = vadd.f32 %v2567, %v2679
      %2681 = vmatprep.mubr.bf16.mxu0 %v893
      %2682 = vmatmul.mubr.bf16.gmra.mxu0 %v892
      %v2683 = vpop.f32.mrf.mxu0
      %v2684 = vadd.f32 %v2571, %v2683
      %v2685 = vpop.f32.mrf.mxu0
      %v2686 = vadd.f32 %v2573, %v2685
      %v2687 = vpop.f32.mrf.mxu0
      %v2688 = vadd.f32 %v2575, %v2687
      %v2689 = vpop.f32.mrf.mxu0
      %v2690 = vadd.f32 %v2577, %v2689
      %2691 = vmatprep.mubr.bf16.mxu0 %v907
      %2692 = vmatmul.mubr.bf16.gmra.mxu0 %v906
      %v2693 = vpop.f32.mrf.mxu0
      %v2694 = vadd.f32 %v2581, %v2693
      %v2695 = vpop.f32.mrf.mxu0
      %v2696 = vadd.f32 %v2583, %v2695
      %v2697 = vpop.f32.mrf.mxu0
      %v2698 = vadd.f32 %v2585, %v2697
      %v2699 = vpop.f32.mrf.mxu0
      %v2700 = vadd.f32 %v2587, %v2699
      %2701 = vmatprep.mubr.bf16.mxu0 %v921
      %2702 = vmatmul.mubr.bf16.gmra.mxu0 %v920
      %v2703 = vpop.f32.mrf.mxu0
      %v2704 = vadd.f32 %v2591, %v2703
      %v2705 = vpop.f32.mrf.mxu0
      %v2706 = vadd.f32 %v2593, %v2705
      %v2707 = vpop.f32.mrf.mxu0
      %v2708 = vadd.f32 %v2595, %v2707
      %v2709 = vpop.f32.mrf.mxu0
      %v2710 = vadd.f32 %v2597, %v2709
      %2711 = vmatprep.mubr.bf16.mxu0 %v935
      %2712 = vmatmul.mubr.bf16.gmra.mxu0 %v934
      %v2713 = vpop.f32.mrf.mxu0
      %v2714 = vadd.f32 %v2601, %v2713
      %v2715 = vpop.f32.mrf.mxu0
      %v2716 = vadd.f32 %v2603, %v2715
      %v2717 = vpop.f32.mrf.mxu0
      %v2718 = vadd.f32 %v2605, %v2717
      %v2719 = vpop.f32.mrf.mxu0
      %v2720 = vadd.f32 %v2607, %v2719
      %2721 = vmatprep.mubr.bf16.mxu0 %v949
      %2722 = vmatmul.mubr.bf16.gmra.mxu0 %v948
      %v2723 = vpop.f32.mrf.mxu0
      %v2724 = vadd.f32 %v2611, %v2723
      %v2725 = vpop.f32.mrf.mxu0
      %v2726 = vadd.f32 %v2613, %v2725
      %v2727 = vpop.f32.mrf.mxu0
      %v2728 = vadd.f32 %v2615, %v2727
      %v2729 = vpop.f32.mrf.mxu0
      %v2730 = vadd.f32 %v2617, %v2729
      %2731 = vmatprep.mubr.bf16.mxu0 %v963
      %2732 = vmatmul.mubr.bf16.gmra.mxu0 %v962
      %v2733 = vpop.f32.mrf.mxu0
      %v2734 = vadd.f32 %v2621, %v2733
      %v2735 = vpop.f32.mrf.mxu0
      %v2736 = vadd.f32 %v2623, %v2735
      %v2737 = vpop.f32.mrf.mxu0
      %v2738 = vadd.f32 %v2625, %v2737
      %v2739 = vpop.f32.mrf.mxu0
      %v2740 = vadd.f32 %v2627, %v2739
      %2741 = vdwg.mxu0
      %2742 = vmatprep.subr.bf16.mxu0 %v1895
      %2743 = vmatpush1.bf16.msra.mxu0 %v1894
      %2744 = vmatprep.subr.bf16.mxu0 %v1893
      %2745 = vmatpush1.bf16.msra.mxu0 %v1892
      %2746 = vmatprep.subr.bf16.mxu0 %v1891
      %2747 = vmatpush1.bf16.msra.mxu0 %v1890
      %2748 = vmatprep.subr.bf16.mxu0 %v1889
      %2749 = vmatpush1.bf16.msra.mxu0 %v1888
      %2750 = vmatprep.subr.bf16.mxu0 %v1887
      %2751 = vmatpush1.bf16.msra.mxu0 %v1886
      %2752 = vmatprep.subr.bf16.mxu0 %v1885
      %2753 = vmatpush1.bf16.msra.mxu0 %v1884
      %2754 = vmatprep.subr.bf16.mxu0 %v1883
      %2755 = vmatpush1.bf16.msra.mxu0 %v1882
      %2756 = vmatprep.subr.bf16.mxu0 %v1881
      %2757 = vmatpush1.bf16.msra.mxu0 %v1880
      %2758 = vmatprep.subr.bf16.mxu0 %v1911
      %2759 = vmatpush2.bf16.msra.mxu0 %v1910
      %2760 = vmatprep.subr.bf16.mxu0 %v1909
      %2761 = vmatpush2.bf16.msra.mxu0 %v1908
      %2762 = vmatprep.subr.bf16.mxu0 %v1907
      %2763 = vmatpush2.bf16.msra.mxu0 %v1906
      %2764 = vmatprep.subr.bf16.mxu0 %v1905
      %2765 = vmatpush2.bf16.msra.mxu0 %v1904
      %2766 = vmatprep.subr.bf16.mxu0 %v1903
      %2767 = vmatpush2.bf16.msra.mxu0 %v1902
      %2768 = vmatprep.subr.bf16.mxu0 %v1901
      %2769 = vmatpush2.bf16.msra.mxu0 %v1900
      %2770 = vmatprep.subr.bf16.mxu0 %v1899
      %2771 = vmatpush2.bf16.msra.mxu0 %v1898
      %2772 = vmatprep.subr.bf16.mxu0 %v1897
      %2773 = vmatpush2.bf16.msra.mxu0 %v1896
      %2774 = vmatprep.mubr.bf16.mxu0 %v867
      %2775 = vmatmul.mubr.bf16.gmra.mxu0 %v866
      %v2776 = vpop.f32.mrf.mxu0
      %v2777 = vadd.f32 %v2664, %v2776
      %v2778 = vpop.f32.mrf.mxu0
      %v2779 = vadd.f32 %v2666, %v2778
      %v2780 = vpop.f32.mrf.mxu0
      %v2781 = vadd.f32 %v2668, %v2780
      %v2782 = vpop.f32.mrf.mxu0
      %v2783 = vadd.f32 %v2670, %v2782
      %2784 = vmatprep.mubr.bf16.mxu0 %v881
      %2785 = vmatmul.mubr.bf16.gmra.mxu0 %v880
      %v2786 = vpop.f32.mrf.mxu0
      %v2787 = vadd.f32 %v2674, %v2786
      %v2788 = vpop.f32.mrf.mxu0
      %v2789 = vadd.f32 %v2676, %v2788
      %v2790 = vpop.f32.mrf.mxu0
      %v2791 = vadd.f32 %v2678, %v2790
      %v2792 = vpop.f32.mrf.mxu0
      %v2793 = vadd.f32 %v2680, %v2792
      %2794 = vmatprep.mubr.bf16.mxu0 %v895
      %2795 = vmatmul.mubr.bf16.gmra.mxu0 %v894
      %v2796 = vpop.f32.mrf.mxu0
      %v2797 = vadd.f32 %v2684, %v2796
      %v2798 = vpop.f32.mrf.mxu0
      %v2799 = vadd.f32 %v2686, %v2798
      %v2800 = vpop.f32.mrf.mxu0
      %v2801 = vadd.f32 %v2688, %v2800
      %v2802 = vpop.f32.mrf.mxu0
      %v2803 = vadd.f32 %v2690, %v2802
      %2804 = vmatprep.mubr.bf16.mxu0 %v909
      %2805 = vmatmul.mubr.bf16.gmra.mxu0 %v908
      %v2806 = vpop.f32.mrf.mxu0
      %v2807 = vadd.f32 %v2694, %v2806
      %v2808 = vpop.f32.mrf.mxu0
      %v2809 = vadd.f32 %v2696, %v2808
      %v2810 = vpop.f32.mrf.mxu0
      %v2811 = vadd.f32 %v2698, %v2810
      %v2812 = vpop.f32.mrf.mxu0
      %v2813 = vadd.f32 %v2700, %v2812
      %2814 = vmatprep.mubr.bf16.mxu0 %v923
      %2815 = vmatmul.mubr.bf16.gmra.mxu0 %v922
      %v2816 = vpop.f32.mrf.mxu0
      %v2817 = vadd.f32 %v2704, %v2816
      %v2818 = vpop.f32.mrf.mxu0
      %v2819 = vadd.f32 %v2706, %v2818
      %v2820 = vpop.f32.mrf.mxu0
      %v2821 = vadd.f32 %v2708, %v2820
      %v2822 = vpop.f32.mrf.mxu0
      %v2823 = vadd.f32 %v2710, %v2822
      %2824 = vmatprep.mubr.bf16.mxu0 %v937
      %2825 = vmatmul.mubr.bf16.gmra.mxu0 %v936
      %v2826 = vpop.f32.mrf.mxu0
      %v2827 = vadd.f32 %v2714, %v2826
      %v2828 = vpop.f32.mrf.mxu0
      %v2829 = vadd.f32 %v2716, %v2828
      %v2830 = vpop.f32.mrf.mxu0
      %v2831 = vadd.f32 %v2718, %v2830
      %v2832 = vpop.f32.mrf.mxu0
      %v2833 = vadd.f32 %v2720, %v2832
      %2834 = vmatprep.mubr.bf16.mxu0 %v951
      %2835 = vmatmul.mubr.bf16.gmra.mxu0 %v950
      %v2836 = vpop.f32.mrf.mxu0
      %v2837 = vadd.f32 %v2724, %v2836
      %v2838 = vpop.f32.mrf.mxu0
      %v2839 = vadd.f32 %v2726, %v2838
      %v2840 = vpop.f32.mrf.mxu0
      %v2841 = vadd.f32 %v2728, %v2840
      %v2842 = vpop.f32.mrf.mxu0
      %v2843 = vadd.f32 %v2730, %v2842
      %2844 = vmatprep.mubr.bf16.mxu0 %v965
      %2845 = vmatmul.mubr.bf16.gmra.mxu0 %v964
      %v2846 = vpop.f32.mrf.mxu0
      %v2847 = vadd.f32 %v2734, %v2846
      %v2848 = vpop.f32.mrf.mxu0
      %v2849 = vadd.f32 %v2736, %v2848
      %v2850 = vpop.f32.mrf.mxu0
      %v2851 = vadd.f32 %v2738, %v2850
      %v2852 = vpop.f32.mrf.mxu0
      %v2853 = vadd.f32 %v2740, %v2852
      %2854 = vdwg.mxu0
      %2855 = vmatprep.subr.bf16.mxu0 %v1927
      %2856 = vmatpush1.bf16.msra.mxu0 %v1926
      %2857 = vmatprep.subr.bf16.mxu0 %v1925
      %2858 = vmatpush1.bf16.msra.mxu0 %v1924
      %2859 = vmatprep.subr.bf16.mxu0 %v1923
      %2860 = vmatpush1.bf16.msra.mxu0 %v1922
      %2861 = vmatprep.subr.bf16.mxu0 %v1921
      %2862 = vmatpush1.bf16.msra.mxu0 %v1920
      %2863 = vmatprep.subr.bf16.mxu0 %v1919
      %2864 = vmatpush1.bf16.msra.mxu0 %v1918
      %2865 = vmatprep.subr.bf16.mxu0 %v1917
      %2866 = vmatpush1.bf16.msra.mxu0 %v1916
      %2867 = vmatprep.subr.bf16.mxu0 %v1915
      %2868 = vmatpush1.bf16.msra.mxu0 %v1914
      %2869 = vmatprep.subr.bf16.mxu0 %v1913
      %2870 = vmatpush1.bf16.msra.mxu0 %v1912
      %2871 = vmatprep.subr.bf16.mxu0 0
      %2872 = vmatpush2.bf16.msra.mxu0 0
      %2873 = vmatprep.subr.bf16.mxu0 0
      %2874 = vmatpush2.bf16.msra.mxu0 0
      %2875 = vmatprep.subr.bf16.mxu0 0
      %2876 = vmatpush2.bf16.msra.mxu0 0
      %2877 = vmatprep.subr.bf16.mxu0 0
      %2878 = vmatpush2.bf16.msra.mxu0 0
      %2879 = vmatprep.subr.bf16.mxu0 %v1935
      %2880 = vmatpush2.bf16.msra.mxu0 %v1934
      %2881 = vmatprep.subr.bf16.mxu0 %v1933
      %2882 = vmatpush2.bf16.msra.mxu0 %v1932
      %2883 = vmatprep.subr.bf16.mxu0 %v1931
      %2884 = vmatpush2.bf16.msra.mxu0 %v1930
      %2885 = vmatprep.subr.bf16.mxu0 %v1929
      %2886 = vmatpush2.bf16.msra.mxu0 %v1928
      %2887 = vmatprep.mubr.bf16.mxu0 %v2154
      %2888 = vmatmul.mubr.bf16.gmra.mxu0 %v868
      %v2889 = vpop.f32.mrf.mxu0
      %v2890 = vadd.f32 %v2777, %v2889
      %v2891 = vpop.f32.mrf.mxu0
      %v2892 = vadd.f32 %v2779, %v2891
      %v2893 = vpop.f32.mrf.mxu0
      %v2894 = vadd.f32 %v2781, %v2893
      %v2895 = vpop.f32.mrf.mxu0
      %v2896 = vadd.f32 %v2783, %v2895
      %2897 = vmatprep.mubr.bf16.mxu0 %v2157
      %2898 = vmatmul.mubr.bf16.gmra.mxu0 %v882
      %v2899 = vpop.f32.mrf.mxu0
      %v2900 = vadd.f32 %v2787, %v2899
      %v2901 = vpop.f32.mrf.mxu0
      %v2902 = vadd.f32 %v2789, %v2901
      %v2903 = vpop.f32.mrf.mxu0
      %v2904 = vadd.f32 %v2791, %v2903
      %v2905 = vpop.f32.mrf.mxu0
      %v2906 = vadd.f32 %v2793, %v2905
      %2907 = vmatprep.mubr.bf16.mxu0 %v2160
      %2908 = vmatmul.mubr.bf16.gmra.mxu0 %v896
      %v2909 = vpop.f32.mrf.mxu0
      %v2910 = vadd.f32 %v2797, %v2909
      %v2911 = vpop.f32.mrf.mxu0
      %v2912 = vadd.f32 %v2799, %v2911
      %v2913 = vpop.f32.mrf.mxu0
      %v2914 = vadd.f32 %v2801, %v2913
      %v2915 = vpop.f32.mrf.mxu0
      %v2916 = vadd.f32 %v2803, %v2915
      %2917 = vmatprep.mubr.bf16.mxu0 %v2163
      %2918 = vmatmul.mubr.bf16.gmra.mxu0 %v910
      %v2919 = vpop.f32.mrf.mxu0
      %v2920 = vadd.f32 %v2807, %v2919
      %v2921 = vpop.f32.mrf.mxu0
      %v2922 = vadd.f32 %v2809, %v2921
      %v2923 = vpop.f32.mrf.mxu0
      %v2924 = vadd.f32 %v2811, %v2923
      %v2925 = vpop.f32.mrf.mxu0
      %v2926 = vadd.f32 %v2813, %v2925
      %2927 = vmatprep.mubr.bf16.mxu0 %v2166
      %2928 = vmatmul.mubr.bf16.gmra.mxu0 %v924
      %v2929 = vpop.f32.mrf.mxu0
      %v2930 = vadd.f32 %v2817, %v2929
      %v2931 = vpop.f32.mrf.mxu0
      %v2932 = vadd.f32 %v2819, %v2931
      %v2933 = vpop.f32.mrf.mxu0
      %v2934 = vadd.f32 %v2821, %v2933
      %v2935 = vpop.f32.mrf.mxu0
      %v2936 = vadd.f32 %v2823, %v2935
      %2937 = vmatprep.mubr.bf16.mxu0 %v2169
      %2938 = vmatmul.mubr.bf16.gmra.mxu0 %v938
      %v2939 = vpop.f32.mrf.mxu0
      %v2940 = vadd.f32 %v2827, %v2939
      %v2941 = vpop.f32.mrf.mxu0
      %v2942 = vadd.f32 %v2829, %v2941
      %v2943 = vpop.f32.mrf.mxu0
      %v2944 = vadd.f32 %v2831, %v2943
      %v2945 = vpop.f32.mrf.mxu0
      %v2946 = vadd.f32 %v2833, %v2945
      %2947 = vmatprep.mubr.bf16.mxu0 %v2172
      %2948 = vmatmul.mubr.bf16.gmra.mxu0 %v952
      %v2949 = vpop.f32.mrf.mxu0
      %v2950 = vadd.f32 %v2837, %v2949
      %v2951 = vpop.f32.mrf.mxu0
      %v2952 = vadd.f32 %v2839, %v2951
      %v2953 = vpop.f32.mrf.mxu0
      %v2954 = vadd.f32 %v2841, %v2953
      %v2955 = vpop.f32.mrf.mxu0
      %v2956 = vadd.f32 %v2843, %v2955
      %2957 = vmatprep.mubr.bf16.mxu0 %v2175
      %2958 = vmatmul.mubr.bf16.gmra.mxu0 %v966
      %v2959 = vpop.f32.mrf.mxu0
      %v2960 = vadd.f32 %v2847, %v2959
      %v2961 = vpop.f32.mrf.mxu0
      %v2962 = vadd.f32 %v2849, %v2961
      %v2963 = vpop.f32.mrf.mxu0
      %v2964 = vadd.f32 %v2851, %v2963
      %v2965 = vpop.f32.mrf.mxu0
      %v2966 = vadd.f32 %v2853, %v2965
      %2967 = vdwg.mxu0
      %v2968 = vmax.f32 %v2890, 0.0
      %v2969 = vmax.f32 %v2892, 0.0
      %v2970 = vmax.f32 %v2894, 0.0
      %v2971 = vmax.f32 %v2896, 0.0
      %v2972 = vmax.f32 %v2900, 0.0
      %v2973 = vmax.f32 %v2902, 0.0
      %v2974 = vmax.f32 %v2904, 0.0
      %v2975 = vmax.f32 %v2906, 0.0
      %v2976 = vmax.f32 %v2910, 0.0
      %v2977 = vmax.f32 %v2912, 0.0
      %v2978 = vmax.f32 %v2914, 0.0
      %v2979 = vmax.f32 %v2916, 0.0
      %v2980 = vmax.f32 %v2920, 0.0
      %v2981 = vmax.f32 %v2922, 0.0
      %v2982 = vmax.f32 %v2924, 0.0
      %v2983 = vmax.f32 %v2926, 0.0
      %v2984 = vmax.f32 %v2930, 0.0
      %v2985 = vmax.f32 %v2932, 0.0
      %v2986 = vmax.f32 %v2934, 0.0
      %v2987 = vmax.f32 %v2936, 0.0
      %v2988 = vmax.f32 %v2940, 0.0
      %v2989 = vmax.f32 %v2942, 0.0
      %v2990 = vmax.f32 %v2944, 0.0
      %v2991 = vmax.f32 %v2946, 0.0
      %v2992 = vmax.f32 %v2950, 0.0
      %v2993 = vmax.f32 %v2952, 0.0
      %v2994 = vmax.f32 %v2954, 0.0
      %v2995 = vmax.f32 %v2956, 0.0
      %v2996 = vmax.f32 %v2960, 0.0
      %v2997 = vmax.f32 %v2962, 0.0
      %v2998 = vmax.f32 %v2964, 0.0
      %v2999 = vmax.f32 %v2966, 0.0
      %3000 = vst [vmem:[%s177] sm:$0xff] %v2968
      %3001 = vst.msk [vmem:[%s177 + $0x8] sm:$0xff] %vm2152, %v2969
      %3002 = vst [vmem:[%s177 + $0x10] sm:$0xff] %v2970
      %3003 = vst.msk [vmem:[%s177 + $0x18] sm:$0xff] %vm2152, %v2971
      %3004 = vst [vmem:[%s177 + $0x20] sm:$0xff] %v2972
      %3005 = vst.msk [vmem:[%s177 + $0x28] sm:$0xff] %vm2152, %v2973
      %3006 = vst [vmem:[%s177 + $0x30] sm:$0xff] %v2974
      %3007 = vst.msk [vmem:[%s177 + $0x38] sm:$0xff] %vm2152, %v2975
      %3008 = vst [vmem:[%s177 + $0x40] sm:$0xff] %v2976
      %3009 = vst.msk [vmem:[%s177 + $0x48] sm:$0xff] %vm2152, %v2977
      %3010 = vst [vmem:[%s177 + $0x50] sm:$0xff] %v2978
      %3011 = vst.msk [vmem:[%s177 + $0x58] sm:$0xff] %vm2152, %v2979
      %3012 = vst [vmem:[%s177 + $0x60] sm:$0xff] %v2980
      %3013 = vst.msk [vmem:[%s177 + $0x68] sm:$0xff] %vm2152, %v2981
      %3014 = vst [vmem:[%s177 + $0x70] sm:$0xff] %v2982
      %3015 = vst.msk [vmem:[%s177 + $0x78] sm:$0xff] %vm2152, %v2983
      %3016 = vst [vmem:[%s177 + $0x80] sm:$0xff] %v2984
      %3017 = vst.msk [vmem:[%s177 + $0x88] sm:$0xff] %vm2152, %v2985
      %3018 = vst [vmem:[%s177 + $0x90] sm:$0xff] %v2986
      %3019 = vst.msk [vmem:[%s177 + $0x98] sm:$0xff] %vm2152, %v2987
      %3020 = vst [vmem:[%s177 + $0xa0] sm:$0xff] %v2988
      %3021 = vst.msk [vmem:[%s177 + $0xa8] sm:$0xff] %vm2152, %v2989
      %3022 = vst [vmem:[%s177 + $0xb0] sm:$0xff] %v2990
      %3023 = vst.msk [vmem:[%s177 + $0xb8] sm:$0xff] %vm2152, %v2991
      %3024 = vst [vmem:[%s177 + $0xc0] sm:$0xff] %v2992
      %3025 = vst.msk [vmem:[%s177 + $0xc8] sm:$0xff] %vm2152, %v2993
      %3026 = vst [vmem:[%s177 + $0xd0] sm:$0xff] %v2994
      %3027 = vst.msk [vmem:[%s177 + $0xd8] sm:$0xff] %vm2152, %v2995
      %3028 = vst [vmem:[%s177 + $0xe0] sm:$0xff] %v2996
      %3029 = vst.msk [vmem:[%s177 + $0xe8] sm:$0xff] %vm2152, %v2997
      %3030 = vst [vmem:[%s177 + $0xf0] sm:$0xff] %v2998
      %3031 = vst.msk [vmem:[%s177 + $0xf8] sm:$0xff] %vm2152, %v2999
      %s3032 = smul.u32 16, %s14
      %p3033 = scmp.lt.s32.totalorder %s3032, 31
      %s3034 = scalar_select %p3033, %s3032, 31
      %s3035 = smul.addr %s3034, 2
      %s3036 = smul.addr %s3035, 8
      %s3037 = scalar_lea.vmem %s3, %s3036
      // Predicated region
      $region33: #{_lambda_.6} parent=31 // pred_check
        %p3038 = pneg %p100
      $region34: #{_lambda_.6} parent=31 // pred_check_branch
        %3040 = sbr.rel (%p3038) target = $region36
      $region35: #{_lambda_.6} parent=31 // pred_region
        %s3041 = smul.u32 16, %s14
      $region36: #{_lambda_.6} parent=31 // pred_fallthru
        _
    $region32: #{_lambda_.6} parent=5 // pred_fallthru
      _
    %p3042 = scmp.le.s32.totalorder 2, %s9
    // Predicated region
    $region37: #{_lambda_.6} parent=5 // pred_check
      %p3043 = pneg %p3042
    $region38: #{_lambda_.6} parent=5 // pred_check_branch
      %3045 = sbr.rel (%p3043) target = $region40
    $region39: #{_lambda_.6} parent=5 // pred_region
      %s3046 = ssub.s32 %s9, 2
      // Predicated region
      $region41: #{_lambda_.6} parent=39 // pred_check
        %p3047 = pneg %p106
      $region42: #{_lambda_.6} parent=39 // pred_check_branch
        %3049 = sbr.rel (%p3047) target = $region44
      $region43: #{_lambda_.6} parent=39 // pred_region
        %s3050 = smul.u32 16, %s15
        %p3051 = scmp.lt.s32.totalorder %s3050, 31
        %s3052 = scalar_select %p3051, %s3050, 31
        %s3053 = smul.addr %s3052, 2
        %s3054 = smul.addr %s3053, 8
        %s3055 = scalar_lea.vmem %s3, %s3054
      $region44: #{_lambda_.6} parent=39 // pred_fallthru
        _
    $region40: #{_lambda_.6} parent=5 // pred_fallthru
      _
  $region6: #{_lambda_.6} parent=0 // loop_footer
    %s13 = sadd.s32 1, %s9
  $region7: #{_lambda_.6} parent=0 // loop_footer_branch
    %8 = sbr.rel target = $region3
  $region8: #{_lambda_.6} parent=0 // loop_exit
    _

// kernel: _lambda_.7
$region0: #{_lambda_.7}
  #allocation0 [shape = 'u32[]', space=smem, size = 0x4, offset = 0x4, fixed_abs, tag = 'smem constant byte address 0x4 - core index']
  #allocation1 [shape = 'u32[144,128]{1,0:T(1,128)}', space=vmem, size = 0x12000, scoped, tag = 'internal scratch']
  %s0 = inlined_call_operand.vmem [shape: bf16[64,1728], index: 0, kind: input, shape index: {}]
  %s1 = inlined_call_operand.vmem [shape: bf16[1728,256], index: 1, kind: input, shape index: {}]
  %s2 = inlined_call_operand.vmem [shape: f32[1,256], index: 2, kind: input, shape index: {}]
  %s3 = inlined_call_operand.vmem [shape: f32[64,256], index: 3, kind: output, shape index: {}]
  %s4 = sld [smem:[#allocation0]]
  $region45: #{_lambda_.7} parent=0
    _
  %s6 = ssub.s32 1, %s4
  %s7 = scalar_select 0, %s6, %s4
  loop: start=0, step=1, limit=4
  $region2: #{_lambda_.7} parent=0 // loop_pre_header
    _
  $region3: #{_lambda_.7} parent=0 // loop_header
    %s9 = sphi 0, %s13
    %p10 = scmp.ge.s32.totalorder %s9, 4
    %s19 = sphi 0, %s21
    %s22 = sphi 0, %s19
    %s23 = sphi 0, %s22
    %s39 = sphi 0, %s23
    %s43 = sphi 0, %s43
    %s45 = sphi 0, %s43
    %s46 = sphi 0, %s45
    %s60 = sphi 0, %s46
    %s64 = sphi 0, %s64
    %s66 = sphi 0, %s64
    %s67 = sphi 0, %s66
    %s81 = sphi 0, %s67
    %s87 = sphi 0, %s89
    %s90 = sphi 0, %s87
    %s91 = sphi 0, %s90
    %s107 = sphi 0, %s91
  $region4: #{_lambda_.7} parent=0 // loop_header_branch
    %12 = sbr.rel (%p10) target = $region8
  $region5: #{_lambda_.7} parent=0 // loop_body
    %s14 = ssub.s32 %s9, 1
    %s15 = ssub.s32 %s9, 2
    %s16 = sadd.s32 %s9, 1
    %s17 = ssub.s32 %s9, %s16
    %p18 = scmp.eq.s32.totalorder %s17, 0
    %s20 = sadd.s32 %s19, 1
    %s21 = scalar_select %p18, %s19, %s20
    %p24 = pneg %p18
    %p25 = scmp.eq.s32.totalorder %s9, 1
    %p26 = por %p24, %p25
    %p27 = scmp.ne.s32.totalorder %s19, %s22
    %p28 = scmp.eq.s32.totalorder %s9, 0
    %p29 = por %p27, %p28
    %p30 = scmp.ne.s32.totalorder %s19, %s22
    %p31 = scmp.eq.s32.totalorder %s14, 1
    %p32 = por %p30, %p31
    %p33 = scmp.ne.s32.totalorder %s22, %s23
    %p34 = scmp.eq.s32.totalorder %s14, 0
    %p35 = por %p33, %p34
    %p36 = scmp.ne.s32.totalorder %s22, %s23
    %p37 = scmp.eq.s32.totalorder %s15, 1
    %p38 = por %p36, %p37
    %p40 = scmp.ne.s32.totalorder %s23, %s39
    %p41 = scmp.eq.s32.totalorder %s15, 0
    %p42 = por %p40, %p41
    %s44 = sadd.s32 %s43, 1
    %p47 = scmp.eq.s32.totalorder %s9, 1
    %p48 = scmp.ne.s32.totalorder %s43, %s45
    %p49 = scmp.eq.s32.totalorder %s9, 0
    %p50 = por %p48, %p49
    %p51 = scmp.ne.s32.totalorder %s43, %s45
    %p52 = scmp.eq.s32.totalorder %s14, 1
    %p53 = por %p51, %p52
    %p54 = scmp.ne.s32.totalorder %s45, %s46
    %p55 = scmp.eq.s32.totalorder %s14, 0
    %p56 = por %p54, %p55
    %p57 = scmp.ne.s32.totalorder %s45, %s46
    %p58 = scmp.eq.s32.totalorder %s15, 1
    %p59 = por %p57, %p58
    %p61 = scmp.ne.s32.totalorder %s46, %s60
    %p62 = scmp.eq.s32.totalorder %s15, 0
    %p63 = por %p61, %p62
    %s65 = sadd.s32 %s64, 1
    %p68 = scmp.eq.s32.totalorder %s9, 1
    %p69 = scmp.ne.s32.totalorder %s64, %s66
    %p70 = scmp.eq.s32.totalorder %s9, 0
    %p71 = por %p69, %p70
    %p72 = scmp.ne.s32.totalorder %s64, %s66
    %p73 = scmp.eq.s32.totalorder %s14, 1
    %p74 = por %p72, %p73
    %p75 = scmp.ne.s32.totalorder %s66, %s67
    %p76 = scmp.eq.s32.totalorder %s14, 0
    %p77 = por %p75, %p76
    %p78 = scmp.ne.s32.totalorder %s66, %s67
    %p79 = scmp.eq.s32.totalorder %s15, 1
    %p80 = por %p78, %p79
    %p82 = scmp.ne.s32.totalorder %s67, %s81
    %p83 = scmp.eq.s32.totalorder %s15, 0
    %p84 = por %p82, %p83
    %s85 = ssub.s32 %s9, %s16
    %p86 = scmp.eq.s32.totalorder %s85, 0
    %s88 = sadd.s32 %s87, 1
    %s89 = scalar_select %p86, %s87, %s88
    %p92 = pneg %p86
    %p93 = scmp.eq.s32.totalorder %s9, 1
    %p94 = por %p92, %p93
    %p95 = scmp.ne.s32.totalorder %s87, %s90
    %p96 = scmp.eq.s32.totalorder %s9, 0
    %p97 = por %p95, %p96
    %p98 = scmp.ne.s32.totalorder %s87, %s90
    %p99 = scmp.eq.s32.totalorder %s14, 1
    %p100 = por %p98, %p99
    %p101 = scmp.ne.s32.totalorder %s90, %s91
    %p102 = scmp.eq.s32.totalorder %s14, 0
    %p103 = por %p101, %p102
    %p104 = scmp.ne.s32.totalorder %s90, %s91
    %p105 = scmp.eq.s32.totalorder %s15, 1
    %p106 = por %p104, %p105
    %p108 = scmp.ne.s32.totalorder %s91, %s107
    %p109 = scmp.eq.s32.totalorder %s15, 0
    %p110 = por %p108, %p109
    %p111 = scmp.le.s32.totalorder 1, %s9
    %p112 = scmp.lt.s32.totalorder %s9, 3
    %p113 = pnand %p111, %p112
    %p114 = pneg %p113
    // Predicated region
    $region9: #{_lambda_.7} parent=5 // pred_check
      _
    $region10: #{_lambda_.7} parent=5 // pred_check_branch
      %116 = sbr.rel (%p113) target = $region12
    $region11: #{_lambda_.7} parent=5 // pred_region
      %s117 = ssub.s32 %s9, 1
      // Predicated region
      $region13: #{_lambda_.7} parent=11 // pred_check
        %p118 = pneg %p56
      $region14: #{_lambda_.7} parent=11 // pred_check_branch
        %120 = sbr.rel (%p118) target = $region16
      $region15: #{_lambda_.7} parent=11 // pred_region
        _
      $region16: #{_lambda_.7} parent=11 // pred_fallthru
        _
      // Predicated region
      $region17: #{_lambda_.7} parent=11 // pred_check
        %p121 = pneg %p77
      $region18: #{_lambda_.7} parent=11 // pred_check_branch
        %123 = sbr.rel (%p121) target = $region20
      $region19: #{_lambda_.7} parent=11 // pred_region
        _
      $region20: #{_lambda_.7} parent=11 // pred_fallthru
        _
    $region12: #{_lambda_.7} parent=5 // pred_fallthru
      _
    %p124 = scmp.lt.s32.totalorder %s9, 2
    // Predicated region
    $region21: #{_lambda_.7} parent=5 // pred_check
      %p125 = pneg %p124
    $region22: #{_lambda_.7} parent=5 // pred_check_branch
      %127 = sbr.rel (%p125) target = $region24
    $region23: #{_lambda_.7} parent=5 // pred_region
      // Predicated region
      $region25: #{_lambda_.7} parent=23 // pred_check
        %p128 = pneg %p29
      $region26: #{_lambda_.7} parent=23 // pred_check_branch
        %130 = sbr.rel (%p128) target = $region28
      $region27: #{_lambda_.7} parent=23 // pred_region
        %s131 = smul.u32 4, %s9
        %p132 = scmp.lt.s32.totalorder %s131, 7
        %s133 = scalar_select %p132, %s131, 7
        %s134 = smul.addr %s133, 14
        %s135 = smul.addr %s134, 4
        %s136 = scalar_lea.vmem %s0, %s135
        %s137 = smul.u32 4, %s9
      $region28: #{_lambda_.7} parent=23 // pred_fallthru
        _
    $region24: #{_lambda_.7} parent=5 // pred_fallthru
      _
    %p138 = scmp.le.s32.totalorder 1, %s9
    %p139 = scmp.lt.s32.totalorder %s9, 3
    %p140 = pnand %p138, %p139
    %p141 = pneg %p140
    // Predicated region
    $region29: #{_lambda_.7} parent=5 // pred_check
      _
    $region30: #{_lambda_.7} parent=5 // pred_check_branch
      %143 = sbr.rel (%p140) target = $region32
    $region31: #{_lambda_.7} parent=5 // pred_region
      %s144 = ssub.s32 %s9, 1
      %s145 = smul.u32 4, %s14
      %p146 = scmp.lt.s32.totalorder %s145, 7
      %s147 = scalar_select %p146, %s145, 7
      %s148 = smul.addr %s147, 14
      %s149 = smul.addr %s148, 4
      %s150 = scalar_lea.vmem %s0, %s149
      %p151 = pneg %p35
      %p152 = pneg %p32
      %p153 = pneg %p56
      %p154 = pneg %p53
      %p155 = pneg %p77
      %p156 = pneg %p74
      %p157 = pneg %p103
      %p158 = pneg %p100
      %s159 = smul.u32 4, %s14
      %p160 = scmp.lt.s32.totalorder %s159, 7
      %s161 = scalar_select %p160, %s159, 7
      %s162 = smul.addr %s161, 2
      %s163 = smul.addr %s162, 8
      %s164 = scalar_lea.vmem %s3, %s163
      %s165 = smul.u32 4, %s14
      %p166 = scmp.lt.s32.totalorder %s165, 7
      %s167 = scalar_select %p166, %s165, 7
      %s168 = smul.addr %s167, 14
      %s169 = smul.addr %s168, 4
      %s170 = scalar_lea.vmem %s0, %s169
      %s171 = smul.u32 4, %s14
      %s172 = smul.u32 4, %s14
      %p173 = scmp.lt.s32.totalorder %s172, 7
      %s174 = scalar_select %p173, %s172, 7
      %s175 = smul.addr %s174, 2
      %s176 = smul.addr %s175, 8
      %s177 = scalar_lea.vmem %s3, %s176
      %s178 = smul.u32 4, %s14
      %v180 = vld [vmem:[%s170] sm:$0xff]
      %v181 = vld [vmem:[%s170 + $0x8] sm:$0xff]
      %v182 = vld [vmem:[%s170 + $0x10] sm:$0xff]
      %v183 = vld [vmem:[%s170 + $0x18] sm:$0xff]
      %v184 = vld [vmem:[%s170 + $0x20] sm:$0xff]
      %v185 = vld [vmem:[%s170 + $0x28] sm:$0xff]
      %v186 = vld [vmem:[%s170 + $0x30] sm:$0xff]
      %v187 = vld [vmem:[%s170 + $0x38] sm:$0xff]
      %v188 = vld [vmem:[%s170 + $0x40] sm:$0xff]
      %v189 = vld [vmem:[%s170 + $0x48] sm:$0xff]
      %v190 = vld [vmem:[%s170 + $0x50] sm:$0xff]
      %v191 = vld [vmem:[%s170 + $0x58] sm:$0xff]
      %v192 = vld [vmem:[%s170 + $0x60] sm:$0xff]
      %v193 = vld [vmem:[%s170 + $0x68] sm:$0xff]
      %v194 = vld [vmem:[%s170 + $0x70] sm:$0xff]
      %v195 = vld [vmem:[%s170 + $0x78] sm:$0xff]
      %v196 = vld [vmem:[%s170 + $0x80] sm:$0xff]
      %v197 = vld [vmem:[%s170 + $0x88] sm:$0xff]
      %v198 = vld [vmem:[%s170 + $0x90] sm:$0xff]
      %v199 = vld [vmem:[%s170 + $0x98] sm:$0xff]
      %v200 = vld [vmem:[%s170 + $0xa0] sm:$0xff]
      %v201 = vld [vmem:[%s170 + $0xa8] sm:$0xff]
      %v202 = vld [vmem:[%s170 + $0xb0] sm:$0xff]
      %v203 = vld [vmem:[%s170 + $0xb8] sm:$0xff]
      %v204 = vld [vmem:[%s170 + $0xc0] sm:$0xff]
      %v205 = vld [vmem:[%s170 + $0xc8] sm:$0xff]
      %v206 = vld [vmem:[%s170 + $0xd0] sm:$0xff]
      %v207 = vld [vmem:[%s170 + $0xd8] sm:$0xff]
      %v208 = vld [vmem:[%s1] sm:$0xff]
      %v209 = vld [vmem:[%s1 + $0x8] sm:$0xff]
      %v210 = vld [vmem:[%s1 + $0x10] sm:$0xff]
      %v211 = vld [vmem:[%s1 + $0x18] sm:$0xff]
      %v212 = vld [vmem:[%s1 + $0x20] sm:$0xff]
      %v213 = vld [vmem:[%s1 + $0x28] sm:$0xff]
      %v214 = vld [vmem:[%s1 + $0x30] sm:$0xff]
      %v215 = vld [vmem:[%s1 + $0x38] sm:$0xff]
      %v216 = vld [vmem:[%s1 + $0x40] sm:$0xff]
      %v217 = vld [vmem:[%s1 + $0x48] sm:$0xff]
      %v218 = vld [vmem:[%s1 + $0x50] sm:$0xff]
      %v219 = vld [vmem:[%s1 + $0x58] sm:$0xff]
      %v220 = vld [vmem:[%s1 + $0x60] sm:$0xff]
      %v221 = vld [vmem:[%s1 + $0x68] sm:$0xff]
      %v222 = vld [vmem:[%s1 + $0x70] sm:$0xff]
      %v223 = vld [vmem:[%s1 + $0x78] sm:$0xff]
      %v224 = vld [vmem:[%s1 + $0x80] sm:$0xff]
      %v225 = vld [vmem:[%s1 + $0x88] sm:$0xff]
      %v226 = vld [vmem:[%s1 + $0x90] sm:$0xff]
      %v227 = vld [vmem:[%s1 + $0x98] sm:$0xff]
      %v228 = vld [vmem:[%s1 + $0xa0] sm:$0xff]
      %v229 = vld [vmem:[%s1 + $0xa8] sm:$0xff]
      %v230 = vld [vmem:[%s1 + $0xb0] sm:$0xff]
      %v231 = vld [vmem:[%s1 + $0xb8] sm:$0xff]
      %v232 = vld [vmem:[%s1 + $0xc0] sm:$0xff]
      %v233 = vld [vmem:[%s1 + $0xc8] sm:$0xff]
      %v234 = vld [vmem:[%s1 + $0xd0] sm:$0xff]
      %v235 = vld [vmem:[%s1 + $0xd8] sm:$0xff]
      %v236 = vld [vmem:[%s1 + $0xe0] sm:$0xff]
      %v237 = vld [vmem:[%s1 + $0xe8] sm:$0xff]
      %v238 = vld [vmem:[%s1 + $0xf0] sm:$0xff]
      %v239 = vld [vmem:[%s1 + $0xf8] sm:$0xff]
      %v240 = vld [vmem:[%s1 + $0x100] sm:$0xff]
      %v241 = vld [vmem:[%s1 + $0x108] sm:$0xff]
      %v242 = vld [vmem:[%s1 + $0x110] sm:$0xff]
      %v243 = vld [vmem:[%s1 + $0x118] sm:$0xff]
      %v244 = vld [vmem:[%s1 + $0x120] sm:$0xff]
      %v245 = vld [vmem:[%s1 + $0x128] sm:$0xff]
      %v246 = vld [vmem:[%s1 + $0x130] sm:$0xff]
      %v247 = vld [vmem:[%s1 + $0x138] sm:$0xff]
      %v248 = vld [vmem:[%s1 + $0x140] sm:$0xff]
      %v249 = vld [vmem:[%s1 + $0x148] sm:$0xff]
      %v250 = vld [vmem:[%s1 + $0x150] sm:$0xff]
      %v251 = vld [vmem:[%s1 + $0x158] sm:$0xff]
      %v252 = vld [vmem:[%s1 + $0x160] sm:$0xff]
      %v253 = vld [vmem:[%s1 + $0x168] sm:$0xff]
      %v254 = vld [vmem:[%s1 + $0x170] sm:$0xff]
      %v255 = vld [vmem:[%s1 + $0x178] sm:$0xff]
      %v256 = vld [vmem:[%s1 + $0x180] sm:$0xff]
      %v257 = vld [vmem:[%s1 + $0x188] sm:$0xff]
      %v258 = vld [vmem:[%s1 + $0x190] sm:$0xff]
      %v259 = vld [vmem:[%s1 + $0x198] sm:$0xff]
      %v260 = vld [vmem:[%s1 + $0x1a0] sm:$0xff]
      %v261 = vld [vmem:[%s1 + $0x1a8] sm:$0xff]
      %v262 = vld [vmem:[%s1 + $0x1b0] sm:$0xff]
      %v263 = vld [vmem:[%s1 + $0x1b8] sm:$0xff]
      %v264 = vld [vmem:[%s1 + $0x1c0] sm:$0xff]
      %v265 = vld [vmem:[%s1 + $0x1c8] sm:$0xff]
      %v266 = vld [vmem:[%s1 + $0x1d0] sm:$0xff]
      %v267 = vld [vmem:[%s1 + $0x1d8] sm:$0xff]
      %v268 = vld [vmem:[%s1 + $0x1e0] sm:$0xff]
      %v269 = vld [vmem:[%s1 + $0x1e8] sm:$0xff]
      %v270 = vld [vmem:[%s1 + $0x1f0] sm:$0xff]
      %v271 = vld [vmem:[%s1 + $0x1f8] sm:$0xff]
      %v272 = vld [vmem:[%s1 + $0x200] sm:$0xff]
      %v273 = vld [vmem:[%s1 + $0x208] sm:$0xff]
      %v274 = vld [vmem:[%s1 + $0x210] sm:$0xff]
      %v275 = vld [vmem:[%s1 + $0x218] sm:$0xff]
      %v276 = vld [vmem:[%s1 + $0x220] sm:$0xff]
      %v277 = vld [vmem:[%s1 + $0x228] sm:$0xff]
      %v278 = vld [vmem:[%s1 + $0x230] sm:$0xff]
      %v279 = vld [vmem:[%s1 + $0x238] sm:$0xff]
      %v280 = vld [vmem:[%s1 + $0x240] sm:$0xff]
      %v281 = vld [vmem:[%s1 + $0x248] sm:$0xff]
      %v282 = vld [vmem:[%s1 + $0x250] sm:$0xff]
      %v283 = vld [vmem:[%s1 + $0x258] sm:$0xff]
      %v284 = vld [vmem:[%s1 + $0x260] sm:$0xff]
      %v285 = vld [vmem:[%s1 + $0x268] sm:$0xff]
      %v286 = vld [vmem:[%s1 + $0x270] sm:$0xff]
      %v287 = vld [vmem:[%s1 + $0x278] sm:$0xff]
      %v288 = vld [vmem:[%s1 + $0x280] sm:$0xff]
      %v289 = vld [vmem:[%s1 + $0x288] sm:$0xff]
      %v290 = vld [vmem:[%s1 + $0x290] sm:$0xff]
      %v291 = vld [vmem:[%s1 + $0x298] sm:$0xff]
      %v292 = vld [vmem:[%s1 + $0x2a0] sm:$0xff]
      %v293 = vld [vmem:[%s1 + $0x2a8] sm:$0xff]
      %v294 = vld [vmem:[%s1 + $0x2b0] sm:$0xff]
      %v295 = vld [vmem:[%s1 + $0x2b8] sm:$0xff]
      %v296 = vld [vmem:[%s1 + $0x2c0] sm:$0xff]
      %v297 = vld [vmem:[%s1 + $0x2c8] sm:$0xff]
      %v298 = vld [vmem:[%s1 + $0x2d0] sm:$0xff]
      %v299 = vld [vmem:[%s1 + $0x2d8] sm:$0xff]
      %v300 = vld [vmem:[%s1 + $0x2e0] sm:$0xff]
      %v301 = vld [vmem:[%s1 + $0x2e8] sm:$0xff]
      %v302 = vld [vmem:[%s1 + $0x2f0] sm:$0xff]
      %v303 = vld [vmem:[%s1 + $0x2f8] sm:$0xff]
      %v304 = vld [vmem:[%s1 + $0x300] sm:$0xff]
      %v305 = vld [vmem:[%s1 + $0x308] sm:$0xff]
      %v306 = vld [vmem:[%s1 + $0x310] sm:$0xff]
      %v307 = vld [vmem:[%s1 + $0x318] sm:$0xff]
      %v308 = vld [vmem:[%s1 + $0x320] sm:$0xff]
      %v309 = vld [vmem:[%s1 + $0x328] sm:$0xff]
      %v310 = vld [vmem:[%s1 + $0x330] sm:$0xff]
      %v311 = vld [vmem:[%s1 + $0x338] sm:$0xff]
      %v312 = vld [vmem:[%s1 + $0x340] sm:$0xff]
      %v313 = vld [vmem:[%s1 + $0x348] sm:$0xff]
      %v314 = vld [vmem:[%s1 + $0x350] sm:$0xff]
      %v315 = vld [vmem:[%s1 + $0x358] sm:$0xff]
      %v316 = vld [vmem:[%s1 + $0x360] sm:$0xff]
      %v317 = vld [vmem:[%s1 + $0x368] sm:$0xff]
      %v318 = vld [vmem:[%s1 + $0x370] sm:$0xff]
      %v319 = vld [vmem:[%s1 + $0x378] sm:$0xff]
      %v320 = vld [vmem:[%s1 + $0x380] sm:$0xff]
      %v321 = vld [vmem:[%s1 + $0x388] sm:$0xff]
      %v322 = vld [vmem:[%s1 + $0x390] sm:$0xff]
      %v323 = vld [vmem:[%s1 + $0x398] sm:$0xff]
      %v324 = vld [vmem:[%s1 + $0x3a0] sm:$0xff]
      %v325 = vld [vmem:[%s1 + $0x3a8] sm:$0xff]
      %v326 = vld [vmem:[%s1 + $0x3b0] sm:$0xff]
      %v327 = vld [vmem:[%s1 + $0x3b8] sm:$0xff]
      %v328 = vld [vmem:[%s1 + $0x3c0] sm:$0xff]
      %v329 = vld [vmem:[%s1 + $0x3c8] sm:$0xff]
      %v330 = vld [vmem:[%s1 + $0x3d0] sm:$0xff]
      %v331 = vld [vmem:[%s1 + $0x3d8] sm:$0xff]
      %v332 = vld [vmem:[%s1 + $0x3e0] sm:$0xff]
      %v333 = vld [vmem:[%s1 + $0x3e8] sm:$0xff]
      %v334 = vld [vmem:[%s1 + $0x3f0] sm:$0xff]
      %v335 = vld [vmem:[%s1 + $0x3f8] sm:$0xff]
      %v336 = vld [vmem:[%s1 + $0x400] sm:$0xff]
      %v337 = vld [vmem:[%s1 + $0x408] sm:$0xff]
      %v338 = vld [vmem:[%s1 + $0x410] sm:$0xff]
      %v339 = vld [vmem:[%s1 + $0x418] sm:$0xff]
      %v340 = vld [vmem:[%s1 + $0x420] sm:$0xff]
      %v341 = vld [vmem:[%s1 + $0x428] sm:$0xff]
      %v342 = vld [vmem:[%s1 + $0x430] sm:$0xff]
      %v343 = vld [vmem:[%s1 + $0x438] sm:$0xff]
      %v344 = vld [vmem:[%s1 + $0x440] sm:$0xff]
      %v345 = vld [vmem:[%s1 + $0x448] sm:$0xff]
      %v346 = vld [vmem:[%s1 + $0x450] sm:$0xff]
      %v347 = vld [vmem:[%s1 + $0x458] sm:$0xff]
      %v348 = vld [vmem:[%s1 + $0x460] sm:$0xff]
      %v349 = vld [vmem:[%s1 + $0x468] sm:$0xff]
      %v350 = vld [vmem:[%s1 + $0x470] sm:$0xff]
      %v351 = vld [vmem:[%s1 + $0x478] sm:$0xff]
      %v352 = vld [vmem:[%s1 + $0x480] sm:$0xff]
      %v353 = vld [vmem:[%s1 + $0x488] sm:$0xff]
      %v354 = vld [vmem:[%s1 + $0x490] sm:$0xff]
      %v355 = vld [vmem:[%s1 + $0x498] sm:$0xff]
      %v356 = vld [vmem:[%s1 + $0x4a0] sm:$0xff]
      %v357 = vld [vmem:[%s1 + $0x4a8] sm:$0xff]
      %v358 = vld [vmem:[%s1 + $0x4b0] sm:$0xff]
      %v359 = vld [vmem:[%s1 + $0x4b8] sm:$0xff]
      %v360 = vld [vmem:[%s1 + $0x4c0] sm:$0xff]
      %v361 = vld [vmem:[%s1 + $0x4c8] sm:$0xff]
      %v362 = vld [vmem:[%s1 + $0x4d0] sm:$0xff]
      %v363 = vld [vmem:[%s1 + $0x4d8] sm:$0xff]
      %v364 = vld [vmem:[%s1 + $0x4e0] sm:$0xff]
      %v365 = vld [vmem:[%s1 + $0x4e8] sm:$0xff]
      %v366 = vld [vmem:[%s1 + $0x4f0] sm:$0xff]
      %v367 = vld [vmem:[%s1 + $0x4f8] sm:$0xff]
      %v368 = vld [vmem:[%s1 + $0x500] sm:$0xff]
      %v369 = vld [vmem:[%s1 + $0x508] sm:$0xff]
      %v370 = vld [vmem:[%s1 + $0x510] sm:$0xff]
      %v371 = vld [vmem:[%s1 + $0x518] sm:$0xff]
      %v372 = vld [vmem:[%s1 + $0x520] sm:$0xff]
      %v373 = vld [vmem:[%s1 + $0x528] sm:$0xff]
      %v374 = vld [vmem:[%s1 + $0x530] sm:$0xff]
      %v375 = vld [vmem:[%s1 + $0x538] sm:$0xff]
      %v376 = vld [vmem:[%s1 + $0x540] sm:$0xff]
      %v377 = vld [vmem:[%s1 + $0x548] sm:$0xff]
      %v378 = vld [vmem:[%s1 + $0x550] sm:$0xff]
      %v379 = vld [vmem:[%s1 + $0x558] sm:$0xff]
      %v380 = vld [vmem:[%s1 + $0x560] sm:$0xff]
      %v381 = vld [vmem:[%s1 + $0x568] sm:$0xff]
      %v382 = vld [vmem:[%s1 + $0x570] sm:$0xff]
      %v383 = vld [vmem:[%s1 + $0x578] sm:$0xff]
      %v384 = vld [vmem:[%s1 + $0x580] sm:$0xff]
      %v385 = vld [vmem:[%s1 + $0x588] sm:$0xff]
      %v386 = vld [vmem:[%s1 + $0x590] sm:$0xff]
      %v387 = vld [vmem:[%s1 + $0x598] sm:$0xff]
      %v388 = vld [vmem:[%s1 + $0x5a0] sm:$0xff]
      %v389 = vld [vmem:[%s1 + $0x5a8] sm:$0xff]
      %v390 = vld [vmem:[%s1 + $0x5b0] sm:$0xff]
      %v391 = vld [vmem:[%s1 + $0x5b8] sm:$0xff]
      %v392 = vld [vmem:[%s1 + $0x5c0] sm:$0xff]
      %v393 = vld [vmem:[%s1 + $0x5c8] sm:$0xff]
      %v394 = vld [vmem:[%s1 + $0x5d0] sm:$0xff]
      %v395 = vld [vmem:[%s1 + $0x5d8] sm:$0xff]
      %v396 = vld [vmem:[%s1 + $0x5e0] sm:$0xff]
      %v397 = vld [vmem:[%s1 + $0x5e8] sm:$0xff]
      %v398 = vld [vmem:[%s1 + $0x5f0] sm:$0xff]
      %v399 = vld [vmem:[%s1 + $0x5f8] sm:$0xff]
      %v400 = vld [vmem:[%s1 + $0x600] sm:$0xff]
      %v401 = vld [vmem:[%s1 + $0x608] sm:$0xff]
      %v402 = vld [vmem:[%s1 + $0x610] sm:$0xff]
      %v403 = vld [vmem:[%s1 + $0x618] sm:$0xff]
      %v404 = vld [vmem:[%s1 + $0x620] sm:$0xff]
      %v405 = vld [vmem:[%s1 + $0x628] sm:$0xff]
      %v406 = vld [vmem:[%s1 + $0x630] sm:$0xff]
      %v407 = vld [vmem:[%s1 + $0x638] sm:$0xff]
      %v408 = vld [vmem:[%s1 + $0x640] sm:$0xff]
      %v409 = vld [vmem:[%s1 + $0x648] sm:$0xff]
      %v410 = vld [vmem:[%s1 + $0x650] sm:$0xff]
      %v411 = vld [vmem:[%s1 + $0x658] sm:$0xff]
      %v412 = vld [vmem:[%s1 + $0x660] sm:$0xff]
      %v413 = vld [vmem:[%s1 + $0x668] sm:$0xff]
      %v414 = vld [vmem:[%s1 + $0x670] sm:$0xff]
      %v415 = vld [vmem:[%s1 + $0x678] sm:$0xff]
      %v416 = vld [vmem:[%s1 + $0x680] sm:$0xff]
      %v417 = vld [vmem:[%s1 + $0x688] sm:$0xff]
      %v418 = vld [vmem:[%s1 + $0x690] sm:$0xff]
      %v419 = vld [vmem:[%s1 + $0x698] sm:$0xff]
      %v420 = vld [vmem:[%s1 + $0x6a0] sm:$0xff]
      %v421 = vld [vmem:[%s1 + $0x6a8] sm:$0xff]
      %v422 = vld [vmem:[%s1 + $0x6b0] sm:$0xff]
      %v423 = vld [vmem:[%s1 + $0x6b8] sm:$0xff]
      %v424 = vld [vmem:[%s2] sm:$0x3]
      %v426 = vlaneseq
      %v427 = vshrl.u32 %v426, 7
      %v428 = vsub.s32 0, %v427
      %v429 = vrot.slane %v424, %v428
      %v430 = vlaneseq
      %v431 = vshrl.u32 %v430, 7
      %v432 = vsub.s32 1, %v431
      %v433 = vrot.slane %v424, %v432
      %v464 = vunpack.c.l.b16 %v180
      %v465 = vunpack.c.h.b16 %v180
      %v466 = vunpack.c.l.b16 %v181
      %v467 = vunpack.c.h.b16 %v181
      %v468 = vunpack.c.l.b16 %v182
      %v469 = vunpack.c.h.b16 %v182
      %v470 = vunpack.c.l.b16 %v183
      %v471 = vunpack.c.h.b16 %v183
      %v472 = vunpack.c.l.b16 %v184
      %v473 = vunpack.c.h.b16 %v184
      %v474 = vunpack.c.l.b16 %v185
      %v475 = vunpack.c.h.b16 %v185
      %v476 = vunpack.c.l.b16 %v186
      %v477 = vunpack.c.h.b16 %v186
      %v478 = vunpack.c.l.b16 %v187
      %v479 = vunpack.c.h.b16 %v187
      %v480 = vunpack.c.l.b16 %v188
      %v481 = vunpack.c.h.b16 %v188
      %v482 = vunpack.c.l.b16 %v189
      %v483 = vunpack.c.h.b16 %v189
      %v484 = vunpack.c.l.b16 %v190
      %v485 = vunpack.c.h.b16 %v190
      %v486 = vunpack.c.l.b16 %v191
      %v487 = vunpack.c.h.b16 %v191
      %v488 = vunpack.c.l.b16 %v192
      %v489 = vunpack.c.h.b16 %v192
      %v490 = vunpack.c.l.b16 %v193
      %v491 = vunpack.c.h.b16 %v193
      %v492 = vunpack.c.l.b16 %v194
      %v493 = vunpack.c.h.b16 %v194
      %v494 = vunpack.c.l.b16 %v195
      %v495 = vunpack.c.h.b16 %v195
      %v496 = vunpack.c.l.b16 %v196
      %v497 = vunpack.c.h.b16 %v196
      %v498 = vunpack.c.l.b16 %v197
      %v499 = vunpack.c.h.b16 %v197
      %v500 = vunpack.c.l.b16 %v198
      %v501 = vunpack.c.h.b16 %v198
      %v502 = vunpack.c.l.b16 %v199
      %v503 = vunpack.c.h.b16 %v199
      %v504 = vunpack.c.l.b16 %v200
      %v505 = vunpack.c.h.b16 %v200
      %v506 = vunpack.c.l.b16 %v201
      %v507 = vunpack.c.h.b16 %v201
      %v508 = vunpack.c.l.b16 %v202
      %v509 = vunpack.c.h.b16 %v202
      %v510 = vunpack.c.l.b16 %v203
      %v511 = vunpack.c.h.b16 %v203
      %v512 = vunpack.c.l.b16 %v204
      %v513 = vunpack.c.h.b16 %v204
      %v514 = vunpack.c.l.b16 %v205
      %v515 = vunpack.c.h.b16 %v205
      %v516 = vunpack.c.l.b16 %v206
      %v517 = vunpack.c.h.b16 %v206
      %v518 = vunpack.c.l.b16 %v207
      %v519 = vunpack.c.h.b16 %v207
      %v520 = vpack.c.b16 %v478, %v464
      %v521 = vpack.c.b16 %v479, %v465
      %v522 = vpack.c.b16 %v480, %v466
      %v523 = vpack.c.b16 %v481, %v467
      %v524 = vpack.c.b16 %v482, %v468
      %v525 = vpack.c.b16 %v483, %v469
      %v526 = vpack.c.b16 %v484, %v470
      %v527 = vpack.c.b16 %v485, %v471
      %v528 = vpack.c.b16 %v486, %v472
      %v529 = vpack.c.b16 %v487, %v473
      %v530 = vpack.c.b16 %v488, %v474
      %v531 = vpack.c.b16 %v489, %v475
      %v532 = vpack.c.b16 %v490, %v476
      %v533 = vpack.c.b16 %v491, %v477
      %v534 = vpack.c.b16 %v506, %v492
      %v535 = vpack.c.b16 %v507, %v493
      %v536 = vpack.c.b16 %v508, %v494
      %v537 = vpack.c.b16 %v509, %v495
      %v538 = vpack.c.b16 %v510, %v496
      %v539 = vpack.c.b16 %v511, %v497
      %v540 = vpack.c.b16 %v512, %v498
      %v541 = vpack.c.b16 %v513, %v499
      %v542 = vpack.c.b16 %v514, %v500
      %v543 = vpack.c.b16 %v515, %v501
      %v544 = vpack.c.b16 %v516, %v502
      %v545 = vpack.c.b16 %v517, %v503
      %v546 = vpack.c.b16 %v518, %v504
      %v547 = vpack.c.b16 %v519, %v505
      %v790 = vunpack.c.l.b16 %v208
      %v791 = vunpack.c.h.b16 %v208
      %v792 = vunpack.c.l.b16 %v209
      %v793 = vunpack.c.h.b16 %v209
      %v794 = vunpack.c.l.b16 %v210
      %v795 = vunpack.c.h.b16 %v210
      %v796 = vunpack.c.l.b16 %v211
      %v797 = vunpack.c.h.b16 %v211
      %v798 = vunpack.c.l.b16 %v212
      %v799 = vunpack.c.h.b16 %v212
      %v800 = vunpack.c.l.b16 %v213
      %v801 = vunpack.c.h.b16 %v213
      %v802 = vunpack.c.l.b16 %v214
      %v803 = vunpack.c.h.b16 %v214
      %v804 = vunpack.c.l.b16 %v215
      %v805 = vunpack.c.h.b16 %v215
      %v806 = vunpack.c.l.b16 %v216
      %v807 = vunpack.c.h.b16 %v216
      %v808 = vunpack.c.l.b16 %v217
      %v809 = vunpack.c.h.b16 %v217
      %v810 = vunpack.c.l.b16 %v218
      %v811 = vunpack.c.h.b16 %v218
      %v812 = vunpack.c.l.b16 %v219
      %v813 = vunpack.c.h.b16 %v219
      %v814 = vunpack.c.l.b16 %v220
      %v815 = vunpack.c.h.b16 %v220
      %v816 = vunpack.c.l.b16 %v221
      %v817 = vunpack.c.h.b16 %v221
      %v818 = vunpack.c.l.b16 %v222
      %v819 = vunpack.c.h.b16 %v222
      %v820 = vunpack.c.l.b16 %v223
      %v821 = vunpack.c.h.b16 %v223
      %v822 = vunpack.c.l.b16 %v224
      %v823 = vunpack.c.h.b16 %v224
      %v824 = vunpack.c.l.b16 %v225
      %v825 = vunpack.c.h.b16 %v225
      %v826 = vunpack.c.l.b16 %v226
      %v827 = vunpack.c.h.b16 %v226
      %v828 = vunpack.c.l.b16 %v227
      %v829 = vunpack.c.h.b16 %v227
      %v830 = vunpack.c.l.b16 %v228
      %v831 = vunpack.c.h.b16 %v228
      %v832 = vunpack.c.l.b16 %v229
      %v833 = vunpack.c.h.b16 %v229
      %v834 = vunpack.c.l.b16 %v230
      %v835 = vunpack.c.h.b16 %v230
      %v836 = vunpack.c.l.b16 %v231
      %v837 = vunpack.c.h.b16 %v231
      %v838 = vunpack.c.l.b16 %v232
      %v839 = vunpack.c.h.b16 %v232
      %v840 = vunpack.c.l.b16 %v233
      %v841 = vunpack.c.h.b16 %v233
      %v842 = vunpack.c.l.b16 %v234
      %v843 = vunpack.c.h.b16 %v234
      %v844 = vunpack.c.l.b16 %v235
      %v845 = vunpack.c.h.b16 %v235
      %v846 = vunpack.c.l.b16 %v236
      %v847 = vunpack.c.h.b16 %v236
      %v848 = vunpack.c.l.b16 %v237
      %v849 = vunpack.c.h.b16 %v237
      %v850 = vunpack.c.l.b16 %v238
      %v851 = vunpack.c.h.b16 %v238
      %v852 = vunpack.c.l.b16 %v239
      %v853 = vunpack.c.h.b16 %v239
      %v854 = vunpack.c.l.b16 %v240
      %v855 = vunpack.c.h.b16 %v240
      %v856 = vunpack.c.l.b16 %v241
      %v857 = vunpack.c.h.b16 %v241
      %v858 = vunpack.c.l.b16 %v242
      %v859 = vunpack.c.h.b16 %v242
      %v860 = vunpack.c.l.b16 %v243
      %v861 = vunpack.c.h.b16 %v243
      %v862 = vunpack.c.l.b16 %v244
      %v863 = vunpack.c.h.b16 %v244
      %v864 = vunpack.c.l.b16 %v245
      %v865 = vunpack.c.h.b16 %v245
      %v866 = vunpack.c.l.b16 %v246
      %v867 = vunpack.c.h.b16 %v246
      %v868 = vunpack.c.l.b16 %v247
      %v869 = vunpack.c.h.b16 %v247
      %v870 = vunpack.c.l.b16 %v248
      %v871 = vunpack.c.h.b16 %v248
      %v872 = vunpack.c.l.b16 %v249
      %v873 = vunpack.c.h.b16 %v249
      %v874 = vunpack.c.l.b16 %v250
      %v875 = vunpack.c.h.b16 %v250
      %v876 = vunpack.c.l.b16 %v251
      %v877 = vunpack.c.h.b16 %v251
      %v878 = vunpack.c.l.b16 %v252
      %v879 = vunpack.c.h.b16 %v252
      %v880 = vunpack.c.l.b16 %v253
      %v881 = vunpack.c.h.b16 %v253
      %v882 = vunpack.c.l.b16 %v254
      %v883 = vunpack.c.h.b16 %v254
      %v884 = vunpack.c.l.b16 %v255
      %v885 = vunpack.c.h.b16 %v255
      %v886 = vunpack.c.l.b16 %v256
      %v887 = vunpack.c.h.b16 %v256
      %v888 = vunpack.c.l.b16 %v257
      %v889 = vunpack.c.h.b16 %v257
      %v890 = vunpack.c.l.b16 %v258
      %v891 = vunpack.c.h.b16 %v258
      %v892 = vunpack.c.l.b16 %v259
      %v893 = vunpack.c.h.b16 %v259
      %v894 = vunpack.c.l.b16 %v260
      %v895 = vunpack.c.h.b16 %v260
      %v896 = vunpack.c.l.b16 %v261
      %v897 = vunpack.c.h.b16 %v261
      %v898 = vunpack.c.l.b16 %v262
      %v899 = vunpack.c.h.b16 %v262
      %v900 = vunpack.c.l.b16 %v263
      %v901 = vunpack.c.h.b16 %v263
      %v902 = vunpack.c.l.b16 %v264
      %v903 = vunpack.c.h.b16 %v264
      %v904 = vunpack.c.l.b16 %v265
      %v905 = vunpack.c.h.b16 %v265
      %v906 = vunpack.c.l.b16 %v266
      %v907 = vunpack.c.h.b16 %v266
      %v908 = vunpack.c.l.b16 %v267
      %v909 = vunpack.c.h.b16 %v267
      %v910 = vunpack.c.l.b16 %v268
      %v911 = vunpack.c.h.b16 %v268
      %v912 = vunpack.c.l.b16 %v269
      %v913 = vunpack.c.h.b16 %v269
      %v914 = vunpack.c.l.b16 %v270
      %v915 = vunpack.c.h.b16 %v270
      %v916 = vunpack.c.l.b16 %v271
      %v917 = vunpack.c.h.b16 %v271
      %v918 = vunpack.c.l.b16 %v272
      %v919 = vunpack.c.h.b16 %v272
      %v920 = vunpack.c.l.b16 %v273
      %v921 = vunpack.c.h.b16 %v273
      %v922 = vunpack.c.l.b16 %v274
      %v923 = vunpack.c.h.b16 %v274
      %v924 = vunpack.c.l.b16 %v275
      %v925 = vunpack.c.h.b16 %v275
      %v926 = vunpack.c.l.b16 %v276
      %v927 = vunpack.c.h.b16 %v276
      %v928 = vunpack.c.l.b16 %v277
      %v929 = vunpack.c.h.b16 %v277
      %v930 = vunpack.c.l.b16 %v278
      %v931 = vunpack.c.h.b16 %v278
      %v932 = vunpack.c.l.b16 %v279
      %v933 = vunpack.c.h.b16 %v279
      %v934 = vunpack.c.l.b16 %v280
      %v935 = vunpack.c.h.b16 %v280
      %v936 = vunpack.c.l.b16 %v281
      %v937 = vunpack.c.h.b16 %v281
      %v938 = vunpack.c.l.b16 %v282
      %v939 = vunpack.c.h.b16 %v282
      %v940 = vunpack.c.l.b16 %v283
      %v941 = vunpack.c.h.b16 %v283
      %v942 = vunpack.c.l.b16 %v284
      %v943 = vunpack.c.h.b16 %v284
      %v944 = vunpack.c.l.b16 %v285
      %v945 = vunpack.c.h.b16 %v285
      %v946 = vunpack.c.l.b16 %v286
      %v947 = vunpack.c.h.b16 %v286
      %v948 = vunpack.c.l.b16 %v287
      %v949 = vunpack.c.h.b16 %v287
      %v950 = vunpack.c.l.b16 %v288
      %v951 = vunpack.c.h.b16 %v288
      %v952 = vunpack.c.l.b16 %v289
      %v953 = vunpack.c.h.b16 %v289
      %v954 = vunpack.c.l.b16 %v290
      %v955 = vunpack.c.h.b16 %v290
      %v956 = vunpack.c.l.b16 %v291
      %v957 = vunpack.c.h.b16 %v291
      %v958 = vunpack.c.l.b16 %v292
      %v959 = vunpack.c.h.b16 %v292
      %v960 = vunpack.c.l.b16 %v293
      %v961 = vunpack.c.h.b16 %v293
      %v962 = vunpack.c.l.b16 %v294
      %v963 = vunpack.c.h.b16 %v294
      %v964 = vunpack.c.l.b16 %v295
      %v965 = vunpack.c.h.b16 %v295
      %v966 = vunpack.c.l.b16 %v296
      %v967 = vunpack.c.h.b16 %v296
      %v968 = vunpack.c.l.b16 %v297
      %v969 = vunpack.c.h.b16 %v297
      %v970 = vunpack.c.l.b16 %v298
      %v971 = vunpack.c.h.b16 %v298
      %v972 = vunpack.c.l.b16 %v299
      %v973 = vunpack.c.h.b16 %v299
      %v974 = vunpack.c.l.b16 %v300
      %v975 = vunpack.c.h.b16 %v300
      %v976 = vunpack.c.l.b16 %v301
      %v977 = vunpack.c.h.b16 %v301
      %v978 = vunpack.c.l.b16 %v302
      %v979 = vunpack.c.h.b16 %v302
      %v980 = vunpack.c.l.b16 %v303
      %v981 = vunpack.c.h.b16 %v303
      %v982 = vunpack.c.l.b16 %v304
      %v983 = vunpack.c.h.b16 %v304
      %v984 = vunpack.c.l.b16 %v305
      %v985 = vunpack.c.h.b16 %v305
      %v986 = vunpack.c.l.b16 %v306
      %v987 = vunpack.c.h.b16 %v306
      %v988 = vunpack.c.l.b16 %v307
      %v989 = vunpack.c.h.b16 %v307
      %v990 = vunpack.c.l.b16 %v308
      %v991 = vunpack.c.h.b16 %v308
      %v992 = vunpack.c.l.b16 %v309
      %v993 = vunpack.c.h.b16 %v309
      %v994 = vunpack.c.l.b16 %v310
      %v995 = vunpack.c.h.b16 %v310
      %v996 = vunpack.c.l.b16 %v311
      %v997 = vunpack.c.h.b16 %v311
      %v998 = vunpack.c.l.b16 %v312
      %v999 = vunpack.c.h.b16 %v312
      %v1000 = vunpack.c.l.b16 %v313
      %v1001 = vunpack.c.h.b16 %v313
      %v1002 = vunpack.c.l.b16 %v314
      %v1003 = vunpack.c.h.b16 %v314
      %v1004 = vunpack.c.l.b16 %v315
      %v1005 = vunpack.c.h.b16 %v315
      %v1006 = vunpack.c.l.b16 %v316
      %v1007 = vunpack.c.h.b16 %v316
      %v1008 = vunpack.c.l.b16 %v317
      %v1009 = vunpack.c.h.b16 %v317
      %v1010 = vunpack.c.l.b16 %v318
      %v1011 = vunpack.c.h.b16 %v318
      %v1012 = vunpack.c.l.b16 %v319
      %v1013 = vunpack.c.h.b16 %v319
      %v1014 = vunpack.c.l.b16 %v320
      %v1015 = vunpack.c.h.b16 %v320
      %v1016 = vunpack.c.l.b16 %v321
      %v1017 = vunpack.c.h.b16 %v321
      %v1018 = vunpack.c.l.b16 %v322
      %v1019 = vunpack.c.h.b16 %v322
      %v1020 = vunpack.c.l.b16 %v323
      %v1021 = vunpack.c.h.b16 %v323
      %v1022 = vunpack.c.l.b16 %v324
      %v1023 = vunpack.c.h.b16 %v324
      %v1024 = vunpack.c.l.b16 %v325
      %v1025 = vunpack.c.h.b16 %v325
      %v1026 = vunpack.c.l.b16 %v326
      %v1027 = vunpack.c.h.b16 %v326
      %v1028 = vunpack.c.l.b16 %v327
      %v1029 = vunpack.c.h.b16 %v327
      %v1030 = vunpack.c.l.b16 %v328
      %v1031 = vunpack.c.h.b16 %v328
      %v1032 = vunpack.c.l.b16 %v329
      %v1033 = vunpack.c.h.b16 %v329
      %v1034 = vunpack.c.l.b16 %v330
      %v1035 = vunpack.c.h.b16 %v330
      %v1036 = vunpack.c.l.b16 %v331
      %v1037 = vunpack.c.h.b16 %v331
      %v1038 = vunpack.c.l.b16 %v332
      %v1039 = vunpack.c.h.b16 %v332
      %v1040 = vunpack.c.l.b16 %v333
      %v1041 = vunpack.c.h.b16 %v333
      %v1042 = vunpack.c.l.b16 %v334
      %v1043 = vunpack.c.h.b16 %v334
      %v1044 = vunpack.c.l.b16 %v335
      %v1045 = vunpack.c.h.b16 %v335
      %v1046 = vunpack.c.l.b16 %v336
      %v1047 = vunpack.c.h.b16 %v336
      %v1048 = vunpack.c.l.b16 %v337
      %v1049 = vunpack.c.h.b16 %v337
      %v1050 = vunpack.c.l.b16 %v338
      %v1051 = vunpack.c.h.b16 %v338
      %v1052 = vunpack.c.l.b16 %v339
      %v1053 = vunpack.c.h.b16 %v339
      %v1054 = vunpack.c.l.b16 %v340
      %v1055 = vunpack.c.h.b16 %v340
      %v1056 = vunpack.c.l.b16 %v341
      %v1057 = vunpack.c.h.b16 %v341
      %v1058 = vunpack.c.l.b16 %v342
      %v1059 = vunpack.c.h.b16 %v342
      %v1060 = vunpack.c.l.b16 %v343
      %v1061 = vunpack.c.h.b16 %v343
      %v1062 = vunpack.c.l.b16 %v344
      %v1063 = vunpack.c.h.b16 %v344
      %v1064 = vunpack.c.l.b16 %v345
      %v1065 = vunpack.c.h.b16 %v345
      %v1066 = vunpack.c.l.b16 %v346
      %v1067 = vunpack.c.h.b16 %v346
      %v1068 = vunpack.c.l.b16 %v347
      %v1069 = vunpack.c.h.b16 %v347
      %v1070 = vunpack.c.l.b16 %v348
      %v1071 = vunpack.c.h.b16 %v348
      %v1072 = vunpack.c.l.b16 %v349
      %v1073 = vunpack.c.h.b16 %v349
      %v1074 = vunpack.c.l.b16 %v350
      %v1075 = vunpack.c.h.b16 %v350
      %v1076 = vunpack.c.l.b16 %v351
      %v1077 = vunpack.c.h.b16 %v351
      %v1078 = vunpack.c.l.b16 %v352
      %v1079 = vunpack.c.h.b16 %v352
      %v1080 = vunpack.c.l.b16 %v353
      %v1081 = vunpack.c.h.b16 %v353
      %v1082 = vunpack.c.l.b16 %v354
      %v1083 = vunpack.c.h.b16 %v354
      %v1084 = vunpack.c.l.b16 %v355
      %v1085 = vunpack.c.h.b16 %v355
      %v1086 = vunpack.c.l.b16 %v356
      %v1087 = vunpack.c.h.b16 %v356
      %v1088 = vunpack.c.l.b16 %v357
      %v1089 = vunpack.c.h.b16 %v357
      %v1090 = vunpack.c.l.b16 %v358
      %v1091 = vunpack.c.h.b16 %v358
      %v1092 = vunpack.c.l.b16 %v359
      %v1093 = vunpack.c.h.b16 %v359
      %v1094 = vunpack.c.l.b16 %v360
      %v1095 = vunpack.c.h.b16 %v360
      %v1096 = vunpack.c.l.b16 %v361
      %v1097 = vunpack.c.h.b16 %v361
      %v1098 = vunpack.c.l.b16 %v362
      %v1099 = vunpack.c.h.b16 %v362
      %v1100 = vunpack.c.l.b16 %v363
      %v1101 = vunpack.c.h.b16 %v363
      %v1102 = vunpack.c.l.b16 %v364
      %v1103 = vunpack.c.h.b16 %v364
      %v1104 = vunpack.c.l.b16 %v365
      %v1105 = vunpack.c.h.b16 %v365
      %v1106 = vunpack.c.l.b16 %v366
      %v1107 = vunpack.c.h.b16 %v366
      %v1108 = vunpack.c.l.b16 %v367
      %v1109 = vunpack.c.h.b16 %v367
      %v1110 = vunpack.c.l.b16 %v368
      %v1111 = vunpack.c.h.b16 %v368
      %v1112 = vunpack.c.l.b16 %v369
      %v1113 = vunpack.c.h.b16 %v369
      %v1114 = vunpack.c.l.b16 %v370
      %v1115 = vunpack.c.h.b16 %v370
      %v1116 = vunpack.c.l.b16 %v371
      %v1117 = vunpack.c.h.b16 %v371
      %v1118 = vunpack.c.l.b16 %v372
      %v1119 = vunpack.c.h.b16 %v372
      %v1120 = vunpack.c.l.b16 %v373
      %v1121 = vunpack.c.h.b16 %v373
      %v1122 = vunpack.c.l.b16 %v374
      %v1123 = vunpack.c.h.b16 %v374
      %v1124 = vunpack.c.l.b16 %v375
      %v1125 = vunpack.c.h.b16 %v375
      %v1126 = vunpack.c.l.b16 %v376
      %v1127 = vunpack.c.h.b16 %v376
      %v1128 = vunpack.c.l.b16 %v377
      %v1129 = vunpack.c.h.b16 %v377
      %v1130 = vunpack.c.l.b16 %v378
      %v1131 = vunpack.c.h.b16 %v378
      %v1132 = vunpack.c.l.b16 %v379
      %v1133 = vunpack.c.h.b16 %v379
      %v1134 = vunpack.c.l.b16 %v380
      %v1135 = vunpack.c.h.b16 %v380
      %v1136 = vunpack.c.l.b16 %v381
      %v1137 = vunpack.c.h.b16 %v381
      %v1138 = vunpack.c.l.b16 %v382
      %v1139 = vunpack.c.h.b16 %v382
      %v1140 = vunpack.c.l.b16 %v383
      %v1141 = vunpack.c.h.b16 %v383
      %v1142 = vunpack.c.l.b16 %v384
      %v1143 = vunpack.c.h.b16 %v384
      %v1144 = vunpack.c.l.b16 %v385
      %v1145 = vunpack.c.h.b16 %v385
      %v1146 = vunpack.c.l.b16 %v386
      %v1147 = vunpack.c.h.b16 %v386
      %v1148 = vunpack.c.l.b16 %v387
      %v1149 = vunpack.c.h.b16 %v387
      %v1150 = vunpack.c.l.b16 %v388
      %v1151 = vunpack.c.h.b16 %v388
      %v1152 = vunpack.c.l.b16 %v389
      %v1153 = vunpack.c.h.b16 %v389
      %v1154 = vunpack.c.l.b16 %v390
      %v1155 = vunpack.c.h.b16 %v390
      %v1156 = vunpack.c.l.b16 %v391
      %v1157 = vunpack.c.h.b16 %v391
      %v1158 = vunpack.c.l.b16 %v392
      %v1159 = vunpack.c.h.b16 %v392
      %v1160 = vunpack.c.l.b16 %v393
      %v1161 = vunpack.c.h.b16 %v393
      %v1162 = vunpack.c.l.b16 %v394
      %v1163 = vunpack.c.h.b16 %v394
      %v1164 = vunpack.c.l.b16 %v395
      %v1165 = vunpack.c.h.b16 %v395
      %v1166 = vunpack.c.l.b16 %v396
      %v1167 = vunpack.c.h.b16 %v396
      %v1168 = vunpack.c.l.b16 %v397
      %v1169 = vunpack.c.h.b16 %v397
      %v1170 = vunpack.c.l.b16 %v398
      %v1171 = vunpack.c.h.b16 %v398
      %v1172 = vunpack.c.l.b16 %v399
      %v1173 = vunpack.c.h.b16 %v399
      %v1174 = vunpack.c.l.b16 %v400
      %v1175 = vunpack.c.h.b16 %v400
      %v1176 = vunpack.c.l.b16 %v401
      %v1177 = vunpack.c.h.b16 %v401
      %v1178 = vunpack.c.l.b16 %v402
      %v1179 = vunpack.c.h.b16 %v402
      %v1180 = vunpack.c.l.b16 %v403
      %v1181 = vunpack.c.h.b16 %v403
      %v1182 = vunpack.c.l.b16 %v404
      %v1183 = vunpack.c.h.b16 %v404
      %v1184 = vunpack.c.l.b16 %v405
      %v1185 = vunpack.c.h.b16 %v405
      %v1186 = vunpack.c.l.b16 %v406
      %v1187 = vunpack.c.h.b16 %v406
      %v1188 = vunpack.c.l.b16 %v407
      %v1189 = vunpack.c.h.b16 %v407
      %v1190 = vunpack.c.l.b16 %v408
      %v1191 = vunpack.c.h.b16 %v408
      %v1192 = vunpack.c.l.b16 %v409
      %v1193 = vunpack.c.h.b16 %v409
      %v1194 = vunpack.c.l.b16 %v410
      %v1195 = vunpack.c.h.b16 %v410
      %v1196 = vunpack.c.l.b16 %v411
      %v1197 = vunpack.c.h.b16 %v411
      %v1198 = vunpack.c.l.b16 %v412
      %v1199 = vunpack.c.h.b16 %v412
      %v1200 = vunpack.c.l.b16 %v413
      %v1201 = vunpack.c.h.b16 %v413
      %v1202 = vunpack.c.l.b16 %v414
      %v1203 = vunpack.c.h.b16 %v414
      %v1204 = vunpack.c.l.b16 %v415
      %v1205 = vunpack.c.h.b16 %v415
      %v1206 = vunpack.c.l.b16 %v416
      %v1207 = vunpack.c.h.b16 %v416
      %v1208 = vunpack.c.l.b16 %v417
      %v1209 = vunpack.c.h.b16 %v417
      %v1210 = vunpack.c.l.b16 %v418
      %v1211 = vunpack.c.h.b16 %v418
      %v1212 = vunpack.c.l.b16 %v419
      %v1213 = vunpack.c.h.b16 %v419
      %v1214 = vunpack.c.l.b16 %v420
      %v1215 = vunpack.c.h.b16 %v420
      %v1216 = vunpack.c.l.b16 %v421
      %v1217 = vunpack.c.h.b16 %v421
      %v1218 = vunpack.c.l.b16 %v422
      %v1219 = vunpack.c.h.b16 %v422
      %v1220 = vunpack.c.l.b16 %v423
      %v1221 = vunpack.c.h.b16 %v423
      %v1222 = vpack.c.b16 %v792, %v790
      %v1223 = vpack.c.b16 %v793, %v791
      %v1224 = vpack.c.b16 %v796, %v794
      %v1225 = vpack.c.b16 %v797, %v795
      %v1226 = vpack.c.b16 %v800, %v798
      %v1227 = vpack.c.b16 %v801, %v799
      %v1228 = vpack.c.b16 %v804, %v802
      %v1229 = vpack.c.b16 %v805, %v803
      %v1230 = vpack.c.b16 %v808, %v806
      %v1231 = vpack.c.b16 %v809, %v807
      %v1232 = vpack.c.b16 %v812, %v810
      %v1233 = vpack.c.b16 %v813, %v811
      %v1234 = vpack.c.b16 %v816, %v814
      %v1235 = vpack.c.b16 %v817, %v815
      %v1236 = vpack.c.b16 %v820, %v818
      %v1237 = vpack.c.b16 %v821, %v819
      %v1238 = vpack.c.b16 %v824, %v822
      %v1239 = vpack.c.b16 %v825, %v823
      %v1240 = vpack.c.b16 %v828, %v826
      %v1241 = vpack.c.b16 %v829, %v827
      %v1242 = vpack.c.b16 %v832, %v830
      %v1243 = vpack.c.b16 %v833, %v831
      %v1244 = vpack.c.b16 %v836, %v834
      %v1245 = vpack.c.b16 %v837, %v835
      %v1246 = vpack.c.b16 %v840, %v838
      %v1247 = vpack.c.b16 %v841, %v839
      %v1248 = vpack.c.b16 %v844, %v842
      %v1249 = vpack.c.b16 %v845, %v843
      %v1250 = vpack.c.b16 %v848, %v846
      %v1251 = vpack.c.b16 %v849, %v847
      %v1252 = vpack.c.b16 %v852, %v850
      %v1253 = vpack.c.b16 %v853, %v851
      %v1254 = vpack.c.b16 %v856, %v854
      %v1255 = vpack.c.b16 %v857, %v855
      %v1256 = vpack.c.b16 %v860, %v858
      %v1257 = vpack.c.b16 %v861, %v859
      %v1258 = vpack.c.b16 %v864, %v862
      %v1259 = vpack.c.b16 %v865, %v863
      %v1260 = vpack.c.b16 %v868, %v866
      %v1261 = vpack.c.b16 %v869, %v867
      %v1262 = vpack.c.b16 %v872, %v870
      %v1263 = vpack.c.b16 %v873, %v871
      %v1264 = vpack.c.b16 %v876, %v874
      %v1265 = vpack.c.b16 %v877, %v875
      %v1266 = vpack.c.b16 %v880, %v878
      %v1267 = vpack.c.b16 %v881, %v879
      %v1268 = vpack.c.b16 %v884, %v882
      %v1269 = vpack.c.b16 %v885, %v883
      %v1270 = vpack.c.b16 %v888, %v886
      %v1271 = vpack.c.b16 %v889, %v887
      %v1272 = vpack.c.b16 %v892, %v890
      %v1273 = vpack.c.b16 %v893, %v891
      %v1274 = vpack.c.b16 %v896, %v894
      %v1275 = vpack.c.b16 %v897, %v895
      %v1276 = vpack.c.b16 %v900, %v898
      %v1277 = vpack.c.b16 %v901, %v899
      %v1278 = vpack.c.b16 %v904, %v902
      %v1279 = vpack.c.b16 %v905, %v903
      %v1280 = vpack.c.b16 %v908, %v906
      %v1281 = vpack.c.b16 %v909, %v907
      %v1282 = vpack.c.b16 %v912, %v910
      %v1283 = vpack.c.b16 %v913, %v911
      %v1284 = vpack.c.b16 %v916, %v914
      %v1285 = vpack.c.b16 %v917, %v915
      %v1286 = vpack.c.b16 %v920, %v918
      %v1287 = vpack.c.b16 %v921, %v919
      %v1288 = vpack.c.b16 %v924, %v922
      %v1289 = vpack.c.b16 %v925, %v923
      %v1290 = vpack.c.b16 %v928, %v926
      %v1291 = vpack.c.b16 %v929, %v927
      %v1292 = vpack.c.b16 %v932, %v930
      %v1293 = vpack.c.b16 %v933, %v931
      %v1294 = vpack.c.b16 %v936, %v934
      %v1295 = vpack.c.b16 %v937, %v935
      %v1296 = vpack.c.b16 %v940, %v938
      %v1297 = vpack.c.b16 %v941, %v939
      %v1298 = vpack.c.b16 %v944, %v942
      %v1299 = vpack.c.b16 %v945, %v943
      %v1300 = vpack.c.b16 %v948, %v946
      %v1301 = vpack.c.b16 %v949, %v947
      %v1302 = vpack.c.b16 %v952, %v950
      %v1303 = vpack.c.b16 %v953, %v951
      %v1304 = vpack.c.b16 %v956, %v954
      %v1305 = vpack.c.b16 %v957, %v955
      %v1306 = vpack.c.b16 %v960, %v958
      %v1307 = vpack.c.b16 %v961, %v959
      %v1308 = vpack.c.b16 %v964, %v962
      %v1309 = vpack.c.b16 %v965, %v963
      %v1310 = vpack.c.b16 %v968, %v966
      %v1311 = vpack.c.b16 %v969, %v967
      %v1312 = vpack.c.b16 %v972, %v970
      %v1313 = vpack.c.b16 %v973, %v971
      %v1314 = vpack.c.b16 %v976, %v974
      %v1315 = vpack.c.b16 %v977, %v975
      %v1316 = vpack.c.b16 %v980, %v978
      %v1317 = vpack.c.b16 %v981, %v979
      %v1318 = vpack.c.b16 %v984, %v982
      %v1319 = vpack.c.b16 %v985, %v983
      %v1320 = vpack.c.b16 %v988, %v986
      %v1321 = vpack.c.b16 %v989, %v987
      %v1322 = vpack.c.b16 %v992, %v990
      %v1323 = vpack.c.b16 %v993, %v991
      %v1324 = vpack.c.b16 %v996, %v994
      %v1325 = vpack.c.b16 %v997, %v995
      %v1326 = vpack.c.b16 %v1000, %v998
      %v1327 = vpack.c.b16 %v1001, %v999
      %v1328 = vpack.c.b16 %v1004, %v1002
      %v1329 = vpack.c.b16 %v1005, %v1003
      %v1330 = vpack.c.b16 %v1008, %v1006
      %v1331 = vpack.c.b16 %v1009, %v1007
      %v1332 = vpack.c.b16 %v1012, %v1010
      %v1333 = vpack.c.b16 %v1013, %v1011
      %v1334 = vpack.c.b16 %v1016, %v1014
      %v1335 = vpack.c.b16 %v1017, %v1015
      %v1336 = vpack.c.b16 %v1020, %v1018
      %v1337 = vpack.c.b16 %v1021, %v1019
      %v1338 = vpack.c.b16 %v1024, %v1022
      %v1339 = vpack.c.b16 %v1025, %v1023
      %v1340 = vpack.c.b16 %v1028, %v1026
      %v1341 = vpack.c.b16 %v1029, %v1027
      %v1342 = vpack.c.b16 %v1032, %v1030
      %v1343 = vpack.c.b16 %v1033, %v1031
      %v1344 = vpack.c.b16 %v1036, %v1034
      %v1345 = vpack.c.b16 %v1037, %v1035
      %v1346 = vpack.c.b16 %v1040, %v1038
      %v1347 = vpack.c.b16 %v1041, %v1039
      %v1348 = vpack.c.b16 %v1044, %v1042
      %v1349 = vpack.c.b16 %v1045, %v1043
      %v1350 = vpack.c.b16 %v1048, %v1046
      %v1351 = vpack.c.b16 %v1049, %v1047
      %v1352 = vpack.c.b16 %v1052, %v1050
      %v1353 = vpack.c.b16 %v1053, %v1051
      %v1354 = vpack.c.b16 %v1056, %v1054
      %v1355 = vpack.c.b16 %v1057, %v1055
      %v1356 = vpack.c.b16 %v1060, %v1058
      %v1357 = vpack.c.b16 %v1061, %v1059
      %v1358 = vpack.c.b16 %v1064, %v1062
      %v1359 = vpack.c.b16 %v1065, %v1063
      %v1360 = vpack.c.b16 %v1068, %v1066
      %v1361 = vpack.c.b16 %v1069, %v1067
      %v1362 = vpack.c.b16 %v1072, %v1070
      %v1363 = vpack.c.b16 %v1073, %v1071
      %v1364 = vpack.c.b16 %v1076, %v1074
      %v1365 = vpack.c.b16 %v1077, %v1075
      %v1366 = vpack.c.b16 %v1080, %v1078
      %v1367 = vpack.c.b16 %v1081, %v1079
      %v1368 = vpack.c.b16 %v1084, %v1082
      %v1369 = vpack.c.b16 %v1085, %v1083
      %v1370 = vpack.c.b16 %v1088, %v1086
      %v1371 = vpack.c.b16 %v1089, %v1087
      %v1372 = vpack.c.b16 %v1092, %v1090
      %v1373 = vpack.c.b16 %v1093, %v1091
      %v1374 = vpack.c.b16 %v1096, %v1094
      %v1375 = vpack.c.b16 %v1097, %v1095
      %v1376 = vpack.c.b16 %v1100, %v1098
      %v1377 = vpack.c.b16 %v1101, %v1099
      %v1378 = vpack.c.b16 %v1104, %v1102
      %v1379 = vpack.c.b16 %v1105, %v1103
      %v1380 = vpack.c.b16 %v1108, %v1106
      %v1381 = vpack.c.b16 %v1109, %v1107
      %v1382 = vpack.c.b16 %v1112, %v1110
      %v1383 = vpack.c.b16 %v1113, %v1111
      %v1384 = vpack.c.b16 %v1116, %v1114
      %v1385 = vpack.c.b16 %v1117, %v1115
      %v1386 = vpack.c.b16 %v1120, %v1118
      %v1387 = vpack.c.b16 %v1121, %v1119
      %v1388 = vpack.c.b16 %v1124, %v1122
      %v1389 = vpack.c.b16 %v1125, %v1123
      %v1390 = vpack.c.b16 %v1128, %v1126
      %v1391 = vpack.c.b16 %v1129, %v1127
      %v1392 = vpack.c.b16 %v1132, %v1130
      %v1393 = vpack.c.b16 %v1133, %v1131
      %v1394 = vpack.c.b16 %v1136, %v1134
      %v1395 = vpack.c.b16 %v1137, %v1135
      %v1396 = vpack.c.b16 %v1140, %v1138
      %v1397 = vpack.c.b16 %v1141, %v1139
      %v1398 = vpack.c.b16 %v1144, %v1142
      %v1399 = vpack.c.b16 %v1145, %v1143
      %v1400 = vpack.c.b16 %v1148, %v1146
      %v1401 = vpack.c.b16 %v1149, %v1147
      %v1402 = vpack.c.b16 %v1152, %v1150
      %v1403 = vpack.c.b16 %v1153, %v1151
      %v1404 = vpack.c.b16 %v1156, %v1154
      %v1405 = vpack.c.b16 %v1157, %v1155
      %v1406 = vpack.c.b16 %v1160, %v1158
      %v1407 = vpack.c.b16 %v1161, %v1159
      %v1408 = vpack.c.b16 %v1164, %v1162
      %v1409 = vpack.c.b16 %v1165, %v1163
      %v1410 = vpack.c.b16 %v1168, %v1166
      %v1411 = vpack.c.b16 %v1169, %v1167
      %v1412 = vpack.c.b16 %v1172, %v1170
      %v1413 = vpack.c.b16 %v1173, %v1171
      %v1414 = vpack.c.b16 %v1176, %v1174
      %v1415 = vpack.c.b16 %v1177, %v1175
      %v1416 = vpack.c.b16 %v1180, %v1178
      %v1417 = vpack.c.b16 %v1181, %v1179
      %v1418 = vpack.c.b16 %v1184, %v1182
      %v1419 = vpack.c.b16 %v1185, %v1183
      %v1420 = vpack.c.b16 %v1188, %v1186
      %v1421 = vpack.c.b16 %v1189, %v1187
      %v1422 = vpack.c.b16 %v1192, %v1190
      %v1423 = vpack.c.b16 %v1193, %v1191
      %v1424 = vpack.c.b16 %v1196, %v1194
      %v1425 = vpack.c.b16 %v1197, %v1195
      %v1426 = vpack.c.b16 %v1200, %v1198
      %v1427 = vpack.c.b16 %v1201, %v1199
      %v1428 = vpack.c.b16 %v1204, %v1202
      %v1429 = vpack.c.b16 %v1205, %v1203
      %v1430 = vpack.c.b16 %v1208, %v1206
      %v1431 = vpack.c.b16 %v1209, %v1207
      %v1432 = vpack.c.b16 %v1212, %v1210
      %v1433 = vpack.c.b16 %v1213, %v1211
      %v1434 = vpack.c.b16 %v1216, %v1214
      %v1435 = vpack.c.b16 %v1217, %v1215
      %v1436 = vpack.c.b16 %v1220, %v1218
      %v1437 = vpack.c.b16 %v1221, %v1219
      %vm1654 = vcmask 523264
      %v1656 = vsel %vm1654, %v533, 0
      %v1659 = vsel %vm1654, %v547, 0
      %1661 = vmatprep.subr.bf16.mxu0 %v1237
      %1662 = vmatpush1.bf16.msra.mxu0 %v1236
      %1663 = vmatprep.subr.bf16.mxu0 %v1235
      %1664 = vmatpush1.bf16.msra.mxu0 %v1234
      %1665 = vmatprep.subr.bf16.mxu0 %v1233
      %1666 = vmatpush1.bf16.msra.mxu0 %v1232
      %1667 = vmatprep.subr.bf16.mxu0 %v1231
      %1668 = vmatpush1.bf16.msra.mxu0 %v1230
      %1669 = vmatprep.subr.bf16.mxu0 %v1229
      %1670 = vmatpush1.bf16.msra.mxu0 %v1228
      %1671 = vmatprep.subr.bf16.mxu0 %v1227
      %1672 = vmatpush1.bf16.msra.mxu0 %v1226
      %1673 = vmatprep.subr.bf16.mxu0 %v1225
      %1674 = vmatpush1.bf16.msra.mxu0 %v1224
      %1675 = vmatprep.subr.bf16.mxu0 %v1223
      %1676 = vmatpush1.bf16.msra.mxu0 %v1222
      %1677 = vmatprep.subr.bf16.mxu0 %v1253
      %1678 = vmatpush2.bf16.msra.mxu0 %v1252
      %1679 = vmatprep.subr.bf16.mxu0 %v1251
      %1680 = vmatpush2.bf16.msra.mxu0 %v1250
      %1681 = vmatprep.subr.bf16.mxu0 %v1249
      %1682 = vmatpush2.bf16.msra.mxu0 %v1248
      %1683 = vmatprep.subr.bf16.mxu0 %v1247
      %1684 = vmatpush2.bf16.msra.mxu0 %v1246
      %1685 = vmatprep.subr.bf16.mxu0 %v1245
      %1686 = vmatpush2.bf16.msra.mxu0 %v1244
      %1687 = vmatprep.subr.bf16.mxu0 %v1243
      %1688 = vmatpush2.bf16.msra.mxu0 %v1242
      %1689 = vmatprep.subr.bf16.mxu0 %v1241
      %1690 = vmatpush2.bf16.msra.mxu0 %v1240
      %1691 = vmatprep.subr.bf16.mxu0 %v1239
      %1692 = vmatpush2.bf16.msra.mxu0 %v1238
      %1693 = vmatprep.mubr.bf16.mxu0 %v521
      %1694 = vmatmul.mubr.bf16.gmra.mxu0 %v520
      %v1695 = vpop.f32.mrf.mxu0
      %v1696 = vadd.f32 %v429, %v1695
      %v1697 = vpop.f32.mrf.mxu0
      %v1698 = vadd.f32 %v433, %v1697
      %v1699 = vpop.f32.mrf.mxu0
      %v1700 = vadd.f32 %v429, %v1699
      %v1701 = vpop.f32.mrf.mxu0
      %v1702 = vadd.f32 %v433, %v1701
      %1703 = vmatprep.mubr.bf16.mxu0 %v535
      %1704 = vmatmul.mubr.bf16.gmra.mxu0 %v534
      %v1705 = vpop.f32.mrf.mxu0
      %v1706 = vadd.f32 %v429, %v1705
      %v1707 = vpop.f32.mrf.mxu0
      %v1708 = vadd.f32 %v433, %v1707
      %v1709 = vpop.f32.mrf.mxu0
      %v1710 = vadd.f32 %v429, %v1709
      %v1711 = vpop.f32.mrf.mxu0
      %v1712 = vadd.f32 %v433, %v1711
      %1713 = vdwg.mxu0
      %1714 = vmatprep.subr.bf16.mxu0 %v1269
      %1715 = vmatpush1.bf16.msra.mxu0 %v1268
      %1716 = vmatprep.subr.bf16.mxu0 %v1267
      %1717 = vmatpush1.bf16.msra.mxu0 %v1266
      %1718 = vmatprep.subr.bf16.mxu0 %v1265
      %1719 = vmatpush1.bf16.msra.mxu0 %v1264
      %1720 = vmatprep.subr.bf16.mxu0 %v1263
      %1721 = vmatpush1.bf16.msra.mxu0 %v1262
      %1722 = vmatprep.subr.bf16.mxu0 %v1261
      %1723 = vmatpush1.bf16.msra.mxu0 %v1260
      %1724 = vmatprep.subr.bf16.mxu0 %v1259
      %1725 = vmatpush1.bf16.msra.mxu0 %v1258
      %1726 = vmatprep.subr.bf16.mxu0 %v1257
      %1727 = vmatpush1.bf16.msra.mxu0 %v1256
      %1728 = vmatprep.subr.bf16.mxu0 %v1255
      %1729 = vmatpush1.bf16.msra.mxu0 %v1254
      %1730 = vmatprep.subr.bf16.mxu0 %v1285
      %1731 = vmatpush2.bf16.msra.mxu0 %v1284
      %1732 = vmatprep.subr.bf16.mxu0 %v1283
      %1733 = vmatpush2.bf16.msra.mxu0 %v1282
      %1734 = vmatprep.subr.bf16.mxu0 %v1281
      %1735 = vmatpush2.bf16.msra.mxu0 %v1280
      %1736 = vmatprep.subr.bf16.mxu0 %v1279
      %1737 = vmatpush2.bf16.msra.mxu0 %v1278
      %1738 = vmatprep.subr.bf16.mxu0 %v1277
      %1739 = vmatpush2.bf16.msra.mxu0 %v1276
      %1740 = vmatprep.subr.bf16.mxu0 %v1275
      %1741 = vmatpush2.bf16.msra.mxu0 %v1274
      %1742 = vmatprep.subr.bf16.mxu0 %v1273
      %1743 = vmatpush2.bf16.msra.mxu0 %v1272
      %1744 = vmatprep.subr.bf16.mxu0 %v1271
      %1745 = vmatpush2.bf16.msra.mxu0 %v1270
      %1746 = vmatprep.mubr.bf16.mxu0 %v523
      %1747 = vmatmul.mubr.bf16.gmra.mxu0 %v522
      %v1748 = vpop.f32.mrf.mxu0
      %v1749 = vadd.f32 %v1696, %v1748
      %v1750 = vpop.f32.mrf.mxu0
      %v1751 = vadd.f32 %v1698, %v1750
      %v1752 = vpop.f32.mrf.mxu0
      %v1753 = vadd.f32 %v1700, %v1752
      %v1754 = vpop.f32.mrf.mxu0
      %v1755 = vadd.f32 %v1702, %v1754
      %1756 = vmatprep.mubr.bf16.mxu0 %v537
      %1757 = vmatmul.mubr.bf16.gmra.mxu0 %v536
      %v1758 = vpop.f32.mrf.mxu0
      %v1759 = vadd.f32 %v1706, %v1758
      %v1760 = vpop.f32.mrf.mxu0
      %v1761 = vadd.f32 %v1708, %v1760
      %v1762 = vpop.f32.mrf.mxu0
      %v1763 = vadd.f32 %v1710, %v1762
      %v1764 = vpop.f32.mrf.mxu0
      %v1765 = vadd.f32 %v1712, %v1764
      %1766 = vdwg.mxu0
      %1767 = vmatprep.subr.bf16.mxu0 %v1301
      %1768 = vmatpush1.bf16.msra.mxu0 %v1300
      %1769 = vmatprep.subr.bf16.mxu0 %v1299
      %1770 = vmatpush1.bf16.msra.mxu0 %v1298
      %1771 = vmatprep.subr.bf16.mxu0 %v1297
      %1772 = vmatpush1.bf16.msra.mxu0 %v1296
      %1773 = vmatprep.subr.bf16.mxu0 %v1295
      %1774 = vmatpush1.bf16.msra.mxu0 %v1294
      %1775 = vmatprep.subr.bf16.mxu0 %v1293
      %1776 = vmatpush1.bf16.msra.mxu0 %v1292
      %1777 = vmatprep.subr.bf16.mxu0 %v1291
      %1778 = vmatpush1.bf16.msra.mxu0 %v1290
      %1779 = vmatprep.subr.bf16.mxu0 %v1289
      %1780 = vmatpush1.bf16.msra.mxu0 %v1288
      %1781 = vmatprep.subr.bf16.mxu0 %v1287
      %1782 = vmatpush1.bf16.msra.mxu0 %v1286
      %1783 = vmatprep.subr.bf16.mxu0 %v1317
      %1784 = vmatpush2.bf16.msra.mxu0 %v1316
      %1785 = vmatprep.subr.bf16.mxu0 %v1315
      %1786 = vmatpush2.bf16.msra.mxu0 %v1314
      %1787 = vmatprep.subr.bf16.mxu0 %v1313
      %1788 = vmatpush2.bf16.msra.mxu0 %v1312
      %1789 = vmatprep.subr.bf16.mxu0 %v1311
      %1790 = vmatpush2.bf16.msra.mxu0 %v1310
      %1791 = vmatprep.subr.bf16.mxu0 %v1309
      %1792 = vmatpush2.bf16.msra.mxu0 %v1308
      %1793 = vmatprep.subr.bf16.mxu0 %v1307
      %1794 = vmatpush2.bf16.msra.mxu0 %v1306
      %1795 = vmatprep.subr.bf16.mxu0 %v1305
      %1796 = vmatpush2.bf16.msra.mxu0 %v1304
      %1797 = vmatprep.subr.bf16.mxu0 %v1303
      %1798 = vmatpush2.bf16.msra.mxu0 %v1302
      %1799 = vmatprep.mubr.bf16.mxu0 %v525
      %1800 = vmatmul.mubr.bf16.gmra.mxu0 %v524
      %v1801 = vpop.f32.mrf.mxu0
      %v1802 = vadd.f32 %v1749, %v1801
      %v1803 = vpop.f32.mrf.mxu0
      %v1804 = vadd.f32 %v1751, %v1803
      %v1805 = vpop.f32.mrf.mxu0
      %v1806 = vadd.f32 %v1753, %v1805
      %v1807 = vpop.f32.mrf.mxu0
      %v1808 = vadd.f32 %v1755, %v1807
      %1809 = vmatprep.mubr.bf16.mxu0 %v539
      %1810 = vmatmul.mubr.bf16.gmra.mxu0 %v538
      %v1811 = vpop.f32.mrf.mxu0
      %v1812 = vadd.f32 %v1759, %v1811
      %v1813 = vpop.f32.mrf.mxu0
      %v1814 = vadd.f32 %v1761, %v1813
      %v1815 = vpop.f32.mrf.mxu0
      %v1816 = vadd.f32 %v1763, %v1815
      %v1817 = vpop.f32.mrf.mxu0
      %v1818 = vadd.f32 %v1765, %v1817
      %1819 = vdwg.mxu0
      %1820 = vmatprep.subr.bf16.mxu0 %v1333
      %1821 = vmatpush1.bf16.msra.mxu0 %v1332
      %1822 = vmatprep.subr.bf16.mxu0 %v1331
      %1823 = vmatpush1.bf16.msra.mxu0 %v1330
      %1824 = vmatprep.subr.bf16.mxu0 %v1329
      %1825 = vmatpush1.bf16.msra.mxu0 %v1328
      %1826 = vmatprep.subr.bf16.mxu0 %v1327
      %1827 = vmatpush1.bf16.msra.mxu0 %v1326
      %1828 = vmatprep.subr.bf16.mxu0 %v1325
      %1829 = vmatpush1.bf16.msra.mxu0 %v1324
      %1830 = vmatprep.subr.bf16.mxu0 %v1323
      %1831 = vmatpush1.bf16.msra.mxu0 %v1322
      %1832 = vmatprep.subr.bf16.mxu0 %v1321
      %1833 = vmatpush1.bf16.msra.mxu0 %v1320
      %1834 = vmatprep.subr.bf16.mxu0 %v1319
      %1835 = vmatpush1.bf16.msra.mxu0 %v1318
      %1836 = vmatprep.subr.bf16.mxu0 %v1349
      %1837 = vmatpush2.bf16.msra.mxu0 %v1348
      %1838 = vmatprep.subr.bf16.mxu0 %v1347
      %1839 = vmatpush2.bf16.msra.mxu0 %v1346
      %1840 = vmatprep.subr.bf16.mxu0 %v1345
      %1841 = vmatpush2.bf16.msra.mxu0 %v1344
      %1842 = vmatprep.subr.bf16.mxu0 %v1343
      %1843 = vmatpush2.bf16.msra.mxu0 %v1342
      %1844 = vmatprep.subr.bf16.mxu0 %v1341
      %1845 = vmatpush2.bf16.msra.mxu0 %v1340
      %1846 = vmatprep.subr.bf16.mxu0 %v1339
      %1847 = vmatpush2.bf16.msra.mxu0 %v1338
      %1848 = vmatprep.subr.bf16.mxu0 %v1337
      %1849 = vmatpush2.bf16.msra.mxu0 %v1336
      %1850 = vmatprep.subr.bf16.mxu0 %v1335
      %1851 = vmatpush2.bf16.msra.mxu0 %v1334
      %1852 = vmatprep.mubr.bf16.mxu0 %v527
      %1853 = vmatmul.mubr.bf16.gmra.mxu0 %v526
      %v1854 = vpop.f32.mrf.mxu0
      %v1855 = vadd.f32 %v1802, %v1854
      %v1856 = vpop.f32.mrf.mxu0
      %v1857 = vadd.f32 %v1804, %v1856
      %v1858 = vpop.f32.mrf.mxu0
      %v1859 = vadd.f32 %v1806, %v1858
      %v1860 = vpop.f32.mrf.mxu0
      %v1861 = vadd.f32 %v1808, %v1860
      %1862 = vmatprep.mubr.bf16.mxu0 %v541
      %1863 = vmatmul.mubr.bf16.gmra.mxu0 %v540
      %v1864 = vpop.f32.mrf.mxu0
      %v1865 = vadd.f32 %v1812, %v1864
      %v1866 = vpop.f32.mrf.mxu0
      %v1867 = vadd.f32 %v1814, %v1866
      %v1868 = vpop.f32.mrf.mxu0
      %v1869 = vadd.f32 %v1816, %v1868
      %v1870 = vpop.f32.mrf.mxu0
      %v1871 = vadd.f32 %v1818, %v1870
      %1872 = vdwg.mxu0
      %1873 = vmatprep.subr.bf16.mxu0 %v1365
      %1874 = vmatpush1.bf16.msra.mxu0 %v1364
      %1875 = vmatprep.subr.bf16.mxu0 %v1363
      %1876 = vmatpush1.bf16.msra.mxu0 %v1362
      %1877 = vmatprep.subr.bf16.mxu0 %v1361
      %1878 = vmatpush1.bf16.msra.mxu0 %v1360
      %1879 = vmatprep.subr.bf16.mxu0 %v1359
      %1880 = vmatpush1.bf16.msra.mxu0 %v1358
      %1881 = vmatprep.subr.bf16.mxu0 %v1357
      %1882 = vmatpush1.bf16.msra.mxu0 %v1356
      %1883 = vmatprep.subr.bf16.mxu0 %v1355
      %1884 = vmatpush1.bf16.msra.mxu0 %v1354
      %1885 = vmatprep.subr.bf16.mxu0 %v1353
      %1886 = vmatpush1.bf16.msra.mxu0 %v1352
      %1887 = vmatprep.subr.bf16.mxu0 %v1351
      %1888 = vmatpush1.bf16.msra.mxu0 %v1350
      %1889 = vmatprep.subr.bf16.mxu0 %v1381
      %1890 = vmatpush2.bf16.msra.mxu0 %v1380
      %1891 = vmatprep.subr.bf16.mxu0 %v1379
      %1892 = vmatpush2.bf16.msra.mxu0 %v1378
      %1893 = vmatprep.subr.bf16.mxu0 %v1377
      %1894 = vmatpush2.bf16.msra.mxu0 %v1376
      %1895 = vmatprep.subr.bf16.mxu0 %v1375
      %1896 = vmatpush2.bf16.msra.mxu0 %v1374
      %1897 = vmatprep.subr.bf16.mxu0 %v1373
      %1898 = vmatpush2.bf16.msra.mxu0 %v1372
      %1899 = vmatprep.subr.bf16.mxu0 %v1371
      %1900 = vmatpush2.bf16.msra.mxu0 %v1370
      %1901 = vmatprep.subr.bf16.mxu0 %v1369
      %1902 = vmatpush2.bf16.msra.mxu0 %v1368
      %1903 = vmatprep.subr.bf16.mxu0 %v1367
      %1904 = vmatpush2.bf16.msra.mxu0 %v1366
      %1905 = vmatprep.mubr.bf16.mxu0 %v529
      %1906 = vmatmul.mubr.bf16.gmra.mxu0 %v528
      %v1907 = vpop.f32.mrf.mxu0
      %v1908 = vadd.f32 %v1855, %v1907
      %v1909 = vpop.f32.mrf.mxu0
      %v1910 = vadd.f32 %v1857, %v1909
      %v1911 = vpop.f32.mrf.mxu0
      %v1912 = vadd.f32 %v1859, %v1911
      %v1913 = vpop.f32.mrf.mxu0
      %v1914 = vadd.f32 %v1861, %v1913
      %1915 = vmatprep.mubr.bf16.mxu0 %v543
      %1916 = vmatmul.mubr.bf16.gmra.mxu0 %v542
      %v1917 = vpop.f32.mrf.mxu0
      %v1918 = vadd.f32 %v1865, %v1917
      %v1919 = vpop.f32.mrf.mxu0
      %v1920 = vadd.f32 %v1867, %v1919
      %v1921 = vpop.f32.mrf.mxu0
      %v1922 = vadd.f32 %v1869, %v1921
      %v1923 = vpop.f32.mrf.mxu0
      %v1924 = vadd.f32 %v1871, %v1923
      %1925 = vdwg.mxu0
      %1926 = vmatprep.subr.bf16.mxu0 %v1397
      %1927 = vmatpush1.bf16.msra.mxu0 %v1396
      %1928 = vmatprep.subr.bf16.mxu0 %v1395
      %1929 = vmatpush1.bf16.msra.mxu0 %v1394
      %1930 = vmatprep.subr.bf16.mxu0 %v1393
      %1931 = vmatpush1.bf16.msra.mxu0 %v1392
      %1932 = vmatprep.subr.bf16.mxu0 %v1391
      %1933 = vmatpush1.bf16.msra.mxu0 %v1390
      %1934 = vmatprep.subr.bf16.mxu0 %v1389
      %1935 = vmatpush1.bf16.msra.mxu0 %v1388
      %1936 = vmatprep.subr.bf16.mxu0 %v1387
      %1937 = vmatpush1.bf16.msra.mxu0 %v1386
      %1938 = vmatprep.subr.bf16.mxu0 %v1385
      %1939 = vmatpush1.bf16.msra.mxu0 %v1384
      %1940 = vmatprep.subr.bf16.mxu0 %v1383
      %1941 = vmatpush1.bf16.msra.mxu0 %v1382
      %1942 = vmatprep.subr.bf16.mxu0 %v1413
      %1943 = vmatpush2.bf16.msra.mxu0 %v1412
      %1944 = vmatprep.subr.bf16.mxu0 %v1411
      %1945 = vmatpush2.bf16.msra.mxu0 %v1410
      %1946 = vmatprep.subr.bf16.mxu0 %v1409
      %1947 = vmatpush2.bf16.msra.mxu0 %v1408
      %1948 = vmatprep.subr.bf16.mxu0 %v1407
      %1949 = vmatpush2.bf16.msra.mxu0 %v1406
      %1950 = vmatprep.subr.bf16.mxu0 %v1405
      %1951 = vmatpush2.bf16.msra.mxu0 %v1404
      %1952 = vmatprep.subr.bf16.mxu0 %v1403
      %1953 = vmatpush2.bf16.msra.mxu0 %v1402
      %1954 = vmatprep.subr.bf16.mxu0 %v1401
      %1955 = vmatpush2.bf16.msra.mxu0 %v1400
      %1956 = vmatprep.subr.bf16.mxu0 %v1399
      %1957 = vmatpush2.bf16.msra.mxu0 %v1398
      %1958 = vmatprep.mubr.bf16.mxu0 %v531
      %1959 = vmatmul.mubr.bf16.gmra.mxu0 %v530
      %v1960 = vpop.f32.mrf.mxu0
      %v1961 = vadd.f32 %v1908, %v1960
      %v1962 = vpop.f32.mrf.mxu0
      %v1963 = vadd.f32 %v1910, %v1962
      %v1964 = vpop.f32.mrf.mxu0
      %v1965 = vadd.f32 %v1912, %v1964
      %v1966 = vpop.f32.mrf.mxu0
      %v1967 = vadd.f32 %v1914, %v1966
      %1968 = vmatprep.mubr.bf16.mxu0 %v545
      %1969 = vmatmul.mubr.bf16.gmra.mxu0 %v544
      %v1970 = vpop.f32.mrf.mxu0
      %v1971 = vadd.f32 %v1918, %v1970
      %v1972 = vpop.f32.mrf.mxu0
      %v1973 = vadd.f32 %v1920, %v1972
      %v1974 = vpop.f32.mrf.mxu0
      %v1975 = vadd.f32 %v1922, %v1974
      %v1976 = vpop.f32.mrf.mxu0
      %v1977 = vadd.f32 %v1924, %v1976
      %1978 = vdwg.mxu0
      %1979 = vmatprep.subr.bf16.mxu0 %v1429
      %1980 = vmatpush1.bf16.msra.mxu0 %v1428
      %1981 = vmatprep.subr.bf16.mxu0 %v1427
      %1982 = vmatpush1.bf16.msra.mxu0 %v1426
      %1983 = vmatprep.subr.bf16.mxu0 %v1425
      %1984 = vmatpush1.bf16.msra.mxu0 %v1424
      %1985 = vmatprep.subr.bf16.mxu0 %v1423
      %1986 = vmatpush1.bf16.msra.mxu0 %v1422
      %1987 = vmatprep.subr.bf16.mxu0 %v1421
      %1988 = vmatpush1.bf16.msra.mxu0 %v1420
      %1989 = vmatprep.subr.bf16.mxu0 %v1419
      %1990 = vmatpush1.bf16.msra.mxu0 %v1418
      %1991 = vmatprep.subr.bf16.mxu0 %v1417
      %1992 = vmatpush1.bf16.msra.mxu0 %v1416
      %1993 = vmatprep.subr.bf16.mxu0 %v1415
      %1994 = vmatpush1.bf16.msra.mxu0 %v1414
      %1995 = vmatprep.subr.bf16.mxu0 0
      %1996 = vmatpush2.bf16.msra.mxu0 0
      %1997 = vmatprep.subr.bf16.mxu0 0
      %1998 = vmatpush2.bf16.msra.mxu0 0
      %1999 = vmatprep.subr.bf16.mxu0 0
      %2000 = vmatpush2.bf16.msra.mxu0 0
      %2001 = vmatprep.subr.bf16.mxu0 0
      %2002 = vmatpush2.bf16.msra.mxu0 0
      %2003 = vmatprep.subr.bf16.mxu0 %v1437
      %2004 = vmatpush2.bf16.msra.mxu0 %v1436
      %2005 = vmatprep.subr.bf16.mxu0 %v1435
      %2006 = vmatpush2.bf16.msra.mxu0 %v1434
      %2007 = vmatprep.subr.bf16.mxu0 %v1433
      %2008 = vmatpush2.bf16.msra.mxu0 %v1432
      %2009 = vmatprep.subr.bf16.mxu0 %v1431
      %2010 = vmatpush2.bf16.msra.mxu0 %v1430
      %2011 = vmatprep.mubr.bf16.mxu0 %v1656
      %2012 = vmatmul.mubr.bf16.gmra.mxu0 %v532
      %v2013 = vpop.f32.mrf.mxu0
      %v2014 = vadd.f32 %v1961, %v2013
      %v2015 = vpop.f32.mrf.mxu0
      %v2016 = vadd.f32 %v1963, %v2015
      %v2017 = vpop.f32.mrf.mxu0
      %v2018 = vadd.f32 %v1965, %v2017
      %v2019 = vpop.f32.mrf.mxu0
      %v2020 = vadd.f32 %v1967, %v2019
      %2021 = vmatprep.mubr.bf16.mxu0 %v1659
      %2022 = vmatmul.mubr.bf16.gmra.mxu0 %v546
      %v2023 = vpop.f32.mrf.mxu0
      %v2024 = vadd.f32 %v1971, %v2023
      %v2025 = vpop.f32.mrf.mxu0
      %v2026 = vadd.f32 %v1973, %v2025
      %v2027 = vpop.f32.mrf.mxu0
      %v2028 = vadd.f32 %v1975, %v2027
      %v2029 = vpop.f32.mrf.mxu0
      %v2030 = vadd.f32 %v1977, %v2029
      %2031 = vdwg.mxu0
      %v2032 = vmax.f32 %v2014, 0.0
      %v2033 = vmax.f32 %v2016, 0.0
      %v2034 = vmax.f32 %v2018, 0.0
      %v2035 = vmax.f32 %v2020, 0.0
      %v2036 = vmax.f32 %v2024, 0.0
      %v2037 = vmax.f32 %v2026, 0.0
      %v2038 = vmax.f32 %v2028, 0.0
      %v2039 = vmax.f32 %v2030, 0.0
      %2040 = vst [vmem:[%s177] sm:$0xff] %v2032
      %2041 = vst [vmem:[%s177 + $0x8] sm:$0xff] %v2033
      %2042 = vst [vmem:[%s177 + $0x10] sm:$0xff] %v2034
      %2043 = vst [vmem:[%s177 + $0x18] sm:$0xff] %v2035
      %2044 = vst [vmem:[%s177 + $0x20] sm:$0xff] %v2036
      %2045 = vst [vmem:[%s177 + $0x28] sm:$0xff] %v2037
      %2046 = vst [vmem:[%s177 + $0x30] sm:$0xff] %v2038
      %2047 = vst [vmem:[%s177 + $0x38] sm:$0xff] %v2039
      %s2048 = smul.u32 4, %s14
      %p2049 = scmp.lt.s32.totalorder %s2048, 7
      %s2050 = scalar_select %p2049, %s2048, 7
      %s2051 = smul.addr %s2050, 2
      %s2052 = smul.addr %s2051, 8
      %s2053 = scalar_lea.vmem %s3, %s2052
      // Predicated region
      $region33: #{_lambda_.7} parent=31 // pred_check
        %p2054 = pneg %p100
      $region34: #{_lambda_.7} parent=31 // pred_check_branch
        %2056 = sbr.rel (%p2054) target = $region36
      $region35: #{_lambda_.7} parent=31 // pred_region
        %s2057 = smul.u32 4, %s14
      $region36: #{_lambda_.7} parent=31 // pred_fallthru
        _
    $region32: #{_lambda_.7} parent=5 // pred_fallthru
      _
    %p2058 = scmp.le.s32.totalorder 2, %s9
    // Predicated region
    $region37: #{_lambda_.7} parent=5 // pred_check
      %p2059 = pneg %p2058
    $region38: #{_lambda_.7} parent=5 // pred_check_branch
      %2061 = sbr.rel (%p2059) target = $region40
    $region39: #{_lambda_.7} parent=5 // pred_region
      %s2062 = ssub.s32 %s9, 2
      // Predicated region
      $region41: #{_lambda_.7} parent=39 // pred_check
        %p2063 = pneg %p106
      $region42: #{_lambda_.7} parent=39 // pred_check_branch
        %2065 = sbr.rel (%p2063) target = $region44
      $region43: #{_lambda_.7} parent=39 // pred_region
        %s2066 = smul.u32 4, %s15
        %p2067 = scmp.lt.s32.totalorder %s2066, 7
        %s2068 = scalar_select %p2067, %s2066, 7
        %s2069 = smul.addr %s2068, 2
        %s2070 = smul.addr %s2069, 8
        %s2071 = scalar_lea.vmem %s3, %s2070
      $region44: #{_lambda_.7} parent=39 // pred_fallthru
        _
    $region40: #{_lambda_.7} parent=5 // pred_fallthru
      _
  $region6: #{_lambda_.7} parent=0 // loop_footer
    %s13 = sadd.s32 1, %s9
  $region7: #{_lambda_.7} parent=0 // loop_footer_branch
    %8 = sbr.rel target = $region3
  $region8: #{_lambda_.7} parent=0 // loop_exit
    _

</llo_original>
